<compile_context>
chip_gen: v7x
topology: tpu7x:2x2x1
jax: 0.10.0
libtpu: 0.0.40
codegen_flags: <defaults>
</compile_context>

<pallas_src>
import math
import numpy as np
import jax
import jax.numpy as jnp
from jax.experimental import pallas as pl
from jax.experimental.pallas import tpu as pltpu

# ---- module hyper-parameters (match EquivariantBlock defaults) ----
HIDDEN_NF = 32
N_LAYERS = 2
NORM_FACTOR = 100.0        # normalization_factor, aggregation_method='sum'
INV_NORM_FACTOR = 1.0 / NORM_FACTOR
NORM_CONSTANT = 1.0        # attention=True, tanh=False -> coords_range unused

H = HIDDEN_NF


# ----------------------------------------------------------------------------
# Pallas kernel: whole EquivariantBlock forward for the stacked batch.
# ----------------------------------------------------------------------------
def eqblock_kernel(grow_ref, gcol_ref, gdiff_ref, srow_ref,
                   h_ref, x_ref, ea_ref, nmask_ref, emask_ref,
                   we1_ref, be1_ref, we2_ref, be2_ref, watt_ref, batt_ref,
                   wn1_ref, bn1_ref, wn2_ref, bn2_ref,
                   wc1_ref, bc1_ref, wc2_ref, bc2_ref, wc3_ref,
                   h_out_ref, x_out_ref, einp_s, ninp_s):
    f32 = jnp.float32

    def mm(a, b):
        return jnp.dot(a, b, preferred_element_type=f32)

    grow = grow_ref[...]          # [BE, BN] block-diagonal row one-hots
    gcol = gcol_ref[...]          # [BE, BN]
    srow = srow_ref[...]          # [BN, BE] structural scatter (= grow.T)
    h = h_ref[...]                # [BN, H]
    x = x_ref[...]                # [BN, 3]
    nmask = nmask_ref[...]        # [BN, 1]
    emask = emask_ref[...]        # [BE, 1]

    # ---- coord2diff ----
    coord_diff = mm(gdiff_ref[...], x)                                   # [BE, 3]
    radial = jnp.sum(coord_diff * coord_diff, axis=-1, keepdims=True)    # [BE, 1]
    inv = pl.reciprocal(jnp.sqrt(radial + 1e-8) + NORM_CONSTANT, approx=True)
    coord_diff = coord_diff * inv

    # loop-invariant tail of the edge/coord MLP input: [radial, edge_attr]
    einp_s[:, 2 * H:2 * H + 1] = radial
    einp_s[:, 2 * H + 1:2 * H + 2] = ea_ref[...]

    # ---- n_layers GCL layers (attention=True), statically unrolled ----
    for l in range(N_LAYERS):
        einp_s[:, 0:H] = mm(grow, h)          # h[row]
        einp_s[:, H:2 * H] = mm(gcol, h)      # h[col]
        m1 = jax.nn.silu(mm(einp_s[...], we1_ref[l]) + be1_ref[l])
        mij = jax.nn.silu(mm(m1, we2_ref[l]) + be2_ref[l])
        att = jax.nn.sigmoid(
            jnp.sum(mij * watt_ref[l], axis=-1, keepdims=True) + batt_ref[l])
        edge_feat = mij * att * emask
        agg = mm(srow, edge_feat) * INV_NORM_FACTOR                      # [BN, H]
        ninp_s[:, 0:H] = h
        ninp_s[:, H:2 * H] = agg
        n1 = jax.nn.silu(mm(ninp_s[...], wn1_ref[l]) + bn1_ref[l])
        h = (h + mm(n1, wn2_ref[l]) + bn2_ref[l]) * nmask

    # ---- EquivariantUpdate (tanh=False) ----
    einp_s[:, 0:H] = mm(grow, h)
    einp_s[:, H:2 * H] = mm(gcol, h)
    c1 = jax.nn.silu(mm(einp_s[...], wc1_ref[...]) + bc1_ref[...])
    c2 = jax.nn.silu(mm(c1, wc2_ref[...]) + bc2_ref[...])
    phi = jnp.sum(c2 * wc3_ref[...], axis=-1, keepdims=True)             # [BE, 1]
    trans = coord_diff * phi * emask
    x_out_ref[...] = (x + mm(srow, trans) * INV_NORM_FACTOR) * nmask
    h_out_ref[...] = h                                                   # already node-masked


# ----------------------------------------------------------------------------
# Wrapper: batch of B graphs (shared topology, per-graph features / masks).
# ----------------------------------------------------------------------------
def equivariant_block(h, x, edge_index, edge_attr, node_mask, edge_mask, kp):
    B, N, Hf = h.shape
    assert Hf == H
    row, col = edge_index[0], edge_index[1]
    E = row.shape[0]
    f32 = jnp.float32
    BN, BE = B * N, B * E

    # block-diagonal one-hot gather/scatter matrices (shared topology)
    grow = jax.nn.one_hot(row, N, dtype=f32)                    # [E, N]
    gcol = jax.nn.one_hot(col, N, dtype=f32)                    # [E, N]
    eyeB = jnp.eye(B, dtype=f32)
    grow_bd = jnp.kron(eyeB, grow)                              # [BE, BN]
    gcol_bd = jnp.kron(eyeB, gcol)                              # [BE, BN]
    gdiff_bd = grow_bd - gcol_bd                                # [BE, BN]
    srow_bd = grow_bd.T                                         # [BN, BE]

    # stack graphs along the sublane axis
    h_st = h.reshape(BN, H)
    x_st = x.reshape(BN, 3)
    ea_st = edge_attr.reshape(BE, 1)
    nm_st = node_mask.reshape(BN, 1).astype(f32)
    em_st = edge_mask.reshape(BE, 1).astype(f32)

    def fs(shape):
        nd = len(shape)
        return pl.BlockSpec(shape, lambda i, nd=nd: (0,) * nd)

    data_inputs = [grow_bd, gcol_bd, gdiff_bd, srow_bd,
                   h_st, x_st, ea_st, nm_st, em_st]
    param_names = ['we1', 'be1', 'we2', 'be2', 'watt', 'batt',
                   'wn1', 'bn1', 'wn2', 'bn2',
                   'wc1', 'bc1', 'wc2', 'bc2', 'wc3']
    param_inputs = [kp[n] for n in param_names]
    inputs = data_inputs + param_inputs

    h_out, x_out = pl.pallas_call(
        eqblock_kernel,
        grid=(1,),
        in_specs=[fs(a.shape) for a in inputs],
        out_specs=(fs((BN, H)), fs((BN, 3))),
        out_shape=(jax.ShapeDtypeStruct((BN, H), f32),
                   jax.ShapeDtypeStruct((BN, 3), f32)),
        scratch_shapes=[pltpu.VMEM((BE, 2 * H + 2), f32),   # edge/coord MLP input
                        pltpu.VMEM((BN, 2 * H), f32)],      # node MLP input
        compiler_params=pltpu.CompilerParams(
            dimension_semantics=("arbitrary",),
            vmem_limit_bytes=32 * 1024 * 1024),
    )(*inputs)

    return h_out.reshape(B, N, H), x_out.reshape(B, N, 3)


# ----------------------------------------------------------------------------
# Deterministic synthetic parameters + fused packing for the kernel.
# ----------------------------------------------------------------------------
def xavier(key, shape, gain=1.0):
    fan_in, fan_out = shape[-2], shape[-1]
    limit = gain * math.sqrt(6.0 / (fan_in + fan_out))
    return jax.random.uniform(key, shape, jnp.float32, -limit, limit)


def make_params(key):
    ks = iter(jax.random.split(key, 64))

    def u(shape, scale=0.05):
        return jax.random.uniform(next(ks), shape, jnp.float32, -scale, scale)

    def stack_w(shape, gain=1.0):
        return jnp.stack([xavier(next(ks), shape, gain) for _ in range(N_LAYERS)], 0)

    def stack_b(shape):
        return jnp.stack([u(shape) for _ in range(N_LAYERS)], 0)

    p = dict(
        we1h=stack_w((H, H)), we1t=stack_w((H, H)), we1a=stack_w((2, H)),
        be1=stack_b((1, H)),
        we2=stack_w((H, H)), be2=stack_b((1, H)),
        watt=stack_w((H, 1)), batt=stack_b((1, 1)),
        wn1x=stack_w((H, H)), wn1a=stack_w((H, H)), bn1=stack_b((1, H)),
        wn2=stack_w((H, H)), bn2=stack_b((1, H)),
        wc1h=xavier(next(ks), (H, H)), wc1t=xavier(next(ks), (H, H)),
        wc1a=xavier(next(ks), (2, H)), bc1=u((1, H)),
        wc2=xavier(next(ks), (H, H)), bc2=u((1, H)),
        wc3=xavier(next(ks), (H, 1), gain=0.001),
    )
    return p


def pack_params(p):
    # fused, layer-stacked parameter tensors (every kernel read is tile-aligned)
    we1 = jnp.concatenate([p['we1h'], p['we1t'], p['we1a']], axis=1)   # [L, 2H+2, H]
    wn1 = jnp.concatenate([p['wn1x'], p['wn1a']], axis=1)              # [L, 2H, H]
    wc1 = jnp.concatenate([p['wc1h'], p['wc1t'], p['wc1a']], axis=0)   # [2H+2, H]
    return dict(
        we1=we1, be1=p['be1'], we2=p['we2'], be2=p['be2'],
        watt=jnp.swapaxes(p['watt'], 1, 2), batt=p['batt'],
        wn1=wn1, bn1=p['bn1'], wn2=p['wn2'], bn2=p['bn2'],
        wc1=wc1, bc1=p['bc1'], wc2=p['wc2'], bc2=p['bc2'],
        wc3=p['wc3'].T,
    )


# ----------------------------------------------------------------------------
# Pure-JAX reference (mirrors the PyTorch forward) for a sanity check
# ----------------------------------------------------------------------------
def ref_forward(h, x, edge_index, edge_attr_in, node_mask, edge_mask, p):
    row, col = edge_index[0], edge_index[1]
    N = h.shape[0]

    coord_diff = x[row] - x[col]
    radial = jnp.sum(coord_diff ** 2, axis=1, keepdims=True)
    norm = jnp.sqrt(radial + 1e-8)
    coord_diff = coord_diff / (norm + NORM_CONSTANT)
    edge_attr = jnp.concatenate([radial, edge_attr_in], axis=1)

    for l in range(N_LAYERS):
        hr, hc = h[row], h[col]
        m1 = jax.nn.silu(hr @ p['we1h'][l] + hc @ p['we1t'][l]
                         + edge_attr @ p['we1a'][l] + p['be1'][l])
        mij = jax.nn.silu(m1 @ p['we2'][l] + p['be2'][l])
        att = jax.nn.sigmoid(mij @ p['watt'][l] + p['batt'][l])
        out = mij * att * edge_mask
        agg = jnp.zeros((N, H), jnp.float32).at[row].add(out) / NORM_FACTOR
        n1 = jax.nn.silu(h @ p['wn1x'][l] + agg @ p['wn1a'][l] + p['bn1'][l])
        h = (h + n1 @ p['wn2'][l] + p['bn2'][l]) * node_mask

    hr, hc = h[row], h[col]
    c1 = jax.nn.silu(hr @ p['wc1h'] + hc @ p['wc1t']
                     + edge_attr @ p['wc1a'] + p['bc1'])
    c2 = jax.nn.silu(c1 @ p['wc2'] + p['bc2'])
    phi = c2 @ p['wc3']
    trans = coord_diff * phi * edge_mask
    aggx = jnp.zeros((N, 3), jnp.float32).at[row].add(trans) / NORM_FACTOR
    x = (x + aggx) * node_mask
    h = h * node_mask
    return h, x


# ----------------------------------------------------------------------------
if __name__ == "__main__":
    key = jax.random.PRNGKey(0)
    k_h, k_x, k_ea, k_p = jax.random.split(key, 4)

    B, N = 4, 8                      # 4 graphs of 8 nodes, hidden_nf = 32
    rows, cols = [], []
    for i in range(N):
        for j in range(N):
            if i != j:
                rows.append(i)
                cols.append(j)
    edge_index = jnp.array([rows, cols], dtype=jnp.int32)   # [2, 56]
    E = edge_index.shape[1]

    h = jax.random.normal(k_h, (B, N, H), jnp.float32)
    x = jax.random.normal(k_x, (B, N, 3), jnp.float32)
    edge_attr = jax.random.normal(k_ea, (B, E, 1), jnp.float32)

    n_valid = N - (jnp.arange(B) % 3)                        # vary padding per graph
    node_mask = (jnp.arange(N)[None, :] < n_valid[:, None]
                 ).astype(jnp.float32)[..., None]            # [B, N, 1]
    edge_mask = node_mask[:, edge_index[0], :] * node_mask[:, edge_index[1], :]

    params = make_params(k_p)
    kparams = pack_params(params)

    h_out, x_out = equivariant_block(h, x, edge_index, edge_attr,
                                     node_mask, edge_mask, kparams)
    jax.block_until_ready((h_out, x_out))

    h_ref, x_ref = [], []
    for b in range(B):
        hb, xb = ref_forward(h[b], x[b], edge_index, edge_attr[b],
                             node_mask[b], edge_mask[b], params)
        h_ref.append(hb)
        x_ref.append(xb)
    h_ref = jnp.stack(h_ref)
    x_ref = jnp.stack(x_ref)

    np.testing.assert_allclose(np.asarray(h_out), np.asarray(h_ref),
                               rtol=2e-3, atol=2e-3)
    np.testing.assert_allclose(np.asarray(x_out), np.asarray(x_ref),
                               rtol=2e-3, atol=2e-3)

    print("KERNEL_OK")
</pallas_src>

<mosaic_0001>
module attributes {stable_mosaic.version = 11 : i64} {
  func.func @eqblock_kernel(%arg0: i32, %arg1: memref<224x32xf32, #tpu.memory_space<vmem>>, %arg2: memref<224x32xf32, #tpu.memory_space<vmem>>, %arg3: memref<224x32xf32, #tpu.memory_space<vmem>>, %arg4: memref<32x224xf32, #tpu.memory_space<vmem>>, %arg5: memref<32x32xf32, #tpu.memory_space<vmem>>, %arg6: memref<32x3xf32, #tpu.memory_space<vmem>>, %arg7: memref<224x1xf32, #tpu.memory_space<vmem>>, %arg8: memref<32x1xf32, #tpu.memory_space<vmem>>, %arg9: memref<224x1xf32, #tpu.memory_space<vmem>>, %arg10: memref<2x66x32xf32, #tpu.memory_space<vmem>>, %arg11: memref<2x1x32xf32, #tpu.memory_space<vmem>>, %arg12: memref<2x32x32xf32, #tpu.memory_space<vmem>>, %arg13: memref<2x1x32xf32, #tpu.memory_space<vmem>>, %arg14: memref<2x1x32xf32, #tpu.memory_space<vmem>>, %arg15: memref<2x1x1xf32, #tpu.memory_space<vmem>>, %arg16: memref<2x64x32xf32, #tpu.memory_space<vmem>>, %arg17: memref<2x1x32xf32, #tpu.memory_space<vmem>>, %arg18: memref<2x32x32xf32, #tpu.memory_space<vmem>>, %arg19: memref<2x1x32xf32, #tpu.memory_space<vmem>>, %arg20: memref<66x32xf32, #tpu.memory_space<vmem>>, %arg21: memref<1x32xf32, #tpu.memory_space<vmem>>, %arg22: memref<32x32xf32, #tpu.memory_space<vmem>>, %arg23: memref<1x32xf32, #tpu.memory_space<vmem>>, %arg24: memref<1x32xf32, #tpu.memory_space<vmem>>, %arg25: memref<32x32xf32, #tpu.memory_space<vmem>>, %arg26: memref<32x3xf32, #tpu.memory_space<vmem>>, %arg27: memref<224x66xf32, #tpu.memory_space<vmem>>, %arg28: memref<32x64xf32, #tpu.memory_space<vmem>>) attributes {dimension_semantics = [#tpu.dimension_semantics<arbitrary>], iteration_bounds = array<i64: 1>, scalar_prefetch = 0 : i64, scratch_operands = 2 : i64, tpu.core_type = #tpu.core_type<tc>, window_params = [{pipeline_mode = #tpu.pipeline_mode<synchronous>, transform_indices = @transform_0, window_bounds = array<i64: 224, 32>}, {pipeline_mode = #tpu.pipeline_mode<synchronous>, transform_indices = @transform_1, window_bounds = array<i64: 224, 32>}, {pipeline_mode = #tpu.pipeline_mode<synchronous>, transform_indices = @transform_2, window_bounds = array<i64: 224, 32>}, {pipeline_mode = #tpu.pipeline_mode<synchronous>, transform_indices = @transform_3, window_bounds = array<i64: 32, 224>}, {pipeline_mode = #tpu.pipeline_mode<synchronous>, transform_indices = @transform_4, window_bounds = array<i64: 32, 32>}, {pipeline_mode = #tpu.pipeline_mode<synchronous>, transform_indices = @transform_5, window_bounds = array<i64: 32, 3>}, {pipeline_mode = #tpu.pipeline_mode<synchronous>, transform_indices = @transform_6, window_bounds = array<i64: 224, 1>}, {pipeline_mode = #tpu.pipeline_mode<synchronous>, transform_indices = @transform_7, window_bounds = array<i64: 32, 1>}, {pipeline_mode = #tpu.pipeline_mode<synchronous>, transform_indices = @transform_8, window_bounds = array<i64: 224, 1>}, {pipeline_mode = #tpu.pipeline_mode<synchronous>, transform_indices = @transform_9, window_bounds = array<i64: 2, 66, 32>}, {pipeline_mode = #tpu.pipeline_mode<synchronous>, transform_indices = @transform_10, window_bounds = array<i64: 2, 1, 32>}, {pipeline_mode = #tpu.pipeline_mode<synchronous>, transform_indices = @transform_11, window_bounds = array<i64: 2, 32, 32>}, {pipeline_mode = #tpu.pipeline_mode<synchronous>, transform_indices = @transform_12, window_bounds = array<i64: 2, 1, 32>}, {pipeline_mode = #tpu.pipeline_mode<synchronous>, transform_indices = @transform_13, window_bounds = array<i64: 2, 1, 32>}, {pipeline_mode = #tpu.pipeline_mode<synchronous>, transform_indices = @transform_14, window_bounds = array<i64: 2, 1, 1>}, {pipeline_mode = #tpu.pipeline_mode<synchronous>, transform_indices = @transform_15, window_bounds = array<i64: 2, 64, 32>}, {pipeline_mode = #tpu.pipeline_mode<synchronous>, transform_indices = @transform_16, window_bounds = array<i64: 2, 1, 32>}, {pipeline_mode = #tpu.pipeline_mode<synchronous>, transform_indices = @transform_17, window_bounds = array<i64: 2, 32, 32>}, {pipeline_mode = #tpu.pipeline_mode<synchronous>, transform_indices = @transform_18, window_bounds = array<i64: 2, 1, 32>}, {pipeline_mode = #tpu.pipeline_mode<synchronous>, transform_indices = @transform_19, window_bounds = array<i64: 66, 32>}, {pipeline_mode = #tpu.pipeline_mode<synchronous>, transform_indices = @transform_20, window_bounds = array<i64: 1, 32>}, {pipeline_mode = #tpu.pipeline_mode<synchronous>, transform_indices = @transform_21, window_bounds = array<i64: 32, 32>}, {pipeline_mode = #tpu.pipeline_mode<synchronous>, transform_indices = @transform_22, window_bounds = array<i64: 1, 32>}, {pipeline_mode = #tpu.pipeline_mode<synchronous>, transform_indices = @transform_23, window_bounds = array<i64: 1, 32>}, {pipeline_mode = #tpu.pipeline_mode<synchronous>, transform_indices = @transform_24, window_bounds = array<i64: 32, 32>}, {pipeline_mode = #tpu.pipeline_mode<synchronous>, transform_indices = @transform_25, window_bounds = array<i64: 32, 3>}]} {
    %c0 = arith.constant 0 : index
    %c0_0 = arith.constant 0 : index
    %0 = vector.load %arg1[%c0, %c0_0] : memref<224x32xf32, #tpu.memory_space<vmem>>, vector<224x32xf32>
    %c0_1 = arith.constant 0 : index
    %c0_2 = arith.constant 0 : index
    %1 = vector.load %arg2[%c0_1, %c0_2] : memref<224x32xf32, #tpu.memory_space<vmem>>, vector<224x32xf32>
    %c0_3 = arith.constant 0 : index
    %c0_4 = arith.constant 0 : index
    %2 = vector.load %arg4[%c0_3, %c0_4] : memref<32x224xf32, #tpu.memory_space<vmem>>, vector<32x224xf32>
    %c0_5 = arith.constant 0 : index
    %c0_6 = arith.constant 0 : index
    %3 = vector.load %arg5[%c0_5, %c0_6] : memref<32x32xf32, #tpu.memory_space<vmem>>, vector<32x32xf32>
    %c0_7 = arith.constant 0 : index
    %c0_8 = arith.constant 0 : index
    %4 = vector.load %arg6[%c0_7, %c0_8] : memref<32x3xf32, #tpu.memory_space<vmem>>, vector<32x3xf32>
    %c0_9 = arith.constant 0 : index
    %c0_10 = arith.constant 0 : index
    %5 = vector.load %arg8[%c0_9, %c0_10] : memref<32x1xf32, #tpu.memory_space<vmem>>, vector<32x1xf32>
    %c0_11 = arith.constant 0 : index
    %c0_12 = arith.constant 0 : index
    %6 = vector.load %arg9[%c0_11, %c0_12] : memref<224x1xf32, #tpu.memory_space<vmem>>, vector<224x1xf32>
    %c0_13 = arith.constant 0 : index
    %c0_14 = arith.constant 0 : index
    %7 = vector.load %arg3[%c0_13, %c0_14] : memref<224x32xf32, #tpu.memory_space<vmem>>, vector<224x32xf32>
    %cst = arith.constant dense<0.000000e+00> : vector<224x3xf32>
    %8 = tpu.matmul %7, %4, %cst {dimension_numbers = #tpu.dot_dimension_numbers<[1], [0], [0], [1], [0, 0, 1, 1], [], []>} : vector<224x32xf32>, vector<32x3xf32>, vector<224x3xf32> -> vector<224x3xf32>
    %9 = arith.mulf %8, %8 : vector<224x3xf32>
    %cst_15 = arith.constant dense<0.000000e+00> : vector<224xf32>
    %10 = vector.multi_reduction <add>, %9, %cst_15 [1] : vector<224x3xf32> to vector<224xf32>
    %11 = vector.shape_cast %10 : vector<224xf32> to vector<224x1xf32>
    %cst_16 = arith.constant 9.99999993E-9 : f32
    %12 = vector.broadcast %cst_16 : f32 to vector<224x1xf32>
    %13 = arith.addf %11, %12 : vector<224x1xf32>
    %14 = math.sqrt %13 : vector<224x1xf32>
    %cst_17 = arith.constant 1.000000e+00 : f32
    %15 = vector.broadcast %cst_17 : f32 to vector<224x1xf32>
    %16 = arith.addf %14, %15 : vector<224x1xf32>
    %17 = tpu.reciprocal %16 {approx = true} : vector<224x1xf32> -> vector<224x1xf32>
    %18 = vector.broadcast %17 : vector<224x1xf32> to vector<224x3xf32>
    %19 = arith.mulf %8, %18 : vector<224x3xf32>
    %c0_18 = arith.constant 0 : index
    %c64 = arith.constant 64 : index
    %20 = vector.load %arg27[%c0_18, %c64] : memref<224x66xf32, #tpu.memory_space<vmem>>, vector<224x1xf32>
    tpu.vector_store %arg27[%c0_18, %c64], %11 {strides = array<i32>} : memref<224x66xf32, #tpu.memory_space<vmem>>, vector<224x1xf32>,
    %c0_19 = arith.constant 0 : index
    %c0_20 = arith.constant 0 : index
    %21 = vector.load %arg7[%c0_19, %c0_20] : memref<224x1xf32, #tpu.memory_space<vmem>>, vector<224x1xf32>
    %c0_21 = arith.constant 0 : index
    %c65 = arith.constant 65 : index
    %22 = vector.load %arg27[%c0_21, %c65] : memref<224x66xf32, #tpu.memory_space<vmem>>, vector<224x1xf32>
    tpu.vector_store %arg27[%c0_21, %c65], %21 {strides = array<i32>} : memref<224x66xf32, #tpu.memory_space<vmem>>, vector<224x1xf32>,
    %cst_22 = arith.constant dense<0.000000e+00> : vector<224x32xf32>
    %23 = tpu.matmul %0, %3, %cst_22 {dimension_numbers = #tpu.dot_dimension_numbers<[1], [0], [0], [1], [0, 0, 1, 1], [], []>} : vector<224x32xf32>, vector<32x32xf32>, vector<224x32xf32> -> vector<224x32xf32>
    %c0_23 = arith.constant 0 : index
    %c0_24 = arith.constant 0 : index
    %24 = vector.load %arg27[%c0_23, %c0_24] : memref<224x66xf32, #tpu.memory_space<vmem>>, vector<224x32xf32>
    tpu.vector_store %arg27[%c0_23, %c0_24], %23 {strides = array<i32>} : memref<224x66xf32, #tpu.memory_space<vmem>>, vector<224x32xf32>,
    %cst_25 = arith.constant dense<0.000000e+00> : vector<224x32xf32>
    %25 = tpu.matmul %1, %3, %cst_25 {dimension_numbers = #tpu.dot_dimension_numbers<[1], [0], [0], [1], [0, 0, 1, 1], [], []>} : vector<224x32xf32>, vector<32x32xf32>, vector<224x32xf32> -> vector<224x32xf32>
    %c0_26 = arith.constant 0 : index
    %c32 = arith.constant 32 : index
    %26 = vector.load %arg27[%c0_26, %c32] : memref<224x66xf32, #tpu.memory_space<vmem>>, vector<224x32xf32>
    tpu.vector_store %arg27[%c0_26, %c32], %25 {strides = array<i32>} : memref<224x66xf32, #tpu.memory_space<vmem>>, vector<224x32xf32>,
    %c0_27 = arith.constant 0 : index
    %c0_28 = arith.constant 0 : index
    %27 = vector.load %arg27[%c0_27, %c0_28] : memref<224x66xf32, #tpu.memory_space<vmem>>, vector<224x66xf32>
    %c0_29 = arith.constant 0 : index
    %c0_30 = arith.constant 0 : index
    %c0_31 = arith.constant 0 : index
    %28 = vector.load %arg10[%c0_29, %c0_30, %c0_31] : memref<2x66x32xf32, #tpu.memory_space<vmem>>, vector<1x66x32xf32>
    %29 = vector.shape_cast %28 : vector<1x66x32xf32> to vector<66x32xf32>
    %cst_32 = arith.constant dense<0.000000e+00> : vector<224x32xf32>
    %30 = tpu.matmul %27, %29, %cst_32 {dimension_numbers = #tpu.dot_dimension_numbers<[1], [0], [0], [1], [0, 0, 1, 1], [], []>} : vector<224x66xf32>, vector<66x32xf32>, vector<224x32xf32> -> vector<224x32xf32>
    %c0_33 = arith.constant 0 : index
    %c0_34 = arith.constant 0 : index
    %c0_35 = arith.constant 0 : index
    %31 = vector.load %arg11[%c0_33, %c0_34, %c0_35] : memref<2x1x32xf32, #tpu.memory_space<vmem>>, vector<1x1x32xf32>
    %32 = vector.shape_cast %31 : vector<1x1x32xf32> to vector<1x32xf32>
    %33 = vector.broadcast %32 : vector<1x32xf32> to vector<224x32xf32>
    %34 = arith.addf %30, %33 : vector<224x32xf32>
    %35 = arith.negf %34 : vector<224x32xf32>
    %36 = math.exp %35 : vector<224x32xf32>
    %cst_36 = arith.constant 1.000000e+00 : f32
    %37 = vector.broadcast %cst_36 : f32 to vector<224x32xf32>
    %38 = arith.addf %37, %36 : vector<224x32xf32>
    %39 = arith.divf %37, %38 : vector<224x32xf32>
    %40 = arith.mulf %34, %39 : vector<224x32xf32>
    %c0_37 = arith.constant 0 : index
    %c0_38 = arith.constant 0 : index
    %c0_39 = arith.constant 0 : index
    %41 = vector.load %arg12[%c0_37, %c0_38, %c0_39] : memref<2x32x32xf32, #tpu.memory_space<vmem>>, vector<1x32x32xf32>
    %42 = vector.shape_cast %41 : vector<1x32x32xf32> to vector<32x32xf32>
    %cst_40 = arith.constant dense<0.000000e+00> : vector<224x32xf32>
    %43 = tpu.matmul %40, %42, %cst_40 {dimension_numbers = #tpu.dot_dimension_numbers<[1], [0], [0], [1], [0, 0, 1, 1], [], []>} : vector<224x32xf32>, vector<32x32xf32>, vector<224x32xf32> -> vector<224x32xf32>
    %c0_41 = arith.constant 0 : index
    %c0_42 = arith.constant 0 : index
    %c0_43 = arith.constant 0 : index
    %44 = vector.load %arg13[%c0_41, %c0_42, %c0_43] : memref<2x1x32xf32, #tpu.memory_space<vmem>>, vector<1x1x32xf32>
    %45 = vector.shape_cast %44 : vector<1x1x32xf32> to vector<1x32xf32>
    %46 = vector.broadcast %45 : vector<1x32xf32> to vector<224x32xf32>
    %47 = arith.addf %43, %46 : vector<224x32xf32>
    %48 = arith.negf %47 : vector<224x32xf32>
    %49 = math.exp %48 : vector<224x32xf32>
    %cst_44 = arith.constant 1.000000e+00 : f32
    %50 = vector.broadcast %cst_44 : f32 to vector<224x32xf32>
    %51 = arith.addf %50, %49 : vector<224x32xf32>
    %52 = arith.divf %50, %51 : vector<224x32xf32>
    %53 = arith.mulf %47, %52 : vector<224x32xf32>
    %c0_45 = arith.constant 0 : index
    %c0_46 = arith.constant 0 : index
    %c0_47 = arith.constant 0 : index
    %54 = vector.load %arg14[%c0_45, %c0_46, %c0_47] : memref<2x1x32xf32, #tpu.memory_space<vmem>>, vector<1x1x32xf32>
    %55 = vector.shape_cast %54 : vector<1x1x32xf32> to vector<1x32xf32>
    %56 = vector.broadcast %55 : vector<1x32xf32> to vector<224x32xf32>
    %57 = arith.mulf %53, %56 : vector<224x32xf32>
    %cst_48 = arith.constant dense<0.000000e+00> : vector<224xf32>
    %58 = vector.multi_reduction <add>, %57, %cst_48 [1] : vector<224x32xf32> to vector<224xf32>
    %59 = vector.shape_cast %58 : vector<224xf32> to vector<224x1xf32>
    %c0_49 = arith.constant 0 : index
    %c0_50 = arith.constant 0 : index
    %c0_51 = arith.constant 0 : index
    %60 = vector.load %arg15[%c0_49, %c0_50, %c0_51] : memref<2x1x1xf32, #tpu.memory_space<vmem>>, vector<1x1x1xf32>
    %61 = vector.shape_cast %60 : vector<1x1x1xf32> to vector<1x1xf32>
    %62 = vector.broadcast %61 : vector<1x1xf32> to vector<224x1xf32>
    %63 = arith.addf %59, %62 : vector<224x1xf32>
    %64 = arith.negf %63 : vector<224x1xf32>
    %65 = math.exp %64 : vector<224x1xf32>
    %cst_52 = arith.constant 1.000000e+00 : f32
    %66 = vector.broadcast %cst_52 : f32 to vector<224x1xf32>
    %67 = arith.addf %66, %65 : vector<224x1xf32>
    %68 = arith.divf %66, %67 : vector<224x1xf32>
    %69 = vector.broadcast %68 : vector<224x1xf32> to vector<224x32xf32>
    %70 = arith.mulf %53, %69 : vector<224x32xf32>
    %71 = vector.broadcast %6 : vector<224x1xf32> to vector<224x32xf32>
    %72 = arith.mulf %70, %71 : vector<224x32xf32>
    %cst_53 = arith.constant dense<0.000000e+00> : vector<32x32xf32>
    %73 = tpu.matmul %2, %72, %cst_53 {dimension_numbers = #tpu.dot_dimension_numbers<[1], [0], [0], [1], [0, 0, 1, 1], [], []>} : vector<32x224xf32>, vector<224x32xf32>, vector<32x32xf32> -> vector<32x32xf32>
    %cst_54 = arith.constant 0.00999999977 : f32
    %74 = vector.broadcast %cst_54 : f32 to vector<32x32xf32>
    %75 = arith.mulf %73, %74 : vector<32x32xf32>
    %c0_55 = arith.constant 0 : index
    %c0_56 = arith.constant 0 : index
    %76 = vector.load %arg28[%c0_55, %c0_56] : memref<32x64xf32, #tpu.memory_space<vmem>>, vector<32x32xf32>
    tpu.vector_store %arg28[%c0_55, %c0_56], %3 {strides = array<i32>} : memref<32x64xf32, #tpu.memory_space<vmem>>, vector<32x32xf32>,
    %c0_57 = arith.constant 0 : index
    %c32_58 = arith.constant 32 : index
    %77 = vector.load %arg28[%c0_57, %c32_58] : memref<32x64xf32, #tpu.memory_space<vmem>>, vector<32x32xf32>
    tpu.vector_store %arg28[%c0_57, %c32_58], %75 {strides = array<i32>} : memref<32x64xf32, #tpu.memory_space<vmem>>, vector<32x32xf32>,
    %c0_59 = arith.constant 0 : index
    %c0_60 = arith.constant 0 : index
    %78 = vector.load %arg28[%c0_59, %c0_60] : memref<32x64xf32, #tpu.memory_space<vmem>>, vector<32x64xf32>
    %c0_61 = arith.constant 0 : index
    %c0_62 = arith.constant 0 : index
    %c0_63 = arith.constant 0 : index
    %79 = vector.load %arg16[%c0_61, %c0_62, %c0_63] : memref<2x64x32xf32, #tpu.memory_space<vmem>>, vector<1x64x32xf32>
    %80 = vector.shape_cast %79 : vector<1x64x32xf32> to vector<64x32xf32>
    %cst_64 = arith.constant dense<0.000000e+00> : vector<32x32xf32>
    %81 = tpu.matmul %78, %80, %cst_64 {dimension_numbers = #tpu.dot_dimension_numbers<[1], [0], [0], [1], [0, 0, 1, 1], [], []>} : vector<32x64xf32>, vector<64x32xf32>, vector<32x32xf32> -> vector<32x32xf32>
    %c0_65 = arith.constant 0 : index
    %c0_66 = arith.constant 0 : index
    %c0_67 = arith.constant 0 : index
    %82 = vector.load %arg17[%c0_65, %c0_66, %c0_67] : memref<2x1x32xf32, #tpu.memory_space<vmem>>, vector<1x1x32xf32>
    %83 = vector.shape_cast %82 : vector<1x1x32xf32> to vector<1x32xf32>
    %84 = vector.broadcast %83 : vector<1x32xf32> to vector<32x32xf32>
    %85 = arith.addf %81, %84 : vector<32x32xf32>
    %86 = arith.negf %85 : vector<32x32xf32>
    %87 = math.exp %86 : vector<32x32xf32>
    %cst_68 = arith.constant 1.000000e+00 : f32
    %88 = vector.broadcast %cst_68 : f32 to vector<32x32xf32>
    %89 = arith.addf %88, %87 : vector<32x32xf32>
    %90 = arith.divf %88, %89 : vector<32x32xf32>
    %91 = arith.mulf %85, %90 : vector<32x32xf32>
    %c0_69 = arith.constant 0 : index
    %c0_70 = arith.constant 0 : index
    %c0_71 = arith.constant 0 : index
    %92 = vector.load %arg18[%c0_69, %c0_70, %c0_71] : memref<2x32x32xf32, #tpu.memory_space<vmem>>, vector<1x32x32xf32>
    %93 = vector.shape_cast %92 : vector<1x32x32xf32> to vector<32x32xf32>
    %cst_72 = arith.constant dense<0.000000e+00> : vector<32x32xf32>
    %94 = tpu.matmul %91, %93, %cst_72 {dimension_numbers = #tpu.dot_dimension_numbers<[1], [0], [0], [1], [0, 0, 1, 1], [], []>} : vector<32x32xf32>, vector<32x32xf32>, vector<32x32xf32> -> vector<32x32xf32>
    %95 = arith.addf %3, %94 : vector<32x32xf32>
    %c0_73 = arith.constant 0 : index
    %c0_74 = arith.constant 0 : index
    %c0_75 = arith.constant 0 : index
    %96 = vector.load %arg19[%c0_73, %c0_74, %c0_75] : memref<2x1x32xf32, #tpu.memory_space<vmem>>, vector<1x1x32xf32>
    %97 = vector.shape_cast %96 : vector<1x1x32xf32> to vector<1x32xf32>
    %98 = vector.broadcast %97 : vector<1x32xf32> to vector<32x32xf32>
    %99 = arith.addf %95, %98 : vector<32x32xf32>
    %100 = vector.broadcast %5 : vector<32x1xf32> to vector<32x32xf32>
    %101 = arith.mulf %99, %100 : vector<32x32xf32>
    %cst_76 = arith.constant dense<0.000000e+00> : vector<224x32xf32>
    %102 = tpu.matmul %0, %101, %cst_76 {dimension_numbers = #tpu.dot_dimension_numbers<[1], [0], [0], [1], [0, 0, 1, 1], [], []>} : vector<224x32xf32>, vector<32x32xf32>, vector<224x32xf32> -> vector<224x32xf32>
    %c0_77 = arith.constant 0 : index
    %c0_78 = arith.constant 0 : index
    %103 = vector.load %arg27[%c0_77, %c0_78] : memref<224x66xf32, #tpu.memory_space<vmem>>, vector<224x32xf32>
    tpu.vector_store %arg27[%c0_77, %c0_78], %102 {strides = array<i32>} : memref<224x66xf32, #tpu.memory_space<vmem>>, vector<224x32xf32>,
    %cst_79 = arith.constant dense<0.000000e+00> : vector<224x32xf32>
    %104 = tpu.matmul %1, %101, %cst_79 {dimension_numbers = #tpu.dot_dimension_numbers<[1], [0], [0], [1], [0, 0, 1, 1], [], []>} : vector<224x32xf32>, vector<32x32xf32>, vector<224x32xf32> -> vector<224x32xf32>
    %c0_80 = arith.constant 0 : index
    %c32_81 = arith.constant 32 : index
    %105 = vector.load %arg27[%c0_80, %c32_81] : memref<224x66xf32, #tpu.memory_space<vmem>>, vector<224x32xf32>
    tpu.vector_store %arg27[%c0_80, %c32_81], %104 {strides = array<i32>} : memref<224x66xf32, #tpu.memory_space<vmem>>, vector<224x32xf32>,
    %c0_82 = arith.constant 0 : index
    %c0_83 = arith.constant 0 : index
    %106 = vector.load %arg27[%c0_82, %c0_83] : memref<224x66xf32, #tpu.memory_space<vmem>>, vector<224x66xf32>
    %c1 = arith.constant 1 : index
    %c0_84 = arith.constant 0 : index
    %c0_85 = arith.constant 0 : index
    %107 = vector.load %arg10[%c1, %c0_84, %c0_85] : memref<2x66x32xf32, #tpu.memory_space<vmem>>, vector<1x66x32xf32>
    %108 = vector.shape_cast %107 : vector<1x66x32xf32> to vector<66x32xf32>
    %cst_86 = arith.constant dense<0.000000e+00> : vector<224x32xf32>
    %109 = tpu.matmul %106, %108, %cst_86 {dimension_numbers = #tpu.dot_dimension_numbers<[1], [0], [0], [1], [0, 0, 1, 1], [], []>} : vector<224x66xf32>, vector<66x32xf32>, vector<224x32xf32> -> vector<224x32xf32>
    %c1_87 = arith.constant 1 : index
    %c0_88 = arith.constant 0 : index
    %c0_89 = arith.constant 0 : index
    %110 = vector.load %arg11[%c1_87, %c0_88, %c0_89] : memref<2x1x32xf32, #tpu.memory_space<vmem>>, vector<1x1x32xf32>
    %111 = vector.shape_cast %110 : vector<1x1x32xf32> to vector<1x32xf32>
    %112 = vector.broadcast %111 : vector<1x32xf32> to vector<224x32xf32>
    %113 = arith.addf %109, %112 : vector<224x32xf32>
    %114 = arith.negf %113 : vector<224x32xf32>
    %115 = math.exp %114 : vector<224x32xf32>
    %cst_90 = arith.constant 1.000000e+00 : f32
    %116 = vector.broadcast %cst_90 : f32 to vector<224x32xf32>
    %117 = arith.addf %116, %115 : vector<224x32xf32>
    %118 = arith.divf %116, %117 : vector<224x32xf32>
    %119 = arith.mulf %113, %118 : vector<224x32xf32>
    %c1_91 = arith.constant 1 : index
    %c0_92 = arith.constant 0 : index
    %c0_93 = arith.constant 0 : index
    %120 = vector.load %arg12[%c1_91, %c0_92, %c0_93] : memref<2x32x32xf32, #tpu.memory_space<vmem>>, vector<1x32x32xf32>
    %121 = vector.shape_cast %120 : vector<1x32x32xf32> to vector<32x32xf32>
    %cst_94 = arith.constant dense<0.000000e+00> : vector<224x32xf32>
    %122 = tpu.matmul %119, %121, %cst_94 {dimension_numbers = #tpu.dot_dimension_numbers<[1], [0], [0], [1], [0, 0, 1, 1], [], []>} : vector<224x32xf32>, vector<32x32xf32>, vector<224x32xf32> -> vector<224x32xf32>
    %c1_95 = arith.constant 1 : index
    %c0_96 = arith.constant 0 : index
    %c0_97 = arith.constant 0 : index
    %123 = vector.load %arg13[%c1_95, %c0_96, %c0_97] : memref<2x1x32xf32, #tpu.memory_space<vmem>>, vector<1x1x32xf32>
    %124 = vector.shape_cast %123 : vector<1x1x32xf32> to vector<1x32xf32>
    %125 = vector.broadcast %124 : vector<1x32xf32> to vector<224x32xf32>
    %126 = arith.addf %122, %125 : vector<224x32xf32>
    %127 = arith.negf %126 : vector<224x32xf32>
    %128 = math.exp %127 : vector<224x32xf32>
    %cst_98 = arith.constant 1.000000e+00 : f32
    %129 = vector.broadcast %cst_98 : f32 to vector<224x32xf32>
    %130 = arith.addf %129, %128 : vector<224x32xf32>
    %131 = arith.divf %129, %130 : vector<224x32xf32>
    %132 = arith.mulf %126, %131 : vector<224x32xf32>
    %c1_99 = arith.constant 1 : index
    %c0_100 = arith.constant 0 : index
    %c0_101 = arith.constant 0 : index
    %133 = vector.load %arg14[%c1_99, %c0_100, %c0_101] : memref<2x1x32xf32, #tpu.memory_space<vmem>>, vector<1x1x32xf32>
    %134 = vector.shape_cast %133 : vector<1x1x32xf32> to vector<1x32xf32>
    %135 = vector.broadcast %134 : vector<1x32xf32> to vector<224x32xf32>
    %136 = arith.mulf %132, %135 : vector<224x32xf32>
    %cst_102 = arith.constant dense<0.000000e+00> : vector<224xf32>
    %137 = vector.multi_reduction <add>, %136, %cst_102 [1] : vector<224x32xf32> to vector<224xf32>
    %138 = vector.shape_cast %137 : vector<224xf32> to vector<224x1xf32>
    %c1_103 = arith.constant 1 : index
    %c0_104 = arith.constant 0 : index
    %c0_105 = arith.constant 0 : index
    %139 = vector.load %arg15[%c1_103, %c0_104, %c0_105] : memref<2x1x1xf32, #tpu.memory_space<vmem>>, vector<1x1x1xf32>
    %140 = vector.shape_cast %139 : vector<1x1x1xf32> to vector<1x1xf32>
    %141 = vector.broadcast %140 : vector<1x1xf32> to vector<224x1xf32>
    %142 = arith.addf %138, %141 : vector<224x1xf32>
    %143 = arith.negf %142 : vector<224x1xf32>
    %144 = math.exp %143 : vector<224x1xf32>
    %cst_106 = arith.constant 1.000000e+00 : f32
    %145 = vector.broadcast %cst_106 : f32 to vector<224x1xf32>
    %146 = arith.addf %145, %144 : vector<224x1xf32>
    %147 = arith.divf %145, %146 : vector<224x1xf32>
    %148 = vector.broadcast %147 : vector<224x1xf32> to vector<224x32xf32>
    %149 = arith.mulf %132, %148 : vector<224x32xf32>
    %150 = vector.broadcast %6 : vector<224x1xf32> to vector<224x32xf32>
    %151 = arith.mulf %149, %150 : vector<224x32xf32>
    %cst_107 = arith.constant dense<0.000000e+00> : vector<32x32xf32>
    %152 = tpu.matmul %2, %151, %cst_107 {dimension_numbers = #tpu.dot_dimension_numbers<[1], [0], [0], [1], [0, 0, 1, 1], [], []>} : vector<32x224xf32>, vector<224x32xf32>, vector<32x32xf32> -> vector<32x32xf32>
    %cst_108 = arith.constant 0.00999999977 : f32
    %153 = vector.broadcast %cst_108 : f32 to vector<32x32xf32>
    %154 = arith.mulf %152, %153 : vector<32x32xf32>
    %c0_109 = arith.constant 0 : index
    %c0_110 = arith.constant 0 : index
    %155 = vector.load %arg28[%c0_109, %c0_110] : memref<32x64xf32, #tpu.memory_space<vmem>>, vector<32x32xf32>
    tpu.vector_store %arg28[%c0_109, %c0_110], %101 {strides = array<i32>} : memref<32x64xf32, #tpu.memory_space<vmem>>, vector<32x32xf32>,
    %c0_111 = arith.constant 0 : index
    %c32_112 = arith.constant 32 : index
    %156 = vector.load %arg28[%c0_111, %c32_112] : memref<32x64xf32, #tpu.memory_space<vmem>>, vector<32x32xf32>
    tpu.vector_store %arg28[%c0_111, %c32_112], %154 {strides = array<i32>} : memref<32x64xf32, #tpu.memory_space<vmem>>, vector<32x32xf32>,
    %c0_113 = arith.constant 0 : index
    %c0_114 = arith.constant 0 : index
    %157 = vector.load %arg28[%c0_113, %c0_114] : memref<32x64xf32, #tpu.memory_space<vmem>>, vector<32x64xf32>
    %c1_115 = arith.constant 1 : index
    %c0_116 = arith.constant 0 : index
    %c0_117 = arith.constant 0 : index
    %158 = vector.load %arg16[%c1_115, %c0_116, %c0_117] : memref<2x64x32xf32, #tpu.memory_space<vmem>>, vector<1x64x32xf32>
    %159 = vector.shape_cast %158 : vector<1x64x32xf32> to vector<64x32xf32>
    %cst_118 = arith.constant dense<0.000000e+00> : vector<32x32xf32>
    %160 = tpu.matmul %157, %159, %cst_118 {dimension_numbers = #tpu.dot_dimension_numbers<[1], [0], [0], [1], [0, 0, 1, 1], [], []>} : vector<32x64xf32>, vector<64x32xf32>, vector<32x32xf32> -> vector<32x32xf32>
    %c1_119 = arith.constant 1 : index
    %c0_120 = arith.constant 0 : index
    %c0_121 = arith.constant 0 : index
    %161 = vector.load %arg17[%c1_119, %c0_120, %c0_121] : memref<2x1x32xf32, #tpu.memory_space<vmem>>, vector<1x1x32xf32>
    %162 = vector.shape_cast %161 : vector<1x1x32xf32> to vector<1x32xf32>
    %163 = vector.broadcast %162 : vector<1x32xf32> to vector<32x32xf32>
    %164 = arith.addf %160, %163 : vector<32x32xf32>
    %165 = arith.negf %164 : vector<32x32xf32>
    %166 = math.exp %165 : vector<32x32xf32>
    %cst_122 = arith.constant 1.000000e+00 : f32
    %167 = vector.broadcast %cst_122 : f32 to vector<32x32xf32>
    %168 = arith.addf %167, %166 : vector<32x32xf32>
    %169 = arith.divf %167, %168 : vector<32x32xf32>
    %170 = arith.mulf %164, %169 : vector<32x32xf32>
    %c1_123 = arith.constant 1 : index
    %c0_124 = arith.constant 0 : index
    %c0_125 = arith.constant 0 : index
    %171 = vector.load %arg18[%c1_123, %c0_124, %c0_125] : memref<2x32x32xf32, #tpu.memory_space<vmem>>, vector<1x32x32xf32>
    %172 = vector.shape_cast %171 : vector<1x32x32xf32> to vector<32x32xf32>
    %cst_126 = arith.constant dense<0.000000e+00> : vector<32x32xf32>
    %173 = tpu.matmul %170, %172, %cst_126 {dimension_numbers = #tpu.dot_dimension_numbers<[1], [0], [0], [1], [0, 0, 1, 1], [], []>} : vector<32x32xf32>, vector<32x32xf32>, vector<32x32xf32> -> vector<32x32xf32>
    %174 = arith.addf %101, %173 : vector<32x32xf32>
    %c1_127 = arith.constant 1 : index
    %c0_128 = arith.constant 0 : index
    %c0_129 = arith.constant 0 : index
    %175 = vector.load %arg19[%c1_127, %c0_128, %c0_129] : memref<2x1x32xf32, #tpu.memory_space<vmem>>, vector<1x1x32xf32>
    %176 = vector.shape_cast %175 : vector<1x1x32xf32> to vector<1x32xf32>
    %177 = vector.broadcast %176 : vector<1x32xf32> to vector<32x32xf32>
    %178 = arith.addf %174, %177 : vector<32x32xf32>
    %179 = vector.broadcast %5 : vector<32x1xf32> to vector<32x32xf32>
    %180 = arith.mulf %178, %179 : vector<32x32xf32>
    %cst_130 = arith.constant dense<0.000000e+00> : vector<224x32xf32>
    %181 = tpu.matmul %0, %180, %cst_130 {dimension_numbers = #tpu.dot_dimension_numbers<[1], [0], [0], [1], [0, 0, 1, 1], [], []>} : vector<224x32xf32>, vector<32x32xf32>, vector<224x32xf32> -> vector<224x32xf32>
    %c0_131 = arith.constant 0 : index
    %c0_132 = arith.constant 0 : index
    %182 = vector.load %arg27[%c0_131, %c0_132] : memref<224x66xf32, #tpu.memory_space<vmem>>, vector<224x32xf32>
    tpu.vector_store %arg27[%c0_131, %c0_132], %181 {strides = array<i32>} : memref<224x66xf32, #tpu.memory_space<vmem>>, vector<224x32xf32>,
    %cst_133 = arith.constant dense<0.000000e+00> : vector<224x32xf32>
    %183 = tpu.matmul %1, %180, %cst_133 {dimension_numbers = #tpu.dot_dimension_numbers<[1], [0], [0], [1], [0, 0, 1, 1], [], []>} : vector<224x32xf32>, vector<32x32xf32>, vector<224x32xf32> -> vector<224x32xf32>
    %c0_134 = arith.constant 0 : index
    %c32_135 = arith.constant 32 : index
    %184 = vector.load %arg27[%c0_134, %c32_135] : memref<224x66xf32, #tpu.memory_space<vmem>>, vector<224x32xf32>
    tpu.vector_store %arg27[%c0_134, %c32_135], %183 {strides = array<i32>} : memref<224x66xf32, #tpu.memory_space<vmem>>, vector<224x32xf32>,
    %c0_136 = arith.constant 0 : index
    %c0_137 = arith.constant 0 : index
    %185 = vector.load %arg27[%c0_136, %c0_137] : memref<224x66xf32, #tpu.memory_space<vmem>>, vector<224x66xf32>
    %c0_138 = arith.constant 0 : index
    %c0_139 = arith.constant 0 : index
    %186 = vector.load %arg20[%c0_138, %c0_139] : memref<66x32xf32, #tpu.memory_space<vmem>>, vector<66x32xf32>
    %cst_140 = arith.constant dense<0.000000e+00> : vector<224x32xf32>
    %187 = tpu.matmul %185, %186, %cst_140 {dimension_numbers = #tpu.dot_dimension_numbers<[1], [0], [0], [1], [0, 0, 1, 1], [], []>} : vector<224x66xf32>, vector<66x32xf32>, vector<224x32xf32> -> vector<224x32xf32>
    %c0_141 = arith.constant 0 : index
    %c0_142 = arith.constant 0 : index
    %188 = vector.load %arg21[%c0_141, %c0_142] : memref<1x32xf32, #tpu.memory_space<vmem>>, vector<1x32xf32>
    %189 = vector.broadcast %188 : vector<1x32xf32> to vector<224x32xf32>
    %190 = arith.addf %187, %189 : vector<224x32xf32>
    %191 = arith.negf %190 : vector<224x32xf32>
    %192 = math.exp %191 : vector<224x32xf32>
    %cst_143 = arith.constant 1.000000e+00 : f32
    %193 = vector.broadcast %cst_143 : f32 to vector<224x32xf32>
    %194 = arith.addf %193, %192 : vector<224x32xf32>
    %195 = arith.divf %193, %194 : vector<224x32xf32>
    %196 = arith.mulf %190, %195 : vector<224x32xf32>
    %c0_144 = arith.constant 0 : index
    %c0_145 = arith.constant 0 : index
    %197 = vector.load %arg22[%c0_144, %c0_145] : memref<32x32xf32, #tpu.memory_space<vmem>>, vector<32x32xf32>
    %cst_146 = arith.constant dense<0.000000e+00> : vector<224x32xf32>
    %198 = tpu.matmul %196, %197, %cst_146 {dimension_numbers = #tpu.dot_dimension_numbers<[1], [0], [0], [1], [0, 0, 1, 1], [], []>} : vector<224x32xf32>, vector<32x32xf32>, vector<224x32xf32> -> vector<224x32xf32>
    %c0_147 = arith.constant 0 : index
    %c0_148 = arith.constant 0 : index
    %199 = vector.load %arg23[%c0_147, %c0_148] : memref<1x32xf32, #tpu.memory_space<vmem>>, vector<1x32xf32>
    %200 = vector.broadcast %199 : vector<1x32xf32> to vector<224x32xf32>
    %201 = arith.addf %198, %200 : vector<224x32xf32>
    %202 = arith.negf %201 : vector<224x32xf32>
    %203 = math.exp %202 : vector<224x32xf32>
    %cst_149 = arith.constant 1.000000e+00 : f32
    %204 = vector.broadcast %cst_149 : f32 to vector<224x32xf32>
    %205 = arith.addf %204, %203 : vector<224x32xf32>
    %206 = arith.divf %204, %205 : vector<224x32xf32>
    %207 = arith.mulf %201, %206 : vector<224x32xf32>
    %c0_150 = arith.constant 0 : index
    %c0_151 = arith.constant 0 : index
    %208 = vector.load %arg24[%c0_150, %c0_151] : memref<1x32xf32, #tpu.memory_space<vmem>>, vector<1x32xf32>
    %209 = vector.broadcast %208 : vector<1x32xf32> to vector<224x32xf32>
    %210 = arith.mulf %207, %209 : vector<224x32xf32>
    %cst_152 = arith.constant dense<0.000000e+00> : vector<224xf32>
    %211 = vector.multi_reduction <add>, %210, %cst_152 [1] : vector<224x32xf32> to vector<224xf32>
    %212 = vector.shape_cast %211 : vector<224xf32> to vector<224x1xf32>
    %213 = vector.broadcast %212 : vector<224x1xf32> to vector<224x3xf32>
    %214 = arith.mulf %19, %213 : vector<224x3xf32>
    %215 = vector.broadcast %6 : vector<224x1xf32> to vector<224x3xf32>
    %216 = arith.mulf %214, %215 : vector<224x3xf32>
    %cst_153 = arith.constant dense<0.000000e+00> : vector<32x3xf32>
    %217 = tpu.matmul %2, %216, %cst_153 {dimension_numbers = #tpu.dot_dimension_numbers<[1], [0], [0], [1], [0, 0, 1, 1], [], []>} : vector<32x224xf32>, vector<224x3xf32>, vector<32x3xf32> -> vector<32x3xf32>
    %cst_154 = arith.constant 0.00999999977 : f32
    %218 = vector.broadcast %cst_154 : f32 to vector<32x3xf32>
    %219 = arith.mulf %217, %218 : vector<32x3xf32>
    %220 = arith.addf %4, %219 : vector<32x3xf32>
    %221 = vector.broadcast %5 : vector<32x1xf32> to vector<32x3xf32>
    %222 = arith.mulf %220, %221 : vector<32x3xf32>
    %c0_155 = arith.constant 0 : index
    %c0_156 = arith.constant 0 : index
    %223 = vector.load %arg26[%c0_155, %c0_156] : memref<32x3xf32, #tpu.memory_space<vmem>>, vector<32x3xf32>
    tpu.vector_store %arg26[%c0_155, %c0_156], %222 {strides = array<i32>} : memref<32x3xf32, #tpu.memory_space<vmem>>, vector<32x3xf32>,
    %c0_157 = arith.constant 0 : index
    %c0_158 = arith.constant 0 : index
    %224 = vector.load %arg25[%c0_157, %c0_158] : memref<32x32xf32, #tpu.memory_space<vmem>>, vector<32x32xf32>
    tpu.vector_store %arg25[%c0_157, %c0_158], %180 {strides = array<i32>} : memref<32x32xf32, #tpu.memory_space<vmem>>, vector<32x32xf32>,
    return
  }
  func.func @transform_0(%arg0: i32) -> (i32, i32) {
    %c0_i32 = arith.constant 0 : i32
    %c0_i32_0 = arith.constant 0 : i32
    %c0_i32_1 = arith.constant 0 : i32
    return %c0_i32, %c0_i32_0 : i32, i32
  }
  func.func @transform_1(%arg0: i32) -> (i32, i32) {
    %c0_i32 = arith.constant 0 : i32
    %c0_i32_0 = arith.constant 0 : i32
    %c0_i32_1 = arith.constant 0 : i32
    return %c0_i32, %c0_i32_0 : i32, i32
  }
  func.func @transform_2(%arg0: i32) -> (i32, i32) {
    %c0_i32 = arith.constant 0 : i32
    %c0_i32_0 = arith.constant 0 : i32
    %c0_i32_1 = arith.constant 0 : i32
    return %c0_i32, %c0_i32_0 : i32, i32
  }
  func.func @transform_3(%arg0: i32) -> (i32, i32) {
    %c0_i32 = arith.constant 0 : i32
    %c0_i32_0 = arith.constant 0 : i32
    %c0_i32_1 = arith.constant 0 : i32
    return %c0_i32, %c0_i32_0 : i32, i32
  }
  func.func @transform_4(%arg0: i32) -> (i32, i32) {
    %c0_i32 = arith.constant 0 : i32
    %c0_i32_0 = arith.constant 0 : i32
    %c0_i32_1 = arith.constant 0 : i32
    return %c0_i32, %c0_i32_0 : i32, i32
  }
  func.func @transform_5(%arg0: i32) -> (i32, i32) {
    %c0_i32 = arith.constant 0 : i32
    %c0_i32_0 = arith.constant 0 : i32
    %c0_i32_1 = arith.constant 0 : i32
    return %c0_i32, %c0_i32_0 : i32, i32
  }
  func.func @transform_6(%arg0: i32) -> (i32, i32) {
    %c0_i32 = arith.constant 0 : i32
    %c0_i32_0 = arith.constant 0 : i32
    %c0_i32_1 = arith.constant 0 : i32
    return %c0_i32, %c0_i32_0 : i32, i32
  }
  func.func @transform_7(%arg0: i32) -> (i32, i32) {
    %c0_i32 = arith.constant 0 : i32
    %c0_i32_0 = arith.constant 0 : i32
    %c0_i32_1 = arith.constant 0 : i32
    return %c0_i32, %c0_i32_0 : i32, i32
  }
  func.func @transform_8(%arg0: i32) -> (i32, i32) {
    %c0_i32 = arith.constant 0 : i32
    %c0_i32_0 = arith.constant 0 : i32
    %c0_i32_1 = arith.constant 0 : i32
    return %c0_i32, %c0_i32_0 : i32, i32
  }
  func.func @transform_9(%arg0: i32) -> (i32, i32, i32) {
    %c0_i32 = arith.constant 0 : i32
    %c0_i32_0 = arith.constant 0 : i32
    %c0_i32_1 = arith.constant 0 : i32
    %c0_i32_2 = arith.constant 0 : i32
    return %c0_i32, %c0_i32_0, %c0_i32_1 : i32, i32, i32
  }
  func.func @transform_10(%arg0: i32) -> (i32, i32, i32) {
    %c0_i32 = arith.constant 0 : i32
    %c0_i32_0 = arith.constant 0 : i32
    %c0_i32_1 = arith.constant 0 : i32
    %c0_i32_2 = arith.constant 0 : i32
    return %c0_i32, %c0_i32_0, %c0_i32_1 : i32, i32, i32
  }
  func.func @transform_11(%arg0: i32) -> (i32, i32, i32) {
    %c0_i32 = arith.constant 0 : i32
    %c0_i32_0 = arith.constant 0 : i32
    %c0_i32_1 = arith.constant 0 : i32
    %c0_i32_2 = arith.constant 0 : i32
    return %c0_i32, %c0_i32_0, %c0_i32_1 : i32, i32, i32
  }
  func.func @transform_12(%arg0: i32) -> (i32, i32, i32) {
    %c0_i32 = arith.constant 0 : i32
    %c0_i32_0 = arith.constant 0 : i32
    %c0_i32_1 = arith.constant 0 : i32
    %c0_i32_2 = arith.constant 0 : i32
    return %c0_i32, %c0_i32_0, %c0_i32_1 : i32, i32, i32
  }
  func.func @transform_13(%arg0: i32) -> (i32, i32, i32) {
    %c0_i32 = arith.constant 0 : i32
    %c0_i32_0 = arith.constant 0 : i32
    %c0_i32_1 = arith.constant 0 : i32
    %c0_i32_2 = arith.constant 0 : i32
    return %c0_i32, %c0_i32_0, %c0_i32_1 : i32, i32, i32
  }
  func.func @transform_14(%arg0: i32) -> (i32, i32, i32) {
    %c0_i32 = arith.constant 0 : i32
    %c0_i32_0 = arith.constant 0 : i32
    %c0_i32_1 = arith.constant 0 : i32
    %c0_i32_2 = arith.constant 0 : i32
    return %c0_i32, %c0_i32_0, %c0_i32_1 : i32, i32, i32
  }
  func.func @transform_15(%arg0: i32) -> (i32, i32, i32) {
    %c0_i32 = arith.constant 0 : i32
    %c0_i32_0 = arith.constant 0 : i32
    %c0_i32_1 = arith.constant 0 : i32
    %c0_i32_2 = arith.constant 0 : i32
    return %c0_i32, %c0_i32_0, %c0_i32_1 : i32, i32, i32
  }
  func.func @transform_16(%arg0: i32) -> (i32, i32, i32) {
    %c0_i32 = arith.constant 0 : i32
    %c0_i32_0 = arith.constant 0 : i32
    %c0_i32_1 = arith.constant 0 : i32
    %c0_i32_2 = arith.constant 0 : i32
    return %c0_i32, %c0_i32_0, %c0_i32_1 : i32, i32, i32
  }
  func.func @transform_17(%arg0: i32) -> (i32, i32, i32) {
    %c0_i32 = arith.constant 0 : i32
    %c0_i32_0 = arith.constant 0 : i32
    %c0_i32_1 = arith.constant 0 : i32
    %c0_i32_2 = arith.constant 0 : i32
    return %c0_i32, %c0_i32_0, %c0_i32_1 : i32, i32, i32
  }
  func.func @transform_18(%arg0: i32) -> (i32, i32, i32) {
    %c0_i32 = arith.constant 0 : i32
    %c0_i32_0 = arith.constant 0 : i32
    %c0_i32_1 = arith.constant 0 : i32
    %c0_i32_2 = arith.constant 0 : i32
    return %c0_i32, %c0_i32_0, %c0_i32_1 : i32, i32, i32
  }
  func.func @transform_19(%arg0: i32) -> (i32, i32) {
    %c0_i32 = arith.constant 0 : i32
    %c0_i32_0 = arith.constant 0 : i32
    %c0_i32_1 = arith.constant 0 : i32
    return %c0_i32, %c0_i32_0 : i32, i32
  }
  func.func @transform_20(%arg0: i32) -> (i32, i32) {
    %c0_i32 = arith.constant 0 : i32
    %c0_i32_0 = arith.constant 0 : i32
    %c0_i32_1 = arith.constant 0 : i32
    return %c0_i32, %c0_i32_0 : i32, i32
  }
  func.func @transform_21(%arg0: i32) -> (i32, i32) {
    %c0_i32 = arith.constant 0 : i32
    %c0_i32_0 = arith.constant 0 : i32
    %c0_i32_1 = arith.constant 0 : i32
    return %c0_i32, %c0_i32_0 : i32, i32
  }
  func.func @transform_22(%arg0: i32) -> (i32, i32) {
    %c0_i32 = arith.constant 0 : i32
    %c0_i32_0 = arith.constant 0 : i32
    %c0_i32_1 = arith.constant 0 : i32
    return %c0_i32, %c0_i32_0 : i32, i32
  }
  func.func @transform_23(%arg0: i32) -> (i32, i32) {
    %c0_i32 = arith.constant 0 : i32
    %c0_i32_0 = arith.constant 0 : i32
    %c0_i32_1 = arith.constant 0 : i32
    return %c0_i32, %c0_i32_0 : i32, i32
  }
  func.func @transform_24(%arg0: i32) -> (i32, i32) {
    %c0_i32 = arith.constant 0 : i32
    %c0_i32_0 = arith.constant 0 : i32
    %c0_i32_1 = arith.constant 0 : i32
    return %c0_i32, %c0_i32_0 : i32, i32
  }
  func.func @transform_25(%arg0: i32) -> (i32, i32) {
    %c0_i32 = arith.constant 0 : i32
    %c0_i32_0 = arith.constant 0 : i32
    %c0_i32_1 = arith.constant 0 : i32
    return %c0_i32, %c0_i32_0 : i32, i32
  }
}

</mosaic_0001>

<llo_original>
// kernel: tpu_custom_call.1
$region0: #{tpu_custom_call.1}
  #allocation0 [shape = 'u32[]', space=smem, size = 0x4, offset = 0x4, fixed_abs, tag = 'smem constant byte address 0x4 - core index']
  #allocation1 [shape = 'u32[144,128]{1,0:T(1,128)}', space=vmem, size = 0x12000, scoped, tag = 'internal scratch']
  #allocation2 [shape = 'f32[224,66]{1,0:T(8,128)}', space=vmem, size = 0x1c000, scoped, tag = 'scratch operand']
  #allocation3 [shape = 'f32[32,64]{1,0:T(8,128)}', space=vmem, size = 0x4000, scoped, tag = 'scratch operand']
  %s0 = inlined_call_operand.vmem [shape: f32[224,32], index: 0, kind: input, shape index: {}]
  %s1 = inlined_call_operand.vmem [shape: f32[224,32], index: 1, kind: input, shape index: {}]
  %s2 = inlined_call_operand.vmem [shape: f32[224,32], index: 2, kind: input, shape index: {}]
  %s3 = inlined_call_operand.vmem [shape: f32[32,224], index: 3, kind: input, shape index: {}]
  %s4 = inlined_call_operand.vmem [shape: f32[32,32], index: 4, kind: input, shape index: {}]
  %s5 = inlined_call_operand.vmem [shape: f32[32,3], index: 5, kind: input, shape index: {}]
  %s6 = inlined_call_operand.vmem [shape: f32[224,1], index: 6, kind: input, shape index: {}]
  %s7 = inlined_call_operand.vmem [shape: f32[32,1], index: 7, kind: input, shape index: {}]
  %s8 = inlined_call_operand.vmem [shape: f32[224,1], index: 8, kind: input, shape index: {}]
  %s9 = inlined_call_operand.vmem [shape: f32[2,66,32], index: 9, kind: input, shape index: {}]
  %s10 = inlined_call_operand.vmem [shape: f32[2,1,32], index: 10, kind: input, shape index: {}]
  %s11 = inlined_call_operand.vmem [shape: f32[2,32,32], index: 11, kind: input, shape index: {}]
  %s12 = inlined_call_operand.vmem [shape: f32[2,1,32], index: 12, kind: input, shape index: {}]
  %s13 = inlined_call_operand.vmem [shape: f32[2,1,32], index: 13, kind: input, shape index: {}]
  %s14 = inlined_call_operand.vmem [shape: f32[2,1,1], index: 14, kind: input, shape index: {}]
  %s15 = inlined_call_operand.vmem [shape: f32[2,64,32], index: 15, kind: input, shape index: {}]
  %s16 = inlined_call_operand.vmem [shape: f32[2,1,32], index: 16, kind: input, shape index: {}]
  %s17 = inlined_call_operand.vmem [shape: f32[2,32,32], index: 17, kind: input, shape index: {}]
  %s18 = inlined_call_operand.vmem [shape: f32[2,1,32], index: 18, kind: input, shape index: {}]
  %s19 = inlined_call_operand.vmem [shape: f32[66,32], index: 19, kind: input, shape index: {}]
  %s20 = inlined_call_operand.vmem [shape: f32[1,32], index: 20, kind: input, shape index: {}]
  %s21 = inlined_call_operand.vmem [shape: f32[32,32], index: 21, kind: input, shape index: {}]
  %s22 = inlined_call_operand.vmem [shape: f32[1,32], index: 22, kind: input, shape index: {}]
  %s23 = inlined_call_operand.vmem [shape: f32[1,32], index: 23, kind: input, shape index: {}]
  %s24 = inlined_call_operand.hbm [shape: f32[32,32], index: 24, kind: output, shape index: {0}]
  %s25 = inlined_call_operand.vmem [shape: f32[32,3], index: 25, kind: output, shape index: {1}]
  %26 = xla_tuple %s24, %s25
  %s27 = sld [smem:[#allocation0]]
  $region114: #{tpu_custom_call.1} parent=0
    _
  %s29 = ssub.s32 1, %s27
  %s30 = scalar_select 0, %s29, %s27
  $region1: #{tpu_custom_call.1} parent=0
    #allocation4 [shape = 'u8[16384]{0}', space=vmem, size = 0x4000, scoped, tag = 'output window, operand 0, single buffered']
    #allocation5 [shape = 's32[1]{0}', space=sflag, size = 0x4, scoped, tag = 'scoped memory for tpu_custom_call.1']
    %31 = vsyncpa [#allocation5], 0
    // Predicated region
    $region2: #{tpu_custom_call.1} parent=1 // pred_check
      _
    $region3: #{tpu_custom_call.1} parent=1 // pred_check_branch
      %33 = sbr.rel (0) target = $region5
    $region4: #{tpu_custom_call.1} parent=1 // pred_region
      _
    $region5: #{tpu_custom_call.1} parent=1 // pred_fallthru
      _
    // Predicated region
    $region6: #{tpu_custom_call.1} parent=1 // pred_check
      _
    $region7: #{tpu_custom_call.1} parent=1 // pred_check_branch
      %35 = sbr.rel (0) target = $region9
    $region8: #{tpu_custom_call.1} parent=1 // pred_region
      _
    $region9: #{tpu_custom_call.1} parent=1 // pred_fallthru
      _
    // Predicated region
    $region10: #{tpu_custom_call.1} parent=1 // pred_check
      _
    $region11: #{tpu_custom_call.1} parent=1 // pred_check_branch
      %37 = sbr.rel (0) target = $region13
    $region12: #{tpu_custom_call.1} parent=1 // pred_region
      _
    $region13: #{tpu_custom_call.1} parent=1 // pred_fallthru
      _
    // Predicated region
    $region14: #{tpu_custom_call.1} parent=1 // pred_check
      _
    $region15: #{tpu_custom_call.1} parent=1 // pred_check_branch
      %39 = sbr.rel (0) target = $region17
    $region16: #{tpu_custom_call.1} parent=1 // pred_region
      _
    $region17: #{tpu_custom_call.1} parent=1 // pred_fallthru
      _
    // Predicated region
    $region18: #{tpu_custom_call.1} parent=1 // pred_check
      _
    $region19: #{tpu_custom_call.1} parent=1 // pred_check_branch
      %41 = sbr.rel (0) target = $region21
    $region20: #{tpu_custom_call.1} parent=1 // pred_region
      _
    $region21: #{tpu_custom_call.1} parent=1 // pred_fallthru
      _
    // Predicated region
    $region22: #{tpu_custom_call.1} parent=1 // pred_check
      _
    $region23: #{tpu_custom_call.1} parent=1 // pred_check_branch
      %43 = sbr.rel (0) target = $region25
    $region24: #{tpu_custom_call.1} parent=1 // pred_region
      _
    $region25: #{tpu_custom_call.1} parent=1 // pred_fallthru
      _
    // Predicated region
    $region26: #{tpu_custom_call.1} parent=1 // pred_check
      _
    $region27: #{tpu_custom_call.1} parent=1 // pred_check_branch
      %45 = sbr.rel (0) target = $region29
    $region28: #{tpu_custom_call.1} parent=1 // pred_region
      _
    $region29: #{tpu_custom_call.1} parent=1 // pred_fallthru
      _
    // Predicated region
    $region30: #{tpu_custom_call.1} parent=1 // pred_check
      _
    $region31: #{tpu_custom_call.1} parent=1 // pred_check_branch
      %47 = sbr.rel (0) target = $region33
    $region32: #{tpu_custom_call.1} parent=1 // pred_region
      _
    $region33: #{tpu_custom_call.1} parent=1 // pred_fallthru
      _
    // Predicated region
    $region34: #{tpu_custom_call.1} parent=1 // pred_check
      _
    $region35: #{tpu_custom_call.1} parent=1 // pred_check_branch
      %49 = sbr.rel (0) target = $region37
    $region36: #{tpu_custom_call.1} parent=1 // pred_region
      _
    $region37: #{tpu_custom_call.1} parent=1 // pred_fallthru
      _
    // Predicated region
    $region38: #{tpu_custom_call.1} parent=1 // pred_check
      _
    $region39: #{tpu_custom_call.1} parent=1 // pred_check_branch
      %51 = sbr.rel (0) target = $region41
    $region40: #{tpu_custom_call.1} parent=1 // pred_region
      _
    $region41: #{tpu_custom_call.1} parent=1 // pred_fallthru
      _
    // Predicated region
    $region42: #{tpu_custom_call.1} parent=1 // pred_check
      _
    $region43: #{tpu_custom_call.1} parent=1 // pred_check_branch
      %53 = sbr.rel (0) target = $region45
    $region44: #{tpu_custom_call.1} parent=1 // pred_region
      _
    $region45: #{tpu_custom_call.1} parent=1 // pred_fallthru
      _
    // Predicated region
    $region46: #{tpu_custom_call.1} parent=1 // pred_check
      _
    $region47: #{tpu_custom_call.1} parent=1 // pred_check_branch
      %55 = sbr.rel (0) target = $region49
    $region48: #{tpu_custom_call.1} parent=1 // pred_region
      _
    $region49: #{tpu_custom_call.1} parent=1 // pred_fallthru
      _
    // Predicated region
    $region50: #{tpu_custom_call.1} parent=1 // pred_check
      _
    $region51: #{tpu_custom_call.1} parent=1 // pred_check_branch
      %57 = sbr.rel (0) target = $region53
    $region52: #{tpu_custom_call.1} parent=1 // pred_region
      _
    $region53: #{tpu_custom_call.1} parent=1 // pred_fallthru
      _
    // Predicated region
    $region54: #{tpu_custom_call.1} parent=1 // pred_check
      _
    $region55: #{tpu_custom_call.1} parent=1 // pred_check_branch
      %59 = sbr.rel (0) target = $region57
    $region56: #{tpu_custom_call.1} parent=1 // pred_region
      _
    $region57: #{tpu_custom_call.1} parent=1 // pred_fallthru
      _
    // Predicated region
    $region58: #{tpu_custom_call.1} parent=1 // pred_check
      _
    $region59: #{tpu_custom_call.1} parent=1 // pred_check_branch
      %61 = sbr.rel (0) target = $region61
    $region60: #{tpu_custom_call.1} parent=1 // pred_region
      _
    $region61: #{tpu_custom_call.1} parent=1 // pred_fallthru
      _
    // Predicated region
    $region62: #{tpu_custom_call.1} parent=1 // pred_check
      _
    $region63: #{tpu_custom_call.1} parent=1 // pred_check_branch
      %63 = sbr.rel (0) target = $region65
    $region64: #{tpu_custom_call.1} parent=1 // pred_region
      _
    $region65: #{tpu_custom_call.1} parent=1 // pred_fallthru
      _
    // Predicated region
    $region66: #{tpu_custom_call.1} parent=1 // pred_check
      _
    $region67: #{tpu_custom_call.1} parent=1 // pred_check_branch
      %65 = sbr.rel (0) target = $region69
    $region68: #{tpu_custom_call.1} parent=1 // pred_region
      _
    $region69: #{tpu_custom_call.1} parent=1 // pred_fallthru
      _
    // Predicated region
    $region70: #{tpu_custom_call.1} parent=1 // pred_check
      _
    $region71: #{tpu_custom_call.1} parent=1 // pred_check_branch
      %67 = sbr.rel (0) target = $region73
    $region72: #{tpu_custom_call.1} parent=1 // pred_region
      _
    $region73: #{tpu_custom_call.1} parent=1 // pred_fallthru
      _
    // Predicated region
    $region74: #{tpu_custom_call.1} parent=1 // pred_check
      _
    $region75: #{tpu_custom_call.1} parent=1 // pred_check_branch
      %69 = sbr.rel (0) target = $region77
    $region76: #{tpu_custom_call.1} parent=1 // pred_region
      _
    $region77: #{tpu_custom_call.1} parent=1 // pred_fallthru
      _
    // Predicated region
    $region78: #{tpu_custom_call.1} parent=1 // pred_check
      _
    $region79: #{tpu_custom_call.1} parent=1 // pred_check_branch
      %71 = sbr.rel (0) target = $region81
    $region80: #{tpu_custom_call.1} parent=1 // pred_region
      _
    $region81: #{tpu_custom_call.1} parent=1 // pred_fallthru
      _
    // Predicated region
    $region82: #{tpu_custom_call.1} parent=1 // pred_check
      _
    $region83: #{tpu_custom_call.1} parent=1 // pred_check_branch
      %73 = sbr.rel (0) target = $region85
    $region84: #{tpu_custom_call.1} parent=1 // pred_region
      _
    $region85: #{tpu_custom_call.1} parent=1 // pred_fallthru
      _
    // Predicated region
    $region86: #{tpu_custom_call.1} parent=1 // pred_check
      _
    $region87: #{tpu_custom_call.1} parent=1 // pred_check_branch
      %75 = sbr.rel (0) target = $region89
    $region88: #{tpu_custom_call.1} parent=1 // pred_region
      _
    $region89: #{tpu_custom_call.1} parent=1 // pred_fallthru
      _
    // Predicated region
    $region90: #{tpu_custom_call.1} parent=1 // pred_check
      _
    $region91: #{tpu_custom_call.1} parent=1 // pred_check_branch
      %77 = sbr.rel (0) target = $region93
    $region92: #{tpu_custom_call.1} parent=1 // pred_region
      _
    $region93: #{tpu_custom_call.1} parent=1 // pred_fallthru
      _
    // Predicated region
    $region94: #{tpu_custom_call.1} parent=1 // pred_check
      _
    $region95: #{tpu_custom_call.1} parent=1 // pred_check_branch
      %79 = sbr.rel (0) target = $region97
    $region96: #{tpu_custom_call.1} parent=1 // pred_region
      _
    $region97: #{tpu_custom_call.1} parent=1 // pred_fallthru
      _
    %v80 = vld [vmem:[%s0] sm:$0xff]
    %v81 = vld [vmem:[%s0 + $0x8] sm:$0xff]
    %v82 = vld [vmem:[%s0 + $0x10] sm:$0xff]
    %v83 = vld [vmem:[%s0 + $0x18] sm:$0xff]
    %v84 = vld [vmem:[%s0 + $0x20] sm:$0xff]
    %v85 = vld [vmem:[%s0 + $0x28] sm:$0xff]
    %v86 = vld [vmem:[%s0 + $0x30] sm:$0xff]
    %v87 = vld [vmem:[%s0 + $0x38] sm:$0xff]
    %v88 = vld [vmem:[%s0 + $0x40] sm:$0xff]
    %v89 = vld [vmem:[%s0 + $0x48] sm:$0xff]
    %v90 = vld [vmem:[%s0 + $0x50] sm:$0xff]
    %v91 = vld [vmem:[%s0 + $0x58] sm:$0xff]
    %v92 = vld [vmem:[%s0 + $0x60] sm:$0xff]
    %v93 = vld [vmem:[%s0 + $0x68] sm:$0xff]
    %v94 = vld [vmem:[%s0 + $0x70] sm:$0xff]
    %v95 = vld [vmem:[%s0 + $0x78] sm:$0xff]
    %v96 = vld [vmem:[%s0 + $0x80] sm:$0xff]
    %v97 = vld [vmem:[%s0 + $0x88] sm:$0xff]
    %v98 = vld [vmem:[%s0 + $0x90] sm:$0xff]
    %v99 = vld [vmem:[%s0 + $0x98] sm:$0xff]
    %v100 = vld [vmem:[%s0 + $0xa0] sm:$0xff]
    %v101 = vld [vmem:[%s0 + $0xa8] sm:$0xff]
    %v102 = vld [vmem:[%s0 + $0xb0] sm:$0xff]
    %v103 = vld [vmem:[%s0 + $0xb8] sm:$0xff]
    %v104 = vld [vmem:[%s0 + $0xc0] sm:$0xff]
    %v105 = vld [vmem:[%s0 + $0xc8] sm:$0xff]
    %v106 = vld [vmem:[%s0 + $0xd0] sm:$0xff]
    %v107 = vld [vmem:[%s0 + $0xd8] sm:$0xff]
    %v108 = vld [vmem:[%s1] sm:$0xff]
    %v109 = vld [vmem:[%s1 + $0x8] sm:$0xff]
    %v110 = vld [vmem:[%s1 + $0x10] sm:$0xff]
    %v111 = vld [vmem:[%s1 + $0x18] sm:$0xff]
    %v112 = vld [vmem:[%s1 + $0x20] sm:$0xff]
    %v113 = vld [vmem:[%s1 + $0x28] sm:$0xff]
    %v114 = vld [vmem:[%s1 + $0x30] sm:$0xff]
    %v115 = vld [vmem:[%s1 + $0x38] sm:$0xff]
    %v116 = vld [vmem:[%s1 + $0x40] sm:$0xff]
    %v117 = vld [vmem:[%s1 + $0x48] sm:$0xff]
    %v118 = vld [vmem:[%s1 + $0x50] sm:$0xff]
    %v119 = vld [vmem:[%s1 + $0x58] sm:$0xff]
    %v120 = vld [vmem:[%s1 + $0x60] sm:$0xff]
    %v121 = vld [vmem:[%s1 + $0x68] sm:$0xff]
    %v122 = vld [vmem:[%s1 + $0x70] sm:$0xff]
    %v123 = vld [vmem:[%s1 + $0x78] sm:$0xff]
    %v124 = vld [vmem:[%s1 + $0x80] sm:$0xff]
    %v125 = vld [vmem:[%s1 + $0x88] sm:$0xff]
    %v126 = vld [vmem:[%s1 + $0x90] sm:$0xff]
    %v127 = vld [vmem:[%s1 + $0x98] sm:$0xff]
    %v128 = vld [vmem:[%s1 + $0xa0] sm:$0xff]
    %v129 = vld [vmem:[%s1 + $0xa8] sm:$0xff]
    %v130 = vld [vmem:[%s1 + $0xb0] sm:$0xff]
    %v131 = vld [vmem:[%s1 + $0xb8] sm:$0xff]
    %v132 = vld [vmem:[%s1 + $0xc0] sm:$0xff]
    %v133 = vld [vmem:[%s1 + $0xc8] sm:$0xff]
    %v134 = vld [vmem:[%s1 + $0xd0] sm:$0xff]
    %v135 = vld [vmem:[%s1 + $0xd8] sm:$0xff]
    %v136 = vld [vmem:[%s3] sm:$0xff]
    %v137 = vld [vmem:[%s3 + $0x8] sm:$0xff]
    %v138 = vld [vmem:[%s3 + $0x10] sm:$0xff]
    %v139 = vld [vmem:[%s3 + $0x18] sm:$0xff]
    %v140 = vld [vmem:[%s3 + $0x20] sm:$0xff]
    %v141 = vld [vmem:[%s3 + $0x28] sm:$0xff]
    %v142 = vld [vmem:[%s3 + $0x30] sm:$0xff]
    %v143 = vld [vmem:[%s3 + $0x38] sm:$0xff]
    %v144 = vld [vmem:[%s4] sm:$0xff]
    %v145 = vld [vmem:[%s4 + $0x8] sm:$0xff]
    %v146 = vld [vmem:[%s4 + $0x10] sm:$0xff]
    %v147 = vld [vmem:[%s4 + $0x18] sm:$0xff]
    %v148 = vld [vmem:[%s5] sm:$0xff]
    %v149 = vld [vmem:[%s5 + $0x8] sm:$0xff]
    %v150 = vld [vmem:[%s5 + $0x10] sm:$0xff]
    %v151 = vld [vmem:[%s5 + $0x18] sm:$0xff]
    %v152 = vld [vmem:[%s7] sm:$0xff]
    %v153 = vld [vmem:[%s7 + $0x8] sm:$0xff]
    %v154 = vld [vmem:[%s7 + $0x10] sm:$0xff]
    %v155 = vld [vmem:[%s7 + $0x18] sm:$0xff]
    %v156 = vld [vmem:[%s8] sm:$0xff]
    %v157 = vld [vmem:[%s8 + $0x8] sm:$0xff]
    %v158 = vld [vmem:[%s8 + $0x10] sm:$0xff]
    %v159 = vld [vmem:[%s8 + $0x18] sm:$0xff]
    %v160 = vld [vmem:[%s8 + $0x20] sm:$0xff]
    %v161 = vld [vmem:[%s8 + $0x28] sm:$0xff]
    %v162 = vld [vmem:[%s8 + $0x30] sm:$0xff]
    %v163 = vld [vmem:[%s8 + $0x38] sm:$0xff]
    %v164 = vld [vmem:[%s8 + $0x40] sm:$0xff]
    %v165 = vld [vmem:[%s8 + $0x48] sm:$0xff]
    %v166 = vld [vmem:[%s8 + $0x50] sm:$0xff]
    %v167 = vld [vmem:[%s8 + $0x58] sm:$0xff]
    %v168 = vld [vmem:[%s8 + $0x60] sm:$0xff]
    %v169 = vld [vmem:[%s8 + $0x68] sm:$0xff]
    %v170 = vld [vmem:[%s8 + $0x70] sm:$0xff]
    %v171 = vld [vmem:[%s8 + $0x78] sm:$0xff]
    %v172 = vld [vmem:[%s8 + $0x80] sm:$0xff]
    %v173 = vld [vmem:[%s8 + $0x88] sm:$0xff]
    %v174 = vld [vmem:[%s8 + $0x90] sm:$0xff]
    %v175 = vld [vmem:[%s8 + $0x98] sm:$0xff]
    %v176 = vld [vmem:[%s8 + $0xa0] sm:$0xff]
    %v177 = vld [vmem:[%s8 + $0xa8] sm:$0xff]
    %v178 = vld [vmem:[%s8 + $0xb0] sm:$0xff]
    %v179 = vld [vmem:[%s8 + $0xb8] sm:$0xff]
    %v180 = vld [vmem:[%s8 + $0xc0] sm:$0xff]
    %v181 = vld [vmem:[%s8 + $0xc8] sm:$0xff]
    %v182 = vld [vmem:[%s8 + $0xd0] sm:$0xff]
    %v183 = vld [vmem:[%s8 + $0xd8] sm:$0xff]
    %v184 = vld [vmem:[%s2] sm:$0xff]
    %v185 = vld [vmem:[%s2 + $0x8] sm:$0xff]
    %v186 = vld [vmem:[%s2 + $0x10] sm:$0xff]
    %v187 = vld [vmem:[%s2 + $0x18] sm:$0xff]
    %v188 = vld [vmem:[%s2 + $0x20] sm:$0xff]
    %v189 = vld [vmem:[%s2 + $0x28] sm:$0xff]
    %v190 = vld [vmem:[%s2 + $0x30] sm:$0xff]
    %v191 = vld [vmem:[%s2 + $0x38] sm:$0xff]
    %v192 = vld [vmem:[%s2 + $0x40] sm:$0xff]
    %v193 = vld [vmem:[%s2 + $0x48] sm:$0xff]
    %v194 = vld [vmem:[%s2 + $0x50] sm:$0xff]
    %v195 = vld [vmem:[%s2 + $0x58] sm:$0xff]
    %v196 = vld [vmem:[%s2 + $0x60] sm:$0xff]
    %v197 = vld [vmem:[%s2 + $0x68] sm:$0xff]
    %v198 = vld [vmem:[%s2 + $0x70] sm:$0xff]
    %v199 = vld [vmem:[%s2 + $0x78] sm:$0xff]
    %v200 = vld [vmem:[%s2 + $0x80] sm:$0xff]
    %v201 = vld [vmem:[%s2 + $0x88] sm:$0xff]
    %v202 = vld [vmem:[%s2 + $0x90] sm:$0xff]
    %v203 = vld [vmem:[%s2 + $0x98] sm:$0xff]
    %v204 = vld [vmem:[%s2 + $0xa0] sm:$0xff]
    %v205 = vld [vmem:[%s2 + $0xa8] sm:$0xff]
    %v206 = vld [vmem:[%s2 + $0xb0] sm:$0xff]
    %v207 = vld [vmem:[%s2 + $0xb8] sm:$0xff]
    %v208 = vld [vmem:[%s2 + $0xc0] sm:$0xff]
    %v209 = vld [vmem:[%s2 + $0xc8] sm:$0xff]
    %v210 = vld [vmem:[%s2 + $0xd0] sm:$0xff]
    %v211 = vld [vmem:[%s2 + $0xd8] sm:$0xff]
    %vm212 = vcmask 261120
    %v214 = vsel %vm212, %v184, 0
    %v217 = vsel %vm212, %v185, 0
    %v220 = vsel %vm212, %v186, 0
    %v223 = vsel %vm212, %v187, 0
    %v226 = vsel %vm212, %v188, 0
    %v229 = vsel %vm212, %v189, 0
    %v232 = vsel %vm212, %v190, 0
    %v235 = vsel %vm212, %v191, 0
    %v238 = vsel %vm212, %v192, 0
    %v241 = vsel %vm212, %v193, 0
    %v244 = vsel %vm212, %v194, 0
    %v247 = vsel %vm212, %v195, 0
    %v250 = vsel %vm212, %v196, 0
    %v253 = vsel %vm212, %v197, 0
    %v256 = vsel %vm212, %v198, 0
    %v259 = vsel %vm212, %v199, 0
    %v262 = vsel %vm212, %v200, 0
    %v265 = vsel %vm212, %v201, 0
    %v268 = vsel %vm212, %v202, 0
    %v271 = vsel %vm212, %v203, 0
    %v274 = vsel %vm212, %v204, 0
    %v277 = vsel %vm212, %v205, 0
    %v280 = vsel %vm212, %v206, 0
    %v283 = vsel %vm212, %v207, 0
    %v286 = vsel %vm212, %v208, 0
    %v289 = vsel %vm212, %v209, 0
    %v292 = vsel %vm212, %v210, 0
    %v295 = vsel %vm212, %v211, 0
    %297 = vmatprep.subr.mxu0 0.0
    %298 = vmatpush1.msra.mxu0 %v148
    %299 = vmatprep.subr.mxu0 0.0
    %300 = vmatpush1.msra.mxu0 %v149
    %301 = vmatprep.subr.mxu0 0.0
    %302 = vmatpush1.msra.mxu0 %v150
    %303 = vmatprep.subr.mxu0 0.0
    %304 = vmatpush1.msra.mxu0 %v151
    %305 = vmatprep.subr.mxu0 0.0
    %306 = vmatpush1.msra.mxu0 0.0
    %307 = vmatprep.subr.mxu0 0.0
    %308 = vmatpush1.msra.mxu0 0.0
    %309 = vmatprep.subr.mxu0 0.0
    %310 = vmatpush1.msra.mxu0 0.0
    %311 = vmatprep.subr.mxu0 0.0
    %312 = vmatpush1.msra.mxu0 0.0
    %313 = vmatprep.subr.mxu0 0.0
    %314 = vmatpush1.msra.mxu0 0.0
    %315 = vmatprep.subr.mxu0 0.0
    %316 = vmatpush1.msra.mxu0 0.0
    %317 = vmatprep.subr.mxu0 0.0
    %318 = vmatpush1.msra.mxu0 0.0
    %319 = vmatprep.subr.mxu0 0.0
    %320 = vmatpush1.msra.mxu0 0.0
    %321 = vmatprep.subr.mxu0 0.0
    %322 = vmatpush1.msra.mxu0 0.0
    %323 = vmatprep.subr.mxu0 0.0
    %324 = vmatpush1.msra.mxu0 0.0
    %325 = vmatprep.subr.mxu0 0.0
    %326 = vmatpush1.msra.mxu0 0.0
    %327 = vmatprep.subr.mxu0 0.0
    %328 = vmatpush1.msra.mxu0 0.0
    %329 = vmatprep.subr.mxu0 0.0
    %330 = vmatpush1.msra.mxu0 0.0
    %331 = vmatprep.subr.mxu0 0.0
    %332 = vmatpush1.msra.mxu0 0.0
    %333 = vmatprep.subr.mxu0 0.0
    %334 = vmatpush1.msra.mxu0 0.0
    %335 = vmatprep.subr.mxu0 0.0
    %336 = vmatpush1.msra.mxu0 0.0
    %337 = vmatprep.subr.mxu0 0.0
    %338 = vmatpush1.msra.mxu0 0.0
    %339 = vmatprep.subr.mxu0 0.0
    %340 = vmatpush1.msra.mxu0 0.0
    %341 = vmatprep.subr.mxu0 0.0
    %342 = vmatpush1.msra.mxu0 0.0
    %343 = vmatprep.subr.mxu0 0.0
    %344 = vmatpush1.msra.mxu0 0.0
    %345 = vmatprep.subr.mxu0 0.0
    %346 = vmatpush1.msra.mxu0 0.0
    %347 = vmatprep.subr.mxu0 0.0
    %348 = vmatpush1.msra.mxu0 0.0
    %349 = vmatprep.subr.mxu0 0.0
    %350 = vmatpush1.msra.mxu0 0.0
    %351 = vmatprep.subr.mxu0 0.0
    %352 = vmatpush1.msra.mxu0 0.0
    %353 = vmatprep.subr.mxu0 0.0
    %354 = vmatpush1.msra.mxu0 0.0
    %355 = vmatprep.subr.mxu0 0.0
    %356 = vmatpush1.msra.mxu0 0.0
    %357 = vmatprep.subr.mxu0 0.0
    %358 = vmatpush1.msra.mxu0 0.0
    %359 = vmatprep.subr.mxu0 0.0
    %360 = vmatpush1.msra.mxu0 0.0
    %361 = vmatprep.mubr.f32.mxu0 0.0
    %362 = vmatmul.mubr.f32.gmra.mrb[0].mxu0 %v214
    %v363 = vpop.f32.mrb[0].mxu0
    %v364 = vadd.f32 0.0, %v363
    %v365 = vpop.f32.mrb[0].mxu0
    %366 = vmatprep.mubr.f32.mxu0 0.0
    %367 = vmatmul.mubr.f32.gmra.mrb[0].mxu0 %v217
    %v368 = vpop.f32.mrb[0].mxu0
    %v369 = vadd.f32 0.0, %v368
    %v370 = vpop.f32.mrb[0].mxu0
    %371 = vmatprep.mubr.f32.mxu0 0.0
    %372 = vmatmul.mubr.f32.gmra.mrb[0].mxu0 %v220
    %v373 = vpop.f32.mrb[0].mxu0
    %v374 = vadd.f32 0.0, %v373
    %v375 = vpop.f32.mrb[0].mxu0
    %376 = vmatprep.mubr.f32.mxu0 0.0
    %377 = vmatmul.mubr.f32.gmra.mrb[0].mxu0 %v223
    %v378 = vpop.f32.mrb[0].mxu0
    %v379 = vadd.f32 0.0, %v378
    %v380 = vpop.f32.mrb[0].mxu0
    %381 = vmatprep.mubr.f32.mxu0 0.0
    %382 = vmatmul.mubr.f32.gmra.mrb[0].mxu0 %v226
    %v383 = vpop.f32.mrb[0].mxu0
    %v384 = vadd.f32 0.0, %v383
    %v385 = vpop.f32.mrb[0].mxu0
    %386 = vmatprep.mubr.f32.mxu0 0.0
    %387 = vmatmul.mubr.f32.gmra.mrb[0].mxu0 %v229
    %v388 = vpop.f32.mrb[0].mxu0
    %v389 = vadd.f32 0.0, %v388
    %v390 = vpop.f32.mrb[0].mxu0
    %391 = vmatprep.mubr.f32.mxu0 0.0
    %392 = vmatmul.mubr.f32.gmra.mrb[0].mxu0 %v232
    %v393 = vpop.f32.mrb[0].mxu0
    %v394 = vadd.f32 0.0, %v393
    %v395 = vpop.f32.mrb[0].mxu0
    %396 = vmatprep.mubr.f32.mxu0 0.0
    %397 = vmatmul.mubr.f32.gmra.mrb[0].mxu0 %v235
    %v398 = vpop.f32.mrb[0].mxu0
    %v399 = vadd.f32 0.0, %v398
    %v400 = vpop.f32.mrb[0].mxu0
    %401 = vmatprep.mubr.f32.mxu0 0.0
    %402 = vmatmul.mubr.f32.gmra.mrb[0].mxu0 %v238
    %v403 = vpop.f32.mrb[0].mxu0
    %v404 = vadd.f32 0.0, %v403
    %v405 = vpop.f32.mrb[0].mxu0
    %406 = vmatprep.mubr.f32.mxu0 0.0
    %407 = vmatmul.mubr.f32.gmra.mrb[0].mxu0 %v241
    %v408 = vpop.f32.mrb[0].mxu0
    %v409 = vadd.f32 0.0, %v408
    %v410 = vpop.f32.mrb[0].mxu0
    %411 = vmatprep.mubr.f32.mxu0 0.0
    %412 = vmatmul.mubr.f32.gmra.mrb[0].mxu0 %v244
    %v413 = vpop.f32.mrb[0].mxu0
    %v414 = vadd.f32 0.0, %v413
    %v415 = vpop.f32.mrb[0].mxu0
    %416 = vmatprep.mubr.f32.mxu0 0.0
    %417 = vmatmul.mubr.f32.gmra.mrb[0].mxu0 %v247
    %v418 = vpop.f32.mrb[0].mxu0
    %v419 = vadd.f32 0.0, %v418
    %v420 = vpop.f32.mrb[0].mxu0
    %421 = vmatprep.mubr.f32.mxu0 0.0
    %422 = vmatmul.mubr.f32.gmra.mrb[0].mxu0 %v250
    %v423 = vpop.f32.mrb[0].mxu0
    %v424 = vadd.f32 0.0, %v423
    %v425 = vpop.f32.mrb[0].mxu0
    %426 = vmatprep.mubr.f32.mxu0 0.0
    %427 = vmatmul.mubr.f32.gmra.mrb[0].mxu0 %v253
    %v428 = vpop.f32.mrb[0].mxu0
    %v429 = vadd.f32 0.0, %v428
    %v430 = vpop.f32.mrb[0].mxu0
    %431 = vmatprep.mubr.f32.mxu0 0.0
    %432 = vmatmul.mubr.f32.gmra.mrb[0].mxu0 %v256
    %v433 = vpop.f32.mrb[0].mxu0
    %v434 = vadd.f32 0.0, %v433
    %v435 = vpop.f32.mrb[0].mxu0
    %436 = vmatprep.mubr.f32.mxu0 0.0
    %437 = vmatmul.mubr.f32.gmra.mrb[0].mxu0 %v259
    %v438 = vpop.f32.mrb[0].mxu0
    %v439 = vadd.f32 0.0, %v438
    %v440 = vpop.f32.mrb[0].mxu0
    %441 = vmatprep.mubr.f32.mxu0 0.0
    %442 = vmatmul.mubr.f32.gmra.mrb[0].mxu0 %v262
    %v443 = vpop.f32.mrb[0].mxu0
    %v444 = vadd.f32 0.0, %v443
    %v445 = vpop.f32.mrb[0].mxu0
    %446 = vmatprep.mubr.f32.mxu0 0.0
    %447 = vmatmul.mubr.f32.gmra.mrb[0].mxu0 %v265
    %v448 = vpop.f32.mrb[0].mxu0
    %v449 = vadd.f32 0.0, %v448
    %v450 = vpop.f32.mrb[0].mxu0
    %451 = vmatprep.mubr.f32.mxu0 0.0
    %452 = vmatmul.mubr.f32.gmra.mrb[0].mxu0 %v268
    %v453 = vpop.f32.mrb[0].mxu0
    %v454 = vadd.f32 0.0, %v453
    %v455 = vpop.f32.mrb[0].mxu0
    %456 = vmatprep.mubr.f32.mxu0 0.0
    %457 = vmatmul.mubr.f32.gmra.mrb[0].mxu0 %v271
    %v458 = vpop.f32.mrb[0].mxu0
    %v459 = vadd.f32 0.0, %v458
    %v460 = vpop.f32.mrb[0].mxu0
    %461 = vmatprep.mubr.f32.mxu0 0.0
    %462 = vmatmul.mubr.f32.gmra.mrb[0].mxu0 %v274
    %v463 = vpop.f32.mrb[0].mxu0
    %v464 = vadd.f32 0.0, %v463
    %v465 = vpop.f32.mrb[0].mxu0
    %466 = vmatprep.mubr.f32.mxu0 0.0
    %467 = vmatmul.mubr.f32.gmra.mrb[0].mxu0 %v277
    %v468 = vpop.f32.mrb[0].mxu0
    %v469 = vadd.f32 0.0, %v468
    %v470 = vpop.f32.mrb[0].mxu0
    %471 = vmatprep.mubr.f32.mxu0 0.0
    %472 = vmatmul.mubr.f32.gmra.mrb[0].mxu0 %v280
    %v473 = vpop.f32.mrb[0].mxu0
    %v474 = vadd.f32 0.0, %v473
    %v475 = vpop.f32.mrb[0].mxu0
    %476 = vmatprep.mubr.f32.mxu0 0.0
    %477 = vmatmul.mubr.f32.gmra.mrb[0].mxu0 %v283
    %v478 = vpop.f32.mrb[0].mxu0
    %v479 = vadd.f32 0.0, %v478
    %v480 = vpop.f32.mrb[0].mxu0
    %481 = vmatprep.mubr.f32.mxu0 0.0
    %482 = vmatmul.mubr.f32.gmra.mrb[0].mxu0 %v286
    %v483 = vpop.f32.mrb[0].mxu0
    %v484 = vadd.f32 0.0, %v483
    %v485 = vpop.f32.mrb[0].mxu0
    %486 = vmatprep.mubr.f32.mxu0 0.0
    %487 = vmatmul.mubr.f32.gmra.mrb[0].mxu0 %v289
    %v488 = vpop.f32.mrb[0].mxu0
    %v489 = vadd.f32 0.0, %v488
    %v490 = vpop.f32.mrb[0].mxu0
    %491 = vmatprep.mubr.f32.mxu0 0.0
    %492 = vmatmul.mubr.f32.gmra.mrb[0].mxu0 %v292
    %v493 = vpop.f32.mrb[0].mxu0
    %v494 = vadd.f32 0.0, %v493
    %v495 = vpop.f32.mrb[0].mxu0
    %496 = vmatprep.mubr.f32.mxu0 0.0
    %497 = vmatmul.mubr.f32.gmra.mrb[0].mxu0 %v295
    %v498 = vpop.f32.mrb[0].mxu0
    %v499 = vadd.f32 0.0, %v498
    %v500 = vpop.f32.mrb[0].mxu0
    %501 = vdwg.mxu0
    %v502 = vmul.f32 %v364, %v364
    %v503 = vmul.f32 %v369, %v369
    %v504 = vmul.f32 %v374, %v374
    %v505 = vmul.f32 %v379, %v379
    %v506 = vmul.f32 %v384, %v384
    %v507 = vmul.f32 %v389, %v389
    %v508 = vmul.f32 %v394, %v394
    %v509 = vmul.f32 %v399, %v399
    %v510 = vmul.f32 %v404, %v404
    %v511 = vmul.f32 %v409, %v409
    %v512 = vmul.f32 %v414, %v414
    %v513 = vmul.f32 %v419, %v419
    %v514 = vmul.f32 %v424, %v424
    %v515 = vmul.f32 %v429, %v429
    %v516 = vmul.f32 %v434, %v434
    %v517 = vmul.f32 %v439, %v439
    %v518 = vmul.f32 %v444, %v444
    %v519 = vmul.f32 %v449, %v449
    %v520 = vmul.f32 %v454, %v454
    %v521 = vmul.f32 %v459, %v459
    %v522 = vmul.f32 %v464, %v464
    %v523 = vmul.f32 %v469, %v469
    %v524 = vmul.f32 %v474, %v474
    %v525 = vmul.f32 %v479, %v479
    %v526 = vmul.f32 %v484, %v484
    %v527 = vmul.f32 %v489, %v489
    %v528 = vmul.f32 %v494, %v494
    %v529 = vmul.f32 %v499, %v499
    %vm530 = vcmask 23552
    %v531 = vsel %vm530, %v502, 0.0
    %532 = vadd.xlane.f32.xlu0 %v531
    %v533 = vpop.xlane.xlu0 %532
    %v534 = vsel %vm530, %v503, 0.0
    %535 = vadd.xlane.f32.xlu0 %v534
    %v536 = vpop.xlane.xlu0 %535
    %v537 = vsel %vm530, %v504, 0.0
    %538 = vadd.xlane.f32.xlu0 %v537
    %v539 = vpop.xlane.xlu0 %538
    %v540 = vsel %vm530, %v505, 0.0
    %541 = vadd.xlane.f32.xlu0 %v540
    %v542 = vpop.xlane.xlu0 %541
    %v543 = vsel %vm530, %v506, 0.0
    %544 = vadd.xlane.f32.xlu0 %v543
    %v545 = vpop.xlane.xlu0 %544
    %v546 = vsel %vm530, %v507, 0.0
    %547 = vadd.xlane.f32.xlu0 %v546
    %v548 = vpop.xlane.xlu0 %547
    %v549 = vsel %vm530, %v508, 0.0
    %550 = vadd.xlane.f32.xlu0 %v549
    %v551 = vpop.xlane.xlu0 %550
    %v552 = vsel %vm530, %v509, 0.0
    %553 = vadd.xlane.f32.xlu0 %v552
    %v554 = vpop.xlane.xlu0 %553
    %v555 = vsel %vm530, %v510, 0.0
    %556 = vadd.xlane.f32.xlu0 %v555
    %v557 = vpop.xlane.xlu0 %556
    %v558 = vsel %vm530, %v511, 0.0
    %559 = vadd.xlane.f32.xlu0 %v558
    %v560 = vpop.xlane.xlu0 %559
    %v561 = vsel %vm530, %v512, 0.0
    %562 = vadd.xlane.f32.xlu0 %v561
    %v563 = vpop.xlane.xlu0 %562
    %v564 = vsel %vm530, %v513, 0.0
    %565 = vadd.xlane.f32.xlu0 %v564
    %v566 = vpop.xlane.xlu0 %565
    %v567 = vsel %vm530, %v514, 0.0
    %568 = vadd.xlane.f32.xlu0 %v567
    %v569 = vpop.xlane.xlu0 %568
    %v570 = vsel %vm530, %v515, 0.0
    %571 = vadd.xlane.f32.xlu0 %v570
    %v572 = vpop.xlane.xlu0 %571
    %v573 = vsel %vm530, %v516, 0.0
    %574 = vadd.xlane.f32.xlu0 %v573
    %v575 = vpop.xlane.xlu0 %574
    %v576 = vsel %vm530, %v517, 0.0
    %577 = vadd.xlane.f32.xlu0 %v576
    %v578 = vpop.xlane.xlu0 %577
    %v579 = vsel %vm530, %v518, 0.0
    %580 = vadd.xlane.f32.xlu0 %v579
    %v581 = vpop.xlane.xlu0 %580
    %v582 = vsel %vm530, %v519, 0.0
    %583 = vadd.xlane.f32.xlu0 %v582
    %v584 = vpop.xlane.xlu0 %583
    %v585 = vsel %vm530, %v520, 0.0
    %586 = vadd.xlane.f32.xlu0 %v585
    %v587 = vpop.xlane.xlu0 %586
    %v588 = vsel %vm530, %v521, 0.0
    %589 = vadd.xlane.f32.xlu0 %v588
    %v590 = vpop.xlane.xlu0 %589
    %v591 = vsel %vm530, %v522, 0.0
    %592 = vadd.xlane.f32.xlu0 %v591
    %v593 = vpop.xlane.xlu0 %592
    %v594 = vsel %vm530, %v523, 0.0
    %595 = vadd.xlane.f32.xlu0 %v594
    %v596 = vpop.xlane.xlu0 %595
    %v597 = vsel %vm530, %v524, 0.0
    %598 = vadd.xlane.f32.xlu0 %v597
    %v599 = vpop.xlane.xlu0 %598
    %v600 = vsel %vm530, %v525, 0.0
    %601 = vadd.xlane.f32.xlu0 %v600
    %v602 = vpop.xlane.xlu0 %601
    %v603 = vsel %vm530, %v526, 0.0
    %604 = vadd.xlane.f32.xlu0 %v603
    %v605 = vpop.xlane.xlu0 %604
    %v606 = vsel %vm530, %v527, 0.0
    %607 = vadd.xlane.f32.xlu0 %v606
    %v608 = vpop.xlane.xlu0 %607
    %v609 = vsel %vm530, %v528, 0.0
    %610 = vadd.xlane.f32.xlu0 %v609
    %v611 = vpop.xlane.xlu0 %610
    %v612 = vsel %vm530, %v529, 0.0
    %613 = vadd.xlane.f32.xlu0 %v612
    %v614 = vpop.xlane.xlu0 %613
    %v615 = vadd.f32 %v533, 1e-08
    %v616 = vadd.f32 %v536, 1e-08
    %v617 = vadd.f32 %v539, 1e-08
    %v618 = vadd.f32 %v542, 1e-08
    %v619 = vadd.f32 %v545, 1e-08
    %v620 = vadd.f32 %v548, 1e-08
    %v621 = vadd.f32 %v551, 1e-08
    %v622 = vadd.f32 %v554, 1e-08
    %v623 = vadd.f32 %v557, 1e-08
    %v624 = vadd.f32 %v560, 1e-08
    %v625 = vadd.f32 %v563, 1e-08
    %v626 = vadd.f32 %v566, 1e-08
    %v627 = vadd.f32 %v569, 1e-08
    %v628 = vadd.f32 %v572, 1e-08
    %v629 = vadd.f32 %v575, 1e-08
    %v630 = vadd.f32 %v578, 1e-08
    %v631 = vadd.f32 %v581, 1e-08
    %v632 = vadd.f32 %v584, 1e-08
    %v633 = vadd.f32 %v587, 1e-08
    %v634 = vadd.f32 %v590, 1e-08
    %v635 = vadd.f32 %v593, 1e-08
    %v636 = vadd.f32 %v596, 1e-08
    %v637 = vadd.f32 %v599, 1e-08
    %v638 = vadd.f32 %v602, 1e-08
    %v639 = vadd.f32 %v605, 1e-08
    %v640 = vadd.f32 %v608, 1e-08
    %v641 = vadd.f32 %v611, 1e-08
    %v642 = vadd.f32 %v614, 1e-08
    %v643 = vrsqrt.pop %v615
    %v644 = vmul.f32 %v615, %v643
    %vm645 = vcmp.eq.f32.partialorder %v615, inf
    %v646 = vsel %vm645, %v615, %v644
    %vm647 = vcmp.eq.f32.partialorder %v615, 0.0
    %v648 = vand.u32 %v615, 2147483648
    %v649 = vsel %vm647, %v648, %v646
    %v650 = vrsqrt.pop %v616
    %v651 = vmul.f32 %v616, %v650
    %vm652 = vcmp.eq.f32.partialorder %v616, inf
    %v653 = vsel %vm652, %v616, %v651
    %vm654 = vcmp.eq.f32.partialorder %v616, 0.0
    %v655 = vand.u32 %v616, 2147483648
    %v656 = vsel %vm654, %v655, %v653
    %v657 = vrsqrt.pop %v617
    %v658 = vmul.f32 %v617, %v657
    %vm659 = vcmp.eq.f32.partialorder %v617, inf
    %v660 = vsel %vm659, %v617, %v658
    %vm661 = vcmp.eq.f32.partialorder %v617, 0.0
    %v662 = vand.u32 %v617, 2147483648
    %v663 = vsel %vm661, %v662, %v660
    %v664 = vrsqrt.pop %v618
    %v665 = vmul.f32 %v618, %v664
    %vm666 = vcmp.eq.f32.partialorder %v618, inf
    %v667 = vsel %vm666, %v618, %v665
    %vm668 = vcmp.eq.f32.partialorder %v618, 0.0
    %v669 = vand.u32 %v618, 2147483648
    %v670 = vsel %vm668, %v669, %v667
    %v671 = vrsqrt.pop %v619
    %v672 = vmul.f32 %v619, %v671
    %vm673 = vcmp.eq.f32.partialorder %v619, inf
    %v674 = vsel %vm673, %v619, %v672
    %vm675 = vcmp.eq.f32.partialorder %v619, 0.0
    %v676 = vand.u32 %v619, 2147483648
    %v677 = vsel %vm675, %v676, %v674
    %v678 = vrsqrt.pop %v620
    %v679 = vmul.f32 %v620, %v678
    %vm680 = vcmp.eq.f32.partialorder %v620, inf
    %v681 = vsel %vm680, %v620, %v679
    %vm682 = vcmp.eq.f32.partialorder %v620, 0.0
    %v683 = vand.u32 %v620, 2147483648
    %v684 = vsel %vm682, %v683, %v681
    %v685 = vrsqrt.pop %v621
    %v686 = vmul.f32 %v621, %v685
    %vm687 = vcmp.eq.f32.partialorder %v621, inf
    %v688 = vsel %vm687, %v621, %v686
    %vm689 = vcmp.eq.f32.partialorder %v621, 0.0
    %v690 = vand.u32 %v621, 2147483648
    %v691 = vsel %vm689, %v690, %v688
    %v692 = vrsqrt.pop %v622
    %v693 = vmul.f32 %v622, %v692
    %vm694 = vcmp.eq.f32.partialorder %v622, inf
    %v695 = vsel %vm694, %v622, %v693
    %vm696 = vcmp.eq.f32.partialorder %v622, 0.0
    %v697 = vand.u32 %v622, 2147483648
    %v698 = vsel %vm696, %v697, %v695
    %v699 = vrsqrt.pop %v623
    %v700 = vmul.f32 %v623, %v699
    %vm701 = vcmp.eq.f32.partialorder %v623, inf
    %v702 = vsel %vm701, %v623, %v700
    %vm703 = vcmp.eq.f32.partialorder %v623, 0.0
    %v704 = vand.u32 %v623, 2147483648
    %v705 = vsel %vm703, %v704, %v702
    %v706 = vrsqrt.pop %v624
    %v707 = vmul.f32 %v624, %v706
    %vm708 = vcmp.eq.f32.partialorder %v624, inf
    %v709 = vsel %vm708, %v624, %v707
    %vm710 = vcmp.eq.f32.partialorder %v624, 0.0
    %v711 = vand.u32 %v624, 2147483648
    %v712 = vsel %vm710, %v711, %v709
    %v713 = vrsqrt.pop %v625
    %v714 = vmul.f32 %v625, %v713
    %vm715 = vcmp.eq.f32.partialorder %v625, inf
    %v716 = vsel %vm715, %v625, %v714
    %vm717 = vcmp.eq.f32.partialorder %v625, 0.0
    %v718 = vand.u32 %v625, 2147483648
    %v719 = vsel %vm717, %v718, %v716
    %v720 = vrsqrt.pop %v626
    %v721 = vmul.f32 %v626, %v720
    %vm722 = vcmp.eq.f32.partialorder %v626, inf
    %v723 = vsel %vm722, %v626, %v721
    %vm724 = vcmp.eq.f32.partialorder %v626, 0.0
    %v725 = vand.u32 %v626, 2147483648
    %v726 = vsel %vm724, %v725, %v723
    %v727 = vrsqrt.pop %v627
    %v728 = vmul.f32 %v627, %v727
    %vm729 = vcmp.eq.f32.partialorder %v627, inf
    %v730 = vsel %vm729, %v627, %v728
    %vm731 = vcmp.eq.f32.partialorder %v627, 0.0
    %v732 = vand.u32 %v627, 2147483648
    %v733 = vsel %vm731, %v732, %v730
    %v734 = vrsqrt.pop %v628
    %v735 = vmul.f32 %v628, %v734
    %vm736 = vcmp.eq.f32.partialorder %v628, inf
    %v737 = vsel %vm736, %v628, %v735
    %vm738 = vcmp.eq.f32.partialorder %v628, 0.0
    %v739 = vand.u32 %v628, 2147483648
    %v740 = vsel %vm738, %v739, %v737
    %v741 = vrsqrt.pop %v629
    %v742 = vmul.f32 %v629, %v741
    %vm743 = vcmp.eq.f32.partialorder %v629, inf
    %v744 = vsel %vm743, %v629, %v742
    %vm745 = vcmp.eq.f32.partialorder %v629, 0.0
    %v746 = vand.u32 %v629, 2147483648
    %v747 = vsel %vm745, %v746, %v744
    %v748 = vrsqrt.pop %v630
    %v749 = vmul.f32 %v630, %v748
    %vm750 = vcmp.eq.f32.partialorder %v630, inf
    %v751 = vsel %vm750, %v630, %v749
    %vm752 = vcmp.eq.f32.partialorder %v630, 0.0
    %v753 = vand.u32 %v630, 2147483648
    %v754 = vsel %vm752, %v753, %v751
    %v755 = vrsqrt.pop %v631
    %v756 = vmul.f32 %v631, %v755
    %vm757 = vcmp.eq.f32.partialorder %v631, inf
    %v758 = vsel %vm757, %v631, %v756
    %vm759 = vcmp.eq.f32.partialorder %v631, 0.0
    %v760 = vand.u32 %v631, 2147483648
    %v761 = vsel %vm759, %v760, %v758
    %v762 = vrsqrt.pop %v632
    %v763 = vmul.f32 %v632, %v762
    %vm764 = vcmp.eq.f32.partialorder %v632, inf
    %v765 = vsel %vm764, %v632, %v763
    %vm766 = vcmp.eq.f32.partialorder %v632, 0.0
    %v767 = vand.u32 %v632, 2147483648
    %v768 = vsel %vm766, %v767, %v765
    %v769 = vrsqrt.pop %v633
    %v770 = vmul.f32 %v633, %v769
    %vm771 = vcmp.eq.f32.partialorder %v633, inf
    %v772 = vsel %vm771, %v633, %v770
    %vm773 = vcmp.eq.f32.partialorder %v633, 0.0
    %v774 = vand.u32 %v633, 2147483648
    %v775 = vsel %vm773, %v774, %v772
    %v776 = vrsqrt.pop %v634
    %v777 = vmul.f32 %v634, %v776
    %vm778 = vcmp.eq.f32.partialorder %v634, inf
    %v779 = vsel %vm778, %v634, %v777
    %vm780 = vcmp.eq.f32.partialorder %v634, 0.0
    %v781 = vand.u32 %v634, 2147483648
    %v782 = vsel %vm780, %v781, %v779
    %v783 = vrsqrt.pop %v635
    %v784 = vmul.f32 %v635, %v783
    %vm785 = vcmp.eq.f32.partialorder %v635, inf
    %v786 = vsel %vm785, %v635, %v784
    %vm787 = vcmp.eq.f32.partialorder %v635, 0.0
    %v788 = vand.u32 %v635, 2147483648
    %v789 = vsel %vm787, %v788, %v786
    %v790 = vrsqrt.pop %v636
    %v791 = vmul.f32 %v636, %v790
    %vm792 = vcmp.eq.f32.partialorder %v636, inf
    %v793 = vsel %vm792, %v636, %v791
    %vm794 = vcmp.eq.f32.partialorder %v636, 0.0
    %v795 = vand.u32 %v636, 2147483648
    %v796 = vsel %vm794, %v795, %v793
    %v797 = vrsqrt.pop %v637
    %v798 = vmul.f32 %v637, %v797
    %vm799 = vcmp.eq.f32.partialorder %v637, inf
    %v800 = vsel %vm799, %v637, %v798
    %vm801 = vcmp.eq.f32.partialorder %v637, 0.0
    %v802 = vand.u32 %v637, 2147483648
    %v803 = vsel %vm801, %v802, %v800
    %v804 = vrsqrt.pop %v638
    %v805 = vmul.f32 %v638, %v804
    %vm806 = vcmp.eq.f32.partialorder %v638, inf
    %v807 = vsel %vm806, %v638, %v805
    %vm808 = vcmp.eq.f32.partialorder %v638, 0.0
    %v809 = vand.u32 %v638, 2147483648
    %v810 = vsel %vm808, %v809, %v807
    %v811 = vrsqrt.pop %v639
    %v812 = vmul.f32 %v639, %v811
    %vm813 = vcmp.eq.f32.partialorder %v639, inf
    %v814 = vsel %vm813, %v639, %v812
    %vm815 = vcmp.eq.f32.partialorder %v639, 0.0
    %v816 = vand.u32 %v639, 2147483648
    %v817 = vsel %vm815, %v816, %v814
    %v818 = vrsqrt.pop %v640
    %v819 = vmul.f32 %v640, %v818
    %vm820 = vcmp.eq.f32.partialorder %v640, inf
    %v821 = vsel %vm820, %v640, %v819
    %vm822 = vcmp.eq.f32.partialorder %v640, 0.0
    %v823 = vand.u32 %v640, 2147483648
    %v824 = vsel %vm822, %v823, %v821
    %v825 = vrsqrt.pop %v641
    %v826 = vmul.f32 %v641, %v825
    %vm827 = vcmp.eq.f32.partialorder %v641, inf
    %v828 = vsel %vm827, %v641, %v826
    %vm829 = vcmp.eq.f32.partialorder %v641, 0.0
    %v830 = vand.u32 %v641, 2147483648
    %v831 = vsel %vm829, %v830, %v828
    %v832 = vrsqrt.pop %v642
    %v833 = vmul.f32 %v642, %v832
    %vm834 = vcmp.eq.f32.partialorder %v642, inf
    %v835 = vsel %vm834, %v642, %v833
    %vm836 = vcmp.eq.f32.partialorder %v642, 0.0
    %v837 = vand.u32 %v642, 2147483648
    %v838 = vsel %vm836, %v837, %v835
    %v839 = vadd.f32 %v649, 1.0
    %v840 = vadd.f32 %v656, 1.0
    %v841 = vadd.f32 %v663, 1.0
    %v842 = vadd.f32 %v670, 1.0
    %v843 = vadd.f32 %v677, 1.0
    %v844 = vadd.f32 %v684, 1.0
    %v845 = vadd.f32 %v691, 1.0
    %v846 = vadd.f32 %v698, 1.0
    %v847 = vadd.f32 %v705, 1.0
    %v848 = vadd.f32 %v712, 1.0
    %v849 = vadd.f32 %v719, 1.0
    %v850 = vadd.f32 %v726, 1.0
    %v851 = vadd.f32 %v733, 1.0
    %v852 = vadd.f32 %v740, 1.0
    %v853 = vadd.f32 %v747, 1.0
    %v854 = vadd.f32 %v754, 1.0
    %v855 = vadd.f32 %v761, 1.0
    %v856 = vadd.f32 %v768, 1.0
    %v857 = vadd.f32 %v775, 1.0
    %v858 = vadd.f32 %v782, 1.0
    %v859 = vadd.f32 %v789, 1.0
    %v860 = vadd.f32 %v796, 1.0
    %v861 = vadd.f32 %v803, 1.0
    %v862 = vadd.f32 %v810, 1.0
    %v863 = vadd.f32 %v817, 1.0
    %v864 = vadd.f32 %v824, 1.0
    %v865 = vadd.f32 %v831, 1.0
    %v866 = vadd.f32 %v838, 1.0
    %v867 = vrcp.pop %v839
    %v868 = vrcp.pop %v840
    %v869 = vrcp.pop %v841
    %v870 = vrcp.pop %v842
    %v871 = vrcp.pop %v843
    %v872 = vrcp.pop %v844
    %v873 = vrcp.pop %v845
    %v874 = vrcp.pop %v846
    %v875 = vrcp.pop %v847
    %v876 = vrcp.pop %v848
    %v877 = vrcp.pop %v849
    %v878 = vrcp.pop %v850
    %v879 = vrcp.pop %v851
    %v880 = vrcp.pop %v852
    %v881 = vrcp.pop %v853
    %v882 = vrcp.pop %v854
    %v883 = vrcp.pop %v855
    %v884 = vrcp.pop %v856
    %v885 = vrcp.pop %v857
    %v886 = vrcp.pop %v858
    %v887 = vrcp.pop %v859
    %v888 = vrcp.pop %v860
    %v889 = vrcp.pop %v861
    %v890 = vrcp.pop %v862
    %v891 = vrcp.pop %v863
    %v892 = vrcp.pop %v864
    %v893 = vrcp.pop %v865
    %v894 = vrcp.pop %v866
    %v895 = vmul.f32 %v364, %v867
    %v896 = vmul.f32 %v369, %v868
    %v897 = vmul.f32 %v374, %v869
    %v898 = vmul.f32 %v379, %v870
    %v899 = vmul.f32 %v384, %v871
    %v900 = vmul.f32 %v389, %v872
    %v901 = vmul.f32 %v394, %v873
    %v902 = vmul.f32 %v399, %v874
    %v903 = vmul.f32 %v404, %v875
    %v904 = vmul.f32 %v409, %v876
    %v905 = vmul.f32 %v414, %v877
    %v906 = vmul.f32 %v419, %v878
    %v907 = vmul.f32 %v424, %v879
    %v908 = vmul.f32 %v429, %v880
    %v909 = vmul.f32 %v434, %v881
    %v910 = vmul.f32 %v439, %v882
    %v911 = vmul.f32 %v444, %v883
    %v912 = vmul.f32 %v449, %v884
    %v913 = vmul.f32 %v454, %v885
    %v914 = vmul.f32 %v459, %v886
    %v915 = vmul.f32 %v464, %v887
    %v916 = vmul.f32 %v469, %v888
    %v917 = vmul.f32 %v474, %v889
    %v918 = vmul.f32 %v479, %v890
    %v919 = vmul.f32 %v484, %v891
    %v920 = vmul.f32 %v489, %v892
    %v921 = vmul.f32 %v494, %v893
    %v922 = vmul.f32 %v499, %v894
    %vm923 = vcmask 531968
    %924 = vst.msk [vmem:[#allocation2] sm:$0xff] %vm923, %v533
    %925 = vst.msk [vmem:[#allocation2 + $0x8] sm:$0xff] %vm923, %v536
    %926 = vst.msk [vmem:[#allocation2 + $0x10] sm:$0xff] %vm923, %v539
    %927 = vst.msk [vmem:[#allocation2 + $0x18] sm:$0xff] %vm923, %v542
    %928 = vst.msk [vmem:[#allocation2 + $0x20] sm:$0xff] %vm923, %v545
    %929 = vst.msk [vmem:[#allocation2 + $0x28] sm:$0xff] %vm923, %v548
    %930 = vst.msk [vmem:[#allocation2 + $0x30] sm:$0xff] %vm923, %v551
    %931 = vst.msk [vmem:[#allocation2 + $0x38] sm:$0xff] %vm923, %v554
    %932 = vst.msk [vmem:[#allocation2 + $0x40] sm:$0xff] %vm923, %v557
    %933 = vst.msk [vmem:[#allocation2 + $0x48] sm:$0xff] %vm923, %v560
    %934 = vst.msk [vmem:[#allocation2 + $0x50] sm:$0xff] %vm923, %v563
    %935 = vst.msk [vmem:[#allocation2 + $0x58] sm:$0xff] %vm923, %v566
    %936 = vst.msk [vmem:[#allocation2 + $0x60] sm:$0xff] %vm923, %v569
    %937 = vst.msk [vmem:[#allocation2 + $0x68] sm:$0xff] %vm923, %v572
    %938 = vst.msk [vmem:[#allocation2 + $0x70] sm:$0xff] %vm923, %v575
    %939 = vst.msk [vmem:[#allocation2 + $0x78] sm:$0xff] %vm923, %v578
    %940 = vst.msk [vmem:[#allocation2 + $0x80] sm:$0xff] %vm923, %v581
    %941 = vst.msk [vmem:[#allocation2 + $0x88] sm:$0xff] %vm923, %v584
    %942 = vst.msk [vmem:[#allocation2 + $0x90] sm:$0xff] %vm923, %v587
    %943 = vst.msk [vmem:[#allocation2 + $0x98] sm:$0xff] %vm923, %v590
    %944 = vst.msk [vmem:[#allocation2 + $0xa0] sm:$0xff] %vm923, %v593
    %945 = vst.msk [vmem:[#allocation2 + $0xa8] sm:$0xff] %vm923, %v596
    %946 = vst.msk [vmem:[#allocation2 + $0xb0] sm:$0xff] %vm923, %v599
    %947 = vst.msk [vmem:[#allocation2 + $0xb8] sm:$0xff] %vm923, %v602
    %948 = vst.msk [vmem:[#allocation2 + $0xc0] sm:$0xff] %vm923, %v605
    %949 = vst.msk [vmem:[#allocation2 + $0xc8] sm:$0xff] %vm923, %v608
    %950 = vst.msk [vmem:[#allocation2 + $0xd0] sm:$0xff] %vm923, %v611
    %951 = vst.msk [vmem:[#allocation2 + $0xd8] sm:$0xff] %vm923, %v614
    %v952 = vld [vmem:[%s6] sm:$0xff]
    %v953 = vld [vmem:[%s6 + $0x8] sm:$0xff]
    %v954 = vld [vmem:[%s6 + $0x10] sm:$0xff]
    %v955 = vld [vmem:[%s6 + $0x18] sm:$0xff]
    %v956 = vld [vmem:[%s6 + $0x20] sm:$0xff]
    %v957 = vld [vmem:[%s6 + $0x28] sm:$0xff]
    %v958 = vld [vmem:[%s6 + $0x30] sm:$0xff]
    %v959 = vld [vmem:[%s6 + $0x38] sm:$0xff]
    %v960 = vld [vmem:[%s6 + $0x40] sm:$0xff]
    %v961 = vld [vmem:[%s6 + $0x48] sm:$0xff]
    %v962 = vld [vmem:[%s6 + $0x50] sm:$0xff]
    %v963 = vld [vmem:[%s6 + $0x58] sm:$0xff]
    %v964 = vld [vmem:[%s6 + $0x60] sm:$0xff]
    %v965 = vld [vmem:[%s6 + $0x68] sm:$0xff]
    %v966 = vld [vmem:[%s6 + $0x70] sm:$0xff]
    %v967 = vld [vmem:[%s6 + $0x78] sm:$0xff]
    %v968 = vld [vmem:[%s6 + $0x80] sm:$0xff]
    %v969 = vld [vmem:[%s6 + $0x88] sm:$0xff]
    %v970 = vld [vmem:[%s6 + $0x90] sm:$0xff]
    %v971 = vld [vmem:[%s6 + $0x98] sm:$0xff]
    %v972 = vld [vmem:[%s6 + $0xa0] sm:$0xff]
    %v973 = vld [vmem:[%s6 + $0xa8] sm:$0xff]
    %v974 = vld [vmem:[%s6 + $0xb0] sm:$0xff]
    %v975 = vld [vmem:[%s6 + $0xb8] sm:$0xff]
    %v976 = vld [vmem:[%s6 + $0xc0] sm:$0xff]
    %v977 = vld [vmem:[%s6 + $0xc8] sm:$0xff]
    %v978 = vld [vmem:[%s6 + $0xd0] sm:$0xff]
    %v979 = vld [vmem:[%s6 + $0xd8] sm:$0xff]
    %1008 = vrot.lane.b32.xlu0 %v952, 65
    %v1009 = vpop.permute.xlu0 %1008
    %1010 = vrot.lane.b32.xlu0 %v953, 65
    %v1011 = vpop.permute.xlu0 %1010
    %1012 = vrot.lane.b32.xlu0 %v954, 65
    %v1013 = vpop.permute.xlu0 %1012
    %1014 = vrot.lane.b32.xlu0 %v955, 65
    %v1015 = vpop.permute.xlu0 %1014
    %1016 = vrot.lane.b32.xlu0 %v956, 65
    %v1017 = vpop.permute.xlu0 %1016
    %1018 = vrot.lane.b32.xlu0 %v957, 65
    %v1019 = vpop.permute.xlu0 %1018
    %1020 = vrot.lane.b32.xlu0 %v958, 65
    %v1021 = vpop.permute.xlu0 %1020
    %1022 = vrot.lane.b32.xlu0 %v959, 65
    %v1023 = vpop.permute.xlu0 %1022
    %1024 = vrot.lane.b32.xlu0 %v960, 65
    %v1025 = vpop.permute.xlu0 %1024
    %1026 = vrot.lane.b32.xlu0 %v961, 65
    %v1027 = vpop.permute.xlu0 %1026
    %1028 = vrot.lane.b32.xlu0 %v962, 65
    %v1029 = vpop.permute.xlu0 %1028
    %1030 = vrot.lane.b32.xlu0 %v963, 65
    %v1031 = vpop.permute.xlu0 %1030
    %1032 = vrot.lane.b32.xlu0 %v964, 65
    %v1033 = vpop.permute.xlu0 %1032
    %1034 = vrot.lane.b32.xlu0 %v965, 65
    %v1035 = vpop.permute.xlu0 %1034
    %1036 = vrot.lane.b32.xlu0 %v966, 65
    %v1037 = vpop.permute.xlu0 %1036
    %1038 = vrot.lane.b32.xlu0 %v967, 65
    %v1039 = vpop.permute.xlu0 %1038
    %1040 = vrot.lane.b32.xlu0 %v968, 65
    %v1041 = vpop.permute.xlu0 %1040
    %1042 = vrot.lane.b32.xlu0 %v969, 65
    %v1043 = vpop.permute.xlu0 %1042
    %1044 = vrot.lane.b32.xlu0 %v970, 65
    %v1045 = vpop.permute.xlu0 %1044
    %1046 = vrot.lane.b32.xlu0 %v971, 65
    %v1047 = vpop.permute.xlu0 %1046
    %1048 = vrot.lane.b32.xlu0 %v972, 65
    %v1049 = vpop.permute.xlu0 %1048
    %1050 = vrot.lane.b32.xlu0 %v973, 65
    %v1051 = vpop.permute.xlu0 %1050
    %1052 = vrot.lane.b32.xlu0 %v974, 65
    %v1053 = vpop.permute.xlu0 %1052
    %1054 = vrot.lane.b32.xlu0 %v975, 65
    %v1055 = vpop.permute.xlu0 %1054
    %1056 = vrot.lane.b32.xlu0 %v976, 65
    %v1057 = vpop.permute.xlu0 %1056
    %1058 = vrot.lane.b32.xlu0 %v977, 65
    %v1059 = vpop.permute.xlu0 %1058
    %1060 = vrot.lane.b32.xlu0 %v978, 65
    %v1061 = vpop.permute.xlu0 %1060
    %1062 = vrot.lane.b32.xlu0 %v979, 65
    %v1063 = vpop.permute.xlu0 %1062
    %vm1092 = vcmask 540168
    %1093 = vst.msk [vmem:[#allocation2] sm:$0xff] %vm1092, %v1009
    %1094 = vst.msk [vmem:[#allocation2 + $0x8] sm:$0xff] %vm1092, %v1011
    %1095 = vst.msk [vmem:[#allocation2 + $0x10] sm:$0xff] %vm1092, %v1013
    %1096 = vst.msk [vmem:[#allocation2 + $0x18] sm:$0xff] %vm1092, %v1015
    %1097 = vst.msk [vmem:[#allocation2 + $0x20] sm:$0xff] %vm1092, %v1017
    %1098 = vst.msk [vmem:[#allocation2 + $0x28] sm:$0xff] %vm1092, %v1019
    %1099 = vst.msk [vmem:[#allocation2 + $0x30] sm:$0xff] %vm1092, %v1021
    %1100 = vst.msk [vmem:[#allocation2 + $0x38] sm:$0xff] %vm1092, %v1023
    %1101 = vst.msk [vmem:[#allocation2 + $0x40] sm:$0xff] %vm1092, %v1025
    %1102 = vst.msk [vmem:[#allocation2 + $0x48] sm:$0xff] %vm1092, %v1027
    %1103 = vst.msk [vmem:[#allocation2 + $0x50] sm:$0xff] %vm1092, %v1029
    %1104 = vst.msk [vmem:[#allocation2 + $0x58] sm:$0xff] %vm1092, %v1031
    %1105 = vst.msk [vmem:[#allocation2 + $0x60] sm:$0xff] %vm1092, %v1033
    %1106 = vst.msk [vmem:[#allocation2 + $0x68] sm:$0xff] %vm1092, %v1035
    %1107 = vst.msk [vmem:[#allocation2 + $0x70] sm:$0xff] %vm1092, %v1037
    %1108 = vst.msk [vmem:[#allocation2 + $0x78] sm:$0xff] %vm1092, %v1039
    %1109 = vst.msk [vmem:[#allocation2 + $0x80] sm:$0xff] %vm1092, %v1041
    %1110 = vst.msk [vmem:[#allocation2 + $0x88] sm:$0xff] %vm1092, %v1043
    %1111 = vst.msk [vmem:[#allocation2 + $0x90] sm:$0xff] %vm1092, %v1045
    %1112 = vst.msk [vmem:[#allocation2 + $0x98] sm:$0xff] %vm1092, %v1047
    %1113 = vst.msk [vmem:[#allocation2 + $0xa0] sm:$0xff] %vm1092, %v1049
    %1114 = vst.msk [vmem:[#allocation2 + $0xa8] sm:$0xff] %vm1092, %v1051
    %1115 = vst.msk [vmem:[#allocation2 + $0xb0] sm:$0xff] %vm1092, %v1053
    %1116 = vst.msk [vmem:[#allocation2 + $0xb8] sm:$0xff] %vm1092, %v1055
    %1117 = vst.msk [vmem:[#allocation2 + $0xc0] sm:$0xff] %vm1092, %v1057
    %1118 = vst.msk [vmem:[#allocation2 + $0xc8] sm:$0xff] %vm1092, %v1059
    %1119 = vst.msk [vmem:[#allocation2 + $0xd0] sm:$0xff] %vm1092, %v1061
    %1120 = vst.msk [vmem:[#allocation2 + $0xd8] sm:$0xff] %vm1092, %v1063
    %v1122 = vsel %vm212, %v80, 0
    %v1125 = vsel %vm212, %v81, 0
    %v1128 = vsel %vm212, %v82, 0
    %v1131 = vsel %vm212, %v83, 0
    %v1134 = vsel %vm212, %v84, 0
    %v1137 = vsel %vm212, %v85, 0
    %v1140 = vsel %vm212, %v86, 0
    %v1143 = vsel %vm212, %v87, 0
    %v1146 = vsel %vm212, %v88, 0
    %v1149 = vsel %vm212, %v89, 0
    %v1152 = vsel %vm212, %v90, 0
    %v1155 = vsel %vm212, %v91, 0
    %v1158 = vsel %vm212, %v92, 0
    %v1161 = vsel %vm212, %v93, 0
    %v1164 = vsel %vm212, %v94, 0
    %v1167 = vsel %vm212, %v95, 0
    %v1170 = vsel %vm212, %v96, 0
    %v1173 = vsel %vm212, %v97, 0
    %v1176 = vsel %vm212, %v98, 0
    %v1179 = vsel %vm212, %v99, 0
    %v1182 = vsel %vm212, %v100, 0
    %v1185 = vsel %vm212, %v101, 0
    %v1188 = vsel %vm212, %v102, 0
    %v1191 = vsel %vm212, %v103, 0
    %v1194 = vsel %vm212, %v104, 0
    %v1197 = vsel %vm212, %v105, 0
    %v1200 = vsel %vm212, %v106, 0
    %v1203 = vsel %vm212, %v107, 0
    %1205 = vmatprep.subr.mxu0 0.0
    %1206 = vmatpush1.msra.mxu0 %v144
    %1207 = vmatprep.subr.mxu0 0.0
    %1208 = vmatpush1.msra.mxu0 %v145
    %1209 = vmatprep.subr.mxu0 0.0
    %1210 = vmatpush1.msra.mxu0 %v146
    %1211 = vmatprep.subr.mxu0 0.0
    %1212 = vmatpush1.msra.mxu0 %v147
    %1213 = vmatprep.subr.mxu0 0.0
    %1214 = vmatpush1.msra.mxu0 0.0
    %1215 = vmatprep.subr.mxu0 0.0
    %1216 = vmatpush1.msra.mxu0 0.0
    %1217 = vmatprep.subr.mxu0 0.0
    %1218 = vmatpush1.msra.mxu0 0.0
    %1219 = vmatprep.subr.mxu0 0.0
    %1220 = vmatpush1.msra.mxu0 0.0
    %1221 = vmatprep.subr.mxu0 0.0
    %1222 = vmatpush1.msra.mxu0 0.0
    %1223 = vmatprep.subr.mxu0 0.0
    %1224 = vmatpush1.msra.mxu0 0.0
    %1225 = vmatprep.subr.mxu0 0.0
    %1226 = vmatpush1.msra.mxu0 0.0
    %1227 = vmatprep.subr.mxu0 0.0
    %1228 = vmatpush1.msra.mxu0 0.0
    %1229 = vmatprep.subr.mxu0 0.0
    %1230 = vmatpush1.msra.mxu0 0.0
    %1231 = vmatprep.subr.mxu0 0.0
    %1232 = vmatpush1.msra.mxu0 0.0
    %1233 = vmatprep.subr.mxu0 0.0
    %1234 = vmatpush1.msra.mxu0 0.0
    %1235 = vmatprep.subr.mxu0 0.0
    %1236 = vmatpush1.msra.mxu0 0.0
    %1237 = vmatprep.subr.mxu0 0.0
    %1238 = vmatpush1.msra.mxu0 0.0
    %1239 = vmatprep.subr.mxu0 0.0
    %1240 = vmatpush1.msra.mxu0 0.0
    %1241 = vmatprep.subr.mxu0 0.0
    %1242 = vmatpush1.msra.mxu0 0.0
    %1243 = vmatprep.subr.mxu0 0.0
    %1244 = vmatpush1.msra.mxu0 0.0
    %1245 = vmatprep.subr.mxu0 0.0
    %1246 = vmatpush1.msra.mxu0 0.0
    %1247 = vmatprep.subr.mxu0 0.0
    %1248 = vmatpush1.msra.mxu0 0.0
    %1249 = vmatprep.subr.mxu0 0.0
    %1250 = vmatpush1.msra.mxu0 0.0
    %1251 = vmatprep.subr.mxu0 0.0
    %1252 = vmatpush1.msra.mxu0 0.0
    %1253 = vmatprep.subr.mxu0 0.0
    %1254 = vmatpush1.msra.mxu0 0.0
    %1255 = vmatprep.subr.mxu0 0.0
    %1256 = vmatpush1.msra.mxu0 0.0
    %1257 = vmatprep.subr.mxu0 0.0
    %1258 = vmatpush1.msra.mxu0 0.0
    %1259 = vmatprep.subr.mxu0 0.0
    %1260 = vmatpush1.msra.mxu0 0.0
    %1261 = vmatprep.subr.mxu0 0.0
    %1262 = vmatpush1.msra.mxu0 0.0
    %1263 = vmatprep.subr.mxu0 0.0
    %1264 = vmatpush1.msra.mxu0 0.0
    %1265 = vmatprep.subr.mxu0 0.0
    %1266 = vmatpush1.msra.mxu0 0.0
    %1267 = vmatprep.subr.mxu0 0.0
    %1268 = vmatpush1.msra.mxu0 0.0
    %1269 = vmatprep.mubr.f32.mxu0 0.0
    %1270 = vmatmul.mubr.f32.gmra.mrb[0].mxu0 %v1122
    %v1271 = vpop.f32.mrb[0].mxu0
    %v1272 = vadd.f32 0.0, %v1271
    %v1273 = vpop.f32.mrb[0].mxu0
    %1274 = vmatprep.mubr.f32.mxu0 0.0
    %1275 = vmatmul.mubr.f32.gmra.mrb[0].mxu0 %v1125
    %v1276 = vpop.f32.mrb[0].mxu0
    %v1277 = vadd.f32 0.0, %v1276
    %v1278 = vpop.f32.mrb[0].mxu0
    %1279 = vmatprep.mubr.f32.mxu0 0.0
    %1280 = vmatmul.mubr.f32.gmra.mrb[0].mxu0 %v1128
    %v1281 = vpop.f32.mrb[0].mxu0
    %v1282 = vadd.f32 0.0, %v1281
    %v1283 = vpop.f32.mrb[0].mxu0
    %1284 = vmatprep.mubr.f32.mxu0 0.0
    %1285 = vmatmul.mubr.f32.gmra.mrb[0].mxu0 %v1131
    %v1286 = vpop.f32.mrb[0].mxu0
    %v1287 = vadd.f32 0.0, %v1286
    %v1288 = vpop.f32.mrb[0].mxu0
    %1289 = vmatprep.mubr.f32.mxu0 0.0
    %1290 = vmatmul.mubr.f32.gmra.mrb[0].mxu0 %v1134
    %v1291 = vpop.f32.mrb[0].mxu0
    %v1292 = vadd.f32 0.0, %v1291
    %v1293 = vpop.f32.mrb[0].mxu0
    %1294 = vmatprep.mubr.f32.mxu0 0.0
    %1295 = vmatmul.mubr.f32.gmra.mrb[0].mxu0 %v1137
    %v1296 = vpop.f32.mrb[0].mxu0
    %v1297 = vadd.f32 0.0, %v1296
    %v1298 = vpop.f32.mrb[0].mxu0
    %1299 = vmatprep.mubr.f32.mxu0 0.0
    %1300 = vmatmul.mubr.f32.gmra.mrb[0].mxu0 %v1140
    %v1301 = vpop.f32.mrb[0].mxu0
    %v1302 = vadd.f32 0.0, %v1301
    %v1303 = vpop.f32.mrb[0].mxu0
    %1304 = vmatprep.mubr.f32.mxu0 0.0
    %1305 = vmatmul.mubr.f32.gmra.mrb[0].mxu0 %v1143
    %v1306 = vpop.f32.mrb[0].mxu0
    %v1307 = vadd.f32 0.0, %v1306
    %v1308 = vpop.f32.mrb[0].mxu0
    %1309 = vmatprep.mubr.f32.mxu0 0.0
    %1310 = vmatmul.mubr.f32.gmra.mrb[0].mxu0 %v1146
    %v1311 = vpop.f32.mrb[0].mxu0
    %v1312 = vadd.f32 0.0, %v1311
    %v1313 = vpop.f32.mrb[0].mxu0
    %1314 = vmatprep.mubr.f32.mxu0 0.0
    %1315 = vmatmul.mubr.f32.gmra.mrb[0].mxu0 %v1149
    %v1316 = vpop.f32.mrb[0].mxu0
    %v1317 = vadd.f32 0.0, %v1316
    %v1318 = vpop.f32.mrb[0].mxu0
    %1319 = vmatprep.mubr.f32.mxu0 0.0
    %1320 = vmatmul.mubr.f32.gmra.mrb[0].mxu0 %v1152
    %v1321 = vpop.f32.mrb[0].mxu0
    %v1322 = vadd.f32 0.0, %v1321
    %v1323 = vpop.f32.mrb[0].mxu0
    %1324 = vmatprep.mubr.f32.mxu0 0.0
    %1325 = vmatmul.mubr.f32.gmra.mrb[0].mxu0 %v1155
    %v1326 = vpop.f32.mrb[0].mxu0
    %v1327 = vadd.f32 0.0, %v1326
    %v1328 = vpop.f32.mrb[0].mxu0
    %1329 = vmatprep.mubr.f32.mxu0 0.0
    %1330 = vmatmul.mubr.f32.gmra.mrb[0].mxu0 %v1158
    %v1331 = vpop.f32.mrb[0].mxu0
    %v1332 = vadd.f32 0.0, %v1331
    %v1333 = vpop.f32.mrb[0].mxu0
    %1334 = vmatprep.mubr.f32.mxu0 0.0
    %1335 = vmatmul.mubr.f32.gmra.mrb[0].mxu0 %v1161
    %v1336 = vpop.f32.mrb[0].mxu0
    %v1337 = vadd.f32 0.0, %v1336
    %v1338 = vpop.f32.mrb[0].mxu0
    %1339 = vmatprep.mubr.f32.mxu0 0.0
    %1340 = vmatmul.mubr.f32.gmra.mrb[0].mxu0 %v1164
    %v1341 = vpop.f32.mrb[0].mxu0
    %v1342 = vadd.f32 0.0, %v1341
    %v1343 = vpop.f32.mrb[0].mxu0
    %1344 = vmatprep.mubr.f32.mxu0 0.0
    %1345 = vmatmul.mubr.f32.gmra.mrb[0].mxu0 %v1167
    %v1346 = vpop.f32.mrb[0].mxu0
    %v1347 = vadd.f32 0.0, %v1346
    %v1348 = vpop.f32.mrb[0].mxu0
    %1349 = vmatprep.mubr.f32.mxu0 0.0
    %1350 = vmatmul.mubr.f32.gmra.mrb[0].mxu0 %v1170
    %v1351 = vpop.f32.mrb[0].mxu0
    %v1352 = vadd.f32 0.0, %v1351
    %v1353 = vpop.f32.mrb[0].mxu0
    %1354 = vmatprep.mubr.f32.mxu0 0.0
    %1355 = vmatmul.mubr.f32.gmra.mrb[0].mxu0 %v1173
    %v1356 = vpop.f32.mrb[0].mxu0
    %v1357 = vadd.f32 0.0, %v1356
    %v1358 = vpop.f32.mrb[0].mxu0
    %1359 = vmatprep.mubr.f32.mxu0 0.0
    %1360 = vmatmul.mubr.f32.gmra.mrb[0].mxu0 %v1176
    %v1361 = vpop.f32.mrb[0].mxu0
    %v1362 = vadd.f32 0.0, %v1361
    %v1363 = vpop.f32.mrb[0].mxu0
    %1364 = vmatprep.mubr.f32.mxu0 0.0
    %1365 = vmatmul.mubr.f32.gmra.mrb[0].mxu0 %v1179
    %v1366 = vpop.f32.mrb[0].mxu0
    %v1367 = vadd.f32 0.0, %v1366
    %v1368 = vpop.f32.mrb[0].mxu0
    %1369 = vmatprep.mubr.f32.mxu0 0.0
    %1370 = vmatmul.mubr.f32.gmra.mrb[0].mxu0 %v1182
    %v1371 = vpop.f32.mrb[0].mxu0
    %v1372 = vadd.f32 0.0, %v1371
    %v1373 = vpop.f32.mrb[0].mxu0
    %1374 = vmatprep.mubr.f32.mxu0 0.0
    %1375 = vmatmul.mubr.f32.gmra.mrb[0].mxu0 %v1185
    %v1376 = vpop.f32.mrb[0].mxu0
    %v1377 = vadd.f32 0.0, %v1376
    %v1378 = vpop.f32.mrb[0].mxu0
    %1379 = vmatprep.mubr.f32.mxu0 0.0
    %1380 = vmatmul.mubr.f32.gmra.mrb[0].mxu0 %v1188
    %v1381 = vpop.f32.mrb[0].mxu0
    %v1382 = vadd.f32 0.0, %v1381
    %v1383 = vpop.f32.mrb[0].mxu0
    %1384 = vmatprep.mubr.f32.mxu0 0.0
    %1385 = vmatmul.mubr.f32.gmra.mrb[0].mxu0 %v1191
    %v1386 = vpop.f32.mrb[0].mxu0
    %v1387 = vadd.f32 0.0, %v1386
    %v1388 = vpop.f32.mrb[0].mxu0
    %1389 = vmatprep.mubr.f32.mxu0 0.0
    %1390 = vmatmul.mubr.f32.gmra.mrb[0].mxu0 %v1194
    %v1391 = vpop.f32.mrb[0].mxu0
    %v1392 = vadd.f32 0.0, %v1391
    %v1393 = vpop.f32.mrb[0].mxu0
    %1394 = vmatprep.mubr.f32.mxu0 0.0
    %1395 = vmatmul.mubr.f32.gmra.mrb[0].mxu0 %v1197
    %v1396 = vpop.f32.mrb[0].mxu0
    %v1397 = vadd.f32 0.0, %v1396
    %v1398 = vpop.f32.mrb[0].mxu0
    %1399 = vmatprep.mubr.f32.mxu0 0.0
    %1400 = vmatmul.mubr.f32.gmra.mrb[0].mxu0 %v1200
    %v1401 = vpop.f32.mrb[0].mxu0
    %v1402 = vadd.f32 0.0, %v1401
    %v1403 = vpop.f32.mrb[0].mxu0
    %1404 = vmatprep.mubr.f32.mxu0 0.0
    %1405 = vmatmul.mubr.f32.gmra.mrb[0].mxu0 %v1203
    %v1406 = vpop.f32.mrb[0].mxu0
    %v1407 = vadd.f32 0.0, %v1406
    %v1408 = vpop.f32.mrb[0].mxu0
    %1409 = vdwg.mxu0
    %1410 = vst.msk [vmem:[#allocation2] sm:$0xff] %vm212, %v1272
    %1411 = vst.msk [vmem:[#allocation2 + $0x8] sm:$0xff] %vm212, %v1277
    %1412 = vst.msk [vmem:[#allocation2 + $0x10] sm:$0xff] %vm212, %v1282
    %1413 = vst.msk [vmem:[#allocation2 + $0x18] sm:$0xff] %vm212, %v1287
    %1414 = vst.msk [vmem:[#allocation2 + $0x20] sm:$0xff] %vm212, %v1292
    %1415 = vst.msk [vmem:[#allocation2 + $0x28] sm:$0xff] %vm212, %v1297
    %1416 = vst.msk [vmem:[#allocation2 + $0x30] sm:$0xff] %vm212, %v1302
    %1417 = vst.msk [vmem:[#allocation2 + $0x38] sm:$0xff] %vm212, %v1307
    %1418 = vst.msk [vmem:[#allocation2 + $0x40] sm:$0xff] %vm212, %v1312
    %1419 = vst.msk [vmem:[#allocation2 + $0x48] sm:$0xff] %vm212, %v1317
    %1420 = vst.msk [vmem:[#allocation2 + $0x50] sm:$0xff] %vm212, %v1322
    %1421 = vst.msk [vmem:[#allocation2 + $0x58] sm:$0xff] %vm212, %v1327
    %1422 = vst.msk [vmem:[#allocation2 + $0x60] sm:$0xff] %vm212, %v1332
    %1423 = vst.msk [vmem:[#allocation2 + $0x68] sm:$0xff] %vm212, %v1337
    %1424 = vst.msk [vmem:[#allocation2 + $0x70] sm:$0xff] %vm212, %v1342
    %1425 = vst.msk [vmem:[#allocation2 + $0x78] sm:$0xff] %vm212, %v1347
    %1426 = vst.msk [vmem:[#allocation2 + $0x80] sm:$0xff] %vm212, %v1352
    %1427 = vst.msk [vmem:[#allocation2 + $0x88] sm:$0xff] %vm212, %v1357
    %1428 = vst.msk [vmem:[#allocation2 + $0x90] sm:$0xff] %vm212, %v1362
    %1429 = vst.msk [vmem:[#allocation2 + $0x98] sm:$0xff] %vm212, %v1367
    %1430 = vst.msk [vmem:[#allocation2 + $0xa0] sm:$0xff] %vm212, %v1372
    %1431 = vst.msk [vmem:[#allocation2 + $0xa8] sm:$0xff] %vm212, %v1377
    %1432 = vst.msk [vmem:[#allocation2 + $0xb0] sm:$0xff] %vm212, %v1382
    %1433 = vst.msk [vmem:[#allocation2 + $0xb8] sm:$0xff] %vm212, %v1387
    %1434 = vst.msk [vmem:[#allocation2 + $0xc0] sm:$0xff] %vm212, %v1392
    %1435 = vst.msk [vmem:[#allocation2 + $0xc8] sm:$0xff] %vm212, %v1397
    %1436 = vst.msk [vmem:[#allocation2 + $0xd0] sm:$0xff] %vm212, %v1402
    %1437 = vst.msk [vmem:[#allocation2 + $0xd8] sm:$0xff] %vm212, %v1407
    %v1439 = vsel %vm212, %v108, 0
    %v1442 = vsel %vm212, %v109, 0
    %v1445 = vsel %vm212, %v110, 0
    %v1448 = vsel %vm212, %v111, 0
    %v1451 = vsel %vm212, %v112, 0
    %v1454 = vsel %vm212, %v113, 0
    %v1457 = vsel %vm212, %v114, 0
    %v1460 = vsel %vm212, %v115, 0
    %v1463 = vsel %vm212, %v116, 0
    %v1466 = vsel %vm212, %v117, 0
    %v1469 = vsel %vm212, %v118, 0
    %v1472 = vsel %vm212, %v119, 0
    %v1475 = vsel %vm212, %v120, 0
    %v1478 = vsel %vm212, %v121, 0
    %v1481 = vsel %vm212, %v122, 0
    %v1484 = vsel %vm212, %v123, 0
    %v1487 = vsel %vm212, %v124, 0
    %v1490 = vsel %vm212, %v125, 0
    %v1493 = vsel %vm212, %v126, 0
    %v1496 = vsel %vm212, %v127, 0
    %v1499 = vsel %vm212, %v128, 0
    %v1502 = vsel %vm212, %v129, 0
    %v1505 = vsel %vm212, %v130, 0
    %v1508 = vsel %vm212, %v131, 0
    %v1511 = vsel %vm212, %v132, 0
    %v1514 = vsel %vm212, %v133, 0
    %v1517 = vsel %vm212, %v134, 0
    %v1520 = vsel %vm212, %v135, 0
    %1522 = vmatprep.subr.mxu0 0.0
    %1523 = vmatpush1.msra.mxu0 %v144
    %1524 = vmatprep.subr.mxu0 0.0
    %1525 = vmatpush1.msra.mxu0 %v145
    %1526 = vmatprep.subr.mxu0 0.0
    %1527 = vmatpush1.msra.mxu0 %v146
    %1528 = vmatprep.subr.mxu0 0.0
    %1529 = vmatpush1.msra.mxu0 %v147
    %1530 = vmatprep.subr.mxu0 0.0
    %1531 = vmatpush1.msra.mxu0 0.0
    %1532 = vmatprep.subr.mxu0 0.0
    %1533 = vmatpush1.msra.mxu0 0.0
    %1534 = vmatprep.subr.mxu0 0.0
    %1535 = vmatpush1.msra.mxu0 0.0
    %1536 = vmatprep.subr.mxu0 0.0
    %1537 = vmatpush1.msra.mxu0 0.0
    %1538 = vmatprep.subr.mxu0 0.0
    %1539 = vmatpush1.msra.mxu0 0.0
    %1540 = vmatprep.subr.mxu0 0.0
    %1541 = vmatpush1.msra.mxu0 0.0
    %1542 = vmatprep.subr.mxu0 0.0
    %1543 = vmatpush1.msra.mxu0 0.0
    %1544 = vmatprep.subr.mxu0 0.0
    %1545 = vmatpush1.msra.mxu0 0.0
    %1546 = vmatprep.subr.mxu0 0.0
    %1547 = vmatpush1.msra.mxu0 0.0
    %1548 = vmatprep.subr.mxu0 0.0
    %1549 = vmatpush1.msra.mxu0 0.0
    %1550 = vmatprep.subr.mxu0 0.0
    %1551 = vmatpush1.msra.mxu0 0.0
    %1552 = vmatprep.subr.mxu0 0.0
    %1553 = vmatpush1.msra.mxu0 0.0
    %1554 = vmatprep.subr.mxu0 0.0
    %1555 = vmatpush1.msra.mxu0 0.0
    %1556 = vmatprep.subr.mxu0 0.0
    %1557 = vmatpush1.msra.mxu0 0.0
    %1558 = vmatprep.subr.mxu0 0.0
    %1559 = vmatpush1.msra.mxu0 0.0
    %1560 = vmatprep.subr.mxu0 0.0
    %1561 = vmatpush1.msra.mxu0 0.0
    %1562 = vmatprep.subr.mxu0 0.0
    %1563 = vmatpush1.msra.mxu0 0.0
    %1564 = vmatprep.subr.mxu0 0.0
    %1565 = vmatpush1.msra.mxu0 0.0
    %1566 = vmatprep.subr.mxu0 0.0
    %1567 = vmatpush1.msra.mxu0 0.0
    %1568 = vmatprep.subr.mxu0 0.0
    %1569 = vmatpush1.msra.mxu0 0.0
    %1570 = vmatprep.subr.mxu0 0.0
    %1571 = vmatpush1.msra.mxu0 0.0
    %1572 = vmatprep.subr.mxu0 0.0
    %1573 = vmatpush1.msra.mxu0 0.0
    %1574 = vmatprep.subr.mxu0 0.0
    %1575 = vmatpush1.msra.mxu0 0.0
    %1576 = vmatprep.subr.mxu0 0.0
    %1577 = vmatpush1.msra.mxu0 0.0
    %1578 = vmatprep.subr.mxu0 0.0
    %1579 = vmatpush1.msra.mxu0 0.0
    %1580 = vmatprep.subr.mxu0 0.0
    %1581 = vmatpush1.msra.mxu0 0.0
    %1582 = vmatprep.subr.mxu0 0.0
    %1583 = vmatpush1.msra.mxu0 0.0
    %1584 = vmatprep.subr.mxu0 0.0
    %1585 = vmatpush1.msra.mxu0 0.0
    %1586 = vmatprep.mubr.f32.mxu0 0.0
    %1587 = vmatmul.mubr.f32.gmra.mrb[0].mxu0 %v1439
    %v1588 = vpop.f32.mrb[0].mxu0
    %v1589 = vadd.f32 0.0, %v1588
    %v1590 = vpop.f32.mrb[0].mxu0
    %1591 = vmatprep.mubr.f32.mxu0 0.0
    %1592 = vmatmul.mubr.f32.gmra.mrb[0].mxu0 %v1442
    %v1593 = vpop.f32.mrb[0].mxu0
    %v1594 = vadd.f32 0.0, %v1593
    %v1595 = vpop.f32.mrb[0].mxu0
    %1596 = vmatprep.mubr.f32.mxu0 0.0
    %1597 = vmatmul.mubr.f32.gmra.mrb[0].mxu0 %v1445
    %v1598 = vpop.f32.mrb[0].mxu0
    %v1599 = vadd.f32 0.0, %v1598
    %v1600 = vpop.f32.mrb[0].mxu0
    %1601 = vmatprep.mubr.f32.mxu0 0.0
    %1602 = vmatmul.mubr.f32.gmra.mrb[0].mxu0 %v1448
    %v1603 = vpop.f32.mrb[0].mxu0
    %v1604 = vadd.f32 0.0, %v1603
    %v1605 = vpop.f32.mrb[0].mxu0
    %1606 = vmatprep.mubr.f32.mxu0 0.0
    %1607 = vmatmul.mubr.f32.gmra.mrb[0].mxu0 %v1451
    %v1608 = vpop.f32.mrb[0].mxu0
    %v1609 = vadd.f32 0.0, %v1608
    %v1610 = vpop.f32.mrb[0].mxu0
    %1611 = vmatprep.mubr.f32.mxu0 0.0
    %1612 = vmatmul.mubr.f32.gmra.mrb[0].mxu0 %v1454
    %v1613 = vpop.f32.mrb[0].mxu0
    %v1614 = vadd.f32 0.0, %v1613
    %v1615 = vpop.f32.mrb[0].mxu0
    %1616 = vmatprep.mubr.f32.mxu0 0.0
    %1617 = vmatmul.mubr.f32.gmra.mrb[0].mxu0 %v1457
    %v1618 = vpop.f32.mrb[0].mxu0
    %v1619 = vadd.f32 0.0, %v1618
    %v1620 = vpop.f32.mrb[0].mxu0
    %1621 = vmatprep.mubr.f32.mxu0 0.0
    %1622 = vmatmul.mubr.f32.gmra.mrb[0].mxu0 %v1460
    %v1623 = vpop.f32.mrb[0].mxu0
    %v1624 = vadd.f32 0.0, %v1623
    %v1625 = vpop.f32.mrb[0].mxu0
    %1626 = vmatprep.mubr.f32.mxu0 0.0
    %1627 = vmatmul.mubr.f32.gmra.mrb[0].mxu0 %v1463
    %v1628 = vpop.f32.mrb[0].mxu0
    %v1629 = vadd.f32 0.0, %v1628
    %v1630 = vpop.f32.mrb[0].mxu0
    %1631 = vmatprep.mubr.f32.mxu0 0.0
    %1632 = vmatmul.mubr.f32.gmra.mrb[0].mxu0 %v1466
    %v1633 = vpop.f32.mrb[0].mxu0
    %v1634 = vadd.f32 0.0, %v1633
    %v1635 = vpop.f32.mrb[0].mxu0
    %1636 = vmatprep.mubr.f32.mxu0 0.0
    %1637 = vmatmul.mubr.f32.gmra.mrb[0].mxu0 %v1469
    %v1638 = vpop.f32.mrb[0].mxu0
    %v1639 = vadd.f32 0.0, %v1638
    %v1640 = vpop.f32.mrb[0].mxu0
    %1641 = vmatprep.mubr.f32.mxu0 0.0
    %1642 = vmatmul.mubr.f32.gmra.mrb[0].mxu0 %v1472
    %v1643 = vpop.f32.mrb[0].mxu0
    %v1644 = vadd.f32 0.0, %v1643
    %v1645 = vpop.f32.mrb[0].mxu0
    %1646 = vmatprep.mubr.f32.mxu0 0.0
    %1647 = vmatmul.mubr.f32.gmra.mrb[0].mxu0 %v1475
    %v1648 = vpop.f32.mrb[0].mxu0
    %v1649 = vadd.f32 0.0, %v1648
    %v1650 = vpop.f32.mrb[0].mxu0
    %1651 = vmatprep.mubr.f32.mxu0 0.0
    %1652 = vmatmul.mubr.f32.gmra.mrb[0].mxu0 %v1478
    %v1653 = vpop.f32.mrb[0].mxu0
    %v1654 = vadd.f32 0.0, %v1653
    %v1655 = vpop.f32.mrb[0].mxu0
    %1656 = vmatprep.mubr.f32.mxu0 0.0
    %1657 = vmatmul.mubr.f32.gmra.mrb[0].mxu0 %v1481
    %v1658 = vpop.f32.mrb[0].mxu0
    %v1659 = vadd.f32 0.0, %v1658
    %v1660 = vpop.f32.mrb[0].mxu0
    %1661 = vmatprep.mubr.f32.mxu0 0.0
    %1662 = vmatmul.mubr.f32.gmra.mrb[0].mxu0 %v1484
    %v1663 = vpop.f32.mrb[0].mxu0
    %v1664 = vadd.f32 0.0, %v1663
    %v1665 = vpop.f32.mrb[0].mxu0
    %1666 = vmatprep.mubr.f32.mxu0 0.0
    %1667 = vmatmul.mubr.f32.gmra.mrb[0].mxu0 %v1487
    %v1668 = vpop.f32.mrb[0].mxu0
    %v1669 = vadd.f32 0.0, %v1668
    %v1670 = vpop.f32.mrb[0].mxu0
    %1671 = vmatprep.mubr.f32.mxu0 0.0
    %1672 = vmatmul.mubr.f32.gmra.mrb[0].mxu0 %v1490
    %v1673 = vpop.f32.mrb[0].mxu0
    %v1674 = vadd.f32 0.0, %v1673
    %v1675 = vpop.f32.mrb[0].mxu0
    %1676 = vmatprep.mubr.f32.mxu0 0.0
    %1677 = vmatmul.mubr.f32.gmra.mrb[0].mxu0 %v1493
    %v1678 = vpop.f32.mrb[0].mxu0
    %v1679 = vadd.f32 0.0, %v1678
    %v1680 = vpop.f32.mrb[0].mxu0
    %1681 = vmatprep.mubr.f32.mxu0 0.0
    %1682 = vmatmul.mubr.f32.gmra.mrb[0].mxu0 %v1496
    %v1683 = vpop.f32.mrb[0].mxu0
    %v1684 = vadd.f32 0.0, %v1683
    %v1685 = vpop.f32.mrb[0].mxu0
    %1686 = vmatprep.mubr.f32.mxu0 0.0
    %1687 = vmatmul.mubr.f32.gmra.mrb[0].mxu0 %v1499
    %v1688 = vpop.f32.mrb[0].mxu0
    %v1689 = vadd.f32 0.0, %v1688
    %v1690 = vpop.f32.mrb[0].mxu0
    %1691 = vmatprep.mubr.f32.mxu0 0.0
    %1692 = vmatmul.mubr.f32.gmra.mrb[0].mxu0 %v1502
    %v1693 = vpop.f32.mrb[0].mxu0
    %v1694 = vadd.f32 0.0, %v1693
    %v1695 = vpop.f32.mrb[0].mxu0
    %1696 = vmatprep.mubr.f32.mxu0 0.0
    %1697 = vmatmul.mubr.f32.gmra.mrb[0].mxu0 %v1505
    %v1698 = vpop.f32.mrb[0].mxu0
    %v1699 = vadd.f32 0.0, %v1698
    %v1700 = vpop.f32.mrb[0].mxu0
    %1701 = vmatprep.mubr.f32.mxu0 0.0
    %1702 = vmatmul.mubr.f32.gmra.mrb[0].mxu0 %v1508
    %v1703 = vpop.f32.mrb[0].mxu0
    %v1704 = vadd.f32 0.0, %v1703
    %v1705 = vpop.f32.mrb[0].mxu0
    %1706 = vmatprep.mubr.f32.mxu0 0.0
    %1707 = vmatmul.mubr.f32.gmra.mrb[0].mxu0 %v1511
    %v1708 = vpop.f32.mrb[0].mxu0
    %v1709 = vadd.f32 0.0, %v1708
    %v1710 = vpop.f32.mrb[0].mxu0
    %1711 = vmatprep.mubr.f32.mxu0 0.0
    %1712 = vmatmul.mubr.f32.gmra.mrb[0].mxu0 %v1514
    %v1713 = vpop.f32.mrb[0].mxu0
    %v1714 = vadd.f32 0.0, %v1713
    %v1715 = vpop.f32.mrb[0].mxu0
    %1716 = vmatprep.mubr.f32.mxu0 0.0
    %1717 = vmatmul.mubr.f32.gmra.mrb[0].mxu0 %v1517
    %v1718 = vpop.f32.mrb[0].mxu0
    %v1719 = vadd.f32 0.0, %v1718
    %v1720 = vpop.f32.mrb[0].mxu0
    %1721 = vmatprep.mubr.f32.mxu0 0.0
    %1722 = vmatmul.mubr.f32.gmra.mrb[0].mxu0 %v1520
    %v1723 = vpop.f32.mrb[0].mxu0
    %v1724 = vadd.f32 0.0, %v1723
    %v1725 = vpop.f32.mrb[0].mxu0
    %1726 = vdwg.mxu0
    %1755 = vrot.lane.b32.xlu0 %v1589, 32
    %v1756 = vpop.permute.xlu0 %1755
    %1757 = vrot.lane.b32.xlu0 %v1594, 32
    %v1758 = vpop.permute.xlu0 %1757
    %1759 = vrot.lane.b32.xlu0 %v1599, 32
    %v1760 = vpop.permute.xlu0 %1759
    %1761 = vrot.lane.b32.xlu0 %v1604, 32
    %v1762 = vpop.permute.xlu0 %1761
    %1763 = vrot.lane.b32.xlu0 %v1609, 32
    %v1764 = vpop.permute.xlu0 %1763
    %1765 = vrot.lane.b32.xlu0 %v1614, 32
    %v1766 = vpop.permute.xlu0 %1765
    %1767 = vrot.lane.b32.xlu0 %v1619, 32
    %v1768 = vpop.permute.xlu0 %1767
    %1769 = vrot.lane.b32.xlu0 %v1624, 32
    %v1770 = vpop.permute.xlu0 %1769
    %1771 = vrot.lane.b32.xlu0 %v1629, 32
    %v1772 = vpop.permute.xlu0 %1771
    %1773 = vrot.lane.b32.xlu0 %v1634, 32
    %v1774 = vpop.permute.xlu0 %1773
    %1775 = vrot.lane.b32.xlu0 %v1639, 32
    %v1776 = vpop.permute.xlu0 %1775
    %1777 = vrot.lane.b32.xlu0 %v1644, 32
    %v1778 = vpop.permute.xlu0 %1777
    %1779 = vrot.lane.b32.xlu0 %v1649, 32
    %v1780 = vpop.permute.xlu0 %1779
    %1781 = vrot.lane.b32.xlu0 %v1654, 32
    %v1782 = vpop.permute.xlu0 %1781
    %1783 = vrot.lane.b32.xlu0 %v1659, 32
    %v1784 = vpop.permute.xlu0 %1783
    %1785 = vrot.lane.b32.xlu0 %v1664, 32
    %v1786 = vpop.permute.xlu0 %1785
    %1787 = vrot.lane.b32.xlu0 %v1669, 32
    %v1788 = vpop.permute.xlu0 %1787
    %1789 = vrot.lane.b32.xlu0 %v1674, 32
    %v1790 = vpop.permute.xlu0 %1789
    %1791 = vrot.lane.b32.xlu0 %v1679, 32
    %v1792 = vpop.permute.xlu0 %1791
    %1793 = vrot.lane.b32.xlu0 %v1684, 32
    %v1794 = vpop.permute.xlu0 %1793
    %1795 = vrot.lane.b32.xlu0 %v1689, 32
    %v1796 = vpop.permute.xlu0 %1795
    %1797 = vrot.lane.b32.xlu0 %v1694, 32
    %v1798 = vpop.permute.xlu0 %1797
    %1799 = vrot.lane.b32.xlu0 %v1699, 32
    %v1800 = vpop.permute.xlu0 %1799
    %1801 = vrot.lane.b32.xlu0 %v1704, 32
    %v1802 = vpop.permute.xlu0 %1801
    %1803 = vrot.lane.b32.xlu0 %v1709, 32
    %v1804 = vpop.permute.xlu0 %1803
    %1805 = vrot.lane.b32.xlu0 %v1714, 32
    %v1806 = vpop.permute.xlu0 %1805
    %1807 = vrot.lane.b32.xlu0 %v1719, 32
    %v1808 = vpop.permute.xlu0 %1807
    %1809 = vrot.lane.b32.xlu0 %v1724, 32
    %v1810 = vpop.permute.xlu0 %1809
    %vm1839 = vcmask 523520
    %1840 = vst.msk [vmem:[#allocation2] sm:$0xff] %vm1839, %v1756
    %1841 = vst.msk [vmem:[#allocation2 + $0x8] sm:$0xff] %vm1839, %v1758
    %1842 = vst.msk [vmem:[#allocation2 + $0x10] sm:$0xff] %vm1839, %v1760
    %1843 = vst.msk [vmem:[#allocation2 + $0x18] sm:$0xff] %vm1839, %v1762
    %1844 = vst.msk [vmem:[#allocation2 + $0x20] sm:$0xff] %vm1839, %v1764
    %1845 = vst.msk [vmem:[#allocation2 + $0x28] sm:$0xff] %vm1839, %v1766
    %1846 = vst.msk [vmem:[#allocation2 + $0x30] sm:$0xff] %vm1839, %v1768
    %1847 = vst.msk [vmem:[#allocation2 + $0x38] sm:$0xff] %vm1839, %v1770
    %1848 = vst.msk [vmem:[#allocation2 + $0x40] sm:$0xff] %vm1839, %v1772
    %1849 = vst.msk [vmem:[#allocation2 + $0x48] sm:$0xff] %vm1839, %v1774
    %1850 = vst.msk [vmem:[#allocation2 + $0x50] sm:$0xff] %vm1839, %v1776
    %1851 = vst.msk [vmem:[#allocation2 + $0x58] sm:$0xff] %vm1839, %v1778
    %1852 = vst.msk [vmem:[#allocation2 + $0x60] sm:$0xff] %vm1839, %v1780
    %1853 = vst.msk [vmem:[#allocation2 + $0x68] sm:$0xff] %vm1839, %v1782
    %1854 = vst.msk [vmem:[#allocation2 + $0x70] sm:$0xff] %vm1839, %v1784
    %1855 = vst.msk [vmem:[#allocation2 + $0x78] sm:$0xff] %vm1839, %v1786
    %1856 = vst.msk [vmem:[#allocation2 + $0x80] sm:$0xff] %vm1839, %v1788
    %1857 = vst.msk [vmem:[#allocation2 + $0x88] sm:$0xff] %vm1839, %v1790
    %1858 = vst.msk [vmem:[#allocation2 + $0x90] sm:$0xff] %vm1839, %v1792
    %1859 = vst.msk [vmem:[#allocation2 + $0x98] sm:$0xff] %vm1839, %v1794
    %1860 = vst.msk [vmem:[#allocation2 + $0xa0] sm:$0xff] %vm1839, %v1796
    %1861 = vst.msk [vmem:[#allocation2 + $0xa8] sm:$0xff] %vm1839, %v1798
    %1862 = vst.msk [vmem:[#allocation2 + $0xb0] sm:$0xff] %vm1839, %v1800
    %1863 = vst.msk [vmem:[#allocation2 + $0xb8] sm:$0xff] %vm1839, %v1802
    %1864 = vst.msk [vmem:[#allocation2 + $0xc0] sm:$0xff] %vm1839, %v1804
    %1865 = vst.msk [vmem:[#allocation2 + $0xc8] sm:$0xff] %vm1839, %v1806
    %1866 = vst.msk [vmem:[#allocation2 + $0xd0] sm:$0xff] %vm1839, %v1808
    %1867 = vst.msk [vmem:[#allocation2 + $0xd8] sm:$0xff] %vm1839, %v1810
    %v1868 = vld [vmem:[#allocation2] sm:$0xff]
    %v1869 = vld [vmem:[#allocation2 + $0x8] sm:$0xff]
    %v1870 = vld [vmem:[#allocation2 + $0x10] sm:$0xff]
    %v1871 = vld [vmem:[#allocation2 + $0x18] sm:$0xff]
    %v1872 = vld [vmem:[#allocation2 + $0x20] sm:$0xff]
    %v1873 = vld [vmem:[#allocation2 + $0x28] sm:$0xff]
    %v1874 = vld [vmem:[#allocation2 + $0x30] sm:$0xff]
    %v1875 = vld [vmem:[#allocation2 + $0x38] sm:$0xff]
    %v1876 = vld [vmem:[#allocation2 + $0x40] sm:$0xff]
    %v1877 = vld [vmem:[#allocation2 + $0x48] sm:$0xff]
    %v1878 = vld [vmem:[#allocation2 + $0x50] sm:$0xff]
    %v1879 = vld [vmem:[#allocation2 + $0x58] sm:$0xff]
    %v1880 = vld [vmem:[#allocation2 + $0x60] sm:$0xff]
    %v1881 = vld [vmem:[#allocation2 + $0x68] sm:$0xff]
    %v1882 = vld [vmem:[#allocation2 + $0x70] sm:$0xff]
    %v1883 = vld [vmem:[#allocation2 + $0x78] sm:$0xff]
    %v1884 = vld [vmem:[#allocation2 + $0x80] sm:$0xff]
    %v1885 = vld [vmem:[#allocation2 + $0x88] sm:$0xff]
    %v1886 = vld [vmem:[#allocation2 + $0x90] sm:$0xff]
    %v1887 = vld [vmem:[#allocation2 + $0x98] sm:$0xff]
    %v1888 = vld [vmem:[#allocation2 + $0xa0] sm:$0xff]
    %v1889 = vld [vmem:[#allocation2 + $0xa8] sm:$0xff]
    %v1890 = vld [vmem:[#allocation2 + $0xb0] sm:$0xff]
    %v1891 = vld [vmem:[#allocation2 + $0xb8] sm:$0xff]
    %v1892 = vld [vmem:[#allocation2 + $0xc0] sm:$0xff]
    %v1893 = vld [vmem:[#allocation2 + $0xc8] sm:$0xff]
    %v1894 = vld [vmem:[#allocation2 + $0xd0] sm:$0xff]
    %v1895 = vld [vmem:[#allocation2 + $0xd8] sm:$0xff]
    %v1896 = vld [vmem:[%s9] sm:$0xff]
    %v1897 = vld [vmem:[%s9 + $0x8] sm:$0xff]
    %v1898 = vld [vmem:[%s9 + $0x10] sm:$0xff]
    %v1899 = vld [vmem:[%s9 + $0x18] sm:$0xff]
    %v1900 = vld [vmem:[%s9 + $0x20] sm:$0xff]
    %v1901 = vld [vmem:[%s9 + $0x28] sm:$0xff]
    %v1902 = vld [vmem:[%s9 + $0x30] sm:$0xff]
    %v1903 = vld [vmem:[%s9 + $0x38] sm:$0xff]
    %v1904 = vld [vmem:[%s9 + $0x40] sm:$0x3]
    %v1905 = vld [vmem:[%s10] sm:$0x1]
    %v1907 = vlaneseq
    %v1908 = vshrl.u32 %v1907, 7
    %v1909 = vsub.s32 0, %v1908
    %v1910 = vrot.slane %v1905, %v1909
    %vm1912 = vcmask 539648
    %v1914 = vsel %vm1912, %v1868, 0
    %v1917 = vsel %vm1912, %v1869, 0
    %v1920 = vsel %vm1912, %v1870, 0
    %v1923 = vsel %vm1912, %v1871, 0
    %v1926 = vsel %vm1912, %v1872, 0
    %v1929 = vsel %vm1912, %v1873, 0
    %v1932 = vsel %vm1912, %v1874, 0
    %v1935 = vsel %vm1912, %v1875, 0
    %v1938 = vsel %vm1912, %v1876, 0
    %v1941 = vsel %vm1912, %v1877, 0
    %v1944 = vsel %vm1912, %v1878, 0
    %v1947 = vsel %vm1912, %v1879, 0
    %v1950 = vsel %vm1912, %v1880, 0
    %v1953 = vsel %vm1912, %v1881, 0
    %v1956 = vsel %vm1912, %v1882, 0
    %v1959 = vsel %vm1912, %v1883, 0
    %v1962 = vsel %vm1912, %v1884, 0
    %v1965 = vsel %vm1912, %v1885, 0
    %v1968 = vsel %vm1912, %v1886, 0
    %v1971 = vsel %vm1912, %v1887, 0
    %v1974 = vsel %vm1912, %v1888, 0
    %v1977 = vsel %vm1912, %v1889, 0
    %v1980 = vsel %vm1912, %v1890, 0
    %v1983 = vsel %vm1912, %v1891, 0
    %v1986 = vsel %vm1912, %v1892, 0
    %v1989 = vsel %vm1912, %v1893, 0
    %v1992 = vsel %vm1912, %v1894, 0
    %v1995 = vsel %vm1912, %v1895, 0
    %vm1997 = vcmask 1041408
    %v1999 = vsel %vm1997, %v1904, 0
    %2001 = vmatprep.subr.mxu0 0.0
    %2002 = vmatpush1.msra.mxu0 %v1896
    %2003 = vmatprep.subr.mxu0 0.0
    %2004 = vmatpush1.msra.mxu0 %v1897
    %2005 = vmatprep.subr.mxu0 0.0
    %2006 = vmatpush1.msra.mxu0 %v1898
    %2007 = vmatprep.subr.mxu0 0.0
    %2008 = vmatpush1.msra.mxu0 %v1899
    %2009 = vmatprep.subr.mxu0 0.0
    %2010 = vmatpush1.msra.mxu0 %v1900
    %2011 = vmatprep.subr.mxu0 0.0
    %2012 = vmatpush1.msra.mxu0 %v1901
    %2013 = vmatprep.subr.mxu0 0.0
    %2014 = vmatpush1.msra.mxu0 %v1902
    %2015 = vmatprep.subr.mxu0 0.0
    %2016 = vmatpush1.msra.mxu0 %v1903
    %2017 = vmatprep.subr.mxu0 0.0
    %2018 = vmatpush1.msra.mxu0 %v1999
    %2019 = vmatprep.subr.mxu0 0.0
    %2020 = vmatpush1.msra.mxu0 0.0
    %2021 = vmatprep.subr.mxu0 0.0
    %2022 = vmatpush1.msra.mxu0 0.0
    %2023 = vmatprep.subr.mxu0 0.0
    %2024 = vmatpush1.msra.mxu0 0.0
    %2025 = vmatprep.subr.mxu0 0.0
    %2026 = vmatpush1.msra.mxu0 0.0
    %2027 = vmatprep.subr.mxu0 0.0
    %2028 = vmatpush1.msra.mxu0 0.0
    %2029 = vmatprep.subr.mxu0 0.0
    %2030 = vmatpush1.msra.mxu0 0.0
    %2031 = vmatprep.subr.mxu0 0.0
    %2032 = vmatpush1.msra.mxu0 0.0
    %2033 = vmatprep.subr.mxu0 0.0
    %2034 = vmatpush1.msra.mxu0 0.0
    %2035 = vmatprep.subr.mxu0 0.0
    %2036 = vmatpush1.msra.mxu0 0.0
    %2037 = vmatprep.subr.mxu0 0.0
    %2038 = vmatpush1.msra.mxu0 0.0
    %2039 = vmatprep.subr.mxu0 0.0
    %2040 = vmatpush1.msra.mxu0 0.0
    %2041 = vmatprep.subr.mxu0 0.0
    %2042 = vmatpush1.msra.mxu0 0.0
    %2043 = vmatprep.subr.mxu0 0.0
    %2044 = vmatpush1.msra.mxu0 0.0
    %2045 = vmatprep.subr.mxu0 0.0
    %2046 = vmatpush1.msra.mxu0 0.0
    %2047 = vmatprep.subr.mxu0 0.0
    %2048 = vmatpush1.msra.mxu0 0.0
    %2049 = vmatprep.subr.mxu0 0.0
    %2050 = vmatpush1.msra.mxu0 0.0
    %2051 = vmatprep.subr.mxu0 0.0
    %2052 = vmatpush1.msra.mxu0 0.0
    %2053 = vmatprep.subr.mxu0 0.0
    %2054 = vmatpush1.msra.mxu0 0.0
    %2055 = vmatprep.subr.mxu0 0.0
    %2056 = vmatpush1.msra.mxu0 0.0
    %2057 = vmatprep.subr.mxu0 0.0
    %2058 = vmatpush1.msra.mxu0 0.0
    %2059 = vmatprep.subr.mxu0 0.0
    %2060 = vmatpush1.msra.mxu0 0.0
    %2061 = vmatprep.subr.mxu0 0.0
    %2062 = vmatpush1.msra.mxu0 0.0
    %2063 = vmatprep.subr.mxu0 0.0
    %2064 = vmatpush1.msra.mxu0 0.0
    %2065 = vmatprep.mubr.f32.mxu0 0.0
    %2066 = vmatmul.mubr.f32.gmra.mrb[0].mxu0 %v1914
    %v2067 = vpop.f32.mrb[0].mxu0
    %v2068 = vadd.f32 %v1910, %v2067
    %v2069 = vpop.f32.mrb[0].mxu0
    %2070 = vmatprep.mubr.f32.mxu0 0.0
    %2071 = vmatmul.mubr.f32.gmra.mrb[0].mxu0 %v1917
    %v2072 = vpop.f32.mrb[0].mxu0
    %v2073 = vadd.f32 %v1910, %v2072
    %v2074 = vpop.f32.mrb[0].mxu0
    %2075 = vmatprep.mubr.f32.mxu0 0.0
    %2076 = vmatmul.mubr.f32.gmra.mrb[0].mxu0 %v1920
    %v2077 = vpop.f32.mrb[0].mxu0
    %v2078 = vadd.f32 %v1910, %v2077
    %v2079 = vpop.f32.mrb[0].mxu0
    %2080 = vmatprep.mubr.f32.mxu0 0.0
    %2081 = vmatmul.mubr.f32.gmra.mrb[0].mxu0 %v1923
    %v2082 = vpop.f32.mrb[0].mxu0
    %v2083 = vadd.f32 %v1910, %v2082
    %v2084 = vpop.f32.mrb[0].mxu0
    %2085 = vmatprep.mubr.f32.mxu0 0.0
    %2086 = vmatmul.mubr.f32.gmra.mrb[0].mxu0 %v1926
    %v2087 = vpop.f32.mrb[0].mxu0
    %v2088 = vadd.f32 %v1910, %v2087
    %v2089 = vpop.f32.mrb[0].mxu0
    %2090 = vmatprep.mubr.f32.mxu0 0.0
    %2091 = vmatmul.mubr.f32.gmra.mrb[0].mxu0 %v1929
    %v2092 = vpop.f32.mrb[0].mxu0
    %v2093 = vadd.f32 %v1910, %v2092
    %v2094 = vpop.f32.mrb[0].mxu0
    %2095 = vmatprep.mubr.f32.mxu0 0.0
    %2096 = vmatmul.mubr.f32.gmra.mrb[0].mxu0 %v1932
    %v2097 = vpop.f32.mrb[0].mxu0
    %v2098 = vadd.f32 %v1910, %v2097
    %v2099 = vpop.f32.mrb[0].mxu0
    %2100 = vmatprep.mubr.f32.mxu0 0.0
    %2101 = vmatmul.mubr.f32.gmra.mrb[0].mxu0 %v1935
    %v2102 = vpop.f32.mrb[0].mxu0
    %v2103 = vadd.f32 %v1910, %v2102
    %v2104 = vpop.f32.mrb[0].mxu0
    %2105 = vmatprep.mubr.f32.mxu0 0.0
    %2106 = vmatmul.mubr.f32.gmra.mrb[0].mxu0 %v1938
    %v2107 = vpop.f32.mrb[0].mxu0
    %v2108 = vadd.f32 %v1910, %v2107
    %v2109 = vpop.f32.mrb[0].mxu0
    %2110 = vmatprep.mubr.f32.mxu0 0.0
    %2111 = vmatmul.mubr.f32.gmra.mrb[0].mxu0 %v1941
    %v2112 = vpop.f32.mrb[0].mxu0
    %v2113 = vadd.f32 %v1910, %v2112
    %v2114 = vpop.f32.mrb[0].mxu0
    %2115 = vmatprep.mubr.f32.mxu0 0.0
    %2116 = vmatmul.mubr.f32.gmra.mrb[0].mxu0 %v1944
    %v2117 = vpop.f32.mrb[0].mxu0
    %v2118 = vadd.f32 %v1910, %v2117
    %v2119 = vpop.f32.mrb[0].mxu0
    %2120 = vmatprep.mubr.f32.mxu0 0.0
    %2121 = vmatmul.mubr.f32.gmra.mrb[0].mxu0 %v1947
    %v2122 = vpop.f32.mrb[0].mxu0
    %v2123 = vadd.f32 %v1910, %v2122
    %v2124 = vpop.f32.mrb[0].mxu0
    %2125 = vmatprep.mubr.f32.mxu0 0.0
    %2126 = vmatmul.mubr.f32.gmra.mrb[0].mxu0 %v1950
    %v2127 = vpop.f32.mrb[0].mxu0
    %v2128 = vadd.f32 %v1910, %v2127
    %v2129 = vpop.f32.mrb[0].mxu0
    %2130 = vmatprep.mubr.f32.mxu0 0.0
    %2131 = vmatmul.mubr.f32.gmra.mrb[0].mxu0 %v1953
    %v2132 = vpop.f32.mrb[0].mxu0
    %v2133 = vadd.f32 %v1910, %v2132
    %v2134 = vpop.f32.mrb[0].mxu0
    %2135 = vmatprep.mubr.f32.mxu0 0.0
    %2136 = vmatmul.mubr.f32.gmra.mrb[0].mxu0 %v1956
    %v2137 = vpop.f32.mrb[0].mxu0
    %v2138 = vadd.f32 %v1910, %v2137
    %v2139 = vpop.f32.mrb[0].mxu0
    %2140 = vmatprep.mubr.f32.mxu0 0.0
    %2141 = vmatmul.mubr.f32.gmra.mrb[0].mxu0 %v1959
    %v2142 = vpop.f32.mrb[0].mxu0
    %v2143 = vadd.f32 %v1910, %v2142
    %v2144 = vpop.f32.mrb[0].mxu0
    %2145 = vmatprep.mubr.f32.mxu0 0.0
    %2146 = vmatmul.mubr.f32.gmra.mrb[0].mxu0 %v1962
    %v2147 = vpop.f32.mrb[0].mxu0
    %v2148 = vadd.f32 %v1910, %v2147
    %v2149 = vpop.f32.mrb[0].mxu0
    %2150 = vmatprep.mubr.f32.mxu0 0.0
    %2151 = vmatmul.mubr.f32.gmra.mrb[0].mxu0 %v1965
    %v2152 = vpop.f32.mrb[0].mxu0
    %v2153 = vadd.f32 %v1910, %v2152
    %v2154 = vpop.f32.mrb[0].mxu0
    %2155 = vmatprep.mubr.f32.mxu0 0.0
    %2156 = vmatmul.mubr.f32.gmra.mrb[0].mxu0 %v1968
    %v2157 = vpop.f32.mrb[0].mxu0
    %v2158 = vadd.f32 %v1910, %v2157
    %v2159 = vpop.f32.mrb[0].mxu0
    %2160 = vmatprep.mubr.f32.mxu0 0.0
    %2161 = vmatmul.mubr.f32.gmra.mrb[0].mxu0 %v1971
    %v2162 = vpop.f32.mrb[0].mxu0
    %v2163 = vadd.f32 %v1910, %v2162
    %v2164 = vpop.f32.mrb[0].mxu0
    %2165 = vmatprep.mubr.f32.mxu0 0.0
    %2166 = vmatmul.mubr.f32.gmra.mrb[0].mxu0 %v1974
    %v2167 = vpop.f32.mrb[0].mxu0
    %v2168 = vadd.f32 %v1910, %v2167
    %v2169 = vpop.f32.mrb[0].mxu0
    %2170 = vmatprep.mubr.f32.mxu0 0.0
    %2171 = vmatmul.mubr.f32.gmra.mrb[0].mxu0 %v1977
    %v2172 = vpop.f32.mrb[0].mxu0
    %v2173 = vadd.f32 %v1910, %v2172
    %v2174 = vpop.f32.mrb[0].mxu0
    %2175 = vmatprep.mubr.f32.mxu0 0.0
    %2176 = vmatmul.mubr.f32.gmra.mrb[0].mxu0 %v1980
    %v2177 = vpop.f32.mrb[0].mxu0
    %v2178 = vadd.f32 %v1910, %v2177
    %v2179 = vpop.f32.mrb[0].mxu0
    %2180 = vmatprep.mubr.f32.mxu0 0.0
    %2181 = vmatmul.mubr.f32.gmra.mrb[0].mxu0 %v1983
    %v2182 = vpop.f32.mrb[0].mxu0
    %v2183 = vadd.f32 %v1910, %v2182
    %v2184 = vpop.f32.mrb[0].mxu0
    %2185 = vmatprep.mubr.f32.mxu0 0.0
    %2186 = vmatmul.mubr.f32.gmra.mrb[0].mxu0 %v1986
    %v2187 = vpop.f32.mrb[0].mxu0
    %v2188 = vadd.f32 %v1910, %v2187
    %v2189 = vpop.f32.mrb[0].mxu0
    %2190 = vmatprep.mubr.f32.mxu0 0.0
    %2191 = vmatmul.mubr.f32.gmra.mrb[0].mxu0 %v1989
    %v2192 = vpop.f32.mrb[0].mxu0
    %v2193 = vadd.f32 %v1910, %v2192
    %v2194 = vpop.f32.mrb[0].mxu0
    %2195 = vmatprep.mubr.f32.mxu0 0.0
    %2196 = vmatmul.mubr.f32.gmra.mrb[0].mxu0 %v1992
    %v2197 = vpop.f32.mrb[0].mxu0
    %v2198 = vadd.f32 %v1910, %v2197
    %v2199 = vpop.f32.mrb[0].mxu0
    %2200 = vmatprep.mubr.f32.mxu0 0.0
    %2201 = vmatmul.mubr.f32.gmra.mrb[0].mxu0 %v1995
    %v2202 = vpop.f32.mrb[0].mxu0
    %v2203 = vadd.f32 %v1910, %v2202
    %v2204 = vpop.f32.mrb[0].mxu0
    %2205 = vdwg.mxu0
    %v2206 = vxor.u32 %v2068, 2147483648
    %v2207 = vxor.u32 %v2073, 2147483648
    %v2208 = vxor.u32 %v2078, 2147483648
    %v2209 = vxor.u32 %v2083, 2147483648
    %v2210 = vxor.u32 %v2088, 2147483648
    %v2211 = vxor.u32 %v2093, 2147483648
    %v2212 = vxor.u32 %v2098, 2147483648
    %v2213 = vxor.u32 %v2103, 2147483648
    %v2214 = vxor.u32 %v2108, 2147483648
    %v2215 = vxor.u32 %v2113, 2147483648
    %v2216 = vxor.u32 %v2118, 2147483648
    %v2217 = vxor.u32 %v2123, 2147483648
    %v2218 = vxor.u32 %v2128, 2147483648
    %v2219 = vxor.u32 %v2133, 2147483648
    %v2220 = vxor.u32 %v2138, 2147483648
    %v2221 = vxor.u32 %v2143, 2147483648
    %v2222 = vxor.u32 %v2148, 2147483648
    %v2223 = vxor.u32 %v2153, 2147483648
    %v2224 = vxor.u32 %v2158, 2147483648
    %v2225 = vxor.u32 %v2163, 2147483648
    %v2226 = vxor.u32 %v2168, 2147483648
    %v2227 = vxor.u32 %v2173, 2147483648
    %v2228 = vxor.u32 %v2178, 2147483648
    %v2229 = vxor.u32 %v2183, 2147483648
    %v2230 = vxor.u32 %v2188, 2147483648
    %v2231 = vxor.u32 %v2193, 2147483648
    %v2232 = vxor.u32 %v2198, 2147483648
    %v2233 = vxor.u32 %v2203, 2147483648
    %v2234 = vmul.f32 %v2206, 1.442695
    %v2235 = vpow.pop %v2234
    %v2236 = vmul.f32 %v2207, 1.442695
    %v2237 = vpow.pop %v2236
    %v2238 = vmul.f32 %v2208, 1.442695
    %v2239 = vpow.pop %v2238
    %v2240 = vmul.f32 %v2209, 1.442695
    %v2241 = vpow.pop %v2240
    %v2242 = vmul.f32 %v2210, 1.442695
    %v2243 = vpow.pop %v2242
    %v2244 = vmul.f32 %v2211, 1.442695
    %v2245 = vpow.pop %v2244
    %v2246 = vmul.f32 %v2212, 1.442695
    %v2247 = vpow.pop %v2246
    %v2248 = vmul.f32 %v2213, 1.442695
    %v2249 = vpow.pop %v2248
    %v2250 = vmul.f32 %v2214, 1.442695
    %v2251 = vpow.pop %v2250
    %v2252 = vmul.f32 %v2215, 1.442695
    %v2253 = vpow.pop %v2252
    %v2254 = vmul.f32 %v2216, 1.442695
    %v2255 = vpow.pop %v2254
    %v2256 = vmul.f32 %v2217, 1.442695
    %v2257 = vpow.pop %v2256
    %v2258 = vmul.f32 %v2218, 1.442695
    %v2259 = vpow.pop %v2258
    %v2260 = vmul.f32 %v2219, 1.442695
    %v2261 = vpow.pop %v2260
    %v2262 = vmul.f32 %v2220, 1.442695
    %v2263 = vpow.pop %v2262
    %v2264 = vmul.f32 %v2221, 1.442695
    %v2265 = vpow.pop %v2264
    %v2266 = vmul.f32 %v2222, 1.442695
    %v2267 = vpow.pop %v2266
    %v2268 = vmul.f32 %v2223, 1.442695
    %v2269 = vpow.pop %v2268
    %v2270 = vmul.f32 %v2224, 1.442695
    %v2271 = vpow.pop %v2270
    %v2272 = vmul.f32 %v2225, 1.442695
    %v2273 = vpow.pop %v2272
    %v2274 = vmul.f32 %v2226, 1.442695
    %v2275 = vpow.pop %v2274
    %v2276 = vmul.f32 %v2227, 1.442695
    %v2277 = vpow.pop %v2276
    %v2278 = vmul.f32 %v2228, 1.442695
    %v2279 = vpow.pop %v2278
    %v2280 = vmul.f32 %v2229, 1.442695
    %v2281 = vpow.pop %v2280
    %v2282 = vmul.f32 %v2230, 1.442695
    %v2283 = vpow.pop %v2282
    %v2284 = vmul.f32 %v2231, 1.442695
    %v2285 = vpow.pop %v2284
    %v2286 = vmul.f32 %v2232, 1.442695
    %v2287 = vpow.pop %v2286
    %v2288 = vmul.f32 %v2233, 1.442695
    %v2289 = vpow.pop %v2288
    %v2290 = vadd.f32 %v2235, 1.0
    %v2291 = vadd.f32 %v2237, 1.0
    %v2292 = vadd.f32 %v2239, 1.0
    %v2293 = vadd.f32 %v2241, 1.0
    %v2294 = vadd.f32 %v2243, 1.0
    %v2295 = vadd.f32 %v2245, 1.0
    %v2296 = vadd.f32 %v2247, 1.0
    %v2297 = vadd.f32 %v2249, 1.0
    %v2298 = vadd.f32 %v2251, 1.0
    %v2299 = vadd.f32 %v2253, 1.0
    %v2300 = vadd.f32 %v2255, 1.0
    %v2301 = vadd.f32 %v2257, 1.0
    %v2302 = vadd.f32 %v2259, 1.0
    %v2303 = vadd.f32 %v2261, 1.0
    %v2304 = vadd.f32 %v2263, 1.0
    %v2305 = vadd.f32 %v2265, 1.0
    %v2306 = vadd.f32 %v2267, 1.0
    %v2307 = vadd.f32 %v2269, 1.0
    %v2308 = vadd.f32 %v2271, 1.0
    %v2309 = vadd.f32 %v2273, 1.0
    %v2310 = vadd.f32 %v2275, 1.0
    %v2311 = vadd.f32 %v2277, 1.0
    %v2312 = vadd.f32 %v2279, 1.0
    %v2313 = vadd.f32 %v2281, 1.0
    %v2314 = vadd.f32 %v2283, 1.0
    %v2315 = vadd.f32 %v2285, 1.0
    %v2316 = vadd.f32 %v2287, 1.0
    %v2317 = vadd.f32 %v2289, 1.0
    %v2318 = vrcp.pop %v2290
    %v2319 = vmul.f32 1.0, %v2318
    %v2320 = vrcp.pop %v2291
    %v2321 = vmul.f32 1.0, %v2320
    %v2322 = vrcp.pop %v2292
    %v2323 = vmul.f32 1.0, %v2322
    %v2324 = vrcp.pop %v2293
    %v2325 = vmul.f32 1.0, %v2324
    %v2326 = vrcp.pop %v2294
    %v2327 = vmul.f32 1.0, %v2326
    %v2328 = vrcp.pop %v2295
    %v2329 = vmul.f32 1.0, %v2328
    %v2330 = vrcp.pop %v2296
    %v2331 = vmul.f32 1.0, %v2330
    %v2332 = vrcp.pop %v2297
    %v2333 = vmul.f32 1.0, %v2332
    %v2334 = vrcp.pop %v2298
    %v2335 = vmul.f32 1.0, %v2334
    %v2336 = vrcp.pop %v2299
    %v2337 = vmul.f32 1.0, %v2336
    %v2338 = vrcp.pop %v2300
    %v2339 = vmul.f32 1.0, %v2338
    %v2340 = vrcp.pop %v2301
    %v2341 = vmul.f32 1.0, %v2340
    %v2342 = vrcp.pop %v2302
    %v2343 = vmul.f32 1.0, %v2342
    %v2344 = vrcp.pop %v2303
    %v2345 = vmul.f32 1.0, %v2344
    %v2346 = vrcp.pop %v2304
    %v2347 = vmul.f32 1.0, %v2346
    %v2348 = vrcp.pop %v2305
    %v2349 = vmul.f32 1.0, %v2348
    %v2350 = vrcp.pop %v2306
    %v2351 = vmul.f32 1.0, %v2350
    %v2352 = vrcp.pop %v2307
    %v2353 = vmul.f32 1.0, %v2352
    %v2354 = vrcp.pop %v2308
    %v2355 = vmul.f32 1.0, %v2354
    %v2356 = vrcp.pop %v2309
    %v2357 = vmul.f32 1.0, %v2356
    %v2358 = vrcp.pop %v2310
    %v2359 = vmul.f32 1.0, %v2358
    %v2360 = vrcp.pop %v2311
    %v2361 = vmul.f32 1.0, %v2360
    %v2362 = vrcp.pop %v2312
    %v2363 = vmul.f32 1.0, %v2362
    %v2364 = vrcp.pop %v2313
    %v2365 = vmul.f32 1.0, %v2364
    %v2366 = vrcp.pop %v2314
    %v2367 = vmul.f32 1.0, %v2366
    %v2368 = vrcp.pop %v2315
    %v2369 = vmul.f32 1.0, %v2368
    %v2370 = vrcp.pop %v2316
    %v2371 = vmul.f32 1.0, %v2370
    %v2372 = vrcp.pop %v2317
    %v2373 = vmul.f32 1.0, %v2372
    %v2374 = vmul.f32 %v2068, %v2319
    %v2375 = vmul.f32 %v2073, %v2321
    %v2376 = vmul.f32 %v2078, %v2323
    %v2377 = vmul.f32 %v2083, %v2325
    %v2378 = vmul.f32 %v2088, %v2327
    %v2379 = vmul.f32 %v2093, %v2329
    %v2380 = vmul.f32 %v2098, %v2331
    %v2381 = vmul.f32 %v2103, %v2333
    %v2382 = vmul.f32 %v2108, %v2335
    %v2383 = vmul.f32 %v2113, %v2337
    %v2384 = vmul.f32 %v2118, %v2339
    %v2385 = vmul.f32 %v2123, %v2341
    %v2386 = vmul.f32 %v2128, %v2343
    %v2387 = vmul.f32 %v2133, %v2345
    %v2388 = vmul.f32 %v2138, %v2347
    %v2389 = vmul.f32 %v2143, %v2349
    %v2390 = vmul.f32 %v2148, %v2351
    %v2391 = vmul.f32 %v2153, %v2353
    %v2392 = vmul.f32 %v2158, %v2355
    %v2393 = vmul.f32 %v2163, %v2357
    %v2394 = vmul.f32 %v2168, %v2359
    %v2395 = vmul.f32 %v2173, %v2361
    %v2396 = vmul.f32 %v2178, %v2363
    %v2397 = vmul.f32 %v2183, %v2365
    %v2398 = vmul.f32 %v2188, %v2367
    %v2399 = vmul.f32 %v2193, %v2369
    %v2400 = vmul.f32 %v2198, %v2371
    %v2401 = vmul.f32 %v2203, %v2373
    %v2402 = vld [vmem:[%s11] sm:$0xff]
    %v2403 = vld [vmem:[%s11 + $0x8] sm:$0xff]
    %v2404 = vld [vmem:[%s11 + $0x10] sm:$0xff]
    %v2405 = vld [vmem:[%s11 + $0x18] sm:$0xff]
    %v2406 = vld [vmem:[%s12] sm:$0x1]
    %v2408 = vlaneseq
    %v2409 = vshrl.u32 %v2408, 7
    %v2410 = vsub.s32 0, %v2409
    %v2411 = vrot.slane %v2406, %v2410
    %v2414 = vsel %vm212, %v2374, 0
    %v2417 = vsel %vm212, %v2375, 0
    %v2420 = vsel %vm212, %v2376, 0
    %v2423 = vsel %vm212, %v2377, 0
    %v2426 = vsel %vm212, %v2378, 0
    %v2429 = vsel %vm212, %v2379, 0
    %v2432 = vsel %vm212, %v2380, 0
    %v2435 = vsel %vm212, %v2381, 0
    %v2438 = vsel %vm212, %v2382, 0
    %v2441 = vsel %vm212, %v2383, 0
    %v2444 = vsel %vm212, %v2384, 0
    %v2447 = vsel %vm212, %v2385, 0
    %v2450 = vsel %vm212, %v2386, 0
    %v2453 = vsel %vm212, %v2387, 0
    %v2456 = vsel %vm212, %v2388, 0
    %v2459 = vsel %vm212, %v2389, 0
    %v2462 = vsel %vm212, %v2390, 0
    %v2465 = vsel %vm212, %v2391, 0
    %v2468 = vsel %vm212, %v2392, 0
    %v2471 = vsel %vm212, %v2393, 0
    %v2474 = vsel %vm212, %v2394, 0
    %v2477 = vsel %vm212, %v2395, 0
    %v2480 = vsel %vm212, %v2396, 0
    %v2483 = vsel %vm212, %v2397, 0
    %v2486 = vsel %vm212, %v2398, 0
    %v2489 = vsel %vm212, %v2399, 0
    %v2492 = vsel %vm212, %v2400, 0
    %v2495 = vsel %vm212, %v2401, 0
    %2497 = vmatprep.subr.mxu0 0.0
    %2498 = vmatpush1.msra.mxu0 %v2402
    %2499 = vmatprep.subr.mxu0 0.0
    %2500 = vmatpush1.msra.mxu0 %v2403
    %2501 = vmatprep.subr.mxu0 0.0
    %2502 = vmatpush1.msra.mxu0 %v2404
    %2503 = vmatprep.subr.mxu0 0.0
    %2504 = vmatpush1.msra.mxu0 %v2405
    %2505 = vmatprep.subr.mxu0 0.0
    %2506 = vmatpush1.msra.mxu0 0.0
    %2507 = vmatprep.subr.mxu0 0.0
    %2508 = vmatpush1.msra.mxu0 0.0
    %2509 = vmatprep.subr.mxu0 0.0
    %2510 = vmatpush1.msra.mxu0 0.0
    %2511 = vmatprep.subr.mxu0 0.0
    %2512 = vmatpush1.msra.mxu0 0.0
    %2513 = vmatprep.subr.mxu0 0.0
    %2514 = vmatpush1.msra.mxu0 0.0
    %2515 = vmatprep.subr.mxu0 0.0
    %2516 = vmatpush1.msra.mxu0 0.0
    %2517 = vmatprep.subr.mxu0 0.0
    %2518 = vmatpush1.msra.mxu0 0.0
    %2519 = vmatprep.subr.mxu0 0.0
    %2520 = vmatpush1.msra.mxu0 0.0
    %2521 = vmatprep.subr.mxu0 0.0
    %2522 = vmatpush1.msra.mxu0 0.0
    %2523 = vmatprep.subr.mxu0 0.0
    %2524 = vmatpush1.msra.mxu0 0.0
    %2525 = vmatprep.subr.mxu0 0.0
    %2526 = vmatpush1.msra.mxu0 0.0
    %2527 = vmatprep.subr.mxu0 0.0
    %2528 = vmatpush1.msra.mxu0 0.0
    %2529 = vmatprep.subr.mxu0 0.0
    %2530 = vmatpush1.msra.mxu0 0.0
    %2531 = vmatprep.subr.mxu0 0.0
    %2532 = vmatpush1.msra.mxu0 0.0
    %2533 = vmatprep.subr.mxu0 0.0
    %2534 = vmatpush1.msra.mxu0 0.0
    %2535 = vmatprep.subr.mxu0 0.0
    %2536 = vmatpush1.msra.mxu0 0.0
    %2537 = vmatprep.subr.mxu0 0.0
    %2538 = vmatpush1.msra.mxu0 0.0
    %2539 = vmatprep.subr.mxu0 0.0
    %2540 = vmatpush1.msra.mxu0 0.0
    %2541 = vmatprep.subr.mxu0 0.0
    %2542 = vmatpush1.msra.mxu0 0.0
    %2543 = vmatprep.subr.mxu0 0.0
    %2544 = vmatpush1.msra.mxu0 0.0
    %2545 = vmatprep.subr.mxu0 0.0
    %2546 = vmatpush1.msra.mxu0 0.0
    %2547 = vmatprep.subr.mxu0 0.0
    %2548 = vmatpush1.msra.mxu0 0.0
    %2549 = vmatprep.subr.mxu0 0.0
    %2550 = vmatpush1.msra.mxu0 0.0
    %2551 = vmatprep.subr.mxu0 0.0
    %2552 = vmatpush1.msra.mxu0 0.0
    %2553 = vmatprep.subr.mxu0 0.0
    %2554 = vmatpush1.msra.mxu0 0.0
    %2555 = vmatprep.subr.mxu0 0.0
    %2556 = vmatpush1.msra.mxu0 0.0
    %2557 = vmatprep.subr.mxu0 0.0
    %2558 = vmatpush1.msra.mxu0 0.0
    %2559 = vmatprep.subr.mxu0 0.0
    %2560 = vmatpush1.msra.mxu0 0.0
    %2561 = vmatprep.mubr.f32.mxu0 0.0
    %2562 = vmatmul.mubr.f32.gmra.mrb[0].mxu0 %v2414
    %v2563 = vpop.f32.mrb[0].mxu0
    %v2564 = vadd.f32 %v2411, %v2563
    %v2565 = vpop.f32.mrb[0].mxu0
    %2566 = vmatprep.mubr.f32.mxu0 0.0
    %2567 = vmatmul.mubr.f32.gmra.mrb[0].mxu0 %v2417
    %v2568 = vpop.f32.mrb[0].mxu0
    %v2569 = vadd.f32 %v2411, %v2568
    %v2570 = vpop.f32.mrb[0].mxu0
    %2571 = vmatprep.mubr.f32.mxu0 0.0
    %2572 = vmatmul.mubr.f32.gmra.mrb[0].mxu0 %v2420
    %v2573 = vpop.f32.mrb[0].mxu0
    %v2574 = vadd.f32 %v2411, %v2573
    %v2575 = vpop.f32.mrb[0].mxu0
    %2576 = vmatprep.mubr.f32.mxu0 0.0
    %2577 = vmatmul.mubr.f32.gmra.mrb[0].mxu0 %v2423
    %v2578 = vpop.f32.mrb[0].mxu0
    %v2579 = vadd.f32 %v2411, %v2578
    %v2580 = vpop.f32.mrb[0].mxu0
    %2581 = vmatprep.mubr.f32.mxu0 0.0
    %2582 = vmatmul.mubr.f32.gmra.mrb[0].mxu0 %v2426
    %v2583 = vpop.f32.mrb[0].mxu0
    %v2584 = vadd.f32 %v2411, %v2583
    %v2585 = vpop.f32.mrb[0].mxu0
    %2586 = vmatprep.mubr.f32.mxu0 0.0
    %2587 = vmatmul.mubr.f32.gmra.mrb[0].mxu0 %v2429
    %v2588 = vpop.f32.mrb[0].mxu0
    %v2589 = vadd.f32 %v2411, %v2588
    %v2590 = vpop.f32.mrb[0].mxu0
    %2591 = vmatprep.mubr.f32.mxu0 0.0
    %2592 = vmatmul.mubr.f32.gmra.mrb[0].mxu0 %v2432
    %v2593 = vpop.f32.mrb[0].mxu0
    %v2594 = vadd.f32 %v2411, %v2593
    %v2595 = vpop.f32.mrb[0].mxu0
    %2596 = vmatprep.mubr.f32.mxu0 0.0
    %2597 = vmatmul.mubr.f32.gmra.mrb[0].mxu0 %v2435
    %v2598 = vpop.f32.mrb[0].mxu0
    %v2599 = vadd.f32 %v2411, %v2598
    %v2600 = vpop.f32.mrb[0].mxu0
    %2601 = vmatprep.mubr.f32.mxu0 0.0
    %2602 = vmatmul.mubr.f32.gmra.mrb[0].mxu0 %v2438
    %v2603 = vpop.f32.mrb[0].mxu0
    %v2604 = vadd.f32 %v2411, %v2603
    %v2605 = vpop.f32.mrb[0].mxu0
    %2606 = vmatprep.mubr.f32.mxu0 0.0
    %2607 = vmatmul.mubr.f32.gmra.mrb[0].mxu0 %v2441
    %v2608 = vpop.f32.mrb[0].mxu0
    %v2609 = vadd.f32 %v2411, %v2608
    %v2610 = vpop.f32.mrb[0].mxu0
    %2611 = vmatprep.mubr.f32.mxu0 0.0
    %2612 = vmatmul.mubr.f32.gmra.mrb[0].mxu0 %v2444
    %v2613 = vpop.f32.mrb[0].mxu0
    %v2614 = vadd.f32 %v2411, %v2613
    %v2615 = vpop.f32.mrb[0].mxu0
    %2616 = vmatprep.mubr.f32.mxu0 0.0
    %2617 = vmatmul.mubr.f32.gmra.mrb[0].mxu0 %v2447
    %v2618 = vpop.f32.mrb[0].mxu0
    %v2619 = vadd.f32 %v2411, %v2618
    %v2620 = vpop.f32.mrb[0].mxu0
    %2621 = vmatprep.mubr.f32.mxu0 0.0
    %2622 = vmatmul.mubr.f32.gmra.mrb[0].mxu0 %v2450
    %v2623 = vpop.f32.mrb[0].mxu0
    %v2624 = vadd.f32 %v2411, %v2623
    %v2625 = vpop.f32.mrb[0].mxu0
    %2626 = vmatprep.mubr.f32.mxu0 0.0
    %2627 = vmatmul.mubr.f32.gmra.mrb[0].mxu0 %v2453
    %v2628 = vpop.f32.mrb[0].mxu0
    %v2629 = vadd.f32 %v2411, %v2628
    %v2630 = vpop.f32.mrb[0].mxu0
    %2631 = vmatprep.mubr.f32.mxu0 0.0
    %2632 = vmatmul.mubr.f32.gmra.mrb[0].mxu0 %v2456
    %v2633 = vpop.f32.mrb[0].mxu0
    %v2634 = vadd.f32 %v2411, %v2633
    %v2635 = vpop.f32.mrb[0].mxu0
    %2636 = vmatprep.mubr.f32.mxu0 0.0
    %2637 = vmatmul.mubr.f32.gmra.mrb[0].mxu0 %v2459
    %v2638 = vpop.f32.mrb[0].mxu0
    %v2639 = vadd.f32 %v2411, %v2638
    %v2640 = vpop.f32.mrb[0].mxu0
    %2641 = vmatprep.mubr.f32.mxu0 0.0
    %2642 = vmatmul.mubr.f32.gmra.mrb[0].mxu0 %v2462
    %v2643 = vpop.f32.mrb[0].mxu0
    %v2644 = vadd.f32 %v2411, %v2643
    %v2645 = vpop.f32.mrb[0].mxu0
    %2646 = vmatprep.mubr.f32.mxu0 0.0
    %2647 = vmatmul.mubr.f32.gmra.mrb[0].mxu0 %v2465
    %v2648 = vpop.f32.mrb[0].mxu0
    %v2649 = vadd.f32 %v2411, %v2648
    %v2650 = vpop.f32.mrb[0].mxu0
    %2651 = vmatprep.mubr.f32.mxu0 0.0
    %2652 = vmatmul.mubr.f32.gmra.mrb[0].mxu0 %v2468
    %v2653 = vpop.f32.mrb[0].mxu0
    %v2654 = vadd.f32 %v2411, %v2653
    %v2655 = vpop.f32.mrb[0].mxu0
    %2656 = vmatprep.mubr.f32.mxu0 0.0
    %2657 = vmatmul.mubr.f32.gmra.mrb[0].mxu0 %v2471
    %v2658 = vpop.f32.mrb[0].mxu0
    %v2659 = vadd.f32 %v2411, %v2658
    %v2660 = vpop.f32.mrb[0].mxu0
    %2661 = vmatprep.mubr.f32.mxu0 0.0
    %2662 = vmatmul.mubr.f32.gmra.mrb[0].mxu0 %v2474
    %v2663 = vpop.f32.mrb[0].mxu0
    %v2664 = vadd.f32 %v2411, %v2663
    %v2665 = vpop.f32.mrb[0].mxu0
    %2666 = vmatprep.mubr.f32.mxu0 0.0
    %2667 = vmatmul.mubr.f32.gmra.mrb[0].mxu0 %v2477
    %v2668 = vpop.f32.mrb[0].mxu0
    %v2669 = vadd.f32 %v2411, %v2668
    %v2670 = vpop.f32.mrb[0].mxu0
    %2671 = vmatprep.mubr.f32.mxu0 0.0
    %2672 = vmatmul.mubr.f32.gmra.mrb[0].mxu0 %v2480
    %v2673 = vpop.f32.mrb[0].mxu0
    %v2674 = vadd.f32 %v2411, %v2673
    %v2675 = vpop.f32.mrb[0].mxu0
    %2676 = vmatprep.mubr.f32.mxu0 0.0
    %2677 = vmatmul.mubr.f32.gmra.mrb[0].mxu0 %v2483
    %v2678 = vpop.f32.mrb[0].mxu0
    %v2679 = vadd.f32 %v2411, %v2678
    %v2680 = vpop.f32.mrb[0].mxu0
    %2681 = vmatprep.mubr.f32.mxu0 0.0
    %2682 = vmatmul.mubr.f32.gmra.mrb[0].mxu0 %v2486
    %v2683 = vpop.f32.mrb[0].mxu0
    %v2684 = vadd.f32 %v2411, %v2683
    %v2685 = vpop.f32.mrb[0].mxu0
    %2686 = vmatprep.mubr.f32.mxu0 0.0
    %2687 = vmatmul.mubr.f32.gmra.mrb[0].mxu0 %v2489
    %v2688 = vpop.f32.mrb[0].mxu0
    %v2689 = vadd.f32 %v2411, %v2688
    %v2690 = vpop.f32.mrb[0].mxu0
    %2691 = vmatprep.mubr.f32.mxu0 0.0
    %2692 = vmatmul.mubr.f32.gmra.mrb[0].mxu0 %v2492
    %v2693 = vpop.f32.mrb[0].mxu0
    %v2694 = vadd.f32 %v2411, %v2693
    %v2695 = vpop.f32.mrb[0].mxu0
    %2696 = vmatprep.mubr.f32.mxu0 0.0
    %2697 = vmatmul.mubr.f32.gmra.mrb[0].mxu0 %v2495
    %v2698 = vpop.f32.mrb[0].mxu0
    %v2699 = vadd.f32 %v2411, %v2698
    %v2700 = vpop.f32.mrb[0].mxu0
    %2701 = vdwg.mxu0
    %v2702 = vxor.u32 %v2564, 2147483648
    %v2703 = vxor.u32 %v2569, 2147483648
    %v2704 = vxor.u32 %v2574, 2147483648
    %v2705 = vxor.u32 %v2579, 2147483648
    %v2706 = vxor.u32 %v2584, 2147483648
    %v2707 = vxor.u32 %v2589, 2147483648
    %v2708 = vxor.u32 %v2594, 2147483648
    %v2709 = vxor.u32 %v2599, 2147483648
    %v2710 = vxor.u32 %v2604, 2147483648
    %v2711 = vxor.u32 %v2609, 2147483648
    %v2712 = vxor.u32 %v2614, 2147483648
    %v2713 = vxor.u32 %v2619, 2147483648
    %v2714 = vxor.u32 %v2624, 2147483648
    %v2715 = vxor.u32 %v2629, 2147483648
    %v2716 = vxor.u32 %v2634, 2147483648
    %v2717 = vxor.u32 %v2639, 2147483648
    %v2718 = vxor.u32 %v2644, 2147483648
    %v2719 = vxor.u32 %v2649, 2147483648
    %v2720 = vxor.u32 %v2654, 2147483648
    %v2721 = vxor.u32 %v2659, 2147483648
    %v2722 = vxor.u32 %v2664, 2147483648
    %v2723 = vxor.u32 %v2669, 2147483648
    %v2724 = vxor.u32 %v2674, 2147483648
    %v2725 = vxor.u32 %v2679, 2147483648
    %v2726 = vxor.u32 %v2684, 2147483648
    %v2727 = vxor.u32 %v2689, 2147483648
    %v2728 = vxor.u32 %v2694, 2147483648
    %v2729 = vxor.u32 %v2699, 2147483648
    %v2730 = vmul.f32 %v2702, 1.442695
    %v2731 = vpow.pop %v2730
    %v2732 = vmul.f32 %v2703, 1.442695
    %v2733 = vpow.pop %v2732
    %v2734 = vmul.f32 %v2704, 1.442695
    %v2735 = vpow.pop %v2734
    %v2736 = vmul.f32 %v2705, 1.442695
    %v2737 = vpow.pop %v2736
    %v2738 = vmul.f32 %v2706, 1.442695
    %v2739 = vpow.pop %v2738
    %v2740 = vmul.f32 %v2707, 1.442695
    %v2741 = vpow.pop %v2740
    %v2742 = vmul.f32 %v2708, 1.442695
    %v2743 = vpow.pop %v2742
    %v2744 = vmul.f32 %v2709, 1.442695
    %v2745 = vpow.pop %v2744
    %v2746 = vmul.f32 %v2710, 1.442695
    %v2747 = vpow.pop %v2746
    %v2748 = vmul.f32 %v2711, 1.442695
    %v2749 = vpow.pop %v2748
    %v2750 = vmul.f32 %v2712, 1.442695
    %v2751 = vpow.pop %v2750
    %v2752 = vmul.f32 %v2713, 1.442695
    %v2753 = vpow.pop %v2752
    %v2754 = vmul.f32 %v2714, 1.442695
    %v2755 = vpow.pop %v2754
    %v2756 = vmul.f32 %v2715, 1.442695
    %v2757 = vpow.pop %v2756
    %v2758 = vmul.f32 %v2716, 1.442695
    %v2759 = vpow.pop %v2758
    %v2760 = vmul.f32 %v2717, 1.442695
    %v2761 = vpow.pop %v2760
    %v2762 = vmul.f32 %v2718, 1.442695
    %v2763 = vpow.pop %v2762
    %v2764 = vmul.f32 %v2719, 1.442695
    %v2765 = vpow.pop %v2764
    %v2766 = vmul.f32 %v2720, 1.442695
    %v2767 = vpow.pop %v2766
    %v2768 = vmul.f32 %v2721, 1.442695
    %v2769 = vpow.pop %v2768
    %v2770 = vmul.f32 %v2722, 1.442695
    %v2771 = vpow.pop %v2770
    %v2772 = vmul.f32 %v2723, 1.442695
    %v2773 = vpow.pop %v2772
    %v2774 = vmul.f32 %v2724, 1.442695
    %v2775 = vpow.pop %v2774
    %v2776 = vmul.f32 %v2725, 1.442695
    %v2777 = vpow.pop %v2776
    %v2778 = vmul.f32 %v2726, 1.442695
    %v2779 = vpow.pop %v2778
    %v2780 = vmul.f32 %v2727, 1.442695
    %v2781 = vpow.pop %v2780
    %v2782 = vmul.f32 %v2728, 1.442695
    %v2783 = vpow.pop %v2782
    %v2784 = vmul.f32 %v2729, 1.442695
    %v2785 = vpow.pop %v2784
    %v2786 = vadd.f32 %v2731, 1.0
    %v2787 = vadd.f32 %v2733, 1.0
    %v2788 = vadd.f32 %v2735, 1.0
    %v2789 = vadd.f32 %v2737, 1.0
    %v2790 = vadd.f32 %v2739, 1.0
    %v2791 = vadd.f32 %v2741, 1.0
    %v2792 = vadd.f32 %v2743, 1.0
    %v2793 = vadd.f32 %v2745, 1.0
    %v2794 = vadd.f32 %v2747, 1.0
    %v2795 = vadd.f32 %v2749, 1.0
    %v2796 = vadd.f32 %v2751, 1.0
    %v2797 = vadd.f32 %v2753, 1.0
    %v2798 = vadd.f32 %v2755, 1.0
    %v2799 = vadd.f32 %v2757, 1.0
    %v2800 = vadd.f32 %v2759, 1.0
    %v2801 = vadd.f32 %v2761, 1.0
    %v2802 = vadd.f32 %v2763, 1.0
    %v2803 = vadd.f32 %v2765, 1.0
    %v2804 = vadd.f32 %v2767, 1.0
    %v2805 = vadd.f32 %v2769, 1.0
    %v2806 = vadd.f32 %v2771, 1.0
    %v2807 = vadd.f32 %v2773, 1.0
    %v2808 = vadd.f32 %v2775, 1.0
    %v2809 = vadd.f32 %v2777, 1.0
    %v2810 = vadd.f32 %v2779, 1.0
    %v2811 = vadd.f32 %v2781, 1.0
    %v2812 = vadd.f32 %v2783, 1.0
    %v2813 = vadd.f32 %v2785, 1.0
    %v2814 = vrcp.pop %v2786
    %v2815 = vmul.f32 1.0, %v2814
    %v2816 = vrcp.pop %v2787
    %v2817 = vmul.f32 1.0, %v2816
    %v2818 = vrcp.pop %v2788
    %v2819 = vmul.f32 1.0, %v2818
    %v2820 = vrcp.pop %v2789
    %v2821 = vmul.f32 1.0, %v2820
    %v2822 = vrcp.pop %v2790
    %v2823 = vmul.f32 1.0, %v2822
    %v2824 = vrcp.pop %v2791
    %v2825 = vmul.f32 1.0, %v2824
    %v2826 = vrcp.pop %v2792
    %v2827 = vmul.f32 1.0, %v2826
    %v2828 = vrcp.pop %v2793
    %v2829 = vmul.f32 1.0, %v2828
    %v2830 = vrcp.pop %v2794
    %v2831 = vmul.f32 1.0, %v2830
    %v2832 = vrcp.pop %v2795
    %v2833 = vmul.f32 1.0, %v2832
    %v2834 = vrcp.pop %v2796
    %v2835 = vmul.f32 1.0, %v2834
    %v2836 = vrcp.pop %v2797
    %v2837 = vmul.f32 1.0, %v2836
    %v2838 = vrcp.pop %v2798
    %v2839 = vmul.f32 1.0, %v2838
    %v2840 = vrcp.pop %v2799
    %v2841 = vmul.f32 1.0, %v2840
    %v2842 = vrcp.pop %v2800
    %v2843 = vmul.f32 1.0, %v2842
    %v2844 = vrcp.pop %v2801
    %v2845 = vmul.f32 1.0, %v2844
    %v2846 = vrcp.pop %v2802
    %v2847 = vmul.f32 1.0, %v2846
    %v2848 = vrcp.pop %v2803
    %v2849 = vmul.f32 1.0, %v2848
    %v2850 = vrcp.pop %v2804
    %v2851 = vmul.f32 1.0, %v2850
    %v2852 = vrcp.pop %v2805
    %v2853 = vmul.f32 1.0, %v2852
    %v2854 = vrcp.pop %v2806
    %v2855 = vmul.f32 1.0, %v2854
    %v2856 = vrcp.pop %v2807
    %v2857 = vmul.f32 1.0, %v2856
    %v2858 = vrcp.pop %v2808
    %v2859 = vmul.f32 1.0, %v2858
    %v2860 = vrcp.pop %v2809
    %v2861 = vmul.f32 1.0, %v2860
    %v2862 = vrcp.pop %v2810
    %v2863 = vmul.f32 1.0, %v2862
    %v2864 = vrcp.pop %v2811
    %v2865 = vmul.f32 1.0, %v2864
    %v2866 = vrcp.pop %v2812
    %v2867 = vmul.f32 1.0, %v2866
    %v2868 = vrcp.pop %v2813
    %v2869 = vmul.f32 1.0, %v2868
    %v2870 = vmul.f32 %v2564, %v2815
    %v2871 = vmul.f32 %v2569, %v2817
    %v2872 = vmul.f32 %v2574, %v2819
    %v2873 = vmul.f32 %v2579, %v2821
    %v2874 = vmul.f32 %v2584, %v2823
    %v2875 = vmul.f32 %v2589, %v2825
    %v2876 = vmul.f32 %v2594, %v2827
    %v2877 = vmul.f32 %v2599, %v2829
    %v2878 = vmul.f32 %v2604, %v2831
    %v2879 = vmul.f32 %v2609, %v2833
    %v2880 = vmul.f32 %v2614, %v2835
    %v2881 = vmul.f32 %v2619, %v2837
    %v2882 = vmul.f32 %v2624, %v2839
    %v2883 = vmul.f32 %v2629, %v2841
    %v2884 = vmul.f32 %v2634, %v2843
    %v2885 = vmul.f32 %v2639, %v2845
    %v2886 = vmul.f32 %v2644, %v2847
    %v2887 = vmul.f32 %v2649, %v2849
    %v2888 = vmul.f32 %v2654, %v2851
    %v2889 = vmul.f32 %v2659, %v2853
    %v2890 = vmul.f32 %v2664, %v2855
    %v2891 = vmul.f32 %v2669, %v2857
    %v2892 = vmul.f32 %v2674, %v2859
    %v2893 = vmul.f32 %v2679, %v2861
    %v2894 = vmul.f32 %v2684, %v2863
    %v2895 = vmul.f32 %v2689, %v2865
    %v2896 = vmul.f32 %v2694, %v2867
    %v2897 = vmul.f32 %v2699, %v2869
    %v2898 = vld [vmem:[%s13] sm:$0x1]
    %v2900 = vlaneseq
    %v2901 = vshrl.u32 %v2900, 7
    %v2902 = vsub.s32 0, %v2901
    %v2903 = vrot.slane %v2898, %v2902
    %v2905 = vmul.f32 %v2870, %v2903
    %v2906 = vmul.f32 %v2871, %v2903
    %v2907 = vmul.f32 %v2872, %v2903
    %v2908 = vmul.f32 %v2873, %v2903
    %v2909 = vmul.f32 %v2874, %v2903
    %v2910 = vmul.f32 %v2875, %v2903
    %v2911 = vmul.f32 %v2876, %v2903
    %v2912 = vmul.f32 %v2877, %v2903
    %v2913 = vmul.f32 %v2878, %v2903
    %v2914 = vmul.f32 %v2879, %v2903
    %v2915 = vmul.f32 %v2880, %v2903
    %v2916 = vmul.f32 %v2881, %v2903
    %v2917 = vmul.f32 %v2882, %v2903
    %v2918 = vmul.f32 %v2883, %v2903
    %v2919 = vmul.f32 %v2884, %v2903
    %v2920 = vmul.f32 %v2885, %v2903
    %v2921 = vmul.f32 %v2886, %v2903
    %v2922 = vmul.f32 %v2887, %v2903
    %v2923 = vmul.f32 %v2888, %v2903
    %v2924 = vmul.f32 %v2889, %v2903
    %v2925 = vmul.f32 %v2890, %v2903
    %v2926 = vmul.f32 %v2891, %v2903
    %v2927 = vmul.f32 %v2892, %v2903
    %v2928 = vmul.f32 %v2893, %v2903
    %v2929 = vmul.f32 %v2894, %v2903
    %v2930 = vmul.f32 %v2895, %v2903
    %v2931 = vmul.f32 %v2896, %v2903
    %v2932 = vmul.f32 %v2897, %v2903
    %v2933 = vsel %vm212, %v2905, 0.0
    %2934 = vadd.xlane.f32.xlu0 %v2933
    %v2935 = vpop.xlane.xlu0 %2934
    %v2936 = vsel %vm212, %v2906, 0.0
    %2937 = vadd.xlane.f32.xlu0 %v2936
    %v2938 = vpop.xlane.xlu0 %2937
    %v2939 = vsel %vm212, %v2907, 0.0
    %2940 = vadd.xlane.f32.xlu0 %v2939
    %v2941 = vpop.xlane.xlu0 %2940
    %v2942 = vsel %vm212, %v2908, 0.0
    %2943 = vadd.xlane.f32.xlu0 %v2942
    %v2944 = vpop.xlane.xlu0 %2943
    %v2945 = vsel %vm212, %v2909, 0.0
    %2946 = vadd.xlane.f32.xlu0 %v2945
    %v2947 = vpop.xlane.xlu0 %2946
    %v2948 = vsel %vm212, %v2910, 0.0
    %2949 = vadd.xlane.f32.xlu0 %v2948
    %v2950 = vpop.xlane.xlu0 %2949
    %v2951 = vsel %vm212, %v2911, 0.0
    %2952 = vadd.xlane.f32.xlu0 %v2951
    %v2953 = vpop.xlane.xlu0 %2952
    %v2954 = vsel %vm212, %v2912, 0.0
    %2955 = vadd.xlane.f32.xlu0 %v2954
    %v2956 = vpop.xlane.xlu0 %2955
    %v2957 = vsel %vm212, %v2913, 0.0
    %2958 = vadd.xlane.f32.xlu0 %v2957
    %v2959 = vpop.xlane.xlu0 %2958
    %v2960 = vsel %vm212, %v2914, 0.0
    %2961 = vadd.xlane.f32.xlu0 %v2960
    %v2962 = vpop.xlane.xlu0 %2961
    %v2963 = vsel %vm212, %v2915, 0.0
    %2964 = vadd.xlane.f32.xlu0 %v2963
    %v2965 = vpop.xlane.xlu0 %2964
    %v2966 = vsel %vm212, %v2916, 0.0
    %2967 = vadd.xlane.f32.xlu0 %v2966
    %v2968 = vpop.xlane.xlu0 %2967
    %v2969 = vsel %vm212, %v2917, 0.0
    %2970 = vadd.xlane.f32.xlu0 %v2969
    %v2971 = vpop.xlane.xlu0 %2970
    %v2972 = vsel %vm212, %v2918, 0.0
    %2973 = vadd.xlane.f32.xlu0 %v2972
    %v2974 = vpop.xlane.xlu0 %2973
    %v2975 = vsel %vm212, %v2919, 0.0
    %2976 = vadd.xlane.f32.xlu0 %v2975
    %v2977 = vpop.xlane.xlu0 %2976
    %v2978 = vsel %vm212, %v2920, 0.0
    %2979 = vadd.xlane.f32.xlu0 %v2978
    %v2980 = vpop.xlane.xlu0 %2979
    %v2981 = vsel %vm212, %v2921, 0.0
    %2982 = vadd.xlane.f32.xlu0 %v2981
    %v2983 = vpop.xlane.xlu0 %2982
    %v2984 = vsel %vm212, %v2922, 0.0
    %2985 = vadd.xlane.f32.xlu0 %v2984
    %v2986 = vpop.xlane.xlu0 %2985
    %v2987 = vsel %vm212, %v2923, 0.0
    %2988 = vadd.xlane.f32.xlu0 %v2987
    %v2989 = vpop.xlane.xlu0 %2988
    %v2990 = vsel %vm212, %v2924, 0.0
    %2991 = vadd.xlane.f32.xlu0 %v2990
    %v2992 = vpop.xlane.xlu0 %2991
    %v2993 = vsel %vm212, %v2925, 0.0
    %2994 = vadd.xlane.f32.xlu0 %v2993
    %v2995 = vpop.xlane.xlu0 %2994
    %v2996 = vsel %vm212, %v2926, 0.0
    %2997 = vadd.xlane.f32.xlu0 %v2996
    %v2998 = vpop.xlane.xlu0 %2997
    %v2999 = vsel %vm212, %v2927, 0.0
    %3000 = vadd.xlane.f32.xlu0 %v2999
    %v3001 = vpop.xlane.xlu0 %3000
    %v3002 = vsel %vm212, %v2928, 0.0
    %3003 = vadd.xlane.f32.xlu0 %v3002
    %v3004 = vpop.xlane.xlu0 %3003
    %v3005 = vsel %vm212, %v2929, 0.0
    %3006 = vadd.xlane.f32.xlu0 %v3005
    %v3007 = vpop.xlane.xlu0 %3006
    %v3008 = vsel %vm212, %v2930, 0.0
    %3009 = vadd.xlane.f32.xlu0 %v3008
    %v3010 = vpop.xlane.xlu0 %3009
    %v3011 = vsel %vm212, %v2931, 0.0
    %3012 = vadd.xlane.f32.xlu0 %v3011
    %v3013 = vpop.xlane.xlu0 %3012
    %v3014 = vsel %vm212, %v2932, 0.0
    %3015 = vadd.xlane.f32.xlu0 %v3014
    %v3016 = vpop.xlane.xlu0 %3015
    %v3017 = vld [vmem:[%s14] sm:$0x1]
    %v3019 = vlaneseq
    %v3020 = vshrl.u32 %v3019, 7
    %v3021 = vsub.s32 0, %v3020
    %v3022 = vrot.slane %v3017, %v3021
    %v3024 = vadd.f32 %v2935, %v3022
    %v3025 = vadd.f32 %v2938, %v3022
    %v3026 = vadd.f32 %v2941, %v3022
    %v3027 = vadd.f32 %v2944, %v3022
    %v3028 = vadd.f32 %v2947, %v3022
    %v3029 = vadd.f32 %v2950, %v3022
    %v3030 = vadd.f32 %v2953, %v3022
    %v3031 = vadd.f32 %v2956, %v3022
    %v3032 = vadd.f32 %v2959, %v3022
    %v3033 = vadd.f32 %v2962, %v3022
    %v3034 = vadd.f32 %v2965, %v3022
    %v3035 = vadd.f32 %v2968, %v3022
    %v3036 = vadd.f32 %v2971, %v3022
    %v3037 = vadd.f32 %v2974, %v3022
    %v3038 = vadd.f32 %v2977, %v3022
    %v3039 = vadd.f32 %v2980, %v3022
    %v3040 = vadd.f32 %v2983, %v3022
    %v3041 = vadd.f32 %v2986, %v3022
    %v3042 = vadd.f32 %v2989, %v3022
    %v3043 = vadd.f32 %v2992, %v3022
    %v3044 = vadd.f32 %v2995, %v3022
    %v3045 = vadd.f32 %v2998, %v3022
    %v3046 = vadd.f32 %v3001, %v3022
    %v3047 = vadd.f32 %v3004, %v3022
    %v3048 = vadd.f32 %v3007, %v3022
    %v3049 = vadd.f32 %v3010, %v3022
    %v3050 = vadd.f32 %v3013, %v3022
    %v3051 = vadd.f32 %v3016, %v3022
    %v3052 = vxor.u32 %v3024, 2147483648
    %v3053 = vxor.u32 %v3025, 2147483648
    %v3054 = vxor.u32 %v3026, 2147483648
    %v3055 = vxor.u32 %v3027, 2147483648
    %v3056 = vxor.u32 %v3028, 2147483648
    %v3057 = vxor.u32 %v3029, 2147483648
    %v3058 = vxor.u32 %v3030, 2147483648
    %v3059 = vxor.u32 %v3031, 2147483648
    %v3060 = vxor.u32 %v3032, 2147483648
    %v3061 = vxor.u32 %v3033, 2147483648
    %v3062 = vxor.u32 %v3034, 2147483648
    %v3063 = vxor.u32 %v3035, 2147483648
    %v3064 = vxor.u32 %v3036, 2147483648
    %v3065 = vxor.u32 %v3037, 2147483648
    %v3066 = vxor.u32 %v3038, 2147483648
    %v3067 = vxor.u32 %v3039, 2147483648
    %v3068 = vxor.u32 %v3040, 2147483648
    %v3069 = vxor.u32 %v3041, 2147483648
    %v3070 = vxor.u32 %v3042, 2147483648
    %v3071 = vxor.u32 %v3043, 2147483648
    %v3072 = vxor.u32 %v3044, 2147483648
    %v3073 = vxor.u32 %v3045, 2147483648
    %v3074 = vxor.u32 %v3046, 2147483648
    %v3075 = vxor.u32 %v3047, 2147483648
    %v3076 = vxor.u32 %v3048, 2147483648
    %v3077 = vxor.u32 %v3049, 2147483648
    %v3078 = vxor.u32 %v3050, 2147483648
    %v3079 = vxor.u32 %v3051, 2147483648
    %v3080 = vmul.f32 %v3052, 1.442695
    %v3081 = vpow.pop %v3080
    %v3082 = vmul.f32 %v3053, 1.442695
    %v3083 = vpow.pop %v3082
    %v3084 = vmul.f32 %v3054, 1.442695
    %v3085 = vpow.pop %v3084
    %v3086 = vmul.f32 %v3055, 1.442695
    %v3087 = vpow.pop %v3086
    %v3088 = vmul.f32 %v3056, 1.442695
    %v3089 = vpow.pop %v3088
    %v3090 = vmul.f32 %v3057, 1.442695
    %v3091 = vpow.pop %v3090
    %v3092 = vmul.f32 %v3058, 1.442695
    %v3093 = vpow.pop %v3092
    %v3094 = vmul.f32 %v3059, 1.442695
    %v3095 = vpow.pop %v3094
    %v3096 = vmul.f32 %v3060, 1.442695
    %v3097 = vpow.pop %v3096
    %v3098 = vmul.f32 %v3061, 1.442695
    %v3099 = vpow.pop %v3098
    %v3100 = vmul.f32 %v3062, 1.442695
    %v3101 = vpow.pop %v3100
    %v3102 = vmul.f32 %v3063, 1.442695
    %v3103 = vpow.pop %v3102
    %v3104 = vmul.f32 %v3064, 1.442695
    %v3105 = vpow.pop %v3104
    %v3106 = vmul.f32 %v3065, 1.442695
    %v3107 = vpow.pop %v3106
    %v3108 = vmul.f32 %v3066, 1.442695
    %v3109 = vpow.pop %v3108
    %v3110 = vmul.f32 %v3067, 1.442695
    %v3111 = vpow.pop %v3110
    %v3112 = vmul.f32 %v3068, 1.442695
    %v3113 = vpow.pop %v3112
    %v3114 = vmul.f32 %v3069, 1.442695
    %v3115 = vpow.pop %v3114
    %v3116 = vmul.f32 %v3070, 1.442695
    %v3117 = vpow.pop %v3116
    %v3118 = vmul.f32 %v3071, 1.442695
    %v3119 = vpow.pop %v3118
    %v3120 = vmul.f32 %v3072, 1.442695
    %v3121 = vpow.pop %v3120
    %v3122 = vmul.f32 %v3073, 1.442695
    %v3123 = vpow.pop %v3122
    %v3124 = vmul.f32 %v3074, 1.442695
    %v3125 = vpow.pop %v3124
    %v3126 = vmul.f32 %v3075, 1.442695
    %v3127 = vpow.pop %v3126
    %v3128 = vmul.f32 %v3076, 1.442695
    %v3129 = vpow.pop %v3128
    %v3130 = vmul.f32 %v3077, 1.442695
    %v3131 = vpow.pop %v3130
    %v3132 = vmul.f32 %v3078, 1.442695
    %v3133 = vpow.pop %v3132
    %v3134 = vmul.f32 %v3079, 1.442695
    %v3135 = vpow.pop %v3134
    %v3136 = vadd.f32 %v3081, 1.0
    %v3137 = vadd.f32 %v3083, 1.0
    %v3138 = vadd.f32 %v3085, 1.0
    %v3139 = vadd.f32 %v3087, 1.0
    %v3140 = vadd.f32 %v3089, 1.0
    %v3141 = vadd.f32 %v3091, 1.0
    %v3142 = vadd.f32 %v3093, 1.0
    %v3143 = vadd.f32 %v3095, 1.0
    %v3144 = vadd.f32 %v3097, 1.0
    %v3145 = vadd.f32 %v3099, 1.0
    %v3146 = vadd.f32 %v3101, 1.0
    %v3147 = vadd.f32 %v3103, 1.0
    %v3148 = vadd.f32 %v3105, 1.0
    %v3149 = vadd.f32 %v3107, 1.0
    %v3150 = vadd.f32 %v3109, 1.0
    %v3151 = vadd.f32 %v3111, 1.0
    %v3152 = vadd.f32 %v3113, 1.0
    %v3153 = vadd.f32 %v3115, 1.0
    %v3154 = vadd.f32 %v3117, 1.0
    %v3155 = vadd.f32 %v3119, 1.0
    %v3156 = vadd.f32 %v3121, 1.0
    %v3157 = vadd.f32 %v3123, 1.0
    %v3158 = vadd.f32 %v3125, 1.0
    %v3159 = vadd.f32 %v3127, 1.0
    %v3160 = vadd.f32 %v3129, 1.0
    %v3161 = vadd.f32 %v3131, 1.0
    %v3162 = vadd.f32 %v3133, 1.0
    %v3163 = vadd.f32 %v3135, 1.0
    %v3164 = vrcp.pop %v3136
    %v3165 = vmul.f32 1.0, %v3164
    %v3166 = vrcp.pop %v3137
    %v3167 = vmul.f32 1.0, %v3166
    %v3168 = vrcp.pop %v3138
    %v3169 = vmul.f32 1.0, %v3168
    %v3170 = vrcp.pop %v3139
    %v3171 = vmul.f32 1.0, %v3170
    %v3172 = vrcp.pop %v3140
    %v3173 = vmul.f32 1.0, %v3172
    %v3174 = vrcp.pop %v3141
    %v3175 = vmul.f32 1.0, %v3174
    %v3176 = vrcp.pop %v3142
    %v3177 = vmul.f32 1.0, %v3176
    %v3178 = vrcp.pop %v3143
    %v3179 = vmul.f32 1.0, %v3178
    %v3180 = vrcp.pop %v3144
    %v3181 = vmul.f32 1.0, %v3180
    %v3182 = vrcp.pop %v3145
    %v3183 = vmul.f32 1.0, %v3182
    %v3184 = vrcp.pop %v3146
    %v3185 = vmul.f32 1.0, %v3184
    %v3186 = vrcp.pop %v3147
    %v3187 = vmul.f32 1.0, %v3186
    %v3188 = vrcp.pop %v3148
    %v3189 = vmul.f32 1.0, %v3188
    %v3190 = vrcp.pop %v3149
    %v3191 = vmul.f32 1.0, %v3190
    %v3192 = vrcp.pop %v3150
    %v3193 = vmul.f32 1.0, %v3192
    %v3194 = vrcp.pop %v3151
    %v3195 = vmul.f32 1.0, %v3194
    %v3196 = vrcp.pop %v3152
    %v3197 = vmul.f32 1.0, %v3196
    %v3198 = vrcp.pop %v3153
    %v3199 = vmul.f32 1.0, %v3198
    %v3200 = vrcp.pop %v3154
    %v3201 = vmul.f32 1.0, %v3200
    %v3202 = vrcp.pop %v3155
    %v3203 = vmul.f32 1.0, %v3202
    %v3204 = vrcp.pop %v3156
    %v3205 = vmul.f32 1.0, %v3204
    %v3206 = vrcp.pop %v3157
    %v3207 = vmul.f32 1.0, %v3206
    %v3208 = vrcp.pop %v3158
    %v3209 = vmul.f32 1.0, %v3208
    %v3210 = vrcp.pop %v3159
    %v3211 = vmul.f32 1.0, %v3210
    %v3212 = vrcp.pop %v3160
    %v3213 = vmul.f32 1.0, %v3212
    %v3214 = vrcp.pop %v3161
    %v3215 = vmul.f32 1.0, %v3214
    %v3216 = vrcp.pop %v3162
    %v3217 = vmul.f32 1.0, %v3216
    %v3218 = vrcp.pop %v3163
    %v3219 = vmul.f32 1.0, %v3218
    %3221 = vset.pattern.permute.xlu0 0
    %3222 = vperm.xlu0 %3221, %v3165
    %v3223 = vpop.permute.xlu0 %3222
    %3226 = vset.pattern.permute.xlu0 0
    %3227 = vperm.xlu0 %3226, %v3167
    %v3228 = vpop.permute.xlu0 %3227
    %3231 = vset.pattern.permute.xlu0 0
    %3232 = vperm.xlu0 %3231, %v3169
    %v3233 = vpop.permute.xlu0 %3232
    %3236 = vset.pattern.permute.xlu0 0
    %3237 = vperm.xlu0 %3236, %v3171
    %v3238 = vpop.permute.xlu0 %3237
    %3241 = vset.pattern.permute.xlu0 0
    %3242 = vperm.xlu0 %3241, %v3173
    %v3243 = vpop.permute.xlu0 %3242
    %3246 = vset.pattern.permute.xlu0 0
    %3247 = vperm.xlu0 %3246, %v3175
    %v3248 = vpop.permute.xlu0 %3247
    %3251 = vset.pattern.permute.xlu0 0
    %3252 = vperm.xlu0 %3251, %v3177
    %v3253 = vpop.permute.xlu0 %3252
    %3256 = vset.pattern.permute.xlu0 0
    %3257 = vperm.xlu0 %3256, %v3179
    %v3258 = vpop.permute.xlu0 %3257
    %3261 = vset.pattern.permute.xlu0 0
    %3262 = vperm.xlu0 %3261, %v3181
    %v3263 = vpop.permute.xlu0 %3262
    %3266 = vset.pattern.permute.xlu0 0
    %3267 = vperm.xlu0 %3266, %v3183
    %v3268 = vpop.permute.xlu0 %3267
    %3271 = vset.pattern.permute.xlu0 0
    %3272 = vperm.xlu0 %3271, %v3185
    %v3273 = vpop.permute.xlu0 %3272
    %3276 = vset.pattern.permute.xlu0 0
    %3277 = vperm.xlu0 %3276, %v3187
    %v3278 = vpop.permute.xlu0 %3277
    %3281 = vset.pattern.permute.xlu0 0
    %3282 = vperm.xlu0 %3281, %v3189
    %v3283 = vpop.permute.xlu0 %3282
    %3286 = vset.pattern.permute.xlu0 0
    %3287 = vperm.xlu0 %3286, %v3191
    %v3288 = vpop.permute.xlu0 %3287
    %3291 = vset.pattern.permute.xlu0 0
    %3292 = vperm.xlu0 %3291, %v3193
    %v3293 = vpop.permute.xlu0 %3292
    %3296 = vset.pattern.permute.xlu0 0
    %3297 = vperm.xlu0 %3296, %v3195
    %v3298 = vpop.permute.xlu0 %3297
    %3301 = vset.pattern.permute.xlu0 0
    %3302 = vperm.xlu0 %3301, %v3197
    %v3303 = vpop.permute.xlu0 %3302
    %3306 = vset.pattern.permute.xlu0 0
    %3307 = vperm.xlu0 %3306, %v3199
    %v3308 = vpop.permute.xlu0 %3307
    %3311 = vset.pattern.permute.xlu0 0
    %3312 = vperm.xlu0 %3311, %v3201
    %v3313 = vpop.permute.xlu0 %3312
    %3316 = vset.pattern.permute.xlu0 0
    %3317 = vperm.xlu0 %3316, %v3203
    %v3318 = vpop.permute.xlu0 %3317
    %3321 = vset.pattern.permute.xlu0 0
    %3322 = vperm.xlu0 %3321, %v3205
    %v3323 = vpop.permute.xlu0 %3322
    %3326 = vset.pattern.permute.xlu0 0
    %3327 = vperm.xlu0 %3326, %v3207
    %v3328 = vpop.permute.xlu0 %3327
    %3331 = vset.pattern.permute.xlu0 0
    %3332 = vperm.xlu0 %3331, %v3209
    %v3333 = vpop.permute.xlu0 %3332
    %3336 = vset.pattern.permute.xlu0 0
    %3337 = vperm.xlu0 %3336, %v3211
    %v3338 = vpop.permute.xlu0 %3337
    %3341 = vset.pattern.permute.xlu0 0
    %3342 = vperm.xlu0 %3341, %v3213
    %v3343 = vpop.permute.xlu0 %3342
    %3346 = vset.pattern.permute.xlu0 0
    %3347 = vperm.xlu0 %3346, %v3215
    %v3348 = vpop.permute.xlu0 %3347
    %3351 = vset.pattern.permute.xlu0 0
    %3352 = vperm.xlu0 %3351, %v3217
    %v3353 = vpop.permute.xlu0 %3352
    %3356 = vset.pattern.permute.xlu0 0
    %3357 = vperm.xlu0 %3356, %v3219
    %v3358 = vpop.permute.xlu0 %3357
    %v3360 = vmul.f32 %v2870, %v3223
    %v3361 = vmul.f32 %v2871, %v3228
    %v3362 = vmul.f32 %v2872, %v3233
    %v3363 = vmul.f32 %v2873, %v3238
    %v3364 = vmul.f32 %v2874, %v3243
    %v3365 = vmul.f32 %v2875, %v3248
    %v3366 = vmul.f32 %v2876, %v3253
    %v3367 = vmul.f32 %v2877, %v3258
    %v3368 = vmul.f32 %v2878, %v3263
    %v3369 = vmul.f32 %v2879, %v3268
    %v3370 = vmul.f32 %v2880, %v3273
    %v3371 = vmul.f32 %v2881, %v3278
    %v3372 = vmul.f32 %v2882, %v3283
    %v3373 = vmul.f32 %v2883, %v3288
    %v3374 = vmul.f32 %v2884, %v3293
    %v3375 = vmul.f32 %v2885, %v3298
    %v3376 = vmul.f32 %v2886, %v3303
    %v3377 = vmul.f32 %v2887, %v3308
    %v3378 = vmul.f32 %v2888, %v3313
    %v3379 = vmul.f32 %v2889, %v3318
    %v3380 = vmul.f32 %v2890, %v3323
    %v3381 = vmul.f32 %v2891, %v3328
    %v3382 = vmul.f32 %v2892, %v3333
    %v3383 = vmul.f32 %v2893, %v3338
    %v3384 = vmul.f32 %v2894, %v3343
    %v3385 = vmul.f32 %v2895, %v3348
    %v3386 = vmul.f32 %v2896, %v3353
    %v3387 = vmul.f32 %v2897, %v3358
    %3389 = vset.pattern.permute.xlu0 0
    %3390 = vperm.xlu0 %3389, %v156
    %v3391 = vpop.permute.xlu0 %3390
    %3394 = vset.pattern.permute.xlu0 0
    %3395 = vperm.xlu0 %3394, %v157
    %v3396 = vpop.permute.xlu0 %3395
    %3399 = vset.pattern.permute.xlu0 0
    %3400 = vperm.xlu0 %3399, %v158
    %v3401 = vpop.permute.xlu0 %3400
    %3404 = vset.pattern.permute.xlu0 0
    %3405 = vperm.xlu0 %3404, %v159
    %v3406 = vpop.permute.xlu0 %3405
    %3409 = vset.pattern.permute.xlu0 0
    %3410 = vperm.xlu0 %3409, %v160
    %v3411 = vpop.permute.xlu0 %3410
    %3414 = vset.pattern.permute.xlu0 0
    %3415 = vperm.xlu0 %3414, %v161
    %v3416 = vpop.permute.xlu0 %3415
    %3419 = vset.pattern.permute.xlu0 0
    %3420 = vperm.xlu0 %3419, %v162
    %v3421 = vpop.permute.xlu0 %3420
    %3424 = vset.pattern.permute.xlu0 0
    %3425 = vperm.xlu0 %3424, %v163
    %v3426 = vpop.permute.xlu0 %3425
    %3429 = vset.pattern.permute.xlu0 0
    %3430 = vperm.xlu0 %3429, %v164
    %v3431 = vpop.permute.xlu0 %3430
    %3434 = vset.pattern.permute.xlu0 0
    %3435 = vperm.xlu0 %3434, %v165
    %v3436 = vpop.permute.xlu0 %3435
    %3439 = vset.pattern.permute.xlu0 0
    %3440 = vperm.xlu0 %3439, %v166
    %v3441 = vpop.permute.xlu0 %3440
    %3444 = vset.pattern.permute.xlu0 0
    %3445 = vperm.xlu0 %3444, %v167
    %v3446 = vpop.permute.xlu0 %3445
    %3449 = vset.pattern.permute.xlu0 0
    %3450 = vperm.xlu0 %3449, %v168
    %v3451 = vpop.permute.xlu0 %3450
    %3454 = vset.pattern.permute.xlu0 0
    %3455 = vperm.xlu0 %3454, %v169
    %v3456 = vpop.permute.xlu0 %3455
    %3459 = vset.pattern.permute.xlu0 0
    %3460 = vperm.xlu0 %3459, %v170
    %v3461 = vpop.permute.xlu0 %3460
    %3464 = vset.pattern.permute.xlu0 0
    %3465 = vperm.xlu0 %3464, %v171
    %v3466 = vpop.permute.xlu0 %3465
    %3469 = vset.pattern.permute.xlu0 0
    %3470 = vperm.xlu0 %3469, %v172
    %v3471 = vpop.permute.xlu0 %3470
    %3474 = vset.pattern.permute.xlu0 0
    %3475 = vperm.xlu0 %3474, %v173
    %v3476 = vpop.permute.xlu0 %3475
    %3479 = vset.pattern.permute.xlu0 0
    %3480 = vperm.xlu0 %3479, %v174
    %v3481 = vpop.permute.xlu0 %3480
    %3484 = vset.pattern.permute.xlu0 0
    %3485 = vperm.xlu0 %3484, %v175
    %v3486 = vpop.permute.xlu0 %3485
    %3489 = vset.pattern.permute.xlu0 0
    %3490 = vperm.xlu0 %3489, %v176
    %v3491 = vpop.permute.xlu0 %3490
    %3494 = vset.pattern.permute.xlu0 0
    %3495 = vperm.xlu0 %3494, %v177
    %v3496 = vpop.permute.xlu0 %3495
    %3499 = vset.pattern.permute.xlu0 0
    %3500 = vperm.xlu0 %3499, %v178
    %v3501 = vpop.permute.xlu0 %3500
    %3504 = vset.pattern.permute.xlu0 0
    %3505 = vperm.xlu0 %3504, %v179
    %v3506 = vpop.permute.xlu0 %3505
    %3509 = vset.pattern.permute.xlu0 0
    %3510 = vperm.xlu0 %3509, %v180
    %v3511 = vpop.permute.xlu0 %3510
    %3514 = vset.pattern.permute.xlu0 0
    %3515 = vperm.xlu0 %3514, %v181
    %v3516 = vpop.permute.xlu0 %3515
    %3519 = vset.pattern.permute.xlu0 0
    %3520 = vperm.xlu0 %3519, %v182
    %v3521 = vpop.permute.xlu0 %3520
    %3524 = vset.pattern.permute.xlu0 0
    %3525 = vperm.xlu0 %3524, %v183
    %v3526 = vpop.permute.xlu0 %3525
    %v3528 = vmul.f32 %v3360, %v3391
    %v3529 = vmul.f32 %v3361, %v3396
    %v3530 = vmul.f32 %v3362, %v3401
    %v3531 = vmul.f32 %v3363, %v3406
    %v3532 = vmul.f32 %v3364, %v3411
    %v3533 = vmul.f32 %v3365, %v3416
    %v3534 = vmul.f32 %v3366, %v3421
    %v3535 = vmul.f32 %v3367, %v3426
    %v3536 = vmul.f32 %v3368, %v3431
    %v3537 = vmul.f32 %v3369, %v3436
    %v3538 = vmul.f32 %v3370, %v3441
    %v3539 = vmul.f32 %v3371, %v3446
    %v3540 = vmul.f32 %v3372, %v3451
    %v3541 = vmul.f32 %v3373, %v3456
    %v3542 = vmul.f32 %v3374, %v3461
    %v3543 = vmul.f32 %v3375, %v3466
    %v3544 = vmul.f32 %v3376, %v3471
    %v3545 = vmul.f32 %v3377, %v3476
    %v3546 = vmul.f32 %v3378, %v3481
    %v3547 = vmul.f32 %v3379, %v3486
    %v3548 = vmul.f32 %v3380, %v3491
    %v3549 = vmul.f32 %v3381, %v3496
    %v3550 = vmul.f32 %v3382, %v3501
    %v3551 = vmul.f32 %v3383, %v3506
    %v3552 = vmul.f32 %v3384, %v3511
    %v3553 = vmul.f32 %v3385, %v3516
    %v3554 = vmul.f32 %v3386, %v3521
    %v3555 = vmul.f32 %v3387, %v3526
    %vm3556 = vcmask 785408
    %v3558 = vsel %vm3556, %v137, 0
    %v3561 = vsel %vm3556, %v139, 0
    %v3564 = vsel %vm3556, %v141, 0
    %v3567 = vsel %vm3556, %v143, 0
    %3569 = vmatprep.subr.mxu0 0.0
    %3570 = vmatpush1.msra.mxu0 %v3528
    %3571 = vmatprep.subr.mxu0 0.0
    %3572 = vmatpush1.msra.mxu0 %v3529
    %3573 = vmatprep.subr.mxu0 0.0
    %3574 = vmatpush1.msra.mxu0 %v3530
    %3575 = vmatprep.subr.mxu0 0.0
    %3576 = vmatpush1.msra.mxu0 %v3531
    %3577 = vmatprep.subr.mxu0 0.0
    %3578 = vmatpush1.msra.mxu0 %v3532
    %3579 = vmatprep.subr.mxu0 0.0
    %3580 = vmatpush1.msra.mxu0 %v3533
    %3581 = vmatprep.subr.mxu0 0.0
    %3582 = vmatpush1.msra.mxu0 %v3534
    %3583 = vmatprep.subr.mxu0 0.0
    %3584 = vmatpush1.msra.mxu0 %v3535
    %3585 = vmatprep.subr.mxu0 0.0
    %3586 = vmatpush1.msra.mxu0 %v3536
    %3587 = vmatprep.subr.mxu0 0.0
    %3588 = vmatpush1.msra.mxu0 %v3537
    %3589 = vmatprep.subr.mxu0 0.0
    %3590 = vmatpush1.msra.mxu0 %v3538
    %3591 = vmatprep.subr.mxu0 0.0
    %3592 = vmatpush1.msra.mxu0 %v3539
    %3593 = vmatprep.subr.mxu0 0.0
    %3594 = vmatpush1.msra.mxu0 %v3540
    %3595 = vmatprep.subr.mxu0 0.0
    %3596 = vmatpush1.msra.mxu0 %v3541
    %3597 = vmatprep.subr.mxu0 0.0
    %3598 = vmatpush1.msra.mxu0 %v3542
    %3599 = vmatprep.subr.mxu0 0.0
    %3600 = vmatpush1.msra.mxu0 %v3543
    %3601 = vmatprep.subr.mxu0 0.0
    %3602 = vmatpush1.msra.mxu0 %v3544
    %3603 = vmatprep.subr.mxu0 0.0
    %3604 = vmatpush1.msra.mxu0 %v3545
    %3605 = vmatprep.subr.mxu0 0.0
    %3606 = vmatpush1.msra.mxu0 %v3546
    %3607 = vmatprep.subr.mxu0 0.0
    %3608 = vmatpush1.msra.mxu0 %v3547
    %3609 = vmatprep.subr.mxu0 0.0
    %3610 = vmatpush1.msra.mxu0 %v3548
    %3611 = vmatprep.subr.mxu0 0.0
    %3612 = vmatpush1.msra.mxu0 %v3549
    %3613 = vmatprep.subr.mxu0 0.0
    %3614 = vmatpush1.msra.mxu0 %v3550
    %3615 = vmatprep.subr.mxu0 0.0
    %3616 = vmatpush1.msra.mxu0 %v3551
    %3617 = vmatprep.subr.mxu0 0.0
    %3618 = vmatpush1.msra.mxu0 %v3552
    %3619 = vmatprep.subr.mxu0 0.0
    %3620 = vmatpush1.msra.mxu0 %v3553
    %3621 = vmatprep.subr.mxu0 0.0
    %3622 = vmatpush1.msra.mxu0 %v3554
    %3623 = vmatprep.subr.mxu0 0.0
    %3624 = vmatpush1.msra.mxu0 %v3555
    %3625 = vmatprep.subr.mxu0 0.0
    %3626 = vmatpush1.msra.mxu0 0.0
    %3627 = vmatprep.subr.mxu0 0.0
    %3628 = vmatpush1.msra.mxu0 0.0
    %3629 = vmatprep.subr.mxu0 0.0
    %3630 = vmatpush1.msra.mxu0 0.0
    %3631 = vmatprep.subr.mxu0 0.0
    %3632 = vmatpush1.msra.mxu0 0.0
    %3633 = vmatprep.mubr.f32.mxu0 %v3558
    %3634 = vmatmul.mubr.f32.gmra.mrb[0].mxu0 %v136
    %v3635 = vpop.f32.mrb[0].mxu0
    %v3636 = vadd.f32 0.0, %v3635
    %v3637 = vpop.f32.mrb[0].mxu0
    %3638 = vmatprep.mubr.f32.mxu0 %v3561
    %3639 = vmatmul.mubr.f32.gmra.mrb[0].mxu0 %v138
    %v3640 = vpop.f32.mrb[0].mxu0
    %v3641 = vadd.f32 0.0, %v3640
    %v3642 = vpop.f32.mrb[0].mxu0
    %3643 = vmatprep.mubr.f32.mxu0 %v3564
    %3644 = vmatmul.mubr.f32.gmra.mrb[0].mxu0 %v140
    %v3645 = vpop.f32.mrb[0].mxu0
    %v3646 = vadd.f32 0.0, %v3645
    %v3647 = vpop.f32.mrb[0].mxu0
    %3648 = vmatprep.mubr.f32.mxu0 %v3567
    %3649 = vmatmul.mubr.f32.gmra.mrb[0].mxu0 %v142
    %v3650 = vpop.f32.mrb[0].mxu0
    %v3651 = vadd.f32 0.0, %v3650
    %v3652 = vpop.f32.mrb[0].mxu0
    %3653 = vdwg.mxu0
    %v3654 = vmul.f32 %v3636, 0.01
    %v3655 = vmul.f32 %v3641, 0.01
    %v3656 = vmul.f32 %v3646, 0.01
    %v3657 = vmul.f32 %v3651, 0.01
    %3658 = vst.msk [vmem:[#allocation3] sm:$0xff] %vm212, %v144
    %3659 = vst.msk [vmem:[#allocation3 + $0x8] sm:$0xff] %vm212, %v145
    %3660 = vst.msk [vmem:[#allocation3 + $0x10] sm:$0xff] %vm212, %v146
    %3661 = vst.msk [vmem:[#allocation3 + $0x18] sm:$0xff] %vm212, %v147
    %3666 = vrot.lane.b32.xlu0 %v3654, 32
    %v3667 = vpop.permute.xlu0 %3666
    %3668 = vrot.lane.b32.xlu0 %v3655, 32
    %v3669 = vpop.permute.xlu0 %3668
    %3670 = vrot.lane.b32.xlu0 %v3656, 32
    %v3671 = vpop.permute.xlu0 %3670
    %3672 = vrot.lane.b32.xlu0 %v3657, 32
    %v3673 = vpop.permute.xlu0 %3672
    %3678 = vst.msk [vmem:[#allocation3] sm:$0xff] %vm1839, %v3667
    %3679 = vst.msk [vmem:[#allocation3 + $0x8] sm:$0xff] %vm1839, %v3669
    %3680 = vst.msk [vmem:[#allocation3 + $0x10] sm:$0xff] %vm1839, %v3671
    %3681 = vst.msk [vmem:[#allocation3 + $0x18] sm:$0xff] %vm1839, %v3673
    %v3682 = vld [vmem:[#allocation3] sm:$0xff]
    %v3683 = vld [vmem:[#allocation3 + $0x8] sm:$0xff]
    %v3684 = vld [vmem:[#allocation3 + $0x10] sm:$0xff]
    %v3685 = vld [vmem:[#allocation3 + $0x18] sm:$0xff]
    %v3686 = vld [vmem:[%s15] sm:$0xff]
    %v3687 = vld [vmem:[%s15 + $0x8] sm:$0xff]
    %v3688 = vld [vmem:[%s15 + $0x10] sm:$0xff]
    %v3689 = vld [vmem:[%s15 + $0x18] sm:$0xff]
    %v3690 = vld [vmem:[%s15 + $0x20] sm:$0xff]
    %v3691 = vld [vmem:[%s15 + $0x28] sm:$0xff]
    %v3692 = vld [vmem:[%s15 + $0x30] sm:$0xff]
    %v3693 = vld [vmem:[%s15 + $0x38] sm:$0xff]
    %v3694 = vld [vmem:[%s16] sm:$0x1]
    %v3696 = vlaneseq
    %v3697 = vshrl.u32 %v3696, 7
    %v3698 = vsub.s32 0, %v3697
    %v3699 = vrot.slane %v3694, %v3698
    %vm3701 = vcmask 523264
    %v3703 = vsel %vm3701, %v3682, 0
    %v3706 = vsel %vm3701, %v3683, 0
    %v3709 = vsel %vm3701, %v3684, 0
    %v3712 = vsel %vm3701, %v3685, 0
    %3714 = vmatprep.subr.mxu0 0.0
    %3715 = vmatpush1.msra.mxu0 %v3686
    %3716 = vmatprep.subr.mxu0 0.0
    %3717 = vmatpush1.msra.mxu0 %v3687
    %3718 = vmatprep.subr.mxu0 0.0
    %3719 = vmatpush1.msra.mxu0 %v3688
    %3720 = vmatprep.subr.mxu0 0.0
    %3721 = vmatpush1.msra.mxu0 %v3689
    %3722 = vmatprep.subr.mxu0 0.0
    %3723 = vmatpush1.msra.mxu0 %v3690
    %3724 = vmatprep.subr.mxu0 0.0
    %3725 = vmatpush1.msra.mxu0 %v3691
    %3726 = vmatprep.subr.mxu0 0.0
    %3727 = vmatpush1.msra.mxu0 %v3692
    %3728 = vmatprep.subr.mxu0 0.0
    %3729 = vmatpush1.msra.mxu0 %v3693
    %3730 = vmatprep.subr.mxu0 0.0
    %3731 = vmatpush1.msra.mxu0 0.0
    %3732 = vmatprep.subr.mxu0 0.0
    %3733 = vmatpush1.msra.mxu0 0.0
    %3734 = vmatprep.subr.mxu0 0.0
    %3735 = vmatpush1.msra.mxu0 0.0
    %3736 = vmatprep.subr.mxu0 0.0
    %3737 = vmatpush1.msra.mxu0 0.0
    %3738 = vmatprep.subr.mxu0 0.0
    %3739 = vmatpush1.msra.mxu0 0.0
    %3740 = vmatprep.subr.mxu0 0.0
    %3741 = vmatpush1.msra.mxu0 0.0
    %3742 = vmatprep.subr.mxu0 0.0
    %3743 = vmatpush1.msra.mxu0 0.0
    %3744 = vmatprep.subr.mxu0 0.0
    %3745 = vmatpush1.msra.mxu0 0.0
    %3746 = vmatprep.subr.mxu0 0.0
    %3747 = vmatpush1.msra.mxu0 0.0
    %3748 = vmatprep.subr.mxu0 0.0
    %3749 = vmatpush1.msra.mxu0 0.0
    %3750 = vmatprep.subr.mxu0 0.0
    %3751 = vmatpush1.msra.mxu0 0.0
    %3752 = vmatprep.subr.mxu0 0.0
    %3753 = vmatpush1.msra.mxu0 0.0
    %3754 = vmatprep.subr.mxu0 0.0
    %3755 = vmatpush1.msra.mxu0 0.0
    %3756 = vmatprep.subr.mxu0 0.0
    %3757 = vmatpush1.msra.mxu0 0.0
    %3758 = vmatprep.subr.mxu0 0.0
    %3759 = vmatpush1.msra.mxu0 0.0
    %3760 = vmatprep.subr.mxu0 0.0
    %3761 = vmatpush1.msra.mxu0 0.0
    %3762 = vmatprep.subr.mxu0 0.0
    %3763 = vmatpush1.msra.mxu0 0.0
    %3764 = vmatprep.subr.mxu0 0.0
    %3765 = vmatpush1.msra.mxu0 0.0
    %3766 = vmatprep.subr.mxu0 0.0
    %3767 = vmatpush1.msra.mxu0 0.0
    %3768 = vmatprep.subr.mxu0 0.0
    %3769 = vmatpush1.msra.mxu0 0.0
    %3770 = vmatprep.subr.mxu0 0.0
    %3771 = vmatpush1.msra.mxu0 0.0
    %3772 = vmatprep.subr.mxu0 0.0
    %3773 = vmatpush1.msra.mxu0 0.0
    %3774 = vmatprep.subr.mxu0 0.0
    %3775 = vmatpush1.msra.mxu0 0.0
    %3776 = vmatprep.subr.mxu0 0.0
    %3777 = vmatpush1.msra.mxu0 0.0
    %3778 = vmatprep.mubr.f32.mxu0 0.0
    %3779 = vmatmul.mubr.f32.gmra.mrb[0].mxu0 %v3703
    %v3780 = vpop.f32.mrb[0].mxu0
    %v3781 = vadd.f32 %v3699, %v3780
    %v3782 = vpop.f32.mrb[0].mxu0
    %3783 = vmatprep.mubr.f32.mxu0 0.0
    %3784 = vmatmul.mubr.f32.gmra.mrb[0].mxu0 %v3706
    %v3785 = vpop.f32.mrb[0].mxu0
    %v3786 = vadd.f32 %v3699, %v3785
    %v3787 = vpop.f32.mrb[0].mxu0
    %3788 = vmatprep.mubr.f32.mxu0 0.0
    %3789 = vmatmul.mubr.f32.gmra.mrb[0].mxu0 %v3709
    %v3790 = vpop.f32.mrb[0].mxu0
    %v3791 = vadd.f32 %v3699, %v3790
    %v3792 = vpop.f32.mrb[0].mxu0
    %3793 = vmatprep.mubr.f32.mxu0 0.0
    %3794 = vmatmul.mubr.f32.gmra.mrb[0].mxu0 %v3712
    %v3795 = vpop.f32.mrb[0].mxu0
    %v3796 = vadd.f32 %v3699, %v3795
    %v3797 = vpop.f32.mrb[0].mxu0
    %3798 = vdwg.mxu0
    %v3799 = vxor.u32 %v3781, 2147483648
    %v3800 = vxor.u32 %v3786, 2147483648
    %v3801 = vxor.u32 %v3791, 2147483648
    %v3802 = vxor.u32 %v3796, 2147483648
    %v3803 = vmul.f32 %v3799, 1.442695
    %v3804 = vpow.pop %v3803
    %v3805 = vmul.f32 %v3800, 1.442695
    %v3806 = vpow.pop %v3805
    %v3807 = vmul.f32 %v3801, 1.442695
    %v3808 = vpow.pop %v3807
    %v3809 = vmul.f32 %v3802, 1.442695
    %v3810 = vpow.pop %v3809
    %v3811 = vadd.f32 %v3804, 1.0
    %v3812 = vadd.f32 %v3806, 1.0
    %v3813 = vadd.f32 %v3808, 1.0
    %v3814 = vadd.f32 %v3810, 1.0
    %v3815 = vrcp.pop %v3811
    %v3816 = vmul.f32 1.0, %v3815
    %v3817 = vrcp.pop %v3812
    %v3818 = vmul.f32 1.0, %v3817
    %v3819 = vrcp.pop %v3813
    %v3820 = vmul.f32 1.0, %v3819
    %v3821 = vrcp.pop %v3814
    %v3822 = vmul.f32 1.0, %v3821
    %v3823 = vmul.f32 %v3781, %v3816
    %v3824 = vmul.f32 %v3786, %v3818
    %v3825 = vmul.f32 %v3791, %v3820
    %v3826 = vmul.f32 %v3796, %v3822
    %v3827 = vld [vmem:[%s17] sm:$0xff]
    %v3828 = vld [vmem:[%s17 + $0x8] sm:$0xff]
    %v3829 = vld [vmem:[%s17 + $0x10] sm:$0xff]
    %v3830 = vld [vmem:[%s17 + $0x18] sm:$0xff]
    %v3832 = vsel %vm212, %v3823, 0
    %v3835 = vsel %vm212, %v3824, 0
    %v3838 = vsel %vm212, %v3825, 0
    %v3841 = vsel %vm212, %v3826, 0
    %3843 = vmatprep.subr.mxu0 0.0
    %3844 = vmatpush1.msra.mxu0 %v3827
    %3845 = vmatprep.subr.mxu0 0.0
    %3846 = vmatpush1.msra.mxu0 %v3828
    %3847 = vmatprep.subr.mxu0 0.0
    %3848 = vmatpush1.msra.mxu0 %v3829
    %3849 = vmatprep.subr.mxu0 0.0
    %3850 = vmatpush1.msra.mxu0 %v3830
    %3851 = vmatprep.subr.mxu0 0.0
    %3852 = vmatpush1.msra.mxu0 0.0
    %3853 = vmatprep.subr.mxu0 0.0
    %3854 = vmatpush1.msra.mxu0 0.0
    %3855 = vmatprep.subr.mxu0 0.0
    %3856 = vmatpush1.msra.mxu0 0.0
    %3857 = vmatprep.subr.mxu0 0.0
    %3858 = vmatpush1.msra.mxu0 0.0
    %3859 = vmatprep.subr.mxu0 0.0
    %3860 = vmatpush1.msra.mxu0 0.0
    %3861 = vmatprep.subr.mxu0 0.0
    %3862 = vmatpush1.msra.mxu0 0.0
    %3863 = vmatprep.subr.mxu0 0.0
    %3864 = vmatpush1.msra.mxu0 0.0
    %3865 = vmatprep.subr.mxu0 0.0
    %3866 = vmatpush1.msra.mxu0 0.0
    %3867 = vmatprep.subr.mxu0 0.0
    %3868 = vmatpush1.msra.mxu0 0.0
    %3869 = vmatprep.subr.mxu0 0.0
    %3870 = vmatpush1.msra.mxu0 0.0
    %3871 = vmatprep.subr.mxu0 0.0
    %3872 = vmatpush1.msra.mxu0 0.0
    %3873 = vmatprep.subr.mxu0 0.0
    %3874 = vmatpush1.msra.mxu0 0.0
    %3875 = vmatprep.subr.mxu0 0.0
    %3876 = vmatpush1.msra.mxu0 0.0
    %3877 = vmatprep.subr.mxu0 0.0
    %3878 = vmatpush1.msra.mxu0 0.0
    %3879 = vmatprep.subr.mxu0 0.0
    %3880 = vmatpush1.msra.mxu0 0.0
    %3881 = vmatprep.subr.mxu0 0.0
    %3882 = vmatpush1.msra.mxu0 0.0
    %3883 = vmatprep.subr.mxu0 0.0
    %3884 = vmatpush1.msra.mxu0 0.0
    %3885 = vmatprep.subr.mxu0 0.0
    %3886 = vmatpush1.msra.mxu0 0.0
    %3887 = vmatprep.subr.mxu0 0.0
    %3888 = vmatpush1.msra.mxu0 0.0
    %3889 = vmatprep.subr.mxu0 0.0
    %3890 = vmatpush1.msra.mxu0 0.0
    %3891 = vmatprep.subr.mxu0 0.0
    %3892 = vmatpush1.msra.mxu0 0.0
    %3893 = vmatprep.subr.mxu0 0.0
    %3894 = vmatpush1.msra.mxu0 0.0
    %3895 = vmatprep.subr.mxu0 0.0
    %3896 = vmatpush1.msra.mxu0 0.0
    %3897 = vmatprep.subr.mxu0 0.0
    %3898 = vmatpush1.msra.mxu0 0.0
    %3899 = vmatprep.subr.mxu0 0.0
    %3900 = vmatpush1.msra.mxu0 0.0
    %3901 = vmatprep.subr.mxu0 0.0
    %3902 = vmatpush1.msra.mxu0 0.0
    %3903 = vmatprep.subr.mxu0 0.0
    %3904 = vmatpush1.msra.mxu0 0.0
    %3905 = vmatprep.subr.mxu0 0.0
    %3906 = vmatpush1.msra.mxu0 0.0
    %3907 = vmatprep.mubr.f32.mxu0 0.0
    %3908 = vmatmul.mubr.f32.gmra.mrb[0].mxu0 %v3832
    %v3909 = vpop.f32.mrb[0].mxu0
    %v3910 = vadd.f32 0.0, %v3909
    %v3911 = vpop.f32.mrb[0].mxu0
    %3912 = vmatprep.mubr.f32.mxu0 0.0
    %3913 = vmatmul.mubr.f32.gmra.mrb[0].mxu0 %v3835
    %v3914 = vpop.f32.mrb[0].mxu0
    %v3915 = vadd.f32 0.0, %v3914
    %v3916 = vpop.f32.mrb[0].mxu0
    %3917 = vmatprep.mubr.f32.mxu0 0.0
    %3918 = vmatmul.mubr.f32.gmra.mrb[0].mxu0 %v3838
    %v3919 = vpop.f32.mrb[0].mxu0
    %v3920 = vadd.f32 0.0, %v3919
    %v3921 = vpop.f32.mrb[0].mxu0
    %3922 = vmatprep.mubr.f32.mxu0 0.0
    %3923 = vmatmul.mubr.f32.gmra.mrb[0].mxu0 %v3841
    %v3924 = vpop.f32.mrb[0].mxu0
    %v3925 = vadd.f32 0.0, %v3924
    %v3926 = vpop.f32.mrb[0].mxu0
    %3927 = vdwg.mxu0
    %v3928 = vadd.f32 %v144, %v3910
    %v3929 = vadd.f32 %v145, %v3915
    %v3930 = vadd.f32 %v146, %v3920
    %v3931 = vadd.f32 %v147, %v3925
    %v3932 = vld [vmem:[%s18] sm:$0x1]
    %v3934 = vlaneseq
    %v3935 = vshrl.u32 %v3934, 7
    %v3936 = vsub.s32 0, %v3935
    %v3937 = vrot.slane %v3932, %v3936
    %v3939 = vadd.f32 %v3928, %v3937
    %v3940 = vadd.f32 %v3929, %v3937
    %v3941 = vadd.f32 %v3930, %v3937
    %v3942 = vadd.f32 %v3931, %v3937
    %3944 = vset.pattern.permute.xlu0 0
    %3945 = vperm.xlu0 %3944, %v152
    %v3946 = vpop.permute.xlu0 %3945
    %3949 = vset.pattern.permute.xlu0 0
    %3950 = vperm.xlu0 %3949, %v153
    %v3951 = vpop.permute.xlu0 %3950
    %3954 = vset.pattern.permute.xlu0 0
    %3955 = vperm.xlu0 %3954, %v154
    %v3956 = vpop.permute.xlu0 %3955
    %3959 = vset.pattern.permute.xlu0 0
    %3960 = vperm.xlu0 %3959, %v155
    %v3961 = vpop.permute.xlu0 %3960
    %v3963 = vmul.f32 %v3939, %v3946
    %v3964 = vmul.f32 %v3940, %v3951
    %v3965 = vmul.f32 %v3941, %v3956
    %v3966 = vmul.f32 %v3942, %v3961
    %3967 = vmatprep.subr.mxu0 0.0
    %3968 = vmatpush1.msra.mxu0 %v3963
    %3969 = vmatprep.subr.mxu0 0.0
    %3970 = vmatpush1.msra.mxu0 %v3964
    %3971 = vmatprep.subr.mxu0 0.0
    %3972 = vmatpush1.msra.mxu0 %v3965
    %3973 = vmatprep.subr.mxu0 0.0
    %3974 = vmatpush1.msra.mxu0 %v3966
    %3975 = vmatprep.subr.mxu0 0.0
    %3976 = vmatpush1.msra.mxu0 0.0
    %3977 = vmatprep.subr.mxu0 0.0
    %3978 = vmatpush1.msra.mxu0 0.0
    %3979 = vmatprep.subr.mxu0 0.0
    %3980 = vmatpush1.msra.mxu0 0.0
    %3981 = vmatprep.subr.mxu0 0.0
    %3982 = vmatpush1.msra.mxu0 0.0
    %3983 = vmatprep.subr.mxu0 0.0
    %3984 = vmatpush1.msra.mxu0 0.0
    %3985 = vmatprep.subr.mxu0 0.0
    %3986 = vmatpush1.msra.mxu0 0.0
    %3987 = vmatprep.subr.mxu0 0.0
    %3988 = vmatpush1.msra.mxu0 0.0
    %3989 = vmatprep.subr.mxu0 0.0
    %3990 = vmatpush1.msra.mxu0 0.0
    %3991 = vmatprep.subr.mxu0 0.0
    %3992 = vmatpush1.msra.mxu0 0.0
    %3993 = vmatprep.subr.mxu0 0.0
    %3994 = vmatpush1.msra.mxu0 0.0
    %3995 = vmatprep.subr.mxu0 0.0
    %3996 = vmatpush1.msra.mxu0 0.0
    %3997 = vmatprep.subr.mxu0 0.0
    %3998 = vmatpush1.msra.mxu0 0.0
    %3999 = vmatprep.subr.mxu0 0.0
    %4000 = vmatpush1.msra.mxu0 0.0
    %4001 = vmatprep.subr.mxu0 0.0
    %4002 = vmatpush1.msra.mxu0 0.0
    %4003 = vmatprep.subr.mxu0 0.0
    %4004 = vmatpush1.msra.mxu0 0.0
    %4005 = vmatprep.subr.mxu0 0.0
    %4006 = vmatpush1.msra.mxu0 0.0
    %4007 = vmatprep.subr.mxu0 0.0
    %4008 = vmatpush1.msra.mxu0 0.0
    %4009 = vmatprep.subr.mxu0 0.0
    %4010 = vmatpush1.msra.mxu0 0.0
    %4011 = vmatprep.subr.mxu0 0.0
    %4012 = vmatpush1.msra.mxu0 0.0
    %4013 = vmatprep.subr.mxu0 0.0
    %4014 = vmatpush1.msra.mxu0 0.0
    %4015 = vmatprep.subr.mxu0 0.0
    %4016 = vmatpush1.msra.mxu0 0.0
    %4017 = vmatprep.subr.mxu0 0.0
    %4018 = vmatpush1.msra.mxu0 0.0
    %4019 = vmatprep.subr.mxu0 0.0
    %4020 = vmatpush1.msra.mxu0 0.0
    %4021 = vmatprep.subr.mxu0 0.0
    %4022 = vmatpush1.msra.mxu0 0.0
    %4023 = vmatprep.subr.mxu0 0.0
    %4024 = vmatpush1.msra.mxu0 0.0
    %4025 = vmatprep.subr.mxu0 0.0
    %4026 = vmatpush1.msra.mxu0 0.0
    %4027 = vmatprep.subr.mxu0 0.0
    %4028 = vmatpush1.msra.mxu0 0.0
    %4029 = vmatprep.subr.mxu0 0.0
    %4030 = vmatpush1.msra.mxu0 0.0
    %4031 = vmatprep.mubr.f32.mxu0 0.0
    %4032 = vmatmul.mubr.f32.gmra.mrb[0].mxu0 %v1122
    %v4033 = vpop.f32.mrb[0].mxu0
    %v4034 = vadd.f32 0.0, %v4033
    %v4035 = vpop.f32.mrb[0].mxu0
    %4036 = vmatprep.mubr.f32.mxu0 0.0
    %4037 = vmatmul.mubr.f32.gmra.mrb[0].mxu0 %v1125
    %v4038 = vpop.f32.mrb[0].mxu0
    %v4039 = vadd.f32 0.0, %v4038
    %v4040 = vpop.f32.mrb[0].mxu0
    %4041 = vmatprep.mubr.f32.mxu0 0.0
    %4042 = vmatmul.mubr.f32.gmra.mrb[0].mxu0 %v1128
    %v4043 = vpop.f32.mrb[0].mxu0
    %v4044 = vadd.f32 0.0, %v4043
    %v4045 = vpop.f32.mrb[0].mxu0
    %4046 = vmatprep.mubr.f32.mxu0 0.0
    %4047 = vmatmul.mubr.f32.gmra.mrb[0].mxu0 %v1131
    %v4048 = vpop.f32.mrb[0].mxu0
    %v4049 = vadd.f32 0.0, %v4048
    %v4050 = vpop.f32.mrb[0].mxu0
    %4051 = vmatprep.mubr.f32.mxu0 0.0
    %4052 = vmatmul.mubr.f32.gmra.mrb[0].mxu0 %v1134
    %v4053 = vpop.f32.mrb[0].mxu0
    %v4054 = vadd.f32 0.0, %v4053
    %v4055 = vpop.f32.mrb[0].mxu0
    %4056 = vmatprep.mubr.f32.mxu0 0.0
    %4057 = vmatmul.mubr.f32.gmra.mrb[0].mxu0 %v1137
    %v4058 = vpop.f32.mrb[0].mxu0
    %v4059 = vadd.f32 0.0, %v4058
    %v4060 = vpop.f32.mrb[0].mxu0
    %4061 = vmatprep.mubr.f32.mxu0 0.0
    %4062 = vmatmul.mubr.f32.gmra.mrb[0].mxu0 %v1140
    %v4063 = vpop.f32.mrb[0].mxu0
    %v4064 = vadd.f32 0.0, %v4063
    %v4065 = vpop.f32.mrb[0].mxu0
    %4066 = vmatprep.mubr.f32.mxu0 0.0
    %4067 = vmatmul.mubr.f32.gmra.mrb[0].mxu0 %v1143
    %v4068 = vpop.f32.mrb[0].mxu0
    %v4069 = vadd.f32 0.0, %v4068
    %v4070 = vpop.f32.mrb[0].mxu0
    %4071 = vmatprep.mubr.f32.mxu0 0.0
    %4072 = vmatmul.mubr.f32.gmra.mrb[0].mxu0 %v1146
    %v4073 = vpop.f32.mrb[0].mxu0
    %v4074 = vadd.f32 0.0, %v4073
    %v4075 = vpop.f32.mrb[0].mxu0
    %4076 = vmatprep.mubr.f32.mxu0 0.0
    %4077 = vmatmul.mubr.f32.gmra.mrb[0].mxu0 %v1149
    %v4078 = vpop.f32.mrb[0].mxu0
    %v4079 = vadd.f32 0.0, %v4078
    %v4080 = vpop.f32.mrb[0].mxu0
    %4081 = vmatprep.mubr.f32.mxu0 0.0
    %4082 = vmatmul.mubr.f32.gmra.mrb[0].mxu0 %v1152
    %v4083 = vpop.f32.mrb[0].mxu0
    %v4084 = vadd.f32 0.0, %v4083
    %v4085 = vpop.f32.mrb[0].mxu0
    %4086 = vmatprep.mubr.f32.mxu0 0.0
    %4087 = vmatmul.mubr.f32.gmra.mrb[0].mxu0 %v1155
    %v4088 = vpop.f32.mrb[0].mxu0
    %v4089 = vadd.f32 0.0, %v4088
    %v4090 = vpop.f32.mrb[0].mxu0
    %4091 = vmatprep.mubr.f32.mxu0 0.0
    %4092 = vmatmul.mubr.f32.gmra.mrb[0].mxu0 %v1158
    %v4093 = vpop.f32.mrb[0].mxu0
    %v4094 = vadd.f32 0.0, %v4093
    %v4095 = vpop.f32.mrb[0].mxu0
    %4096 = vmatprep.mubr.f32.mxu0 0.0
    %4097 = vmatmul.mubr.f32.gmra.mrb[0].mxu0 %v1161
    %v4098 = vpop.f32.mrb[0].mxu0
    %v4099 = vadd.f32 0.0, %v4098
    %v4100 = vpop.f32.mrb[0].mxu0
    %4101 = vmatprep.mubr.f32.mxu0 0.0
    %4102 = vmatmul.mubr.f32.gmra.mrb[0].mxu0 %v1164
    %v4103 = vpop.f32.mrb[0].mxu0
    %v4104 = vadd.f32 0.0, %v4103
    %v4105 = vpop.f32.mrb[0].mxu0
    %4106 = vmatprep.mubr.f32.mxu0 0.0
    %4107 = vmatmul.mubr.f32.gmra.mrb[0].mxu0 %v1167
    %v4108 = vpop.f32.mrb[0].mxu0
    %v4109 = vadd.f32 0.0, %v4108
    %v4110 = vpop.f32.mrb[0].mxu0
    %4111 = vmatprep.mubr.f32.mxu0 0.0
    %4112 = vmatmul.mubr.f32.gmra.mrb[0].mxu0 %v1170
    %v4113 = vpop.f32.mrb[0].mxu0
    %v4114 = vadd.f32 0.0, %v4113
    %v4115 = vpop.f32.mrb[0].mxu0
    %4116 = vmatprep.mubr.f32.mxu0 0.0
    %4117 = vmatmul.mubr.f32.gmra.mrb[0].mxu0 %v1173
    %v4118 = vpop.f32.mrb[0].mxu0
    %v4119 = vadd.f32 0.0, %v4118
    %v4120 = vpop.f32.mrb[0].mxu0
    %4121 = vmatprep.mubr.f32.mxu0 0.0
    %4122 = vmatmul.mubr.f32.gmra.mrb[0].mxu0 %v1176
    %v4123 = vpop.f32.mrb[0].mxu0
    %v4124 = vadd.f32 0.0, %v4123
    %v4125 = vpop.f32.mrb[0].mxu0
    %4126 = vmatprep.mubr.f32.mxu0 0.0
    %4127 = vmatmul.mubr.f32.gmra.mrb[0].mxu0 %v1179
    %v4128 = vpop.f32.mrb[0].mxu0
    %v4129 = vadd.f32 0.0, %v4128
    %v4130 = vpop.f32.mrb[0].mxu0
    %4131 = vmatprep.mubr.f32.mxu0 0.0
    %4132 = vmatmul.mubr.f32.gmra.mrb[0].mxu0 %v1182
    %v4133 = vpop.f32.mrb[0].mxu0
    %v4134 = vadd.f32 0.0, %v4133
    %v4135 = vpop.f32.mrb[0].mxu0
    %4136 = vmatprep.mubr.f32.mxu0 0.0
    %4137 = vmatmul.mubr.f32.gmra.mrb[0].mxu0 %v1185
    %v4138 = vpop.f32.mrb[0].mxu0
    %v4139 = vadd.f32 0.0, %v4138
    %v4140 = vpop.f32.mrb[0].mxu0
    %4141 = vmatprep.mubr.f32.mxu0 0.0
    %4142 = vmatmul.mubr.f32.gmra.mrb[0].mxu0 %v1188
    %v4143 = vpop.f32.mrb[0].mxu0
    %v4144 = vadd.f32 0.0, %v4143
    %v4145 = vpop.f32.mrb[0].mxu0
    %4146 = vmatprep.mubr.f32.mxu0 0.0
    %4147 = vmatmul.mubr.f32.gmra.mrb[0].mxu0 %v1191
    %v4148 = vpop.f32.mrb[0].mxu0
    %v4149 = vadd.f32 0.0, %v4148
    %v4150 = vpop.f32.mrb[0].mxu0
    %4151 = vmatprep.mubr.f32.mxu0 0.0
    %4152 = vmatmul.mubr.f32.gmra.mrb[0].mxu0 %v1194
    %v4153 = vpop.f32.mrb[0].mxu0
    %v4154 = vadd.f32 0.0, %v4153
    %v4155 = vpop.f32.mrb[0].mxu0
    %4156 = vmatprep.mubr.f32.mxu0 0.0
    %4157 = vmatmul.mubr.f32.gmra.mrb[0].mxu0 %v1197
    %v4158 = vpop.f32.mrb[0].mxu0
    %v4159 = vadd.f32 0.0, %v4158
    %v4160 = vpop.f32.mrb[0].mxu0
    %4161 = vmatprep.mubr.f32.mxu0 0.0
    %4162 = vmatmul.mubr.f32.gmra.mrb[0].mxu0 %v1200
    %v4163 = vpop.f32.mrb[0].mxu0
    %v4164 = vadd.f32 0.0, %v4163
    %v4165 = vpop.f32.mrb[0].mxu0
    %4166 = vmatprep.mubr.f32.mxu0 0.0
    %4167 = vmatmul.mubr.f32.gmra.mrb[0].mxu0 %v1203
    %v4168 = vpop.f32.mrb[0].mxu0
    %v4169 = vadd.f32 0.0, %v4168
    %v4170 = vpop.f32.mrb[0].mxu0
    %4171 = vdwg.mxu0
    %4172 = vst.msk [vmem:[#allocation2] sm:$0xff] %vm212, %v4034
    %4173 = vst.msk [vmem:[#allocation2 + $0x8] sm:$0xff] %vm212, %v4039
    %4174 = vst.msk [vmem:[#allocation2 + $0x10] sm:$0xff] %vm212, %v4044
    %4175 = vst.msk [vmem:[#allocation2 + $0x18] sm:$0xff] %vm212, %v4049
    %4176 = vst.msk [vmem:[#allocation2 + $0x20] sm:$0xff] %vm212, %v4054
    %4177 = vst.msk [vmem:[#allocation2 + $0x28] sm:$0xff] %vm212, %v4059
    %4178 = vst.msk [vmem:[#allocation2 + $0x30] sm:$0xff] %vm212, %v4064
    %4179 = vst.msk [vmem:[#allocation2 + $0x38] sm:$0xff] %vm212, %v4069
    %4180 = vst.msk [vmem:[#allocation2 + $0x40] sm:$0xff] %vm212, %v4074
    %4181 = vst.msk [vmem:[#allocation2 + $0x48] sm:$0xff] %vm212, %v4079
    %4182 = vst.msk [vmem:[#allocation2 + $0x50] sm:$0xff] %vm212, %v4084
    %4183 = vst.msk [vmem:[#allocation2 + $0x58] sm:$0xff] %vm212, %v4089
    %4184 = vst.msk [vmem:[#allocation2 + $0x60] sm:$0xff] %vm212, %v4094
    %4185 = vst.msk [vmem:[#allocation2 + $0x68] sm:$0xff] %vm212, %v4099
    %4186 = vst.msk [vmem:[#allocation2 + $0x70] sm:$0xff] %vm212, %v4104
    %4187 = vst.msk [vmem:[#allocation2 + $0x78] sm:$0xff] %vm212, %v4109
    %4188 = vst.msk [vmem:[#allocation2 + $0x80] sm:$0xff] %vm212, %v4114
    %4189 = vst.msk [vmem:[#allocation2 + $0x88] sm:$0xff] %vm212, %v4119
    %4190 = vst.msk [vmem:[#allocation2 + $0x90] sm:$0xff] %vm212, %v4124
    %4191 = vst.msk [vmem:[#allocation2 + $0x98] sm:$0xff] %vm212, %v4129
    %4192 = vst.msk [vmem:[#allocation2 + $0xa0] sm:$0xff] %vm212, %v4134
    %4193 = vst.msk [vmem:[#allocation2 + $0xa8] sm:$0xff] %vm212, %v4139
    %4194 = vst.msk [vmem:[#allocation2 + $0xb0] sm:$0xff] %vm212, %v4144
    %4195 = vst.msk [vmem:[#allocation2 + $0xb8] sm:$0xff] %vm212, %v4149
    %4196 = vst.msk [vmem:[#allocation2 + $0xc0] sm:$0xff] %vm212, %v4154
    %4197 = vst.msk [vmem:[#allocation2 + $0xc8] sm:$0xff] %vm212, %v4159
    %4198 = vst.msk [vmem:[#allocation2 + $0xd0] sm:$0xff] %vm212, %v4164
    %4199 = vst.msk [vmem:[#allocation2 + $0xd8] sm:$0xff] %vm212, %v4169
    %4200 = vmatprep.subr.mxu0 0.0
    %4201 = vmatpush1.msra.mxu0 %v3963
    %4202 = vmatprep.subr.mxu0 0.0
    %4203 = vmatpush1.msra.mxu0 %v3964
    %4204 = vmatprep.subr.mxu0 0.0
    %4205 = vmatpush1.msra.mxu0 %v3965
    %4206 = vmatprep.subr.mxu0 0.0
    %4207 = vmatpush1.msra.mxu0 %v3966
    %4208 = vmatprep.subr.mxu0 0.0
    %4209 = vmatpush1.msra.mxu0 0.0
    %4210 = vmatprep.subr.mxu0 0.0
    %4211 = vmatpush1.msra.mxu0 0.0
    %4212 = vmatprep.subr.mxu0 0.0
    %4213 = vmatpush1.msra.mxu0 0.0
    %4214 = vmatprep.subr.mxu0 0.0
    %4215 = vmatpush1.msra.mxu0 0.0
    %4216 = vmatprep.subr.mxu0 0.0
    %4217 = vmatpush1.msra.mxu0 0.0
    %4218 = vmatprep.subr.mxu0 0.0
    %4219 = vmatpush1.msra.mxu0 0.0
    %4220 = vmatprep.subr.mxu0 0.0
    %4221 = vmatpush1.msra.mxu0 0.0
    %4222 = vmatprep.subr.mxu0 0.0
    %4223 = vmatpush1.msra.mxu0 0.0
    %4224 = vmatprep.subr.mxu0 0.0
    %4225 = vmatpush1.msra.mxu0 0.0
    %4226 = vmatprep.subr.mxu0 0.0
    %4227 = vmatpush1.msra.mxu0 0.0
    %4228 = vmatprep.subr.mxu0 0.0
    %4229 = vmatpush1.msra.mxu0 0.0
    %4230 = vmatprep.subr.mxu0 0.0
    %4231 = vmatpush1.msra.mxu0 0.0
    %4232 = vmatprep.subr.mxu0 0.0
    %4233 = vmatpush1.msra.mxu0 0.0
    %4234 = vmatprep.subr.mxu0 0.0
    %4235 = vmatpush1.msra.mxu0 0.0
    %4236 = vmatprep.subr.mxu0 0.0
    %4237 = vmatpush1.msra.mxu0 0.0
    %4238 = vmatprep.subr.mxu0 0.0
    %4239 = vmatpush1.msra.mxu0 0.0
    %4240 = vmatprep.subr.mxu0 0.0
    %4241 = vmatpush1.msra.mxu0 0.0
    %4242 = vmatprep.subr.mxu0 0.0
    %4243 = vmatpush1.msra.mxu0 0.0
    %4244 = vmatprep.subr.mxu0 0.0
    %4245 = vmatpush1.msra.mxu0 0.0
    %4246 = vmatprep.subr.mxu0 0.0
    %4247 = vmatpush1.msra.mxu0 0.0
    %4248 = vmatprep.subr.mxu0 0.0
    %4249 = vmatpush1.msra.mxu0 0.0
    %4250 = vmatprep.subr.mxu0 0.0
    %4251 = vmatpush1.msra.mxu0 0.0
    %4252 = vmatprep.subr.mxu0 0.0
    %4253 = vmatpush1.msra.mxu0 0.0
    %4254 = vmatprep.subr.mxu0 0.0
    %4255 = vmatpush1.msra.mxu0 0.0
    %4256 = vmatprep.subr.mxu0 0.0
    %4257 = vmatpush1.msra.mxu0 0.0
    %4258 = vmatprep.subr.mxu0 0.0
    %4259 = vmatpush1.msra.mxu0 0.0
    %4260 = vmatprep.subr.mxu0 0.0
    %4261 = vmatpush1.msra.mxu0 0.0
    %4262 = vmatprep.subr.mxu0 0.0
    %4263 = vmatpush1.msra.mxu0 0.0
    %4264 = vmatprep.mubr.f32.mxu0 0.0
    %4265 = vmatmul.mubr.f32.gmra.mrb[0].mxu0 %v1439
    %v4266 = vpop.f32.mrb[0].mxu0
    %v4267 = vadd.f32 0.0, %v4266
    %v4268 = vpop.f32.mrb[0].mxu0
    %4269 = vmatprep.mubr.f32.mxu0 0.0
    %4270 = vmatmul.mubr.f32.gmra.mrb[0].mxu0 %v1442
    %v4271 = vpop.f32.mrb[0].mxu0
    %v4272 = vadd.f32 0.0, %v4271
    %v4273 = vpop.f32.mrb[0].mxu0
    %4274 = vmatprep.mubr.f32.mxu0 0.0
    %4275 = vmatmul.mubr.f32.gmra.mrb[0].mxu0 %v1445
    %v4276 = vpop.f32.mrb[0].mxu0
    %v4277 = vadd.f32 0.0, %v4276
    %v4278 = vpop.f32.mrb[0].mxu0
    %4279 = vmatprep.mubr.f32.mxu0 0.0
    %4280 = vmatmul.mubr.f32.gmra.mrb[0].mxu0 %v1448
    %v4281 = vpop.f32.mrb[0].mxu0
    %v4282 = vadd.f32 0.0, %v4281
    %v4283 = vpop.f32.mrb[0].mxu0
    %4284 = vmatprep.mubr.f32.mxu0 0.0
    %4285 = vmatmul.mubr.f32.gmra.mrb[0].mxu0 %v1451
    %v4286 = vpop.f32.mrb[0].mxu0
    %v4287 = vadd.f32 0.0, %v4286
    %v4288 = vpop.f32.mrb[0].mxu0
    %4289 = vmatprep.mubr.f32.mxu0 0.0
    %4290 = vmatmul.mubr.f32.gmra.mrb[0].mxu0 %v1454
    %v4291 = vpop.f32.mrb[0].mxu0
    %v4292 = vadd.f32 0.0, %v4291
    %v4293 = vpop.f32.mrb[0].mxu0
    %4294 = vmatprep.mubr.f32.mxu0 0.0
    %4295 = vmatmul.mubr.f32.gmra.mrb[0].mxu0 %v1457
    %v4296 = vpop.f32.mrb[0].mxu0
    %v4297 = vadd.f32 0.0, %v4296
    %v4298 = vpop.f32.mrb[0].mxu0
    %4299 = vmatprep.mubr.f32.mxu0 0.0
    %4300 = vmatmul.mubr.f32.gmra.mrb[0].mxu0 %v1460
    %v4301 = vpop.f32.mrb[0].mxu0
    %v4302 = vadd.f32 0.0, %v4301
    %v4303 = vpop.f32.mrb[0].mxu0
    %4304 = vmatprep.mubr.f32.mxu0 0.0
    %4305 = vmatmul.mubr.f32.gmra.mrb[0].mxu0 %v1463
    %v4306 = vpop.f32.mrb[0].mxu0
    %v4307 = vadd.f32 0.0, %v4306
    %v4308 = vpop.f32.mrb[0].mxu0
    %4309 = vmatprep.mubr.f32.mxu0 0.0
    %4310 = vmatmul.mubr.f32.gmra.mrb[0].mxu0 %v1466
    %v4311 = vpop.f32.mrb[0].mxu0
    %v4312 = vadd.f32 0.0, %v4311
    %v4313 = vpop.f32.mrb[0].mxu0
    %4314 = vmatprep.mubr.f32.mxu0 0.0
    %4315 = vmatmul.mubr.f32.gmra.mrb[0].mxu0 %v1469
    %v4316 = vpop.f32.mrb[0].mxu0
    %v4317 = vadd.f32 0.0, %v4316
    %v4318 = vpop.f32.mrb[0].mxu0
    %4319 = vmatprep.mubr.f32.mxu0 0.0
    %4320 = vmatmul.mubr.f32.gmra.mrb[0].mxu0 %v1472
    %v4321 = vpop.f32.mrb[0].mxu0
    %v4322 = vadd.f32 0.0, %v4321
    %v4323 = vpop.f32.mrb[0].mxu0
    %4324 = vmatprep.mubr.f32.mxu0 0.0
    %4325 = vmatmul.mubr.f32.gmra.mrb[0].mxu0 %v1475
    %v4326 = vpop.f32.mrb[0].mxu0
    %v4327 = vadd.f32 0.0, %v4326
    %v4328 = vpop.f32.mrb[0].mxu0
    %4329 = vmatprep.mubr.f32.mxu0 0.0
    %4330 = vmatmul.mubr.f32.gmra.mrb[0].mxu0 %v1478
    %v4331 = vpop.f32.mrb[0].mxu0
    %v4332 = vadd.f32 0.0, %v4331
    %v4333 = vpop.f32.mrb[0].mxu0
    %4334 = vmatprep.mubr.f32.mxu0 0.0
    %4335 = vmatmul.mubr.f32.gmra.mrb[0].mxu0 %v1481
    %v4336 = vpop.f32.mrb[0].mxu0
    %v4337 = vadd.f32 0.0, %v4336
    %v4338 = vpop.f32.mrb[0].mxu0
    %4339 = vmatprep.mubr.f32.mxu0 0.0
    %4340 = vmatmul.mubr.f32.gmra.mrb[0].mxu0 %v1484
    %v4341 = vpop.f32.mrb[0].mxu0
    %v4342 = vadd.f32 0.0, %v4341
    %v4343 = vpop.f32.mrb[0].mxu0
    %4344 = vmatprep.mubr.f32.mxu0 0.0
    %4345 = vmatmul.mubr.f32.gmra.mrb[0].mxu0 %v1487
    %v4346 = vpop.f32.mrb[0].mxu0
    %v4347 = vadd.f32 0.0, %v4346
    %v4348 = vpop.f32.mrb[0].mxu0
    %4349 = vmatprep.mubr.f32.mxu0 0.0
    %4350 = vmatmul.mubr.f32.gmra.mrb[0].mxu0 %v1490
    %v4351 = vpop.f32.mrb[0].mxu0
    %v4352 = vadd.f32 0.0, %v4351
    %v4353 = vpop.f32.mrb[0].mxu0
    %4354 = vmatprep.mubr.f32.mxu0 0.0
    %4355 = vmatmul.mubr.f32.gmra.mrb[0].mxu0 %v1493
    %v4356 = vpop.f32.mrb[0].mxu0
    %v4357 = vadd.f32 0.0, %v4356
    %v4358 = vpop.f32.mrb[0].mxu0
    %4359 = vmatprep.mubr.f32.mxu0 0.0
    %4360 = vmatmul.mubr.f32.gmra.mrb[0].mxu0 %v1496
    %v4361 = vpop.f32.mrb[0].mxu0
    %v4362 = vadd.f32 0.0, %v4361
    %v4363 = vpop.f32.mrb[0].mxu0
    %4364 = vmatprep.mubr.f32.mxu0 0.0
    %4365 = vmatmul.mubr.f32.gmra.mrb[0].mxu0 %v1499
    %v4366 = vpop.f32.mrb[0].mxu0
    %v4367 = vadd.f32 0.0, %v4366
    %v4368 = vpop.f32.mrb[0].mxu0
    %4369 = vmatprep.mubr.f32.mxu0 0.0
    %4370 = vmatmul.mubr.f32.gmra.mrb[0].mxu0 %v1502
    %v4371 = vpop.f32.mrb[0].mxu0
    %v4372 = vadd.f32 0.0, %v4371
    %v4373 = vpop.f32.mrb[0].mxu0
    %4374 = vmatprep.mubr.f32.mxu0 0.0
    %4375 = vmatmul.mubr.f32.gmra.mrb[0].mxu0 %v1505
    %v4376 = vpop.f32.mrb[0].mxu0
    %v4377 = vadd.f32 0.0, %v4376
    %v4378 = vpop.f32.mrb[0].mxu0
    %4379 = vmatprep.mubr.f32.mxu0 0.0
    %4380 = vmatmul.mubr.f32.gmra.mrb[0].mxu0 %v1508
    %v4381 = vpop.f32.mrb[0].mxu0
    %v4382 = vadd.f32 0.0, %v4381
    %v4383 = vpop.f32.mrb[0].mxu0
    %4384 = vmatprep.mubr.f32.mxu0 0.0
    %4385 = vmatmul.mubr.f32.gmra.mrb[0].mxu0 %v1511
    %v4386 = vpop.f32.mrb[0].mxu0
    %v4387 = vadd.f32 0.0, %v4386
    %v4388 = vpop.f32.mrb[0].mxu0
    %4389 = vmatprep.mubr.f32.mxu0 0.0
    %4390 = vmatmul.mubr.f32.gmra.mrb[0].mxu0 %v1514
    %v4391 = vpop.f32.mrb[0].mxu0
    %v4392 = vadd.f32 0.0, %v4391
    %v4393 = vpop.f32.mrb[0].mxu0
    %4394 = vmatprep.mubr.f32.mxu0 0.0
    %4395 = vmatmul.mubr.f32.gmra.mrb[0].mxu0 %v1517
    %v4396 = vpop.f32.mrb[0].mxu0
    %v4397 = vadd.f32 0.0, %v4396
    %v4398 = vpop.f32.mrb[0].mxu0
    %4399 = vmatprep.mubr.f32.mxu0 0.0
    %4400 = vmatmul.mubr.f32.gmra.mrb[0].mxu0 %v1520
    %v4401 = vpop.f32.mrb[0].mxu0
    %v4402 = vadd.f32 0.0, %v4401
    %v4403 = vpop.f32.mrb[0].mxu0
    %4404 = vdwg.mxu0
    %4433 = vrot.lane.b32.xlu0 %v4267, 32
    %v4434 = vpop.permute.xlu0 %4433
    %4435 = vrot.lane.b32.xlu0 %v4272, 32
    %v4436 = vpop.permute.xlu0 %4435
    %4437 = vrot.lane.b32.xlu0 %v4277, 32
    %v4438 = vpop.permute.xlu0 %4437
    %4439 = vrot.lane.b32.xlu0 %v4282, 32
    %v4440 = vpop.permute.xlu0 %4439
    %4441 = vrot.lane.b32.xlu0 %v4287, 32
    %v4442 = vpop.permute.xlu0 %4441
    %4443 = vrot.lane.b32.xlu0 %v4292, 32
    %v4444 = vpop.permute.xlu0 %4443
    %4445 = vrot.lane.b32.xlu0 %v4297, 32
    %v4446 = vpop.permute.xlu0 %4445
    %4447 = vrot.lane.b32.xlu0 %v4302, 32
    %v4448 = vpop.permute.xlu0 %4447
    %4449 = vrot.lane.b32.xlu0 %v4307, 32
    %v4450 = vpop.permute.xlu0 %4449
    %4451 = vrot.lane.b32.xlu0 %v4312, 32
    %v4452 = vpop.permute.xlu0 %4451
    %4453 = vrot.lane.b32.xlu0 %v4317, 32
    %v4454 = vpop.permute.xlu0 %4453
    %4455 = vrot.lane.b32.xlu0 %v4322, 32
    %v4456 = vpop.permute.xlu0 %4455
    %4457 = vrot.lane.b32.xlu0 %v4327, 32
    %v4458 = vpop.permute.xlu0 %4457
    %4459 = vrot.lane.b32.xlu0 %v4332, 32
    %v4460 = vpop.permute.xlu0 %4459
    %4461 = vrot.lane.b32.xlu0 %v4337, 32
    %v4462 = vpop.permute.xlu0 %4461
    %4463 = vrot.lane.b32.xlu0 %v4342, 32
    %v4464 = vpop.permute.xlu0 %4463
    %4465 = vrot.lane.b32.xlu0 %v4347, 32
    %v4466 = vpop.permute.xlu0 %4465
    %4467 = vrot.lane.b32.xlu0 %v4352, 32
    %v4468 = vpop.permute.xlu0 %4467
    %4469 = vrot.lane.b32.xlu0 %v4357, 32
    %v4470 = vpop.permute.xlu0 %4469
    %4471 = vrot.lane.b32.xlu0 %v4362, 32
    %v4472 = vpop.permute.xlu0 %4471
    %4473 = vrot.lane.b32.xlu0 %v4367, 32
    %v4474 = vpop.permute.xlu0 %4473
    %4475 = vrot.lane.b32.xlu0 %v4372, 32
    %v4476 = vpop.permute.xlu0 %4475
    %4477 = vrot.lane.b32.xlu0 %v4377, 32
    %v4478 = vpop.permute.xlu0 %4477
    %4479 = vrot.lane.b32.xlu0 %v4382, 32
    %v4480 = vpop.permute.xlu0 %4479
    %4481 = vrot.lane.b32.xlu0 %v4387, 32
    %v4482 = vpop.permute.xlu0 %4481
    %4483 = vrot.lane.b32.xlu0 %v4392, 32
    %v4484 = vpop.permute.xlu0 %4483
    %4485 = vrot.lane.b32.xlu0 %v4397, 32
    %v4486 = vpop.permute.xlu0 %4485
    %4487 = vrot.lane.b32.xlu0 %v4402, 32
    %v4488 = vpop.permute.xlu0 %4487
    %4517 = vst.msk [vmem:[#allocation2] sm:$0xff] %vm1839, %v4434
    %4518 = vst.msk [vmem:[#allocation2 + $0x8] sm:$0xff] %vm1839, %v4436
    %4519 = vst.msk [vmem:[#allocation2 + $0x10] sm:$0xff] %vm1839, %v4438
    %4520 = vst.msk [vmem:[#allocation2 + $0x18] sm:$0xff] %vm1839, %v4440
    %4521 = vst.msk [vmem:[#allocation2 + $0x20] sm:$0xff] %vm1839, %v4442
    %4522 = vst.msk [vmem:[#allocation2 + $0x28] sm:$0xff] %vm1839, %v4444
    %4523 = vst.msk [vmem:[#allocation2 + $0x30] sm:$0xff] %vm1839, %v4446
    %4524 = vst.msk [vmem:[#allocation2 + $0x38] sm:$0xff] %vm1839, %v4448
    %4525 = vst.msk [vmem:[#allocation2 + $0x40] sm:$0xff] %vm1839, %v4450
    %4526 = vst.msk [vmem:[#allocation2 + $0x48] sm:$0xff] %vm1839, %v4452
    %4527 = vst.msk [vmem:[#allocation2 + $0x50] sm:$0xff] %vm1839, %v4454
    %4528 = vst.msk [vmem:[#allocation2 + $0x58] sm:$0xff] %vm1839, %v4456
    %4529 = vst.msk [vmem:[#allocation2 + $0x60] sm:$0xff] %vm1839, %v4458
    %4530 = vst.msk [vmem:[#allocation2 + $0x68] sm:$0xff] %vm1839, %v4460
    %4531 = vst.msk [vmem:[#allocation2 + $0x70] sm:$0xff] %vm1839, %v4462
    %4532 = vst.msk [vmem:[#allocation2 + $0x78] sm:$0xff] %vm1839, %v4464
    %4533 = vst.msk [vmem:[#allocation2 + $0x80] sm:$0xff] %vm1839, %v4466
    %4534 = vst.msk [vmem:[#allocation2 + $0x88] sm:$0xff] %vm1839, %v4468
    %4535 = vst.msk [vmem:[#allocation2 + $0x90] sm:$0xff] %vm1839, %v4470
    %4536 = vst.msk [vmem:[#allocation2 + $0x98] sm:$0xff] %vm1839, %v4472
    %4537 = vst.msk [vmem:[#allocation2 + $0xa0] sm:$0xff] %vm1839, %v4474
    %4538 = vst.msk [vmem:[#allocation2 + $0xa8] sm:$0xff] %vm1839, %v4476
    %4539 = vst.msk [vmem:[#allocation2 + $0xb0] sm:$0xff] %vm1839, %v4478
    %4540 = vst.msk [vmem:[#allocation2 + $0xb8] sm:$0xff] %vm1839, %v4480
    %4541 = vst.msk [vmem:[#allocation2 + $0xc0] sm:$0xff] %vm1839, %v4482
    %4542 = vst.msk [vmem:[#allocation2 + $0xc8] sm:$0xff] %vm1839, %v4484
    %4543 = vst.msk [vmem:[#allocation2 + $0xd0] sm:$0xff] %vm1839, %v4486
    %4544 = vst.msk [vmem:[#allocation2 + $0xd8] sm:$0xff] %vm1839, %v4488
    %v4545 = vld [vmem:[#allocation2] sm:$0xff]
    %v4546 = vld [vmem:[#allocation2 + $0x8] sm:$0xff]
    %v4547 = vld [vmem:[#allocation2 + $0x10] sm:$0xff]
    %v4548 = vld [vmem:[#allocation2 + $0x18] sm:$0xff]
    %v4549 = vld [vmem:[#allocation2 + $0x20] sm:$0xff]
    %v4550 = vld [vmem:[#allocation2 + $0x28] sm:$0xff]
    %v4551 = vld [vmem:[#allocation2 + $0x30] sm:$0xff]
    %v4552 = vld [vmem:[#allocation2 + $0x38] sm:$0xff]
    %v4553 = vld [vmem:[#allocation2 + $0x40] sm:$0xff]
    %v4554 = vld [vmem:[#allocation2 + $0x48] sm:$0xff]
    %v4555 = vld [vmem:[#allocation2 + $0x50] sm:$0xff]
    %v4556 = vld [vmem:[#allocation2 + $0x58] sm:$0xff]
    %v4557 = vld [vmem:[#allocation2 + $0x60] sm:$0xff]
    %v4558 = vld [vmem:[#allocation2 + $0x68] sm:$0xff]
    %v4559 = vld [vmem:[#allocation2 + $0x70] sm:$0xff]
    %v4560 = vld [vmem:[#allocation2 + $0x78] sm:$0xff]
    %v4561 = vld [vmem:[#allocation2 + $0x80] sm:$0xff]
    %v4562 = vld [vmem:[#allocation2 + $0x88] sm:$0xff]
    %v4563 = vld [vmem:[#allocation2 + $0x90] sm:$0xff]
    %v4564 = vld [vmem:[#allocation2 + $0x98] sm:$0xff]
    %v4565 = vld [vmem:[#allocation2 + $0xa0] sm:$0xff]
    %v4566 = vld [vmem:[#allocation2 + $0xa8] sm:$0xff]
    %v4567 = vld [vmem:[#allocation2 + $0xb0] sm:$0xff]
    %v4568 = vld [vmem:[#allocation2 + $0xb8] sm:$0xff]
    %v4569 = vld [vmem:[#allocation2 + $0xc0] sm:$0xff]
    %v4570 = vld [vmem:[#allocation2 + $0xc8] sm:$0xff]
    %v4571 = vld [vmem:[#allocation2 + $0xd0] sm:$0xff]
    %v4572 = vld [vmem:[#allocation2 + $0xd8] sm:$0xff]
    %s4573 = scalar_lea.vmem %s9, 72
    %v4574 = vld [vmem:[%s4573] sm:$0xff]
    %v4575 = vld [vmem:[%s4573 + $0x8] sm:$0xff]
    %v4576 = vld [vmem:[%s4573 + $0x10] sm:$0xff]
    %v4577 = vld [vmem:[%s4573 + $0x18] sm:$0xff]
    %v4578 = vld [vmem:[%s4573 + $0x20] sm:$0xff]
    %v4579 = vld [vmem:[%s4573 + $0x28] sm:$0xff]
    %v4580 = vld [vmem:[%s4573 + $0x30] sm:$0xff]
    %v4581 = vld [vmem:[%s4573 + $0x38] sm:$0xff]
    %v4582 = vld [vmem:[%s4573 + $0x40] sm:$0x3]
    %s4583 = scalar_lea.vmem %s10, 1
    %v4584 = vld [vmem:[%s4583] sm:$0x1]
    %v4586 = vlaneseq
    %v4587 = vshrl.u32 %v4586, 7
    %v4588 = vsub.s32 0, %v4587
    %v4589 = vrot.slane %v4584, %v4588
    %v4592 = vsel %vm1912, %v4545, 0
    %v4595 = vsel %vm1912, %v4546, 0
    %v4598 = vsel %vm1912, %v4547, 0
    %v4601 = vsel %vm1912, %v4548, 0
    %v4604 = vsel %vm1912, %v4549, 0
    %v4607 = vsel %vm1912, %v4550, 0
    %v4610 = vsel %vm1912, %v4551, 0
    %v4613 = vsel %vm1912, %v4552, 0
    %v4616 = vsel %vm1912, %v4553, 0
    %v4619 = vsel %vm1912, %v4554, 0
    %v4622 = vsel %vm1912, %v4555, 0
    %v4625 = vsel %vm1912, %v4556, 0
    %v4628 = vsel %vm1912, %v4557, 0
    %v4631 = vsel %vm1912, %v4558, 0
    %v4634 = vsel %vm1912, %v4559, 0
    %v4637 = vsel %vm1912, %v4560, 0
    %v4640 = vsel %vm1912, %v4561, 0
    %v4643 = vsel %vm1912, %v4562, 0
    %v4646 = vsel %vm1912, %v4563, 0
    %v4649 = vsel %vm1912, %v4564, 0
    %v4652 = vsel %vm1912, %v4565, 0
    %v4655 = vsel %vm1912, %v4566, 0
    %v4658 = vsel %vm1912, %v4567, 0
    %v4661 = vsel %vm1912, %v4568, 0
    %v4664 = vsel %vm1912, %v4569, 0
    %v4667 = vsel %vm1912, %v4570, 0
    %v4670 = vsel %vm1912, %v4571, 0
    %v4673 = vsel %vm1912, %v4572, 0
    %v4676 = vsel %vm1997, %v4582, 0
    %4678 = vmatprep.subr.mxu0 0.0
    %4679 = vmatpush1.msra.mxu0 %v4574
    %4680 = vmatprep.subr.mxu0 0.0
    %4681 = vmatpush1.msra.mxu0 %v4575
    %4682 = vmatprep.subr.mxu0 0.0
    %4683 = vmatpush1.msra.mxu0 %v4576
    %4684 = vmatprep.subr.mxu0 0.0
    %4685 = vmatpush1.msra.mxu0 %v4577
    %4686 = vmatprep.subr.mxu0 0.0
    %4687 = vmatpush1.msra.mxu0 %v4578
    %4688 = vmatprep.subr.mxu0 0.0
    %4689 = vmatpush1.msra.mxu0 %v4579
    %4690 = vmatprep.subr.mxu0 0.0
    %4691 = vmatpush1.msra.mxu0 %v4580
    %4692 = vmatprep.subr.mxu0 0.0
    %4693 = vmatpush1.msra.mxu0 %v4581
    %4694 = vmatprep.subr.mxu0 0.0
    %4695 = vmatpush1.msra.mxu0 %v4676
    %4696 = vmatprep.subr.mxu0 0.0
    %4697 = vmatpush1.msra.mxu0 0.0
    %4698 = vmatprep.subr.mxu0 0.0
    %4699 = vmatpush1.msra.mxu0 0.0
    %4700 = vmatprep.subr.mxu0 0.0
    %4701 = vmatpush1.msra.mxu0 0.0
    %4702 = vmatprep.subr.mxu0 0.0
    %4703 = vmatpush1.msra.mxu0 0.0
    %4704 = vmatprep.subr.mxu0 0.0
    %4705 = vmatpush1.msra.mxu0 0.0
    %4706 = vmatprep.subr.mxu0 0.0
    %4707 = vmatpush1.msra.mxu0 0.0
    %4708 = vmatprep.subr.mxu0 0.0
    %4709 = vmatpush1.msra.mxu0 0.0
    %4710 = vmatprep.subr.mxu0 0.0
    %4711 = vmatpush1.msra.mxu0 0.0
    %4712 = vmatprep.subr.mxu0 0.0
    %4713 = vmatpush1.msra.mxu0 0.0
    %4714 = vmatprep.subr.mxu0 0.0
    %4715 = vmatpush1.msra.mxu0 0.0
    %4716 = vmatprep.subr.mxu0 0.0
    %4717 = vmatpush1.msra.mxu0 0.0
    %4718 = vmatprep.subr.mxu0 0.0
    %4719 = vmatpush1.msra.mxu0 0.0
    %4720 = vmatprep.subr.mxu0 0.0
    %4721 = vmatpush1.msra.mxu0 0.0
    %4722 = vmatprep.subr.mxu0 0.0
    %4723 = vmatpush1.msra.mxu0 0.0
    %4724 = vmatprep.subr.mxu0 0.0
    %4725 = vmatpush1.msra.mxu0 0.0
    %4726 = vmatprep.subr.mxu0 0.0
    %4727 = vmatpush1.msra.mxu0 0.0
    %4728 = vmatprep.subr.mxu0 0.0
    %4729 = vmatpush1.msra.mxu0 0.0
    %4730 = vmatprep.subr.mxu0 0.0
    %4731 = vmatpush1.msra.mxu0 0.0
    %4732 = vmatprep.subr.mxu0 0.0
    %4733 = vmatpush1.msra.mxu0 0.0
    %4734 = vmatprep.subr.mxu0 0.0
    %4735 = vmatpush1.msra.mxu0 0.0
    %4736 = vmatprep.subr.mxu0 0.0
    %4737 = vmatpush1.msra.mxu0 0.0
    %4738 = vmatprep.subr.mxu0 0.0
    %4739 = vmatpush1.msra.mxu0 0.0
    %4740 = vmatprep.subr.mxu0 0.0
    %4741 = vmatpush1.msra.mxu0 0.0
    %4742 = vmatprep.mubr.f32.mxu0 0.0
    %4743 = vmatmul.mubr.f32.gmra.mrb[0].mxu0 %v4592
    %v4744 = vpop.f32.mrb[0].mxu0
    %v4745 = vadd.f32 %v4589, %v4744
    %v4746 = vpop.f32.mrb[0].mxu0
    %4747 = vmatprep.mubr.f32.mxu0 0.0
    %4748 = vmatmul.mubr.f32.gmra.mrb[0].mxu0 %v4595
    %v4749 = vpop.f32.mrb[0].mxu0
    %v4750 = vadd.f32 %v4589, %v4749
    %v4751 = vpop.f32.mrb[0].mxu0
    %4752 = vmatprep.mubr.f32.mxu0 0.0
    %4753 = vmatmul.mubr.f32.gmra.mrb[0].mxu0 %v4598
    %v4754 = vpop.f32.mrb[0].mxu0
    %v4755 = vadd.f32 %v4589, %v4754
    %v4756 = vpop.f32.mrb[0].mxu0
    %4757 = vmatprep.mubr.f32.mxu0 0.0
    %4758 = vmatmul.mubr.f32.gmra.mrb[0].mxu0 %v4601
    %v4759 = vpop.f32.mrb[0].mxu0
    %v4760 = vadd.f32 %v4589, %v4759
    %v4761 = vpop.f32.mrb[0].mxu0
    %4762 = vmatprep.mubr.f32.mxu0 0.0
    %4763 = vmatmul.mubr.f32.gmra.mrb[0].mxu0 %v4604
    %v4764 = vpop.f32.mrb[0].mxu0
    %v4765 = vadd.f32 %v4589, %v4764
    %v4766 = vpop.f32.mrb[0].mxu0
    %4767 = vmatprep.mubr.f32.mxu0 0.0
    %4768 = vmatmul.mubr.f32.gmra.mrb[0].mxu0 %v4607
    %v4769 = vpop.f32.mrb[0].mxu0
    %v4770 = vadd.f32 %v4589, %v4769
    %v4771 = vpop.f32.mrb[0].mxu0
    %4772 = vmatprep.mubr.f32.mxu0 0.0
    %4773 = vmatmul.mubr.f32.gmra.mrb[0].mxu0 %v4610
    %v4774 = vpop.f32.mrb[0].mxu0
    %v4775 = vadd.f32 %v4589, %v4774
    %v4776 = vpop.f32.mrb[0].mxu0
    %4777 = vmatprep.mubr.f32.mxu0 0.0
    %4778 = vmatmul.mubr.f32.gmra.mrb[0].mxu0 %v4613
    %v4779 = vpop.f32.mrb[0].mxu0
    %v4780 = vadd.f32 %v4589, %v4779
    %v4781 = vpop.f32.mrb[0].mxu0
    %4782 = vmatprep.mubr.f32.mxu0 0.0
    %4783 = vmatmul.mubr.f32.gmra.mrb[0].mxu0 %v4616
    %v4784 = vpop.f32.mrb[0].mxu0
    %v4785 = vadd.f32 %v4589, %v4784
    %v4786 = vpop.f32.mrb[0].mxu0
    %4787 = vmatprep.mubr.f32.mxu0 0.0
    %4788 = vmatmul.mubr.f32.gmra.mrb[0].mxu0 %v4619
    %v4789 = vpop.f32.mrb[0].mxu0
    %v4790 = vadd.f32 %v4589, %v4789
    %v4791 = vpop.f32.mrb[0].mxu0
    %4792 = vmatprep.mubr.f32.mxu0 0.0
    %4793 = vmatmul.mubr.f32.gmra.mrb[0].mxu0 %v4622
    %v4794 = vpop.f32.mrb[0].mxu0
    %v4795 = vadd.f32 %v4589, %v4794
    %v4796 = vpop.f32.mrb[0].mxu0
    %4797 = vmatprep.mubr.f32.mxu0 0.0
    %4798 = vmatmul.mubr.f32.gmra.mrb[0].mxu0 %v4625
    %v4799 = vpop.f32.mrb[0].mxu0
    %v4800 = vadd.f32 %v4589, %v4799
    %v4801 = vpop.f32.mrb[0].mxu0
    %4802 = vmatprep.mubr.f32.mxu0 0.0
    %4803 = vmatmul.mubr.f32.gmra.mrb[0].mxu0 %v4628
    %v4804 = vpop.f32.mrb[0].mxu0
    %v4805 = vadd.f32 %v4589, %v4804
    %v4806 = vpop.f32.mrb[0].mxu0
    %4807 = vmatprep.mubr.f32.mxu0 0.0
    %4808 = vmatmul.mubr.f32.gmra.mrb[0].mxu0 %v4631
    %v4809 = vpop.f32.mrb[0].mxu0
    %v4810 = vadd.f32 %v4589, %v4809
    %v4811 = vpop.f32.mrb[0].mxu0
    %4812 = vmatprep.mubr.f32.mxu0 0.0
    %4813 = vmatmul.mubr.f32.gmra.mrb[0].mxu0 %v4634
    %v4814 = vpop.f32.mrb[0].mxu0
    %v4815 = vadd.f32 %v4589, %v4814
    %v4816 = vpop.f32.mrb[0].mxu0
    %4817 = vmatprep.mubr.f32.mxu0 0.0
    %4818 = vmatmul.mubr.f32.gmra.mrb[0].mxu0 %v4637
    %v4819 = vpop.f32.mrb[0].mxu0
    %v4820 = vadd.f32 %v4589, %v4819
    %v4821 = vpop.f32.mrb[0].mxu0
    %4822 = vmatprep.mubr.f32.mxu0 0.0
    %4823 = vmatmul.mubr.f32.gmra.mrb[0].mxu0 %v4640
    %v4824 = vpop.f32.mrb[0].mxu0
    %v4825 = vadd.f32 %v4589, %v4824
    %v4826 = vpop.f32.mrb[0].mxu0
    %4827 = vmatprep.mubr.f32.mxu0 0.0
    %4828 = vmatmul.mubr.f32.gmra.mrb[0].mxu0 %v4643
    %v4829 = vpop.f32.mrb[0].mxu0
    %v4830 = vadd.f32 %v4589, %v4829
    %v4831 = vpop.f32.mrb[0].mxu0
    %4832 = vmatprep.mubr.f32.mxu0 0.0
    %4833 = vmatmul.mubr.f32.gmra.mrb[0].mxu0 %v4646
    %v4834 = vpop.f32.mrb[0].mxu0
    %v4835 = vadd.f32 %v4589, %v4834
    %v4836 = vpop.f32.mrb[0].mxu0
    %4837 = vmatprep.mubr.f32.mxu0 0.0
    %4838 = vmatmul.mubr.f32.gmra.mrb[0].mxu0 %v4649
    %v4839 = vpop.f32.mrb[0].mxu0
    %v4840 = vadd.f32 %v4589, %v4839
    %v4841 = vpop.f32.mrb[0].mxu0
    %4842 = vmatprep.mubr.f32.mxu0 0.0
    %4843 = vmatmul.mubr.f32.gmra.mrb[0].mxu0 %v4652
    %v4844 = vpop.f32.mrb[0].mxu0
    %v4845 = vadd.f32 %v4589, %v4844
    %v4846 = vpop.f32.mrb[0].mxu0
    %4847 = vmatprep.mubr.f32.mxu0 0.0
    %4848 = vmatmul.mubr.f32.gmra.mrb[0].mxu0 %v4655
    %v4849 = vpop.f32.mrb[0].mxu0
    %v4850 = vadd.f32 %v4589, %v4849
    %v4851 = vpop.f32.mrb[0].mxu0
    %4852 = vmatprep.mubr.f32.mxu0 0.0
    %4853 = vmatmul.mubr.f32.gmra.mrb[0].mxu0 %v4658
    %v4854 = vpop.f32.mrb[0].mxu0
    %v4855 = vadd.f32 %v4589, %v4854
    %v4856 = vpop.f32.mrb[0].mxu0
    %4857 = vmatprep.mubr.f32.mxu0 0.0
    %4858 = vmatmul.mubr.f32.gmra.mrb[0].mxu0 %v4661
    %v4859 = vpop.f32.mrb[0].mxu0
    %v4860 = vadd.f32 %v4589, %v4859
    %v4861 = vpop.f32.mrb[0].mxu0
    %4862 = vmatprep.mubr.f32.mxu0 0.0
    %4863 = vmatmul.mubr.f32.gmra.mrb[0].mxu0 %v4664
    %v4864 = vpop.f32.mrb[0].mxu0
    %v4865 = vadd.f32 %v4589, %v4864
    %v4866 = vpop.f32.mrb[0].mxu0
    %4867 = vmatprep.mubr.f32.mxu0 0.0
    %4868 = vmatmul.mubr.f32.gmra.mrb[0].mxu0 %v4667
    %v4869 = vpop.f32.mrb[0].mxu0
    %v4870 = vadd.f32 %v4589, %v4869
    %v4871 = vpop.f32.mrb[0].mxu0
    %4872 = vmatprep.mubr.f32.mxu0 0.0
    %4873 = vmatmul.mubr.f32.gmra.mrb[0].mxu0 %v4670
    %v4874 = vpop.f32.mrb[0].mxu0
    %v4875 = vadd.f32 %v4589, %v4874
    %v4876 = vpop.f32.mrb[0].mxu0
    %4877 = vmatprep.mubr.f32.mxu0 0.0
    %4878 = vmatmul.mubr.f32.gmra.mrb[0].mxu0 %v4673
    %v4879 = vpop.f32.mrb[0].mxu0
    %v4880 = vadd.f32 %v4589, %v4879
    %v4881 = vpop.f32.mrb[0].mxu0
    %4882 = vdwg.mxu0
    %v4883 = vxor.u32 %v4745, 2147483648
    %v4884 = vxor.u32 %v4750, 2147483648
    %v4885 = vxor.u32 %v4755, 2147483648
    %v4886 = vxor.u32 %v4760, 2147483648
    %v4887 = vxor.u32 %v4765, 2147483648
    %v4888 = vxor.u32 %v4770, 2147483648
    %v4889 = vxor.u32 %v4775, 2147483648
    %v4890 = vxor.u32 %v4780, 2147483648
    %v4891 = vxor.u32 %v4785, 2147483648
    %v4892 = vxor.u32 %v4790, 2147483648
    %v4893 = vxor.u32 %v4795, 2147483648
    %v4894 = vxor.u32 %v4800, 2147483648
    %v4895 = vxor.u32 %v4805, 2147483648
    %v4896 = vxor.u32 %v4810, 2147483648
    %v4897 = vxor.u32 %v4815, 2147483648
    %v4898 = vxor.u32 %v4820, 2147483648
    %v4899 = vxor.u32 %v4825, 2147483648
    %v4900 = vxor.u32 %v4830, 2147483648
    %v4901 = vxor.u32 %v4835, 2147483648
    %v4902 = vxor.u32 %v4840, 2147483648
    %v4903 = vxor.u32 %v4845, 2147483648
    %v4904 = vxor.u32 %v4850, 2147483648
    %v4905 = vxor.u32 %v4855, 2147483648
    %v4906 = vxor.u32 %v4860, 2147483648
    %v4907 = vxor.u32 %v4865, 2147483648
    %v4908 = vxor.u32 %v4870, 2147483648
    %v4909 = vxor.u32 %v4875, 2147483648
    %v4910 = vxor.u32 %v4880, 2147483648
    %v4911 = vmul.f32 %v4883, 1.442695
    %v4912 = vpow.pop %v4911
    %v4913 = vmul.f32 %v4884, 1.442695
    %v4914 = vpow.pop %v4913
    %v4915 = vmul.f32 %v4885, 1.442695
    %v4916 = vpow.pop %v4915
    %v4917 = vmul.f32 %v4886, 1.442695
    %v4918 = vpow.pop %v4917
    %v4919 = vmul.f32 %v4887, 1.442695
    %v4920 = vpow.pop %v4919
    %v4921 = vmul.f32 %v4888, 1.442695
    %v4922 = vpow.pop %v4921
    %v4923 = vmul.f32 %v4889, 1.442695
    %v4924 = vpow.pop %v4923
    %v4925 = vmul.f32 %v4890, 1.442695
    %v4926 = vpow.pop %v4925
    %v4927 = vmul.f32 %v4891, 1.442695
    %v4928 = vpow.pop %v4927
    %v4929 = vmul.f32 %v4892, 1.442695
    %v4930 = vpow.pop %v4929
    %v4931 = vmul.f32 %v4893, 1.442695
    %v4932 = vpow.pop %v4931
    %v4933 = vmul.f32 %v4894, 1.442695
    %v4934 = vpow.pop %v4933
    %v4935 = vmul.f32 %v4895, 1.442695
    %v4936 = vpow.pop %v4935
    %v4937 = vmul.f32 %v4896, 1.442695
    %v4938 = vpow.pop %v4937
    %v4939 = vmul.f32 %v4897, 1.442695
    %v4940 = vpow.pop %v4939
    %v4941 = vmul.f32 %v4898, 1.442695
    %v4942 = vpow.pop %v4941
    %v4943 = vmul.f32 %v4899, 1.442695
    %v4944 = vpow.pop %v4943
    %v4945 = vmul.f32 %v4900, 1.442695
    %v4946 = vpow.pop %v4945
    %v4947 = vmul.f32 %v4901, 1.442695
    %v4948 = vpow.pop %v4947
    %v4949 = vmul.f32 %v4902, 1.442695
    %v4950 = vpow.pop %v4949
    %v4951 = vmul.f32 %v4903, 1.442695
    %v4952 = vpow.pop %v4951
    %v4953 = vmul.f32 %v4904, 1.442695
    %v4954 = vpow.pop %v4953
    %v4955 = vmul.f32 %v4905, 1.442695
    %v4956 = vpow.pop %v4955
    %v4957 = vmul.f32 %v4906, 1.442695
    %v4958 = vpow.pop %v4957
    %v4959 = vmul.f32 %v4907, 1.442695
    %v4960 = vpow.pop %v4959
    %v4961 = vmul.f32 %v4908, 1.442695
    %v4962 = vpow.pop %v4961
    %v4963 = vmul.f32 %v4909, 1.442695
    %v4964 = vpow.pop %v4963
    %v4965 = vmul.f32 %v4910, 1.442695
    %v4966 = vpow.pop %v4965
    %v4967 = vadd.f32 %v4912, 1.0
    %v4968 = vadd.f32 %v4914, 1.0
    %v4969 = vadd.f32 %v4916, 1.0
    %v4970 = vadd.f32 %v4918, 1.0
    %v4971 = vadd.f32 %v4920, 1.0
    %v4972 = vadd.f32 %v4922, 1.0
    %v4973 = vadd.f32 %v4924, 1.0
    %v4974 = vadd.f32 %v4926, 1.0
    %v4975 = vadd.f32 %v4928, 1.0
    %v4976 = vadd.f32 %v4930, 1.0
    %v4977 = vadd.f32 %v4932, 1.0
    %v4978 = vadd.f32 %v4934, 1.0
    %v4979 = vadd.f32 %v4936, 1.0
    %v4980 = vadd.f32 %v4938, 1.0
    %v4981 = vadd.f32 %v4940, 1.0
    %v4982 = vadd.f32 %v4942, 1.0
    %v4983 = vadd.f32 %v4944, 1.0
    %v4984 = vadd.f32 %v4946, 1.0
    %v4985 = vadd.f32 %v4948, 1.0
    %v4986 = vadd.f32 %v4950, 1.0
    %v4987 = vadd.f32 %v4952, 1.0
    %v4988 = vadd.f32 %v4954, 1.0
    %v4989 = vadd.f32 %v4956, 1.0
    %v4990 = vadd.f32 %v4958, 1.0
    %v4991 = vadd.f32 %v4960, 1.0
    %v4992 = vadd.f32 %v4962, 1.0
    %v4993 = vadd.f32 %v4964, 1.0
    %v4994 = vadd.f32 %v4966, 1.0
    %v4995 = vrcp.pop %v4967
    %v4996 = vmul.f32 1.0, %v4995
    %v4997 = vrcp.pop %v4968
    %v4998 = vmul.f32 1.0, %v4997
    %v4999 = vrcp.pop %v4969
    %v5000 = vmul.f32 1.0, %v4999
    %v5001 = vrcp.pop %v4970
    %v5002 = vmul.f32 1.0, %v5001
    %v5003 = vrcp.pop %v4971
    %v5004 = vmul.f32 1.0, %v5003
    %v5005 = vrcp.pop %v4972
    %v5006 = vmul.f32 1.0, %v5005
    %v5007 = vrcp.pop %v4973
    %v5008 = vmul.f32 1.0, %v5007
    %v5009 = vrcp.pop %v4974
    %v5010 = vmul.f32 1.0, %v5009
    %v5011 = vrcp.pop %v4975
    %v5012 = vmul.f32 1.0, %v5011
    %v5013 = vrcp.pop %v4976
    %v5014 = vmul.f32 1.0, %v5013
    %v5015 = vrcp.pop %v4977
    %v5016 = vmul.f32 1.0, %v5015
    %v5017 = vrcp.pop %v4978
    %v5018 = vmul.f32 1.0, %v5017
    %v5019 = vrcp.pop %v4979
    %v5020 = vmul.f32 1.0, %v5019
    %v5021 = vrcp.pop %v4980
    %v5022 = vmul.f32 1.0, %v5021
    %v5023 = vrcp.pop %v4981
    %v5024 = vmul.f32 1.0, %v5023
    %v5025 = vrcp.pop %v4982
    %v5026 = vmul.f32 1.0, %v5025
    %v5027 = vrcp.pop %v4983
    %v5028 = vmul.f32 1.0, %v5027
    %v5029 = vrcp.pop %v4984
    %v5030 = vmul.f32 1.0, %v5029
    %v5031 = vrcp.pop %v4985
    %v5032 = vmul.f32 1.0, %v5031
    %v5033 = vrcp.pop %v4986
    %v5034 = vmul.f32 1.0, %v5033
    %v5035 = vrcp.pop %v4987
    %v5036 = vmul.f32 1.0, %v5035
    %v5037 = vrcp.pop %v4988
    %v5038 = vmul.f32 1.0, %v5037
    %v5039 = vrcp.pop %v4989
    %v5040 = vmul.f32 1.0, %v5039
    %v5041 = vrcp.pop %v4990
    %v5042 = vmul.f32 1.0, %v5041
    %v5043 = vrcp.pop %v4991
    %v5044 = vmul.f32 1.0, %v5043
    %v5045 = vrcp.pop %v4992
    %v5046 = vmul.f32 1.0, %v5045
    %v5047 = vrcp.pop %v4993
    %v5048 = vmul.f32 1.0, %v5047
    %v5049 = vrcp.pop %v4994
    %v5050 = vmul.f32 1.0, %v5049
    %v5051 = vmul.f32 %v4745, %v4996
    %v5052 = vmul.f32 %v4750, %v4998
    %v5053 = vmul.f32 %v4755, %v5000
    %v5054 = vmul.f32 %v4760, %v5002
    %v5055 = vmul.f32 %v4765, %v5004
    %v5056 = vmul.f32 %v4770, %v5006
    %v5057 = vmul.f32 %v4775, %v5008
    %v5058 = vmul.f32 %v4780, %v5010
    %v5059 = vmul.f32 %v4785, %v5012
    %v5060 = vmul.f32 %v4790, %v5014
    %v5061 = vmul.f32 %v4795, %v5016
    %v5062 = vmul.f32 %v4800, %v5018
    %v5063 = vmul.f32 %v4805, %v5020
    %v5064 = vmul.f32 %v4810, %v5022
    %v5065 = vmul.f32 %v4815, %v5024
    %v5066 = vmul.f32 %v4820, %v5026
    %v5067 = vmul.f32 %v4825, %v5028
    %v5068 = vmul.f32 %v4830, %v5030
    %v5069 = vmul.f32 %v4835, %v5032
    %v5070 = vmul.f32 %v4840, %v5034
    %v5071 = vmul.f32 %v4845, %v5036
    %v5072 = vmul.f32 %v4850, %v5038
    %v5073 = vmul.f32 %v4855, %v5040
    %v5074 = vmul.f32 %v4860, %v5042
    %v5075 = vmul.f32 %v4865, %v5044
    %v5076 = vmul.f32 %v4870, %v5046
    %v5077 = vmul.f32 %v4875, %v5048
    %v5078 = vmul.f32 %v4880, %v5050
    %s5079 = scalar_lea.vmem %s11, 32
    %v5080 = vld [vmem:[%s5079] sm:$0xff]
    %v5081 = vld [vmem:[%s5079 + $0x8] sm:$0xff]
    %v5082 = vld [vmem:[%s5079 + $0x10] sm:$0xff]
    %v5083 = vld [vmem:[%s5079 + $0x18] sm:$0xff]
    %s5084 = scalar_lea.vmem %s12, 1
    %v5085 = vld [vmem:[%s5084] sm:$0x1]
    %v5087 = vlaneseq
    %v5088 = vshrl.u32 %v5087, 7
    %v5089 = vsub.s32 0, %v5088
    %v5090 = vrot.slane %v5085, %v5089
    %v5093 = vsel %vm212, %v5051, 0
    %v5096 = vsel %vm212, %v5052, 0
    %v5099 = vsel %vm212, %v5053, 0
    %v5102 = vsel %vm212, %v5054, 0
    %v5105 = vsel %vm212, %v5055, 0
    %v5108 = vsel %vm212, %v5056, 0
    %v5111 = vsel %vm212, %v5057, 0
    %v5114 = vsel %vm212, %v5058, 0
    %v5117 = vsel %vm212, %v5059, 0
    %v5120 = vsel %vm212, %v5060, 0
    %v5123 = vsel %vm212, %v5061, 0
    %v5126 = vsel %vm212, %v5062, 0
    %v5129 = vsel %vm212, %v5063, 0
    %v5132 = vsel %vm212, %v5064, 0
    %v5135 = vsel %vm212, %v5065, 0
    %v5138 = vsel %vm212, %v5066, 0
    %v5141 = vsel %vm212, %v5067, 0
    %v5144 = vsel %vm212, %v5068, 0
    %v5147 = vsel %vm212, %v5069, 0
    %v5150 = vsel %vm212, %v5070, 0
    %v5153 = vsel %vm212, %v5071, 0
    %v5156 = vsel %vm212, %v5072, 0
    %v5159 = vsel %vm212, %v5073, 0
    %v5162 = vsel %vm212, %v5074, 0
    %v5165 = vsel %vm212, %v5075, 0
    %v5168 = vsel %vm212, %v5076, 0
    %v5171 = vsel %vm212, %v5077, 0
    %v5174 = vsel %vm212, %v5078, 0
    %5176 = vmatprep.subr.mxu0 0.0
    %5177 = vmatpush1.msra.mxu0 %v5080
    %5178 = vmatprep.subr.mxu0 0.0
    %5179 = vmatpush1.msra.mxu0 %v5081
    %5180 = vmatprep.subr.mxu0 0.0
    %5181 = vmatpush1.msra.mxu0 %v5082
    %5182 = vmatprep.subr.mxu0 0.0
    %5183 = vmatpush1.msra.mxu0 %v5083
    %5184 = vmatprep.subr.mxu0 0.0
    %5185 = vmatpush1.msra.mxu0 0.0
    %5186 = vmatprep.subr.mxu0 0.0
    %5187 = vmatpush1.msra.mxu0 0.0
    %5188 = vmatprep.subr.mxu0 0.0
    %5189 = vmatpush1.msra.mxu0 0.0
    %5190 = vmatprep.subr.mxu0 0.0
    %5191 = vmatpush1.msra.mxu0 0.0
    %5192 = vmatprep.subr.mxu0 0.0
    %5193 = vmatpush1.msra.mxu0 0.0
    %5194 = vmatprep.subr.mxu0 0.0
    %5195 = vmatpush1.msra.mxu0 0.0
    %5196 = vmatprep.subr.mxu0 0.0
    %5197 = vmatpush1.msra.mxu0 0.0
    %5198 = vmatprep.subr.mxu0 0.0
    %5199 = vmatpush1.msra.mxu0 0.0
    %5200 = vmatprep.subr.mxu0 0.0
    %5201 = vmatpush1.msra.mxu0 0.0
    %5202 = vmatprep.subr.mxu0 0.0
    %5203 = vmatpush1.msra.mxu0 0.0
    %5204 = vmatprep.subr.mxu0 0.0
    %5205 = vmatpush1.msra.mxu0 0.0
    %5206 = vmatprep.subr.mxu0 0.0
    %5207 = vmatpush1.msra.mxu0 0.0
    %5208 = vmatprep.subr.mxu0 0.0
    %5209 = vmatpush1.msra.mxu0 0.0
    %5210 = vmatprep.subr.mxu0 0.0
    %5211 = vmatpush1.msra.mxu0 0.0
    %5212 = vmatprep.subr.mxu0 0.0
    %5213 = vmatpush1.msra.mxu0 0.0
    %5214 = vmatprep.subr.mxu0 0.0
    %5215 = vmatpush1.msra.mxu0 0.0
    %5216 = vmatprep.subr.mxu0 0.0
    %5217 = vmatpush1.msra.mxu0 0.0
    %5218 = vmatprep.subr.mxu0 0.0
    %5219 = vmatpush1.msra.mxu0 0.0
    %5220 = vmatprep.subr.mxu0 0.0
    %5221 = vmatpush1.msra.mxu0 0.0
    %5222 = vmatprep.subr.mxu0 0.0
    %5223 = vmatpush1.msra.mxu0 0.0
    %5224 = vmatprep.subr.mxu0 0.0
    %5225 = vmatpush1.msra.mxu0 0.0
    %5226 = vmatprep.subr.mxu0 0.0
    %5227 = vmatpush1.msra.mxu0 0.0
    %5228 = vmatprep.subr.mxu0 0.0
    %5229 = vmatpush1.msra.mxu0 0.0
    %5230 = vmatprep.subr.mxu0 0.0
    %5231 = vmatpush1.msra.mxu0 0.0
    %5232 = vmatprep.subr.mxu0 0.0
    %5233 = vmatpush1.msra.mxu0 0.0
    %5234 = vmatprep.subr.mxu0 0.0
    %5235 = vmatpush1.msra.mxu0 0.0
    %5236 = vmatprep.subr.mxu0 0.0
    %5237 = vmatpush1.msra.mxu0 0.0
    %5238 = vmatprep.subr.mxu0 0.0
    %5239 = vmatpush1.msra.mxu0 0.0
    %5240 = vmatprep.mubr.f32.mxu0 0.0
    %5241 = vmatmul.mubr.f32.gmra.mrb[0].mxu0 %v5093
    %v5242 = vpop.f32.mrb[0].mxu0
    %v5243 = vadd.f32 %v5090, %v5242
    %v5244 = vpop.f32.mrb[0].mxu0
    %5245 = vmatprep.mubr.f32.mxu0 0.0
    %5246 = vmatmul.mubr.f32.gmra.mrb[0].mxu0 %v5096
    %v5247 = vpop.f32.mrb[0].mxu0
    %v5248 = vadd.f32 %v5090, %v5247
    %v5249 = vpop.f32.mrb[0].mxu0
    %5250 = vmatprep.mubr.f32.mxu0 0.0
    %5251 = vmatmul.mubr.f32.gmra.mrb[0].mxu0 %v5099
    %v5252 = vpop.f32.mrb[0].mxu0
    %v5253 = vadd.f32 %v5090, %v5252
    %v5254 = vpop.f32.mrb[0].mxu0
    %5255 = vmatprep.mubr.f32.mxu0 0.0
    %5256 = vmatmul.mubr.f32.gmra.mrb[0].mxu0 %v5102
    %v5257 = vpop.f32.mrb[0].mxu0
    %v5258 = vadd.f32 %v5090, %v5257
    %v5259 = vpop.f32.mrb[0].mxu0
    %5260 = vmatprep.mubr.f32.mxu0 0.0
    %5261 = vmatmul.mubr.f32.gmra.mrb[0].mxu0 %v5105
    %v5262 = vpop.f32.mrb[0].mxu0
    %v5263 = vadd.f32 %v5090, %v5262
    %v5264 = vpop.f32.mrb[0].mxu0
    %5265 = vmatprep.mubr.f32.mxu0 0.0
    %5266 = vmatmul.mubr.f32.gmra.mrb[0].mxu0 %v5108
    %v5267 = vpop.f32.mrb[0].mxu0
    %v5268 = vadd.f32 %v5090, %v5267
    %v5269 = vpop.f32.mrb[0].mxu0
    %5270 = vmatprep.mubr.f32.mxu0 0.0
    %5271 = vmatmul.mubr.f32.gmra.mrb[0].mxu0 %v5111
    %v5272 = vpop.f32.mrb[0].mxu0
    %v5273 = vadd.f32 %v5090, %v5272
    %v5274 = vpop.f32.mrb[0].mxu0
    %5275 = vmatprep.mubr.f32.mxu0 0.0
    %5276 = vmatmul.mubr.f32.gmra.mrb[0].mxu0 %v5114
    %v5277 = vpop.f32.mrb[0].mxu0
    %v5278 = vadd.f32 %v5090, %v5277
    %v5279 = vpop.f32.mrb[0].mxu0
    %5280 = vmatprep.mubr.f32.mxu0 0.0
    %5281 = vmatmul.mubr.f32.gmra.mrb[0].mxu0 %v5117
    %v5282 = vpop.f32.mrb[0].mxu0
    %v5283 = vadd.f32 %v5090, %v5282
    %v5284 = vpop.f32.mrb[0].mxu0
    %5285 = vmatprep.mubr.f32.mxu0 0.0
    %5286 = vmatmul.mubr.f32.gmra.mrb[0].mxu0 %v5120
    %v5287 = vpop.f32.mrb[0].mxu0
    %v5288 = vadd.f32 %v5090, %v5287
    %v5289 = vpop.f32.mrb[0].mxu0
    %5290 = vmatprep.mubr.f32.mxu0 0.0
    %5291 = vmatmul.mubr.f32.gmra.mrb[0].mxu0 %v5123
    %v5292 = vpop.f32.mrb[0].mxu0
    %v5293 = vadd.f32 %v5090, %v5292
    %v5294 = vpop.f32.mrb[0].mxu0
    %5295 = vmatprep.mubr.f32.mxu0 0.0
    %5296 = vmatmul.mubr.f32.gmra.mrb[0].mxu0 %v5126
    %v5297 = vpop.f32.mrb[0].mxu0
    %v5298 = vadd.f32 %v5090, %v5297
    %v5299 = vpop.f32.mrb[0].mxu0
    %5300 = vmatprep.mubr.f32.mxu0 0.0
    %5301 = vmatmul.mubr.f32.gmra.mrb[0].mxu0 %v5129
    %v5302 = vpop.f32.mrb[0].mxu0
    %v5303 = vadd.f32 %v5090, %v5302
    %v5304 = vpop.f32.mrb[0].mxu0
    %5305 = vmatprep.mubr.f32.mxu0 0.0
    %5306 = vmatmul.mubr.f32.gmra.mrb[0].mxu0 %v5132
    %v5307 = vpop.f32.mrb[0].mxu0
    %v5308 = vadd.f32 %v5090, %v5307
    %v5309 = vpop.f32.mrb[0].mxu0
    %5310 = vmatprep.mubr.f32.mxu0 0.0
    %5311 = vmatmul.mubr.f32.gmra.mrb[0].mxu0 %v5135
    %v5312 = vpop.f32.mrb[0].mxu0
    %v5313 = vadd.f32 %v5090, %v5312
    %v5314 = vpop.f32.mrb[0].mxu0
    %5315 = vmatprep.mubr.f32.mxu0 0.0
    %5316 = vmatmul.mubr.f32.gmra.mrb[0].mxu0 %v5138
    %v5317 = vpop.f32.mrb[0].mxu0
    %v5318 = vadd.f32 %v5090, %v5317
    %v5319 = vpop.f32.mrb[0].mxu0
    %5320 = vmatprep.mubr.f32.mxu0 0.0
    %5321 = vmatmul.mubr.f32.gmra.mrb[0].mxu0 %v5141
    %v5322 = vpop.f32.mrb[0].mxu0
    %v5323 = vadd.f32 %v5090, %v5322
    %v5324 = vpop.f32.mrb[0].mxu0
    %5325 = vmatprep.mubr.f32.mxu0 0.0
    %5326 = vmatmul.mubr.f32.gmra.mrb[0].mxu0 %v5144
    %v5327 = vpop.f32.mrb[0].mxu0
    %v5328 = vadd.f32 %v5090, %v5327
    %v5329 = vpop.f32.mrb[0].mxu0
    %5330 = vmatprep.mubr.f32.mxu0 0.0
    %5331 = vmatmul.mubr.f32.gmra.mrb[0].mxu0 %v5147
    %v5332 = vpop.f32.mrb[0].mxu0
    %v5333 = vadd.f32 %v5090, %v5332
    %v5334 = vpop.f32.mrb[0].mxu0
    %5335 = vmatprep.mubr.f32.mxu0 0.0
    %5336 = vmatmul.mubr.f32.gmra.mrb[0].mxu0 %v5150
    %v5337 = vpop.f32.mrb[0].mxu0
    %v5338 = vadd.f32 %v5090, %v5337
    %v5339 = vpop.f32.mrb[0].mxu0
    %5340 = vmatprep.mubr.f32.mxu0 0.0
    %5341 = vmatmul.mubr.f32.gmra.mrb[0].mxu0 %v5153
    %v5342 = vpop.f32.mrb[0].mxu0
    %v5343 = vadd.f32 %v5090, %v5342
    %v5344 = vpop.f32.mrb[0].mxu0
    %5345 = vmatprep.mubr.f32.mxu0 0.0
    %5346 = vmatmul.mubr.f32.gmra.mrb[0].mxu0 %v5156
    %v5347 = vpop.f32.mrb[0].mxu0
    %v5348 = vadd.f32 %v5090, %v5347
    %v5349 = vpop.f32.mrb[0].mxu0
    %5350 = vmatprep.mubr.f32.mxu0 0.0
    %5351 = vmatmul.mubr.f32.gmra.mrb[0].mxu0 %v5159
    %v5352 = vpop.f32.mrb[0].mxu0
    %v5353 = vadd.f32 %v5090, %v5352
    %v5354 = vpop.f32.mrb[0].mxu0
    %5355 = vmatprep.mubr.f32.mxu0 0.0
    %5356 = vmatmul.mubr.f32.gmra.mrb[0].mxu0 %v5162
    %v5357 = vpop.f32.mrb[0].mxu0
    %v5358 = vadd.f32 %v5090, %v5357
    %v5359 = vpop.f32.mrb[0].mxu0
    %5360 = vmatprep.mubr.f32.mxu0 0.0
    %5361 = vmatmul.mubr.f32.gmra.mrb[0].mxu0 %v5165
    %v5362 = vpop.f32.mrb[0].mxu0
    %v5363 = vadd.f32 %v5090, %v5362
    %v5364 = vpop.f32.mrb[0].mxu0
    %5365 = vmatprep.mubr.f32.mxu0 0.0
    %5366 = vmatmul.mubr.f32.gmra.mrb[0].mxu0 %v5168
    %v5367 = vpop.f32.mrb[0].mxu0
    %v5368 = vadd.f32 %v5090, %v5367
    %v5369 = vpop.f32.mrb[0].mxu0
    %5370 = vmatprep.mubr.f32.mxu0 0.0
    %5371 = vmatmul.mubr.f32.gmra.mrb[0].mxu0 %v5171
    %v5372 = vpop.f32.mrb[0].mxu0
    %v5373 = vadd.f32 %v5090, %v5372
    %v5374 = vpop.f32.mrb[0].mxu0
    %5375 = vmatprep.mubr.f32.mxu0 0.0
    %5376 = vmatmul.mubr.f32.gmra.mrb[0].mxu0 %v5174
    %v5377 = vpop.f32.mrb[0].mxu0
    %v5378 = vadd.f32 %v5090, %v5377
    %v5379 = vpop.f32.mrb[0].mxu0
    %5380 = vdwg.mxu0
    %v5381 = vxor.u32 %v5243, 2147483648
    %v5382 = vxor.u32 %v5248, 2147483648
    %v5383 = vxor.u32 %v5253, 2147483648
    %v5384 = vxor.u32 %v5258, 2147483648
    %v5385 = vxor.u32 %v5263, 2147483648
    %v5386 = vxor.u32 %v5268, 2147483648
    %v5387 = vxor.u32 %v5273, 2147483648
    %v5388 = vxor.u32 %v5278, 2147483648
    %v5389 = vxor.u32 %v5283, 2147483648
    %v5390 = vxor.u32 %v5288, 2147483648
    %v5391 = vxor.u32 %v5293, 2147483648
    %v5392 = vxor.u32 %v5298, 2147483648
    %v5393 = vxor.u32 %v5303, 2147483648
    %v5394 = vxor.u32 %v5308, 2147483648
    %v5395 = vxor.u32 %v5313, 2147483648
    %v5396 = vxor.u32 %v5318, 2147483648
    %v5397 = vxor.u32 %v5323, 2147483648
    %v5398 = vxor.u32 %v5328, 2147483648
    %v5399 = vxor.u32 %v5333, 2147483648
    %v5400 = vxor.u32 %v5338, 2147483648
    %v5401 = vxor.u32 %v5343, 2147483648
    %v5402 = vxor.u32 %v5348, 2147483648
    %v5403 = vxor.u32 %v5353, 2147483648
    %v5404 = vxor.u32 %v5358, 2147483648
    %v5405 = vxor.u32 %v5363, 2147483648
    %v5406 = vxor.u32 %v5368, 2147483648
    %v5407 = vxor.u32 %v5373, 2147483648
    %v5408 = vxor.u32 %v5378, 2147483648
    %v5409 = vmul.f32 %v5381, 1.442695
    %v5410 = vpow.pop %v5409
    %v5411 = vmul.f32 %v5382, 1.442695
    %v5412 = vpow.pop %v5411
    %v5413 = vmul.f32 %v5383, 1.442695
    %v5414 = vpow.pop %v5413
    %v5415 = vmul.f32 %v5384, 1.442695
    %v5416 = vpow.pop %v5415
    %v5417 = vmul.f32 %v5385, 1.442695
    %v5418 = vpow.pop %v5417
    %v5419 = vmul.f32 %v5386, 1.442695
    %v5420 = vpow.pop %v5419
    %v5421 = vmul.f32 %v5387, 1.442695
    %v5422 = vpow.pop %v5421
    %v5423 = vmul.f32 %v5388, 1.442695
    %v5424 = vpow.pop %v5423
    %v5425 = vmul.f32 %v5389, 1.442695
    %v5426 = vpow.pop %v5425
    %v5427 = vmul.f32 %v5390, 1.442695
    %v5428 = vpow.pop %v5427
    %v5429 = vmul.f32 %v5391, 1.442695
    %v5430 = vpow.pop %v5429
    %v5431 = vmul.f32 %v5392, 1.442695
    %v5432 = vpow.pop %v5431
    %v5433 = vmul.f32 %v5393, 1.442695
    %v5434 = vpow.pop %v5433
    %v5435 = vmul.f32 %v5394, 1.442695
    %v5436 = vpow.pop %v5435
    %v5437 = vmul.f32 %v5395, 1.442695
    %v5438 = vpow.pop %v5437
    %v5439 = vmul.f32 %v5396, 1.442695
    %v5440 = vpow.pop %v5439
    %v5441 = vmul.f32 %v5397, 1.442695
    %v5442 = vpow.pop %v5441
    %v5443 = vmul.f32 %v5398, 1.442695
    %v5444 = vpow.pop %v5443
    %v5445 = vmul.f32 %v5399, 1.442695
    %v5446 = vpow.pop %v5445
    %v5447 = vmul.f32 %v5400, 1.442695
    %v5448 = vpow.pop %v5447
    %v5449 = vmul.f32 %v5401, 1.442695
    %v5450 = vpow.pop %v5449
    %v5451 = vmul.f32 %v5402, 1.442695
    %v5452 = vpow.pop %v5451
    %v5453 = vmul.f32 %v5403, 1.442695
    %v5454 = vpow.pop %v5453
    %v5455 = vmul.f32 %v5404, 1.442695
    %v5456 = vpow.pop %v5455
    %v5457 = vmul.f32 %v5405, 1.442695
    %v5458 = vpow.pop %v5457
    %v5459 = vmul.f32 %v5406, 1.442695
    %v5460 = vpow.pop %v5459
    %v5461 = vmul.f32 %v5407, 1.442695
    %v5462 = vpow.pop %v5461
    %v5463 = vmul.f32 %v5408, 1.442695
    %v5464 = vpow.pop %v5463
    %v5465 = vadd.f32 %v5410, 1.0
    %v5466 = vadd.f32 %v5412, 1.0
    %v5467 = vadd.f32 %v5414, 1.0
    %v5468 = vadd.f32 %v5416, 1.0
    %v5469 = vadd.f32 %v5418, 1.0
    %v5470 = vadd.f32 %v5420, 1.0
    %v5471 = vadd.f32 %v5422, 1.0
    %v5472 = vadd.f32 %v5424, 1.0
    %v5473 = vadd.f32 %v5426, 1.0
    %v5474 = vadd.f32 %v5428, 1.0
    %v5475 = vadd.f32 %v5430, 1.0
    %v5476 = vadd.f32 %v5432, 1.0
    %v5477 = vadd.f32 %v5434, 1.0
    %v5478 = vadd.f32 %v5436, 1.0
    %v5479 = vadd.f32 %v5438, 1.0
    %v5480 = vadd.f32 %v5440, 1.0
    %v5481 = vadd.f32 %v5442, 1.0
    %v5482 = vadd.f32 %v5444, 1.0
    %v5483 = vadd.f32 %v5446, 1.0
    %v5484 = vadd.f32 %v5448, 1.0
    %v5485 = vadd.f32 %v5450, 1.0
    %v5486 = vadd.f32 %v5452, 1.0
    %v5487 = vadd.f32 %v5454, 1.0
    %v5488 = vadd.f32 %v5456, 1.0
    %v5489 = vadd.f32 %v5458, 1.0
    %v5490 = vadd.f32 %v5460, 1.0
    %v5491 = vadd.f32 %v5462, 1.0
    %v5492 = vadd.f32 %v5464, 1.0
    %v5493 = vrcp.pop %v5465
    %v5494 = vmul.f32 1.0, %v5493
    %v5495 = vrcp.pop %v5466
    %v5496 = vmul.f32 1.0, %v5495
    %v5497 = vrcp.pop %v5467
    %v5498 = vmul.f32 1.0, %v5497
    %v5499 = vrcp.pop %v5468
    %v5500 = vmul.f32 1.0, %v5499
    %v5501 = vrcp.pop %v5469
    %v5502 = vmul.f32 1.0, %v5501
    %v5503 = vrcp.pop %v5470
    %v5504 = vmul.f32 1.0, %v5503
    %v5505 = vrcp.pop %v5471
    %v5506 = vmul.f32 1.0, %v5505
    %v5507 = vrcp.pop %v5472
    %v5508 = vmul.f32 1.0, %v5507
    %v5509 = vrcp.pop %v5473
    %v5510 = vmul.f32 1.0, %v5509
    %v5511 = vrcp.pop %v5474
    %v5512 = vmul.f32 1.0, %v5511
    %v5513 = vrcp.pop %v5475
    %v5514 = vmul.f32 1.0, %v5513
    %v5515 = vrcp.pop %v5476
    %v5516 = vmul.f32 1.0, %v5515
    %v5517 = vrcp.pop %v5477
    %v5518 = vmul.f32 1.0, %v5517
    %v5519 = vrcp.pop %v5478
    %v5520 = vmul.f32 1.0, %v5519
    %v5521 = vrcp.pop %v5479
    %v5522 = vmul.f32 1.0, %v5521
    %v5523 = vrcp.pop %v5480
    %v5524 = vmul.f32 1.0, %v5523
    %v5525 = vrcp.pop %v5481
    %v5526 = vmul.f32 1.0, %v5525
    %v5527 = vrcp.pop %v5482
    %v5528 = vmul.f32 1.0, %v5527
    %v5529 = vrcp.pop %v5483
    %v5530 = vmul.f32 1.0, %v5529
    %v5531 = vrcp.pop %v5484
    %v5532 = vmul.f32 1.0, %v5531
    %v5533 = vrcp.pop %v5485
    %v5534 = vmul.f32 1.0, %v5533
    %v5535 = vrcp.pop %v5486
    %v5536 = vmul.f32 1.0, %v5535
    %v5537 = vrcp.pop %v5487
    %v5538 = vmul.f32 1.0, %v5537
    %v5539 = vrcp.pop %v5488
    %v5540 = vmul.f32 1.0, %v5539
    %v5541 = vrcp.pop %v5489
    %v5542 = vmul.f32 1.0, %v5541
    %v5543 = vrcp.pop %v5490
    %v5544 = vmul.f32 1.0, %v5543
    %v5545 = vrcp.pop %v5491
    %v5546 = vmul.f32 1.0, %v5545
    %v5547 = vrcp.pop %v5492
    %v5548 = vmul.f32 1.0, %v5547
    %v5549 = vmul.f32 %v5243, %v5494
    %v5550 = vmul.f32 %v5248, %v5496
    %v5551 = vmul.f32 %v5253, %v5498
    %v5552 = vmul.f32 %v5258, %v5500
    %v5553 = vmul.f32 %v5263, %v5502
    %v5554 = vmul.f32 %v5268, %v5504
    %v5555 = vmul.f32 %v5273, %v5506
    %v5556 = vmul.f32 %v5278, %v5508
    %v5557 = vmul.f32 %v5283, %v5510
    %v5558 = vmul.f32 %v5288, %v5512
    %v5559 = vmul.f32 %v5293, %v5514
    %v5560 = vmul.f32 %v5298, %v5516
    %v5561 = vmul.f32 %v5303, %v5518
    %v5562 = vmul.f32 %v5308, %v5520
    %v5563 = vmul.f32 %v5313, %v5522
    %v5564 = vmul.f32 %v5318, %v5524
    %v5565 = vmul.f32 %v5323, %v5526
    %v5566 = vmul.f32 %v5328, %v5528
    %v5567 = vmul.f32 %v5333, %v5530
    %v5568 = vmul.f32 %v5338, %v5532
    %v5569 = vmul.f32 %v5343, %v5534
    %v5570 = vmul.f32 %v5348, %v5536
    %v5571 = vmul.f32 %v5353, %v5538
    %v5572 = vmul.f32 %v5358, %v5540
    %v5573 = vmul.f32 %v5363, %v5542
    %v5574 = vmul.f32 %v5368, %v5544
    %v5575 = vmul.f32 %v5373, %v5546
    %v5576 = vmul.f32 %v5378, %v5548
    %s5577 = scalar_lea.vmem %s13, 1
    %v5578 = vld [vmem:[%s5577] sm:$0x1]
    %v5580 = vlaneseq
    %v5581 = vshrl.u32 %v5580, 7
    %v5582 = vsub.s32 0, %v5581
    %v5583 = vrot.slane %v5578, %v5582
    %v5585 = vmul.f32 %v5549, %v5583
    %v5586 = vmul.f32 %v5550, %v5583
    %v5587 = vmul.f32 %v5551, %v5583
    %v5588 = vmul.f32 %v5552, %v5583
    %v5589 = vmul.f32 %v5553, %v5583
    %v5590 = vmul.f32 %v5554, %v5583
    %v5591 = vmul.f32 %v5555, %v5583
    %v5592 = vmul.f32 %v5556, %v5583
    %v5593 = vmul.f32 %v5557, %v5583
    %v5594 = vmul.f32 %v5558, %v5583
    %v5595 = vmul.f32 %v5559, %v5583
    %v5596 = vmul.f32 %v5560, %v5583
    %v5597 = vmul.f32 %v5561, %v5583
    %v5598 = vmul.f32 %v5562, %v5583
    %v5599 = vmul.f32 %v5563, %v5583
    %v5600 = vmul.f32 %v5564, %v5583
    %v5601 = vmul.f32 %v5565, %v5583
    %v5602 = vmul.f32 %v5566, %v5583
    %v5603 = vmul.f32 %v5567, %v5583
    %v5604 = vmul.f32 %v5568, %v5583
    %v5605 = vmul.f32 %v5569, %v5583
    %v5606 = vmul.f32 %v5570, %v5583
    %v5607 = vmul.f32 %v5571, %v5583
    %v5608 = vmul.f32 %v5572, %v5583
    %v5609 = vmul.f32 %v5573, %v5583
    %v5610 = vmul.f32 %v5574, %v5583
    %v5611 = vmul.f32 %v5575, %v5583
    %v5612 = vmul.f32 %v5576, %v5583
    %v5613 = vsel %vm212, %v5585, 0.0
    %5614 = vadd.xlane.f32.xlu0 %v5613
    %v5615 = vpop.xlane.xlu0 %5614
    %v5616 = vsel %vm212, %v5586, 0.0
    %5617 = vadd.xlane.f32.xlu0 %v5616
    %v5618 = vpop.xlane.xlu0 %5617
    %v5619 = vsel %vm212, %v5587, 0.0
    %5620 = vadd.xlane.f32.xlu0 %v5619
    %v5621 = vpop.xlane.xlu0 %5620
    %v5622 = vsel %vm212, %v5588, 0.0
    %5623 = vadd.xlane.f32.xlu0 %v5622
    %v5624 = vpop.xlane.xlu0 %5623
    %v5625 = vsel %vm212, %v5589, 0.0
    %5626 = vadd.xlane.f32.xlu0 %v5625
    %v5627 = vpop.xlane.xlu0 %5626
    %v5628 = vsel %vm212, %v5590, 0.0
    %5629 = vadd.xlane.f32.xlu0 %v5628
    %v5630 = vpop.xlane.xlu0 %5629
    %v5631 = vsel %vm212, %v5591, 0.0
    %5632 = vadd.xlane.f32.xlu0 %v5631
    %v5633 = vpop.xlane.xlu0 %5632
    %v5634 = vsel %vm212, %v5592, 0.0
    %5635 = vadd.xlane.f32.xlu0 %v5634
    %v5636 = vpop.xlane.xlu0 %5635
    %v5637 = vsel %vm212, %v5593, 0.0
    %5638 = vadd.xlane.f32.xlu0 %v5637
    %v5639 = vpop.xlane.xlu0 %5638
    %v5640 = vsel %vm212, %v5594, 0.0
    %5641 = vadd.xlane.f32.xlu0 %v5640
    %v5642 = vpop.xlane.xlu0 %5641
    %v5643 = vsel %vm212, %v5595, 0.0
    %5644 = vadd.xlane.f32.xlu0 %v5643
    %v5645 = vpop.xlane.xlu0 %5644
    %v5646 = vsel %vm212, %v5596, 0.0
    %5647 = vadd.xlane.f32.xlu0 %v5646
    %v5648 = vpop.xlane.xlu0 %5647
    %v5649 = vsel %vm212, %v5597, 0.0
    %5650 = vadd.xlane.f32.xlu0 %v5649
    %v5651 = vpop.xlane.xlu0 %5650
    %v5652 = vsel %vm212, %v5598, 0.0
    %5653 = vadd.xlane.f32.xlu0 %v5652
    %v5654 = vpop.xlane.xlu0 %5653
    %v5655 = vsel %vm212, %v5599, 0.0
    %5656 = vadd.xlane.f32.xlu0 %v5655
    %v5657 = vpop.xlane.xlu0 %5656
    %v5658 = vsel %vm212, %v5600, 0.0
    %5659 = vadd.xlane.f32.xlu0 %v5658
    %v5660 = vpop.xlane.xlu0 %5659
    %v5661 = vsel %vm212, %v5601, 0.0
    %5662 = vadd.xlane.f32.xlu0 %v5661
    %v5663 = vpop.xlane.xlu0 %5662
    %v5664 = vsel %vm212, %v5602, 0.0
    %5665 = vadd.xlane.f32.xlu0 %v5664
    %v5666 = vpop.xlane.xlu0 %5665
    %v5667 = vsel %vm212, %v5603, 0.0
    %5668 = vadd.xlane.f32.xlu0 %v5667
    %v5669 = vpop.xlane.xlu0 %5668
    %v5670 = vsel %vm212, %v5604, 0.0
    %5671 = vadd.xlane.f32.xlu0 %v5670
    %v5672 = vpop.xlane.xlu0 %5671
    %v5673 = vsel %vm212, %v5605, 0.0
    %5674 = vadd.xlane.f32.xlu0 %v5673
    %v5675 = vpop.xlane.xlu0 %5674
    %v5676 = vsel %vm212, %v5606, 0.0
    %5677 = vadd.xlane.f32.xlu0 %v5676
    %v5678 = vpop.xlane.xlu0 %5677
    %v5679 = vsel %vm212, %v5607, 0.0
    %5680 = vadd.xlane.f32.xlu0 %v5679
    %v5681 = vpop.xlane.xlu0 %5680
    %v5682 = vsel %vm212, %v5608, 0.0
    %5683 = vadd.xlane.f32.xlu0 %v5682
    %v5684 = vpop.xlane.xlu0 %5683
    %v5685 = vsel %vm212, %v5609, 0.0
    %5686 = vadd.xlane.f32.xlu0 %v5685
    %v5687 = vpop.xlane.xlu0 %5686
    %v5688 = vsel %vm212, %v5610, 0.0
    %5689 = vadd.xlane.f32.xlu0 %v5688
    %v5690 = vpop.xlane.xlu0 %5689
    %v5691 = vsel %vm212, %v5611, 0.0
    %5692 = vadd.xlane.f32.xlu0 %v5691
    %v5693 = vpop.xlane.xlu0 %5692
    %v5694 = vsel %vm212, %v5612, 0.0
    %5695 = vadd.xlane.f32.xlu0 %v5694
    %v5696 = vpop.xlane.xlu0 %5695
    %s5697 = scalar_lea.vmem %s14, 1
    %v5698 = vld [vmem:[%s5697] sm:$0x1]
    %v5700 = vlaneseq
    %v5701 = vshrl.u32 %v5700, 7
    %v5702 = vsub.s32 0, %v5701
    %v5703 = vrot.slane %v5698, %v5702
    %v5705 = vadd.f32 %v5615, %v5703
    %v5706 = vadd.f32 %v5618, %v5703
    %v5707 = vadd.f32 %v5621, %v5703
    %v5708 = vadd.f32 %v5624, %v5703
    %v5709 = vadd.f32 %v5627, %v5703
    %v5710 = vadd.f32 %v5630, %v5703
    %v5711 = vadd.f32 %v5633, %v5703
    %v5712 = vadd.f32 %v5636, %v5703
    %v5713 = vadd.f32 %v5639, %v5703
    %v5714 = vadd.f32 %v5642, %v5703
    %v5715 = vadd.f32 %v5645, %v5703
    %v5716 = vadd.f32 %v5648, %v5703
    %v5717 = vadd.f32 %v5651, %v5703
    %v5718 = vadd.f32 %v5654, %v5703
    %v5719 = vadd.f32 %v5657, %v5703
    %v5720 = vadd.f32 %v5660, %v5703
    %v5721 = vadd.f32 %v5663, %v5703
    %v5722 = vadd.f32 %v5666, %v5703
    %v5723 = vadd.f32 %v5669, %v5703
    %v5724 = vadd.f32 %v5672, %v5703
    %v5725 = vadd.f32 %v5675, %v5703
    %v5726 = vadd.f32 %v5678, %v5703
    %v5727 = vadd.f32 %v5681, %v5703
    %v5728 = vadd.f32 %v5684, %v5703
    %v5729 = vadd.f32 %v5687, %v5703
    %v5730 = vadd.f32 %v5690, %v5703
    %v5731 = vadd.f32 %v5693, %v5703
    %v5732 = vadd.f32 %v5696, %v5703
    %v5733 = vxor.u32 %v5705, 2147483648
    %v5734 = vxor.u32 %v5706, 2147483648
    %v5735 = vxor.u32 %v5707, 2147483648
    %v5736 = vxor.u32 %v5708, 2147483648
    %v5737 = vxor.u32 %v5709, 2147483648
    %v5738 = vxor.u32 %v5710, 2147483648
    %v5739 = vxor.u32 %v5711, 2147483648
    %v5740 = vxor.u32 %v5712, 2147483648
    %v5741 = vxor.u32 %v5713, 2147483648
    %v5742 = vxor.u32 %v5714, 2147483648
    %v5743 = vxor.u32 %v5715, 2147483648
    %v5744 = vxor.u32 %v5716, 2147483648
    %v5745 = vxor.u32 %v5717, 2147483648
    %v5746 = vxor.u32 %v5718, 2147483648
    %v5747 = vxor.u32 %v5719, 2147483648
    %v5748 = vxor.u32 %v5720, 2147483648
    %v5749 = vxor.u32 %v5721, 2147483648
    %v5750 = vxor.u32 %v5722, 2147483648
    %v5751 = vxor.u32 %v5723, 2147483648
    %v5752 = vxor.u32 %v5724, 2147483648
    %v5753 = vxor.u32 %v5725, 2147483648
    %v5754 = vxor.u32 %v5726, 2147483648
    %v5755 = vxor.u32 %v5727, 2147483648
    %v5756 = vxor.u32 %v5728, 2147483648
    %v5757 = vxor.u32 %v5729, 2147483648
    %v5758 = vxor.u32 %v5730, 2147483648
    %v5759 = vxor.u32 %v5731, 2147483648
    %v5760 = vxor.u32 %v5732, 2147483648
    %v5761 = vmul.f32 %v5733, 1.442695
    %v5762 = vpow.pop %v5761
    %v5763 = vmul.f32 %v5734, 1.442695
    %v5764 = vpow.pop %v5763
    %v5765 = vmul.f32 %v5735, 1.442695
    %v5766 = vpow.pop %v5765
    %v5767 = vmul.f32 %v5736, 1.442695
    %v5768 = vpow.pop %v5767
    %v5769 = vmul.f32 %v5737, 1.442695
    %v5770 = vpow.pop %v5769
    %v5771 = vmul.f32 %v5738, 1.442695
    %v5772 = vpow.pop %v5771
    %v5773 = vmul.f32 %v5739, 1.442695
    %v5774 = vpow.pop %v5773
    %v5775 = vmul.f32 %v5740, 1.442695
    %v5776 = vpow.pop %v5775
    %v5777 = vmul.f32 %v5741, 1.442695
    %v5778 = vpow.pop %v5777
    %v5779 = vmul.f32 %v5742, 1.442695
    %v5780 = vpow.pop %v5779
    %v5781 = vmul.f32 %v5743, 1.442695
    %v5782 = vpow.pop %v5781
    %v5783 = vmul.f32 %v5744, 1.442695
    %v5784 = vpow.pop %v5783
    %v5785 = vmul.f32 %v5745, 1.442695
    %v5786 = vpow.pop %v5785
    %v5787 = vmul.f32 %v5746, 1.442695
    %v5788 = vpow.pop %v5787
    %v5789 = vmul.f32 %v5747, 1.442695
    %v5790 = vpow.pop %v5789
    %v5791 = vmul.f32 %v5748, 1.442695
    %v5792 = vpow.pop %v5791
    %v5793 = vmul.f32 %v5749, 1.442695
    %v5794 = vpow.pop %v5793
    %v5795 = vmul.f32 %v5750, 1.442695
    %v5796 = vpow.pop %v5795
    %v5797 = vmul.f32 %v5751, 1.442695
    %v5798 = vpow.pop %v5797
    %v5799 = vmul.f32 %v5752, 1.442695
    %v5800 = vpow.pop %v5799
    %v5801 = vmul.f32 %v5753, 1.442695
    %v5802 = vpow.pop %v5801
    %v5803 = vmul.f32 %v5754, 1.442695
    %v5804 = vpow.pop %v5803
    %v5805 = vmul.f32 %v5755, 1.442695
    %v5806 = vpow.pop %v5805
    %v5807 = vmul.f32 %v5756, 1.442695
    %v5808 = vpow.pop %v5807
    %v5809 = vmul.f32 %v5757, 1.442695
    %v5810 = vpow.pop %v5809
    %v5811 = vmul.f32 %v5758, 1.442695
    %v5812 = vpow.pop %v5811
    %v5813 = vmul.f32 %v5759, 1.442695
    %v5814 = vpow.pop %v5813
    %v5815 = vmul.f32 %v5760, 1.442695
    %v5816 = vpow.pop %v5815
    %v5817 = vadd.f32 %v5762, 1.0
    %v5818 = vadd.f32 %v5764, 1.0
    %v5819 = vadd.f32 %v5766, 1.0
    %v5820 = vadd.f32 %v5768, 1.0
    %v5821 = vadd.f32 %v5770, 1.0
    %v5822 = vadd.f32 %v5772, 1.0
    %v5823 = vadd.f32 %v5774, 1.0
    %v5824 = vadd.f32 %v5776, 1.0
    %v5825 = vadd.f32 %v5778, 1.0
    %v5826 = vadd.f32 %v5780, 1.0
    %v5827 = vadd.f32 %v5782, 1.0
    %v5828 = vadd.f32 %v5784, 1.0
    %v5829 = vadd.f32 %v5786, 1.0
    %v5830 = vadd.f32 %v5788, 1.0
    %v5831 = vadd.f32 %v5790, 1.0
    %v5832 = vadd.f32 %v5792, 1.0
    %v5833 = vadd.f32 %v5794, 1.0
    %v5834 = vadd.f32 %v5796, 1.0
    %v5835 = vadd.f32 %v5798, 1.0
    %v5836 = vadd.f32 %v5800, 1.0
    %v5837 = vadd.f32 %v5802, 1.0
    %v5838 = vadd.f32 %v5804, 1.0
    %v5839 = vadd.f32 %v5806, 1.0
    %v5840 = vadd.f32 %v5808, 1.0
    %v5841 = vadd.f32 %v5810, 1.0
    %v5842 = vadd.f32 %v5812, 1.0
    %v5843 = vadd.f32 %v5814, 1.0
    %v5844 = vadd.f32 %v5816, 1.0
    %v5845 = vrcp.pop %v5817
    %v5846 = vmul.f32 1.0, %v5845
    %v5847 = vrcp.pop %v5818
    %v5848 = vmul.f32 1.0, %v5847
    %v5849 = vrcp.pop %v5819
    %v5850 = vmul.f32 1.0, %v5849
    %v5851 = vrcp.pop %v5820
    %v5852 = vmul.f32 1.0, %v5851
    %v5853 = vrcp.pop %v5821
    %v5854 = vmul.f32 1.0, %v5853
    %v5855 = vrcp.pop %v5822
    %v5856 = vmul.f32 1.0, %v5855
    %v5857 = vrcp.pop %v5823
    %v5858 = vmul.f32 1.0, %v5857
    %v5859 = vrcp.pop %v5824
    %v5860 = vmul.f32 1.0, %v5859
    %v5861 = vrcp.pop %v5825
    %v5862 = vmul.f32 1.0, %v5861
    %v5863 = vrcp.pop %v5826
    %v5864 = vmul.f32 1.0, %v5863
    %v5865 = vrcp.pop %v5827
    %v5866 = vmul.f32 1.0, %v5865
    %v5867 = vrcp.pop %v5828
    %v5868 = vmul.f32 1.0, %v5867
    %v5869 = vrcp.pop %v5829
    %v5870 = vmul.f32 1.0, %v5869
    %v5871 = vrcp.pop %v5830
    %v5872 = vmul.f32 1.0, %v5871
    %v5873 = vrcp.pop %v5831
    %v5874 = vmul.f32 1.0, %v5873
    %v5875 = vrcp.pop %v5832
    %v5876 = vmul.f32 1.0, %v5875
    %v5877 = vrcp.pop %v5833
    %v5878 = vmul.f32 1.0, %v5877
    %v5879 = vrcp.pop %v5834
    %v5880 = vmul.f32 1.0, %v5879
    %v5881 = vrcp.pop %v5835
    %v5882 = vmul.f32 1.0, %v5881
    %v5883 = vrcp.pop %v5836
    %v5884 = vmul.f32 1.0, %v5883
    %v5885 = vrcp.pop %v5837
    %v5886 = vmul.f32 1.0, %v5885
    %v5887 = vrcp.pop %v5838
    %v5888 = vmul.f32 1.0, %v5887
    %v5889 = vrcp.pop %v5839
    %v5890 = vmul.f32 1.0, %v5889
    %v5891 = vrcp.pop %v5840
    %v5892 = vmul.f32 1.0, %v5891
    %v5893 = vrcp.pop %v5841
    %v5894 = vmul.f32 1.0, %v5893
    %v5895 = vrcp.pop %v5842
    %v5896 = vmul.f32 1.0, %v5895
    %v5897 = vrcp.pop %v5843
    %v5898 = vmul.f32 1.0, %v5897
    %v5899 = vrcp.pop %v5844
    %v5900 = vmul.f32 1.0, %v5899
    %5902 = vset.pattern.permute.xlu0 0
    %5903 = vperm.xlu0 %5902, %v5846
    %v5904 = vpop.permute.xlu0 %5903
    %5907 = vset.pattern.permute.xlu0 0
    %5908 = vperm.xlu0 %5907, %v5848
    %v5909 = vpop.permute.xlu0 %5908
    %5912 = vset.pattern.permute.xlu0 0
    %5913 = vperm.xlu0 %5912, %v5850
    %v5914 = vpop.permute.xlu0 %5913
    %5917 = vset.pattern.permute.xlu0 0
    %5918 = vperm.xlu0 %5917, %v5852
    %v5919 = vpop.permute.xlu0 %5918
    %5922 = vset.pattern.permute.xlu0 0
    %5923 = vperm.xlu0 %5922, %v5854
    %v5924 = vpop.permute.xlu0 %5923
    %5927 = vset.pattern.permute.xlu0 0
    %5928 = vperm.xlu0 %5927, %v5856
    %v5929 = vpop.permute.xlu0 %5928
    %5932 = vset.pattern.permute.xlu0 0
    %5933 = vperm.xlu0 %5932, %v5858
    %v5934 = vpop.permute.xlu0 %5933
    %5937 = vset.pattern.permute.xlu0 0
    %5938 = vperm.xlu0 %5937, %v5860
    %v5939 = vpop.permute.xlu0 %5938
    %5942 = vset.pattern.permute.xlu0 0
    %5943 = vperm.xlu0 %5942, %v5862
    %v5944 = vpop.permute.xlu0 %5943
    %5947 = vset.pattern.permute.xlu0 0
    %5948 = vperm.xlu0 %5947, %v5864
    %v5949 = vpop.permute.xlu0 %5948
    %5952 = vset.pattern.permute.xlu0 0
    %5953 = vperm.xlu0 %5952, %v5866
    %v5954 = vpop.permute.xlu0 %5953
    %5957 = vset.pattern.permute.xlu0 0
    %5958 = vperm.xlu0 %5957, %v5868
    %v5959 = vpop.permute.xlu0 %5958
    %5962 = vset.pattern.permute.xlu0 0
    %5963 = vperm.xlu0 %5962, %v5870
    %v5964 = vpop.permute.xlu0 %5963
    %5967 = vset.pattern.permute.xlu0 0
    %5968 = vperm.xlu0 %5967, %v5872
    %v5969 = vpop.permute.xlu0 %5968
    %5972 = vset.pattern.permute.xlu0 0
    %5973 = vperm.xlu0 %5972, %v5874
    %v5974 = vpop.permute.xlu0 %5973
    %5977 = vset.pattern.permute.xlu0 0
    %5978 = vperm.xlu0 %5977, %v5876
    %v5979 = vpop.permute.xlu0 %5978
    %5982 = vset.pattern.permute.xlu0 0
    %5983 = vperm.xlu0 %5982, %v5878
    %v5984 = vpop.permute.xlu0 %5983
    %5987 = vset.pattern.permute.xlu0 0
    %5988 = vperm.xlu0 %5987, %v5880
    %v5989 = vpop.permute.xlu0 %5988
    %5992 = vset.pattern.permute.xlu0 0
    %5993 = vperm.xlu0 %5992, %v5882
    %v5994 = vpop.permute.xlu0 %5993
    %5997 = vset.pattern.permute.xlu0 0
    %5998 = vperm.xlu0 %5997, %v5884
    %v5999 = vpop.permute.xlu0 %5998
    %6002 = vset.pattern.permute.xlu0 0
    %6003 = vperm.xlu0 %6002, %v5886
    %v6004 = vpop.permute.xlu0 %6003
    %6007 = vset.pattern.permute.xlu0 0
    %6008 = vperm.xlu0 %6007, %v5888
    %v6009 = vpop.permute.xlu0 %6008
    %6012 = vset.pattern.permute.xlu0 0
    %6013 = vperm.xlu0 %6012, %v5890
    %v6014 = vpop.permute.xlu0 %6013
    %6017 = vset.pattern.permute.xlu0 0
    %6018 = vperm.xlu0 %6017, %v5892
    %v6019 = vpop.permute.xlu0 %6018
    %6022 = vset.pattern.permute.xlu0 0
    %6023 = vperm.xlu0 %6022, %v5894
    %v6024 = vpop.permute.xlu0 %6023
    %6027 = vset.pattern.permute.xlu0 0
    %6028 = vperm.xlu0 %6027, %v5896
    %v6029 = vpop.permute.xlu0 %6028
    %6032 = vset.pattern.permute.xlu0 0
    %6033 = vperm.xlu0 %6032, %v5898
    %v6034 = vpop.permute.xlu0 %6033
    %6037 = vset.pattern.permute.xlu0 0
    %6038 = vperm.xlu0 %6037, %v5900
    %v6039 = vpop.permute.xlu0 %6038
    %v6041 = vmul.f32 %v5549, %v5904
    %v6042 = vmul.f32 %v5550, %v5909
    %v6043 = vmul.f32 %v5551, %v5914
    %v6044 = vmul.f32 %v5552, %v5919
    %v6045 = vmul.f32 %v5553, %v5924
    %v6046 = vmul.f32 %v5554, %v5929
    %v6047 = vmul.f32 %v5555, %v5934
    %v6048 = vmul.f32 %v5556, %v5939
    %v6049 = vmul.f32 %v5557, %v5944
    %v6050 = vmul.f32 %v5558, %v5949
    %v6051 = vmul.f32 %v5559, %v5954
    %v6052 = vmul.f32 %v5560, %v5959
    %v6053 = vmul.f32 %v5561, %v5964
    %v6054 = vmul.f32 %v5562, %v5969
    %v6055 = vmul.f32 %v5563, %v5974
    %v6056 = vmul.f32 %v5564, %v5979
    %v6057 = vmul.f32 %v5565, %v5984
    %v6058 = vmul.f32 %v5566, %v5989
    %v6059 = vmul.f32 %v5567, %v5994
    %v6060 = vmul.f32 %v5568, %v5999
    %v6061 = vmul.f32 %v5569, %v6004
    %v6062 = vmul.f32 %v5570, %v6009
    %v6063 = vmul.f32 %v5571, %v6014
    %v6064 = vmul.f32 %v5572, %v6019
    %v6065 = vmul.f32 %v5573, %v6024
    %v6066 = vmul.f32 %v5574, %v6029
    %v6067 = vmul.f32 %v5575, %v6034
    %v6068 = vmul.f32 %v5576, %v6039
    %v6069 = vmul.f32 %v6041, %v3391
    %v6070 = vmul.f32 %v6042, %v3396
    %v6071 = vmul.f32 %v6043, %v3401
    %v6072 = vmul.f32 %v6044, %v3406
    %v6073 = vmul.f32 %v6045, %v3411
    %v6074 = vmul.f32 %v6046, %v3416
    %v6075 = vmul.f32 %v6047, %v3421
    %v6076 = vmul.f32 %v6048, %v3426
    %v6077 = vmul.f32 %v6049, %v3431
    %v6078 = vmul.f32 %v6050, %v3436
    %v6079 = vmul.f32 %v6051, %v3441
    %v6080 = vmul.f32 %v6052, %v3446
    %v6081 = vmul.f32 %v6053, %v3451
    %v6082 = vmul.f32 %v6054, %v3456
    %v6083 = vmul.f32 %v6055, %v3461
    %v6084 = vmul.f32 %v6056, %v3466
    %v6085 = vmul.f32 %v6057, %v3471
    %v6086 = vmul.f32 %v6058, %v3476
    %v6087 = vmul.f32 %v6059, %v3481
    %v6088 = vmul.f32 %v6060, %v3486
    %v6089 = vmul.f32 %v6061, %v3491
    %v6090 = vmul.f32 %v6062, %v3496
    %v6091 = vmul.f32 %v6063, %v3501
    %v6092 = vmul.f32 %v6064, %v3506
    %v6093 = vmul.f32 %v6065, %v3511
    %v6094 = vmul.f32 %v6066, %v3516
    %v6095 = vmul.f32 %v6067, %v3521
    %v6096 = vmul.f32 %v6068, %v3526
    %6097 = vmatprep.subr.mxu0 0.0
    %6098 = vmatpush1.msra.mxu0 %v6069
    %6099 = vmatprep.subr.mxu0 0.0
    %6100 = vmatpush1.msra.mxu0 %v6070
    %6101 = vmatprep.subr.mxu0 0.0
    %6102 = vmatpush1.msra.mxu0 %v6071
    %6103 = vmatprep.subr.mxu0 0.0
    %6104 = vmatpush1.msra.mxu0 %v6072
    %6105 = vmatprep.subr.mxu0 0.0
    %6106 = vmatpush1.msra.mxu0 %v6073
    %6107 = vmatprep.subr.mxu0 0.0
    %6108 = vmatpush1.msra.mxu0 %v6074
    %6109 = vmatprep.subr.mxu0 0.0
    %6110 = vmatpush1.msra.mxu0 %v6075
    %6111 = vmatprep.subr.mxu0 0.0
    %6112 = vmatpush1.msra.mxu0 %v6076
    %6113 = vmatprep.subr.mxu0 0.0
    %6114 = vmatpush1.msra.mxu0 %v6077
    %6115 = vmatprep.subr.mxu0 0.0
    %6116 = vmatpush1.msra.mxu0 %v6078
    %6117 = vmatprep.subr.mxu0 0.0
    %6118 = vmatpush1.msra.mxu0 %v6079
    %6119 = vmatprep.subr.mxu0 0.0
    %6120 = vmatpush1.msra.mxu0 %v6080
    %6121 = vmatprep.subr.mxu0 0.0
    %6122 = vmatpush1.msra.mxu0 %v6081
    %6123 = vmatprep.subr.mxu0 0.0
    %6124 = vmatpush1.msra.mxu0 %v6082
    %6125 = vmatprep.subr.mxu0 0.0
    %6126 = vmatpush1.msra.mxu0 %v6083
    %6127 = vmatprep.subr.mxu0 0.0
    %6128 = vmatpush1.msra.mxu0 %v6084
    %6129 = vmatprep.subr.mxu0 0.0
    %6130 = vmatpush1.msra.mxu0 %v6085
    %6131 = vmatprep.subr.mxu0 0.0
    %6132 = vmatpush1.msra.mxu0 %v6086
    %6133 = vmatprep.subr.mxu0 0.0
    %6134 = vmatpush1.msra.mxu0 %v6087
    %6135 = vmatprep.subr.mxu0 0.0
    %6136 = vmatpush1.msra.mxu0 %v6088
    %6137 = vmatprep.subr.mxu0 0.0
    %6138 = vmatpush1.msra.mxu0 %v6089
    %6139 = vmatprep.subr.mxu0 0.0
    %6140 = vmatpush1.msra.mxu0 %v6090
    %6141 = vmatprep.subr.mxu0 0.0
    %6142 = vmatpush1.msra.mxu0 %v6091
    %6143 = vmatprep.subr.mxu0 0.0
    %6144 = vmatpush1.msra.mxu0 %v6092
    %6145 = vmatprep.subr.mxu0 0.0
    %6146 = vmatpush1.msra.mxu0 %v6093
    %6147 = vmatprep.subr.mxu0 0.0
    %6148 = vmatpush1.msra.mxu0 %v6094
    %6149 = vmatprep.subr.mxu0 0.0
    %6150 = vmatpush1.msra.mxu0 %v6095
    %6151 = vmatprep.subr.mxu0 0.0
    %6152 = vmatpush1.msra.mxu0 %v6096
    %6153 = vmatprep.subr.mxu0 0.0
    %6154 = vmatpush1.msra.mxu0 0.0
    %6155 = vmatprep.subr.mxu0 0.0
    %6156 = vmatpush1.msra.mxu0 0.0
    %6157 = vmatprep.subr.mxu0 0.0
    %6158 = vmatpush1.msra.mxu0 0.0
    %6159 = vmatprep.subr.mxu0 0.0
    %6160 = vmatpush1.msra.mxu0 0.0
    %6161 = vmatprep.mubr.f32.mxu0 %v3558
    %6162 = vmatmul.mubr.f32.gmra.mrb[0].mxu0 %v136
    %v6163 = vpop.f32.mrb[0].mxu0
    %v6164 = vadd.f32 0.0, %v6163
    %v6165 = vpop.f32.mrb[0].mxu0
    %6166 = vmatprep.mubr.f32.mxu0 %v3561
    %6167 = vmatmul.mubr.f32.gmra.mrb[0].mxu0 %v138
    %v6168 = vpop.f32.mrb[0].mxu0
    %v6169 = vadd.f32 0.0, %v6168
    %v6170 = vpop.f32.mrb[0].mxu0
    %6171 = vmatprep.mubr.f32.mxu0 %v3564
    %6172 = vmatmul.mubr.f32.gmra.mrb[0].mxu0 %v140
    %v6173 = vpop.f32.mrb[0].mxu0
    %v6174 = vadd.f32 0.0, %v6173
    %v6175 = vpop.f32.mrb[0].mxu0
    %6176 = vmatprep.mubr.f32.mxu0 %v3567
    %6177 = vmatmul.mubr.f32.gmra.mrb[0].mxu0 %v142
    %v6178 = vpop.f32.mrb[0].mxu0
    %v6179 = vadd.f32 0.0, %v6178
    %v6180 = vpop.f32.mrb[0].mxu0
    %6181 = vdwg.mxu0
    %v6182 = vmul.f32 %v6164, 0.01
    %v6183 = vmul.f32 %v6169, 0.01
    %v6184 = vmul.f32 %v6174, 0.01
    %v6185 = vmul.f32 %v6179, 0.01
    %6186 = vst.msk [vmem:[#allocation3] sm:$0xff] %vm212, %v3963
    %6187 = vst.msk [vmem:[#allocation3 + $0x8] sm:$0xff] %vm212, %v3964
    %6188 = vst.msk [vmem:[#allocation3 + $0x10] sm:$0xff] %vm212, %v3965
    %6189 = vst.msk [vmem:[#allocation3 + $0x18] sm:$0xff] %vm212, %v3966
    %6194 = vrot.lane.b32.xlu0 %v6182, 32
    %v6195 = vpop.permute.xlu0 %6194
    %6196 = vrot.lane.b32.xlu0 %v6183, 32
    %v6197 = vpop.permute.xlu0 %6196
    %6198 = vrot.lane.b32.xlu0 %v6184, 32
    %v6199 = vpop.permute.xlu0 %6198
    %6200 = vrot.lane.b32.xlu0 %v6185, 32
    %v6201 = vpop.permute.xlu0 %6200
    %6206 = vst.msk [vmem:[#allocation3] sm:$0xff] %vm1839, %v6195
    %6207 = vst.msk [vmem:[#allocation3 + $0x8] sm:$0xff] %vm1839, %v6197
    %6208 = vst.msk [vmem:[#allocation3 + $0x10] sm:$0xff] %vm1839, %v6199
    %6209 = vst.msk [vmem:[#allocation3 + $0x18] sm:$0xff] %vm1839, %v6201
    %v6210 = vld [vmem:[#allocation3] sm:$0xff]
    %v6211 = vld [vmem:[#allocation3 + $0x8] sm:$0xff]
    %v6212 = vld [vmem:[#allocation3 + $0x10] sm:$0xff]
    %v6213 = vld [vmem:[#allocation3 + $0x18] sm:$0xff]
    %s6214 = scalar_lea.vmem %s15, 64
    %v6215 = vld [vmem:[%s6214] sm:$0xff]
    %v6216 = vld [vmem:[%s6214 + $0x8] sm:$0xff]
    %v6217 = vld [vmem:[%s6214 + $0x10] sm:$0xff]
    %v6218 = vld [vmem:[%s6214 + $0x18] sm:$0xff]
    %v6219 = vld [vmem:[%s6214 + $0x20] sm:$0xff]
    %v6220 = vld [vmem:[%s6214 + $0x28] sm:$0xff]
    %v6221 = vld [vmem:[%s6214 + $0x30] sm:$0xff]
    %v6222 = vld [vmem:[%s6214 + $0x38] sm:$0xff]
    %s6223 = scalar_lea.vmem %s16, 1
    %v6224 = vld [vmem:[%s6223] sm:$0x1]
    %v6226 = vlaneseq
    %v6227 = vshrl.u32 %v6226, 7
    %v6228 = vsub.s32 0, %v6227
    %v6229 = vrot.slane %v6224, %v6228
    %v6232 = vsel %vm3701, %v6210, 0
    %v6235 = vsel %vm3701, %v6211, 0
    %v6238 = vsel %vm3701, %v6212, 0
    %v6241 = vsel %vm3701, %v6213, 0
    %6243 = vmatprep.subr.mxu0 0.0
    %6244 = vmatpush1.msra.mxu0 %v6215
    %6245 = vmatprep.subr.mxu0 0.0
    %6246 = vmatpush1.msra.mxu0 %v6216
    %6247 = vmatprep.subr.mxu0 0.0
    %6248 = vmatpush1.msra.mxu0 %v6217
    %6249 = vmatprep.subr.mxu0 0.0
    %6250 = vmatpush1.msra.mxu0 %v6218
    %6251 = vmatprep.subr.mxu0 0.0
    %6252 = vmatpush1.msra.mxu0 %v6219
    %6253 = vmatprep.subr.mxu0 0.0
    %6254 = vmatpush1.msra.mxu0 %v6220
    %6255 = vmatprep.subr.mxu0 0.0
    %6256 = vmatpush1.msra.mxu0 %v6221
    %6257 = vmatprep.subr.mxu0 0.0
    %6258 = vmatpush1.msra.mxu0 %v6222
    %6259 = vmatprep.subr.mxu0 0.0
    %6260 = vmatpush1.msra.mxu0 0.0
    %6261 = vmatprep.subr.mxu0 0.0
    %6262 = vmatpush1.msra.mxu0 0.0
    %6263 = vmatprep.subr.mxu0 0.0
    %6264 = vmatpush1.msra.mxu0 0.0
    %6265 = vmatprep.subr.mxu0 0.0
    %6266 = vmatpush1.msra.mxu0 0.0
    %6267 = vmatprep.subr.mxu0 0.0
    %6268 = vmatpush1.msra.mxu0 0.0
    %6269 = vmatprep.subr.mxu0 0.0
    %6270 = vmatpush1.msra.mxu0 0.0
    %6271 = vmatprep.subr.mxu0 0.0
    %6272 = vmatpush1.msra.mxu0 0.0
    %6273 = vmatprep.subr.mxu0 0.0
    %6274 = vmatpush1.msra.mxu0 0.0
    %6275 = vmatprep.subr.mxu0 0.0
    %6276 = vmatpush1.msra.mxu0 0.0
    %6277 = vmatprep.subr.mxu0 0.0
    %6278 = vmatpush1.msra.mxu0 0.0
    %6279 = vmatprep.subr.mxu0 0.0
    %6280 = vmatpush1.msra.mxu0 0.0
    %6281 = vmatprep.subr.mxu0 0.0
    %6282 = vmatpush1.msra.mxu0 0.0
    %6283 = vmatprep.subr.mxu0 0.0
    %6284 = vmatpush1.msra.mxu0 0.0
    %6285 = vmatprep.subr.mxu0 0.0
    %6286 = vmatpush1.msra.mxu0 0.0
    %6287 = vmatprep.subr.mxu0 0.0
    %6288 = vmatpush1.msra.mxu0 0.0
    %6289 = vmatprep.subr.mxu0 0.0
    %6290 = vmatpush1.msra.mxu0 0.0
    %6291 = vmatprep.subr.mxu0 0.0
    %6292 = vmatpush1.msra.mxu0 0.0
    %6293 = vmatprep.subr.mxu0 0.0
    %6294 = vmatpush1.msra.mxu0 0.0
    %6295 = vmatprep.subr.mxu0 0.0
    %6296 = vmatpush1.msra.mxu0 0.0
    %6297 = vmatprep.subr.mxu0 0.0
    %6298 = vmatpush1.msra.mxu0 0.0
    %6299 = vmatprep.subr.mxu0 0.0
    %6300 = vmatpush1.msra.mxu0 0.0
    %6301 = vmatprep.subr.mxu0 0.0
    %6302 = vmatpush1.msra.mxu0 0.0
    %6303 = vmatprep.subr.mxu0 0.0
    %6304 = vmatpush1.msra.mxu0 0.0
    %6305 = vmatprep.subr.mxu0 0.0
    %6306 = vmatpush1.msra.mxu0 0.0
    %6307 = vmatprep.mubr.f32.mxu0 0.0
    %6308 = vmatmul.mubr.f32.gmra.mrb[0].mxu0 %v6232
    %v6309 = vpop.f32.mrb[0].mxu0
    %v6310 = vadd.f32 %v6229, %v6309
    %v6311 = vpop.f32.mrb[0].mxu0
    %6312 = vmatprep.mubr.f32.mxu0 0.0
    %6313 = vmatmul.mubr.f32.gmra.mrb[0].mxu0 %v6235
    %v6314 = vpop.f32.mrb[0].mxu0
    %v6315 = vadd.f32 %v6229, %v6314
    %v6316 = vpop.f32.mrb[0].mxu0
    %6317 = vmatprep.mubr.f32.mxu0 0.0
    %6318 = vmatmul.mubr.f32.gmra.mrb[0].mxu0 %v6238
    %v6319 = vpop.f32.mrb[0].mxu0
    %v6320 = vadd.f32 %v6229, %v6319
    %v6321 = vpop.f32.mrb[0].mxu0
    %6322 = vmatprep.mubr.f32.mxu0 0.0
    %6323 = vmatmul.mubr.f32.gmra.mrb[0].mxu0 %v6241
    %v6324 = vpop.f32.mrb[0].mxu0
    %v6325 = vadd.f32 %v6229, %v6324
    %v6326 = vpop.f32.mrb[0].mxu0
    %6327 = vdwg.mxu0
    %v6328 = vxor.u32 %v6310, 2147483648
    %v6329 = vxor.u32 %v6315, 2147483648
    %v6330 = vxor.u32 %v6320, 2147483648
    %v6331 = vxor.u32 %v6325, 2147483648
    %v6332 = vmul.f32 %v6328, 1.442695
    %v6333 = vpow.pop %v6332
    %v6334 = vmul.f32 %v6329, 1.442695
    %v6335 = vpow.pop %v6334
    %v6336 = vmul.f32 %v6330, 1.442695
    %v6337 = vpow.pop %v6336
    %v6338 = vmul.f32 %v6331, 1.442695
    %v6339 = vpow.pop %v6338
    %v6340 = vadd.f32 %v6333, 1.0
    %v6341 = vadd.f32 %v6335, 1.0
    %v6342 = vadd.f32 %v6337, 1.0
    %v6343 = vadd.f32 %v6339, 1.0
    %v6344 = vrcp.pop %v6340
    %v6345 = vmul.f32 1.0, %v6344
    %v6346 = vrcp.pop %v6341
    %v6347 = vmul.f32 1.0, %v6346
    %v6348 = vrcp.pop %v6342
    %v6349 = vmul.f32 1.0, %v6348
    %v6350 = vrcp.pop %v6343
    %v6351 = vmul.f32 1.0, %v6350
    %v6352 = vmul.f32 %v6310, %v6345
    %v6353 = vmul.f32 %v6315, %v6347
    %v6354 = vmul.f32 %v6320, %v6349
    %v6355 = vmul.f32 %v6325, %v6351
    %s6356 = scalar_lea.vmem %s17, 32
    %v6357 = vld [vmem:[%s6356] sm:$0xff]
    %v6358 = vld [vmem:[%s6356 + $0x8] sm:$0xff]
    %v6359 = vld [vmem:[%s6356 + $0x10] sm:$0xff]
    %v6360 = vld [vmem:[%s6356 + $0x18] sm:$0xff]
    %v6362 = vsel %vm212, %v6352, 0
    %v6365 = vsel %vm212, %v6353, 0
    %v6368 = vsel %vm212, %v6354, 0
    %v6371 = vsel %vm212, %v6355, 0
    %6373 = vmatprep.subr.mxu0 0.0
    %6374 = vmatpush1.msra.mxu0 %v6357
    %6375 = vmatprep.subr.mxu0 0.0
    %6376 = vmatpush1.msra.mxu0 %v6358
    %6377 = vmatprep.subr.mxu0 0.0
    %6378 = vmatpush1.msra.mxu0 %v6359
    %6379 = vmatprep.subr.mxu0 0.0
    %6380 = vmatpush1.msra.mxu0 %v6360
    %6381 = vmatprep.subr.mxu0 0.0
    %6382 = vmatpush1.msra.mxu0 0.0
    %6383 = vmatprep.subr.mxu0 0.0
    %6384 = vmatpush1.msra.mxu0 0.0
    %6385 = vmatprep.subr.mxu0 0.0
    %6386 = vmatpush1.msra.mxu0 0.0
    %6387 = vmatprep.subr.mxu0 0.0
    %6388 = vmatpush1.msra.mxu0 0.0
    %6389 = vmatprep.subr.mxu0 0.0
    %6390 = vmatpush1.msra.mxu0 0.0
    %6391 = vmatprep.subr.mxu0 0.0
    %6392 = vmatpush1.msra.mxu0 0.0
    %6393 = vmatprep.subr.mxu0 0.0
    %6394 = vmatpush1.msra.mxu0 0.0
    %6395 = vmatprep.subr.mxu0 0.0
    %6396 = vmatpush1.msra.mxu0 0.0
    %6397 = vmatprep.subr.mxu0 0.0
    %6398 = vmatpush1.msra.mxu0 0.0
    %6399 = vmatprep.subr.mxu0 0.0
    %6400 = vmatpush1.msra.mxu0 0.0
    %6401 = vmatprep.subr.mxu0 0.0
    %6402 = vmatpush1.msra.mxu0 0.0
    %6403 = vmatprep.subr.mxu0 0.0
    %6404 = vmatpush1.msra.mxu0 0.0
    %6405 = vmatprep.subr.mxu0 0.0
    %6406 = vmatpush1.msra.mxu0 0.0
    %6407 = vmatprep.subr.mxu0 0.0
    %6408 = vmatpush1.msra.mxu0 0.0
    %6409 = vmatprep.subr.mxu0 0.0
    %6410 = vmatpush1.msra.mxu0 0.0
    %6411 = vmatprep.subr.mxu0 0.0
    %6412 = vmatpush1.msra.mxu0 0.0
    %6413 = vmatprep.subr.mxu0 0.0
    %6414 = vmatpush1.msra.mxu0 0.0
    %6415 = vmatprep.subr.mxu0 0.0
    %6416 = vmatpush1.msra.mxu0 0.0
    %6417 = vmatprep.subr.mxu0 0.0
    %6418 = vmatpush1.msra.mxu0 0.0
    %6419 = vmatprep.subr.mxu0 0.0
    %6420 = vmatpush1.msra.mxu0 0.0
    %6421 = vmatprep.subr.mxu0 0.0
    %6422 = vmatpush1.msra.mxu0 0.0
    %6423 = vmatprep.subr.mxu0 0.0
    %6424 = vmatpush1.msra.mxu0 0.0
    %6425 = vmatprep.subr.mxu0 0.0
    %6426 = vmatpush1.msra.mxu0 0.0
    %6427 = vmatprep.subr.mxu0 0.0
    %6428 = vmatpush1.msra.mxu0 0.0
    %6429 = vmatprep.subr.mxu0 0.0
    %6430 = vmatpush1.msra.mxu0 0.0
    %6431 = vmatprep.subr.mxu0 0.0
    %6432 = vmatpush1.msra.mxu0 0.0
    %6433 = vmatprep.subr.mxu0 0.0
    %6434 = vmatpush1.msra.mxu0 0.0
    %6435 = vmatprep.subr.mxu0 0.0
    %6436 = vmatpush1.msra.mxu0 0.0
    %6437 = vmatprep.mubr.f32.mxu0 0.0
    %6438 = vmatmul.mubr.f32.gmra.mrb[0].mxu0 %v6362
    %v6439 = vpop.f32.mrb[0].mxu0
    %v6440 = vadd.f32 0.0, %v6439
    %v6441 = vpop.f32.mrb[0].mxu0
    %6442 = vmatprep.mubr.f32.mxu0 0.0
    %6443 = vmatmul.mubr.f32.gmra.mrb[0].mxu0 %v6365
    %v6444 = vpop.f32.mrb[0].mxu0
    %v6445 = vadd.f32 0.0, %v6444
    %v6446 = vpop.f32.mrb[0].mxu0
    %6447 = vmatprep.mubr.f32.mxu0 0.0
    %6448 = vmatmul.mubr.f32.gmra.mrb[0].mxu0 %v6368
    %v6449 = vpop.f32.mrb[0].mxu0
    %v6450 = vadd.f32 0.0, %v6449
    %v6451 = vpop.f32.mrb[0].mxu0
    %6452 = vmatprep.mubr.f32.mxu0 0.0
    %6453 = vmatmul.mubr.f32.gmra.mrb[0].mxu0 %v6371
    %v6454 = vpop.f32.mrb[0].mxu0
    %v6455 = vadd.f32 0.0, %v6454
    %v6456 = vpop.f32.mrb[0].mxu0
    %6457 = vdwg.mxu0
    %v6458 = vadd.f32 %v3963, %v6440
    %v6459 = vadd.f32 %v3964, %v6445
    %v6460 = vadd.f32 %v3965, %v6450
    %v6461 = vadd.f32 %v3966, %v6455
    %s6462 = scalar_lea.vmem %s18, 1
    %v6463 = vld [vmem:[%s6462] sm:$0x1]
    %v6465 = vlaneseq
    %v6466 = vshrl.u32 %v6465, 7
    %v6467 = vsub.s32 0, %v6466
    %v6468 = vrot.slane %v6463, %v6467
    %v6470 = vadd.f32 %v6458, %v6468
    %v6471 = vadd.f32 %v6459, %v6468
    %v6472 = vadd.f32 %v6460, %v6468
    %v6473 = vadd.f32 %v6461, %v6468
    %v6474 = vmul.f32 %v6470, %v3946
    %v6475 = vmul.f32 %v6471, %v3951
    %v6476 = vmul.f32 %v6472, %v3956
    %v6477 = vmul.f32 %v6473, %v3961
    %6478 = vmatprep.subr.mxu0 0.0
    %6479 = vmatpush1.msra.mxu0 %v6474
    %6480 = vmatprep.subr.mxu0 0.0
    %6481 = vmatpush1.msra.mxu0 %v6475
    %6482 = vmatprep.subr.mxu0 0.0
    %6483 = vmatpush1.msra.mxu0 %v6476
    %6484 = vmatprep.subr.mxu0 0.0
    %6485 = vmatpush1.msra.mxu0 %v6477
    %6486 = vmatprep.subr.mxu0 0.0
    %6487 = vmatpush1.msra.mxu0 0.0
    %6488 = vmatprep.subr.mxu0 0.0
    %6489 = vmatpush1.msra.mxu0 0.0
    %6490 = vmatprep.subr.mxu0 0.0
    %6491 = vmatpush1.msra.mxu0 0.0
    %6492 = vmatprep.subr.mxu0 0.0
    %6493 = vmatpush1.msra.mxu0 0.0
    %6494 = vmatprep.subr.mxu0 0.0
    %6495 = vmatpush1.msra.mxu0 0.0
    %6496 = vmatprep.subr.mxu0 0.0
    %6497 = vmatpush1.msra.mxu0 0.0
    %6498 = vmatprep.subr.mxu0 0.0
    %6499 = vmatpush1.msra.mxu0 0.0
    %6500 = vmatprep.subr.mxu0 0.0
    %6501 = vmatpush1.msra.mxu0 0.0
    %6502 = vmatprep.subr.mxu0 0.0
    %6503 = vmatpush1.msra.mxu0 0.0
    %6504 = vmatprep.subr.mxu0 0.0
    %6505 = vmatpush1.msra.mxu0 0.0
    %6506 = vmatprep.subr.mxu0 0.0
    %6507 = vmatpush1.msra.mxu0 0.0
    %6508 = vmatprep.subr.mxu0 0.0
    %6509 = vmatpush1.msra.mxu0 0.0
    %6510 = vmatprep.subr.mxu0 0.0
    %6511 = vmatpush1.msra.mxu0 0.0
    %6512 = vmatprep.subr.mxu0 0.0
    %6513 = vmatpush1.msra.mxu0 0.0
    %6514 = vmatprep.subr.mxu0 0.0
    %6515 = vmatpush1.msra.mxu0 0.0
    %6516 = vmatprep.subr.mxu0 0.0
    %6517 = vmatpush1.msra.mxu0 0.0
    %6518 = vmatprep.subr.mxu0 0.0
    %6519 = vmatpush1.msra.mxu0 0.0
    %6520 = vmatprep.subr.mxu0 0.0
    %6521 = vmatpush1.msra.mxu0 0.0
    %6522 = vmatprep.subr.mxu0 0.0
    %6523 = vmatpush1.msra.mxu0 0.0
    %6524 = vmatprep.subr.mxu0 0.0
    %6525 = vmatpush1.msra.mxu0 0.0
    %6526 = vmatprep.subr.mxu0 0.0
    %6527 = vmatpush1.msra.mxu0 0.0
    %6528 = vmatprep.subr.mxu0 0.0
    %6529 = vmatpush1.msra.mxu0 0.0
    %6530 = vmatprep.subr.mxu0 0.0
    %6531 = vmatpush1.msra.mxu0 0.0
    %6532 = vmatprep.subr.mxu0 0.0
    %6533 = vmatpush1.msra.mxu0 0.0
    %6534 = vmatprep.subr.mxu0 0.0
    %6535 = vmatpush1.msra.mxu0 0.0
    %6536 = vmatprep.subr.mxu0 0.0
    %6537 = vmatpush1.msra.mxu0 0.0
    %6538 = vmatprep.subr.mxu0 0.0
    %6539 = vmatpush1.msra.mxu0 0.0
    %6540 = vmatprep.subr.mxu0 0.0
    %6541 = vmatpush1.msra.mxu0 0.0
    %6542 = vmatprep.mubr.f32.mxu0 0.0
    %6543 = vmatmul.mubr.f32.gmra.mrb[0].mxu0 %v1122
    %v6544 = vpop.f32.mrb[0].mxu0
    %v6545 = vadd.f32 0.0, %v6544
    %v6546 = vpop.f32.mrb[0].mxu0
    %6547 = vmatprep.mubr.f32.mxu0 0.0
    %6548 = vmatmul.mubr.f32.gmra.mrb[0].mxu0 %v1125
    %v6549 = vpop.f32.mrb[0].mxu0
    %v6550 = vadd.f32 0.0, %v6549
    %v6551 = vpop.f32.mrb[0].mxu0
    %6552 = vmatprep.mubr.f32.mxu0 0.0
    %6553 = vmatmul.mubr.f32.gmra.mrb[0].mxu0 %v1128
    %v6554 = vpop.f32.mrb[0].mxu0
    %v6555 = vadd.f32 0.0, %v6554
    %v6556 = vpop.f32.mrb[0].mxu0
    %6557 = vmatprep.mubr.f32.mxu0 0.0
    %6558 = vmatmul.mubr.f32.gmra.mrb[0].mxu0 %v1131
    %v6559 = vpop.f32.mrb[0].mxu0
    %v6560 = vadd.f32 0.0, %v6559
    %v6561 = vpop.f32.mrb[0].mxu0
    %6562 = vmatprep.mubr.f32.mxu0 0.0
    %6563 = vmatmul.mubr.f32.gmra.mrb[0].mxu0 %v1134
    %v6564 = vpop.f32.mrb[0].mxu0
    %v6565 = vadd.f32 0.0, %v6564
    %v6566 = vpop.f32.mrb[0].mxu0
    %6567 = vmatprep.mubr.f32.mxu0 0.0
    %6568 = vmatmul.mubr.f32.gmra.mrb[0].mxu0 %v1137
    %v6569 = vpop.f32.mrb[0].mxu0
    %v6570 = vadd.f32 0.0, %v6569
    %v6571 = vpop.f32.mrb[0].mxu0
    %6572 = vmatprep.mubr.f32.mxu0 0.0
    %6573 = vmatmul.mubr.f32.gmra.mrb[0].mxu0 %v1140
    %v6574 = vpop.f32.mrb[0].mxu0
    %v6575 = vadd.f32 0.0, %v6574
    %v6576 = vpop.f32.mrb[0].mxu0
    %6577 = vmatprep.mubr.f32.mxu0 0.0
    %6578 = vmatmul.mubr.f32.gmra.mrb[0].mxu0 %v1143
    %v6579 = vpop.f32.mrb[0].mxu0
    %v6580 = vadd.f32 0.0, %v6579
    %v6581 = vpop.f32.mrb[0].mxu0
    %6582 = vmatprep.mubr.f32.mxu0 0.0
    %6583 = vmatmul.mubr.f32.gmra.mrb[0].mxu0 %v1146
    %v6584 = vpop.f32.mrb[0].mxu0
    %v6585 = vadd.f32 0.0, %v6584
    %v6586 = vpop.f32.mrb[0].mxu0
    %6587 = vmatprep.mubr.f32.mxu0 0.0
    %6588 = vmatmul.mubr.f32.gmra.mrb[0].mxu0 %v1149
    %v6589 = vpop.f32.mrb[0].mxu0
    %v6590 = vadd.f32 0.0, %v6589
    %v6591 = vpop.f32.mrb[0].mxu0
    %6592 = vmatprep.mubr.f32.mxu0 0.0
    %6593 = vmatmul.mubr.f32.gmra.mrb[0].mxu0 %v1152
    %v6594 = vpop.f32.mrb[0].mxu0
    %v6595 = vadd.f32 0.0, %v6594
    %v6596 = vpop.f32.mrb[0].mxu0
    %6597 = vmatprep.mubr.f32.mxu0 0.0
    %6598 = vmatmul.mubr.f32.gmra.mrb[0].mxu0 %v1155
    %v6599 = vpop.f32.mrb[0].mxu0
    %v6600 = vadd.f32 0.0, %v6599
    %v6601 = vpop.f32.mrb[0].mxu0
    %6602 = vmatprep.mubr.f32.mxu0 0.0
    %6603 = vmatmul.mubr.f32.gmra.mrb[0].mxu0 %v1158
    %v6604 = vpop.f32.mrb[0].mxu0
    %v6605 = vadd.f32 0.0, %v6604
    %v6606 = vpop.f32.mrb[0].mxu0
    %6607 = vmatprep.mubr.f32.mxu0 0.0
    %6608 = vmatmul.mubr.f32.gmra.mrb[0].mxu0 %v1161
    %v6609 = vpop.f32.mrb[0].mxu0
    %v6610 = vadd.f32 0.0, %v6609
    %v6611 = vpop.f32.mrb[0].mxu0
    %6612 = vmatprep.mubr.f32.mxu0 0.0
    %6613 = vmatmul.mubr.f32.gmra.mrb[0].mxu0 %v1164
    %v6614 = vpop.f32.mrb[0].mxu0
    %v6615 = vadd.f32 0.0, %v6614
    %v6616 = vpop.f32.mrb[0].mxu0
    %6617 = vmatprep.mubr.f32.mxu0 0.0
    %6618 = vmatmul.mubr.f32.gmra.mrb[0].mxu0 %v1167
    %v6619 = vpop.f32.mrb[0].mxu0
    %v6620 = vadd.f32 0.0, %v6619
    %v6621 = vpop.f32.mrb[0].mxu0
    %6622 = vmatprep.mubr.f32.mxu0 0.0
    %6623 = vmatmul.mubr.f32.gmra.mrb[0].mxu0 %v1170
    %v6624 = vpop.f32.mrb[0].mxu0
    %v6625 = vadd.f32 0.0, %v6624
    %v6626 = vpop.f32.mrb[0].mxu0
    %6627 = vmatprep.mubr.f32.mxu0 0.0
    %6628 = vmatmul.mubr.f32.gmra.mrb[0].mxu0 %v1173
    %v6629 = vpop.f32.mrb[0].mxu0
    %v6630 = vadd.f32 0.0, %v6629
    %v6631 = vpop.f32.mrb[0].mxu0
    %6632 = vmatprep.mubr.f32.mxu0 0.0
    %6633 = vmatmul.mubr.f32.gmra.mrb[0].mxu0 %v1176
    %v6634 = vpop.f32.mrb[0].mxu0
    %v6635 = vadd.f32 0.0, %v6634
    %v6636 = vpop.f32.mrb[0].mxu0
    %6637 = vmatprep.mubr.f32.mxu0 0.0
    %6638 = vmatmul.mubr.f32.gmra.mrb[0].mxu0 %v1179
    %v6639 = vpop.f32.mrb[0].mxu0
    %v6640 = vadd.f32 0.0, %v6639
    %v6641 = vpop.f32.mrb[0].mxu0
    %6642 = vmatprep.mubr.f32.mxu0 0.0
    %6643 = vmatmul.mubr.f32.gmra.mrb[0].mxu0 %v1182
    %v6644 = vpop.f32.mrb[0].mxu0
    %v6645 = vadd.f32 0.0, %v6644
    %v6646 = vpop.f32.mrb[0].mxu0
    %6647 = vmatprep.mubr.f32.mxu0 0.0
    %6648 = vmatmul.mubr.f32.gmra.mrb[0].mxu0 %v1185
    %v6649 = vpop.f32.mrb[0].mxu0
    %v6650 = vadd.f32 0.0, %v6649
    %v6651 = vpop.f32.mrb[0].mxu0
    %6652 = vmatprep.mubr.f32.mxu0 0.0
    %6653 = vmatmul.mubr.f32.gmra.mrb[0].mxu0 %v1188
    %v6654 = vpop.f32.mrb[0].mxu0
    %v6655 = vadd.f32 0.0, %v6654
    %v6656 = vpop.f32.mrb[0].mxu0
    %6657 = vmatprep.mubr.f32.mxu0 0.0
    %6658 = vmatmul.mubr.f32.gmra.mrb[0].mxu0 %v1191
    %v6659 = vpop.f32.mrb[0].mxu0
    %v6660 = vadd.f32 0.0, %v6659
    %v6661 = vpop.f32.mrb[0].mxu0
    %6662 = vmatprep.mubr.f32.mxu0 0.0
    %6663 = vmatmul.mubr.f32.gmra.mrb[0].mxu0 %v1194
    %v6664 = vpop.f32.mrb[0].mxu0
    %v6665 = vadd.f32 0.0, %v6664
    %v6666 = vpop.f32.mrb[0].mxu0
    %6667 = vmatprep.mubr.f32.mxu0 0.0
    %6668 = vmatmul.mubr.f32.gmra.mrb[0].mxu0 %v1197
    %v6669 = vpop.f32.mrb[0].mxu0
    %v6670 = vadd.f32 0.0, %v6669
    %v6671 = vpop.f32.mrb[0].mxu0
    %6672 = vmatprep.mubr.f32.mxu0 0.0
    %6673 = vmatmul.mubr.f32.gmra.mrb[0].mxu0 %v1200
    %v6674 = vpop.f32.mrb[0].mxu0
    %v6675 = vadd.f32 0.0, %v6674
    %v6676 = vpop.f32.mrb[0].mxu0
    %6677 = vmatprep.mubr.f32.mxu0 0.0
    %6678 = vmatmul.mubr.f32.gmra.mrb[0].mxu0 %v1203
    %v6679 = vpop.f32.mrb[0].mxu0
    %v6680 = vadd.f32 0.0, %v6679
    %v6681 = vpop.f32.mrb[0].mxu0
    %6682 = vdwg.mxu0
    %6683 = vst.msk [vmem:[#allocation2] sm:$0xff] %vm212, %v6545
    %6684 = vst.msk [vmem:[#allocation2 + $0x8] sm:$0xff] %vm212, %v6550
    %6685 = vst.msk [vmem:[#allocation2 + $0x10] sm:$0xff] %vm212, %v6555
    %6686 = vst.msk [vmem:[#allocation2 + $0x18] sm:$0xff] %vm212, %v6560
    %6687 = vst.msk [vmem:[#allocation2 + $0x20] sm:$0xff] %vm212, %v6565
    %6688 = vst.msk [vmem:[#allocation2 + $0x28] sm:$0xff] %vm212, %v6570
    %6689 = vst.msk [vmem:[#allocation2 + $0x30] sm:$0xff] %vm212, %v6575
    %6690 = vst.msk [vmem:[#allocation2 + $0x38] sm:$0xff] %vm212, %v6580
    %6691 = vst.msk [vmem:[#allocation2 + $0x40] sm:$0xff] %vm212, %v6585
    %6692 = vst.msk [vmem:[#allocation2 + $0x48] sm:$0xff] %vm212, %v6590
    %6693 = vst.msk [vmem:[#allocation2 + $0x50] sm:$0xff] %vm212, %v6595
    %6694 = vst.msk [vmem:[#allocation2 + $0x58] sm:$0xff] %vm212, %v6600
    %6695 = vst.msk [vmem:[#allocation2 + $0x60] sm:$0xff] %vm212, %v6605
    %6696 = vst.msk [vmem:[#allocation2 + $0x68] sm:$0xff] %vm212, %v6610
    %6697 = vst.msk [vmem:[#allocation2 + $0x70] sm:$0xff] %vm212, %v6615
    %6698 = vst.msk [vmem:[#allocation2 + $0x78] sm:$0xff] %vm212, %v6620
    %6699 = vst.msk [vmem:[#allocation2 + $0x80] sm:$0xff] %vm212, %v6625
    %6700 = vst.msk [vmem:[#allocation2 + $0x88] sm:$0xff] %vm212, %v6630
    %6701 = vst.msk [vmem:[#allocation2 + $0x90] sm:$0xff] %vm212, %v6635
    %6702 = vst.msk [vmem:[#allocation2 + $0x98] sm:$0xff] %vm212, %v6640
    %6703 = vst.msk [vmem:[#allocation2 + $0xa0] sm:$0xff] %vm212, %v6645
    %6704 = vst.msk [vmem:[#allocation2 + $0xa8] sm:$0xff] %vm212, %v6650
    %6705 = vst.msk [vmem:[#allocation2 + $0xb0] sm:$0xff] %vm212, %v6655
    %6706 = vst.msk [vmem:[#allocation2 + $0xb8] sm:$0xff] %vm212, %v6660
    %6707 = vst.msk [vmem:[#allocation2 + $0xc0] sm:$0xff] %vm212, %v6665
    %6708 = vst.msk [vmem:[#allocation2 + $0xc8] sm:$0xff] %vm212, %v6670
    %6709 = vst.msk [vmem:[#allocation2 + $0xd0] sm:$0xff] %vm212, %v6675
    %6710 = vst.msk [vmem:[#allocation2 + $0xd8] sm:$0xff] %vm212, %v6680
    %6711 = vmatprep.subr.mxu0 0.0
    %6712 = vmatpush1.msra.mxu0 %v6474
    %6713 = vmatprep.subr.mxu0 0.0
    %6714 = vmatpush1.msra.mxu0 %v6475
    %6715 = vmatprep.subr.mxu0 0.0
    %6716 = vmatpush1.msra.mxu0 %v6476
    %6717 = vmatprep.subr.mxu0 0.0
    %6718 = vmatpush1.msra.mxu0 %v6477
    %6719 = vmatprep.subr.mxu0 0.0
    %6720 = vmatpush1.msra.mxu0 0.0
    %6721 = vmatprep.subr.mxu0 0.0
    %6722 = vmatpush1.msra.mxu0 0.0
    %6723 = vmatprep.subr.mxu0 0.0
    %6724 = vmatpush1.msra.mxu0 0.0
    %6725 = vmatprep.subr.mxu0 0.0
    %6726 = vmatpush1.msra.mxu0 0.0
    %6727 = vmatprep.subr.mxu0 0.0
    %6728 = vmatpush1.msra.mxu0 0.0
    %6729 = vmatprep.subr.mxu0 0.0
    %6730 = vmatpush1.msra.mxu0 0.0
    %6731 = vmatprep.subr.mxu0 0.0
    %6732 = vmatpush1.msra.mxu0 0.0
    %6733 = vmatprep.subr.mxu0 0.0
    %6734 = vmatpush1.msra.mxu0 0.0
    %6735 = vmatprep.subr.mxu0 0.0
    %6736 = vmatpush1.msra.mxu0 0.0
    %6737 = vmatprep.subr.mxu0 0.0
    %6738 = vmatpush1.msra.mxu0 0.0
    %6739 = vmatprep.subr.mxu0 0.0
    %6740 = vmatpush1.msra.mxu0 0.0
    %6741 = vmatprep.subr.mxu0 0.0
    %6742 = vmatpush1.msra.mxu0 0.0
    %6743 = vmatprep.subr.mxu0 0.0
    %6744 = vmatpush1.msra.mxu0 0.0
    %6745 = vmatprep.subr.mxu0 0.0
    %6746 = vmatpush1.msra.mxu0 0.0
    %6747 = vmatprep.subr.mxu0 0.0
    %6748 = vmatpush1.msra.mxu0 0.0
    %6749 = vmatprep.subr.mxu0 0.0
    %6750 = vmatpush1.msra.mxu0 0.0
    %6751 = vmatprep.subr.mxu0 0.0
    %6752 = vmatpush1.msra.mxu0 0.0
    %6753 = vmatprep.subr.mxu0 0.0
    %6754 = vmatpush1.msra.mxu0 0.0
    %6755 = vmatprep.subr.mxu0 0.0
    %6756 = vmatpush1.msra.mxu0 0.0
    %6757 = vmatprep.subr.mxu0 0.0
    %6758 = vmatpush1.msra.mxu0 0.0
    %6759 = vmatprep.subr.mxu0 0.0
    %6760 = vmatpush1.msra.mxu0 0.0
    %6761 = vmatprep.subr.mxu0 0.0
    %6762 = vmatpush1.msra.mxu0 0.0
    %6763 = vmatprep.subr.mxu0 0.0
    %6764 = vmatpush1.msra.mxu0 0.0
    %6765 = vmatprep.subr.mxu0 0.0
    %6766 = vmatpush1.msra.mxu0 0.0
    %6767 = vmatprep.subr.mxu0 0.0
    %6768 = vmatpush1.msra.mxu0 0.0
    %6769 = vmatprep.subr.mxu0 0.0
    %6770 = vmatpush1.msra.mxu0 0.0
    %6771 = vmatprep.subr.mxu0 0.0
    %6772 = vmatpush1.msra.mxu0 0.0
    %6773 = vmatprep.subr.mxu0 0.0
    %6774 = vmatpush1.msra.mxu0 0.0
    %6775 = vmatprep.mubr.f32.mxu0 0.0
    %6776 = vmatmul.mubr.f32.gmra.mrb[0].mxu0 %v1439
    %v6777 = vpop.f32.mrb[0].mxu0
    %v6778 = vadd.f32 0.0, %v6777
    %v6779 = vpop.f32.mrb[0].mxu0
    %6780 = vmatprep.mubr.f32.mxu0 0.0
    %6781 = vmatmul.mubr.f32.gmra.mrb[0].mxu0 %v1442
    %v6782 = vpop.f32.mrb[0].mxu0
    %v6783 = vadd.f32 0.0, %v6782
    %v6784 = vpop.f32.mrb[0].mxu0
    %6785 = vmatprep.mubr.f32.mxu0 0.0
    %6786 = vmatmul.mubr.f32.gmra.mrb[0].mxu0 %v1445
    %v6787 = vpop.f32.mrb[0].mxu0
    %v6788 = vadd.f32 0.0, %v6787
    %v6789 = vpop.f32.mrb[0].mxu0
    %6790 = vmatprep.mubr.f32.mxu0 0.0
    %6791 = vmatmul.mubr.f32.gmra.mrb[0].mxu0 %v1448
    %v6792 = vpop.f32.mrb[0].mxu0
    %v6793 = vadd.f32 0.0, %v6792
    %v6794 = vpop.f32.mrb[0].mxu0
    %6795 = vmatprep.mubr.f32.mxu0 0.0
    %6796 = vmatmul.mubr.f32.gmra.mrb[0].mxu0 %v1451
    %v6797 = vpop.f32.mrb[0].mxu0
    %v6798 = vadd.f32 0.0, %v6797
    %v6799 = vpop.f32.mrb[0].mxu0
    %6800 = vmatprep.mubr.f32.mxu0 0.0
    %6801 = vmatmul.mubr.f32.gmra.mrb[0].mxu0 %v1454
    %v6802 = vpop.f32.mrb[0].mxu0
    %v6803 = vadd.f32 0.0, %v6802
    %v6804 = vpop.f32.mrb[0].mxu0
    %6805 = vmatprep.mubr.f32.mxu0 0.0
    %6806 = vmatmul.mubr.f32.gmra.mrb[0].mxu0 %v1457
    %v6807 = vpop.f32.mrb[0].mxu0
    %v6808 = vadd.f32 0.0, %v6807
    %v6809 = vpop.f32.mrb[0].mxu0
    %6810 = vmatprep.mubr.f32.mxu0 0.0
    %6811 = vmatmul.mubr.f32.gmra.mrb[0].mxu0 %v1460
    %v6812 = vpop.f32.mrb[0].mxu0
    %v6813 = vadd.f32 0.0, %v6812
    %v6814 = vpop.f32.mrb[0].mxu0
    %6815 = vmatprep.mubr.f32.mxu0 0.0
    %6816 = vmatmul.mubr.f32.gmra.mrb[0].mxu0 %v1463
    %v6817 = vpop.f32.mrb[0].mxu0
    %v6818 = vadd.f32 0.0, %v6817
    %v6819 = vpop.f32.mrb[0].mxu0
    %6820 = vmatprep.mubr.f32.mxu0 0.0
    %6821 = vmatmul.mubr.f32.gmra.mrb[0].mxu0 %v1466
    %v6822 = vpop.f32.mrb[0].mxu0
    %v6823 = vadd.f32 0.0, %v6822
    %v6824 = vpop.f32.mrb[0].mxu0
    %6825 = vmatprep.mubr.f32.mxu0 0.0
    %6826 = vmatmul.mubr.f32.gmra.mrb[0].mxu0 %v1469
    %v6827 = vpop.f32.mrb[0].mxu0
    %v6828 = vadd.f32 0.0, %v6827
    %v6829 = vpop.f32.mrb[0].mxu0
    %6830 = vmatprep.mubr.f32.mxu0 0.0
    %6831 = vmatmul.mubr.f32.gmra.mrb[0].mxu0 %v1472
    %v6832 = vpop.f32.mrb[0].mxu0
    %v6833 = vadd.f32 0.0, %v6832
    %v6834 = vpop.f32.mrb[0].mxu0
    %6835 = vmatprep.mubr.f32.mxu0 0.0
    %6836 = vmatmul.mubr.f32.gmra.mrb[0].mxu0 %v1475
    %v6837 = vpop.f32.mrb[0].mxu0
    %v6838 = vadd.f32 0.0, %v6837
    %v6839 = vpop.f32.mrb[0].mxu0
    %6840 = vmatprep.mubr.f32.mxu0 0.0
    %6841 = vmatmul.mubr.f32.gmra.mrb[0].mxu0 %v1478
    %v6842 = vpop.f32.mrb[0].mxu0
    %v6843 = vadd.f32 0.0, %v6842
    %v6844 = vpop.f32.mrb[0].mxu0
    %6845 = vmatprep.mubr.f32.mxu0 0.0
    %6846 = vmatmul.mubr.f32.gmra.mrb[0].mxu0 %v1481
    %v6847 = vpop.f32.mrb[0].mxu0
    %v6848 = vadd.f32 0.0, %v6847
    %v6849 = vpop.f32.mrb[0].mxu0
    %6850 = vmatprep.mubr.f32.mxu0 0.0
    %6851 = vmatmul.mubr.f32.gmra.mrb[0].mxu0 %v1484
    %v6852 = vpop.f32.mrb[0].mxu0
    %v6853 = vadd.f32 0.0, %v6852
    %v6854 = vpop.f32.mrb[0].mxu0
    %6855 = vmatprep.mubr.f32.mxu0 0.0
    %6856 = vmatmul.mubr.f32.gmra.mrb[0].mxu0 %v1487
    %v6857 = vpop.f32.mrb[0].mxu0
    %v6858 = vadd.f32 0.0, %v6857
    %v6859 = vpop.f32.mrb[0].mxu0
    %6860 = vmatprep.mubr.f32.mxu0 0.0
    %6861 = vmatmul.mubr.f32.gmra.mrb[0].mxu0 %v1490
    %v6862 = vpop.f32.mrb[0].mxu0
    %v6863 = vadd.f32 0.0, %v6862
    %v6864 = vpop.f32.mrb[0].mxu0
    %6865 = vmatprep.mubr.f32.mxu0 0.0
    %6866 = vmatmul.mubr.f32.gmra.mrb[0].mxu0 %v1493
    %v6867 = vpop.f32.mrb[0].mxu0
    %v6868 = vadd.f32 0.0, %v6867
    %v6869 = vpop.f32.mrb[0].mxu0
    %6870 = vmatprep.mubr.f32.mxu0 0.0
    %6871 = vmatmul.mubr.f32.gmra.mrb[0].mxu0 %v1496
    %v6872 = vpop.f32.mrb[0].mxu0
    %v6873 = vadd.f32 0.0, %v6872
    %v6874 = vpop.f32.mrb[0].mxu0
    %6875 = vmatprep.mubr.f32.mxu0 0.0
    %6876 = vmatmul.mubr.f32.gmra.mrb[0].mxu0 %v1499
    %v6877 = vpop.f32.mrb[0].mxu0
    %v6878 = vadd.f32 0.0, %v6877
    %v6879 = vpop.f32.mrb[0].mxu0
    %6880 = vmatprep.mubr.f32.mxu0 0.0
    %6881 = vmatmul.mubr.f32.gmra.mrb[0].mxu0 %v1502
    %v6882 = vpop.f32.mrb[0].mxu0
    %v6883 = vadd.f32 0.0, %v6882
    %v6884 = vpop.f32.mrb[0].mxu0
    %6885 = vmatprep.mubr.f32.mxu0 0.0
    %6886 = vmatmul.mubr.f32.gmra.mrb[0].mxu0 %v1505
    %v6887 = vpop.f32.mrb[0].mxu0
    %v6888 = vadd.f32 0.0, %v6887
    %v6889 = vpop.f32.mrb[0].mxu0
    %6890 = vmatprep.mubr.f32.mxu0 0.0
    %6891 = vmatmul.mubr.f32.gmra.mrb[0].mxu0 %v1508
    %v6892 = vpop.f32.mrb[0].mxu0
    %v6893 = vadd.f32 0.0, %v6892
    %v6894 = vpop.f32.mrb[0].mxu0
    %6895 = vmatprep.mubr.f32.mxu0 0.0
    %6896 = vmatmul.mubr.f32.gmra.mrb[0].mxu0 %v1511
    %v6897 = vpop.f32.mrb[0].mxu0
    %v6898 = vadd.f32 0.0, %v6897
    %v6899 = vpop.f32.mrb[0].mxu0
    %6900 = vmatprep.mubr.f32.mxu0 0.0
    %6901 = vmatmul.mubr.f32.gmra.mrb[0].mxu0 %v1514
    %v6902 = vpop.f32.mrb[0].mxu0
    %v6903 = vadd.f32 0.0, %v6902
    %v6904 = vpop.f32.mrb[0].mxu0
    %6905 = vmatprep.mubr.f32.mxu0 0.0
    %6906 = vmatmul.mubr.f32.gmra.mrb[0].mxu0 %v1517
    %v6907 = vpop.f32.mrb[0].mxu0
    %v6908 = vadd.f32 0.0, %v6907
    %v6909 = vpop.f32.mrb[0].mxu0
    %6910 = vmatprep.mubr.f32.mxu0 0.0
    %6911 = vmatmul.mubr.f32.gmra.mrb[0].mxu0 %v1520
    %v6912 = vpop.f32.mrb[0].mxu0
    %v6913 = vadd.f32 0.0, %v6912
    %v6914 = vpop.f32.mrb[0].mxu0
    %6915 = vdwg.mxu0
    %6944 = vrot.lane.b32.xlu0 %v6778, 32
    %v6945 = vpop.permute.xlu0 %6944
    %6946 = vrot.lane.b32.xlu0 %v6783, 32
    %v6947 = vpop.permute.xlu0 %6946
    %6948 = vrot.lane.b32.xlu0 %v6788, 32
    %v6949 = vpop.permute.xlu0 %6948
    %6950 = vrot.lane.b32.xlu0 %v6793, 32
    %v6951 = vpop.permute.xlu0 %6950
    %6952 = vrot.lane.b32.xlu0 %v6798, 32
    %v6953 = vpop.permute.xlu0 %6952
    %6954 = vrot.lane.b32.xlu0 %v6803, 32
    %v6955 = vpop.permute.xlu0 %6954
    %6956 = vrot.lane.b32.xlu0 %v6808, 32
    %v6957 = vpop.permute.xlu0 %6956
    %6958 = vrot.lane.b32.xlu0 %v6813, 32
    %v6959 = vpop.permute.xlu0 %6958
    %6960 = vrot.lane.b32.xlu0 %v6818, 32
    %v6961 = vpop.permute.xlu0 %6960
    %6962 = vrot.lane.b32.xlu0 %v6823, 32
    %v6963 = vpop.permute.xlu0 %6962
    %6964 = vrot.lane.b32.xlu0 %v6828, 32
    %v6965 = vpop.permute.xlu0 %6964
    %6966 = vrot.lane.b32.xlu0 %v6833, 32
    %v6967 = vpop.permute.xlu0 %6966
    %6968 = vrot.lane.b32.xlu0 %v6838, 32
    %v6969 = vpop.permute.xlu0 %6968
    %6970 = vrot.lane.b32.xlu0 %v6843, 32
    %v6971 = vpop.permute.xlu0 %6970
    %6972 = vrot.lane.b32.xlu0 %v6848, 32
    %v6973 = vpop.permute.xlu0 %6972
    %6974 = vrot.lane.b32.xlu0 %v6853, 32
    %v6975 = vpop.permute.xlu0 %6974
    %6976 = vrot.lane.b32.xlu0 %v6858, 32
    %v6977 = vpop.permute.xlu0 %6976
    %6978 = vrot.lane.b32.xlu0 %v6863, 32
    %v6979 = vpop.permute.xlu0 %6978
    %6980 = vrot.lane.b32.xlu0 %v6868, 32
    %v6981 = vpop.permute.xlu0 %6980
    %6982 = vrot.lane.b32.xlu0 %v6873, 32
    %v6983 = vpop.permute.xlu0 %6982
    %6984 = vrot.lane.b32.xlu0 %v6878, 32
    %v6985 = vpop.permute.xlu0 %6984
    %6986 = vrot.lane.b32.xlu0 %v6883, 32
    %v6987 = vpop.permute.xlu0 %6986
    %6988 = vrot.lane.b32.xlu0 %v6888, 32
    %v6989 = vpop.permute.xlu0 %6988
    %6990 = vrot.lane.b32.xlu0 %v6893, 32
    %v6991 = vpop.permute.xlu0 %6990
    %6992 = vrot.lane.b32.xlu0 %v6898, 32
    %v6993 = vpop.permute.xlu0 %6992
    %6994 = vrot.lane.b32.xlu0 %v6903, 32
    %v6995 = vpop.permute.xlu0 %6994
    %6996 = vrot.lane.b32.xlu0 %v6908, 32
    %v6997 = vpop.permute.xlu0 %6996
    %6998 = vrot.lane.b32.xlu0 %v6913, 32
    %v6999 = vpop.permute.xlu0 %6998
    %7028 = vst.msk [vmem:[#allocation2] sm:$0xff] %vm1839, %v6945
    %7029 = vst.msk [vmem:[#allocation2 + $0x8] sm:$0xff] %vm1839, %v6947
    %7030 = vst.msk [vmem:[#allocation2 + $0x10] sm:$0xff] %vm1839, %v6949
    %7031 = vst.msk [vmem:[#allocation2 + $0x18] sm:$0xff] %vm1839, %v6951
    %7032 = vst.msk [vmem:[#allocation2 + $0x20] sm:$0xff] %vm1839, %v6953
    %7033 = vst.msk [vmem:[#allocation2 + $0x28] sm:$0xff] %vm1839, %v6955
    %7034 = vst.msk [vmem:[#allocation2 + $0x30] sm:$0xff] %vm1839, %v6957
    %7035 = vst.msk [vmem:[#allocation2 + $0x38] sm:$0xff] %vm1839, %v6959
    %7036 = vst.msk [vmem:[#allocation2 + $0x40] sm:$0xff] %vm1839, %v6961
    %7037 = vst.msk [vmem:[#allocation2 + $0x48] sm:$0xff] %vm1839, %v6963
    %7038 = vst.msk [vmem:[#allocation2 + $0x50] sm:$0xff] %vm1839, %v6965
    %7039 = vst.msk [vmem:[#allocation2 + $0x58] sm:$0xff] %vm1839, %v6967
    %7040 = vst.msk [vmem:[#allocation2 + $0x60] sm:$0xff] %vm1839, %v6969
    %7041 = vst.msk [vmem:[#allocation2 + $0x68] sm:$0xff] %vm1839, %v6971
    %7042 = vst.msk [vmem:[#allocation2 + $0x70] sm:$0xff] %vm1839, %v6973
    %7043 = vst.msk [vmem:[#allocation2 + $0x78] sm:$0xff] %vm1839, %v6975
    %7044 = vst.msk [vmem:[#allocation2 + $0x80] sm:$0xff] %vm1839, %v6977
    %7045 = vst.msk [vmem:[#allocation2 + $0x88] sm:$0xff] %vm1839, %v6979
    %7046 = vst.msk [vmem:[#allocation2 + $0x90] sm:$0xff] %vm1839, %v6981
    %7047 = vst.msk [vmem:[#allocation2 + $0x98] sm:$0xff] %vm1839, %v6983
    %7048 = vst.msk [vmem:[#allocation2 + $0xa0] sm:$0xff] %vm1839, %v6985
    %7049 = vst.msk [vmem:[#allocation2 + $0xa8] sm:$0xff] %vm1839, %v6987
    %7050 = vst.msk [vmem:[#allocation2 + $0xb0] sm:$0xff] %vm1839, %v6989
    %7051 = vst.msk [vmem:[#allocation2 + $0xb8] sm:$0xff] %vm1839, %v6991
    %7052 = vst.msk [vmem:[#allocation2 + $0xc0] sm:$0xff] %vm1839, %v6993
    %7053 = vst.msk [vmem:[#allocation2 + $0xc8] sm:$0xff] %vm1839, %v6995
    %7054 = vst.msk [vmem:[#allocation2 + $0xd0] sm:$0xff] %vm1839, %v6997
    %7055 = vst.msk [vmem:[#allocation2 + $0xd8] sm:$0xff] %vm1839, %v6999
    %v7056 = vld [vmem:[#allocation2] sm:$0xff]
    %v7057 = vld [vmem:[#allocation2 + $0x8] sm:$0xff]
    %v7058 = vld [vmem:[#allocation2 + $0x10] sm:$0xff]
    %v7059 = vld [vmem:[#allocation2 + $0x18] sm:$0xff]
    %v7060 = vld [vmem:[#allocation2 + $0x20] sm:$0xff]
    %v7061 = vld [vmem:[#allocation2 + $0x28] sm:$0xff]
    %v7062 = vld [vmem:[#allocation2 + $0x30] sm:$0xff]
    %v7063 = vld [vmem:[#allocation2 + $0x38] sm:$0xff]
    %v7064 = vld [vmem:[#allocation2 + $0x40] sm:$0xff]
    %v7065 = vld [vmem:[#allocation2 + $0x48] sm:$0xff]
    %v7066 = vld [vmem:[#allocation2 + $0x50] sm:$0xff]
    %v7067 = vld [vmem:[#allocation2 + $0x58] sm:$0xff]
    %v7068 = vld [vmem:[#allocation2 + $0x60] sm:$0xff]
    %v7069 = vld [vmem:[#allocation2 + $0x68] sm:$0xff]
    %v7070 = vld [vmem:[#allocation2 + $0x70] sm:$0xff]
    %v7071 = vld [vmem:[#allocation2 + $0x78] sm:$0xff]
    %v7072 = vld [vmem:[#allocation2 + $0x80] sm:$0xff]
    %v7073 = vld [vmem:[#allocation2 + $0x88] sm:$0xff]
    %v7074 = vld [vmem:[#allocation2 + $0x90] sm:$0xff]
    %v7075 = vld [vmem:[#allocation2 + $0x98] sm:$0xff]
    %v7076 = vld [vmem:[#allocation2 + $0xa0] sm:$0xff]
    %v7077 = vld [vmem:[#allocation2 + $0xa8] sm:$0xff]
    %v7078 = vld [vmem:[#allocation2 + $0xb0] sm:$0xff]
    %v7079 = vld [vmem:[#allocation2 + $0xb8] sm:$0xff]
    %v7080 = vld [vmem:[#allocation2 + $0xc0] sm:$0xff]
    %v7081 = vld [vmem:[#allocation2 + $0xc8] sm:$0xff]
    %v7082 = vld [vmem:[#allocation2 + $0xd0] sm:$0xff]
    %v7083 = vld [vmem:[#allocation2 + $0xd8] sm:$0xff]
    %v7084 = vld [vmem:[%s19] sm:$0xff]
    %v7085 = vld [vmem:[%s19 + $0x8] sm:$0xff]
    %v7086 = vld [vmem:[%s19 + $0x10] sm:$0xff]
    %v7087 = vld [vmem:[%s19 + $0x18] sm:$0xff]
    %v7088 = vld [vmem:[%s19 + $0x20] sm:$0xff]
    %v7089 = vld [vmem:[%s19 + $0x28] sm:$0xff]
    %v7090 = vld [vmem:[%s19 + $0x30] sm:$0xff]
    %v7091 = vld [vmem:[%s19 + $0x38] sm:$0xff]
    %v7092 = vld [vmem:[%s19 + $0x40] sm:$0x3]
    %v7093 = vld [vmem:[%s20] sm:$0x1]
    %v7095 = vlaneseq
    %v7096 = vshrl.u32 %v7095, 7
    %v7097 = vsub.s32 0, %v7096
    %v7098 = vrot.slane %v7093, %v7097
    %v7101 = vsel %vm1912, %v7056, 0
    %v7104 = vsel %vm1912, %v7057, 0
    %v7107 = vsel %vm1912, %v7058, 0
    %v7110 = vsel %vm1912, %v7059, 0
    %v7113 = vsel %vm1912, %v7060, 0
    %v7116 = vsel %vm1912, %v7061, 0
    %v7119 = vsel %vm1912, %v7062, 0
    %v7122 = vsel %vm1912, %v7063, 0
    %v7125 = vsel %vm1912, %v7064, 0
    %v7128 = vsel %vm1912, %v7065, 0
    %v7131 = vsel %vm1912, %v7066, 0
    %v7134 = vsel %vm1912, %v7067, 0
    %v7137 = vsel %vm1912, %v7068, 0
    %v7140 = vsel %vm1912, %v7069, 0
    %v7143 = vsel %vm1912, %v7070, 0
    %v7146 = vsel %vm1912, %v7071, 0
    %v7149 = vsel %vm1912, %v7072, 0
    %v7152 = vsel %vm1912, %v7073, 0
    %v7155 = vsel %vm1912, %v7074, 0
    %v7158 = vsel %vm1912, %v7075, 0
    %v7161 = vsel %vm1912, %v7076, 0
    %v7164 = vsel %vm1912, %v7077, 0
    %v7167 = vsel %vm1912, %v7078, 0
    %v7170 = vsel %vm1912, %v7079, 0
    %v7173 = vsel %vm1912, %v7080, 0
    %v7176 = vsel %vm1912, %v7081, 0
    %v7179 = vsel %vm1912, %v7082, 0
    %v7182 = vsel %vm1912, %v7083, 0
    %v7185 = vsel %vm1997, %v7092, 0
    %7187 = vmatprep.subr.mxu0 0.0
    %7188 = vmatpush1.msra.mxu0 %v7084
    %7189 = vmatprep.subr.mxu0 0.0
    %7190 = vmatpush1.msra.mxu0 %v7085
    %7191 = vmatprep.subr.mxu0 0.0
    %7192 = vmatpush1.msra.mxu0 %v7086
    %7193 = vmatprep.subr.mxu0 0.0
    %7194 = vmatpush1.msra.mxu0 %v7087
    %7195 = vmatprep.subr.mxu0 0.0
    %7196 = vmatpush1.msra.mxu0 %v7088
    %7197 = vmatprep.subr.mxu0 0.0
    %7198 = vmatpush1.msra.mxu0 %v7089
    %7199 = vmatprep.subr.mxu0 0.0
    %7200 = vmatpush1.msra.mxu0 %v7090
    %7201 = vmatprep.subr.mxu0 0.0
    %7202 = vmatpush1.msra.mxu0 %v7091
    %7203 = vmatprep.subr.mxu0 0.0
    %7204 = vmatpush1.msra.mxu0 %v7185
    %7205 = vmatprep.subr.mxu0 0.0
    %7206 = vmatpush1.msra.mxu0 0.0
    %7207 = vmatprep.subr.mxu0 0.0
    %7208 = vmatpush1.msra.mxu0 0.0
    %7209 = vmatprep.subr.mxu0 0.0
    %7210 = vmatpush1.msra.mxu0 0.0
    %7211 = vmatprep.subr.mxu0 0.0
    %7212 = vmatpush1.msra.mxu0 0.0
    %7213 = vmatprep.subr.mxu0 0.0
    %7214 = vmatpush1.msra.mxu0 0.0
    %7215 = vmatprep.subr.mxu0 0.0
    %7216 = vmatpush1.msra.mxu0 0.0
    %7217 = vmatprep.subr.mxu0 0.0
    %7218 = vmatpush1.msra.mxu0 0.0
    %7219 = vmatprep.subr.mxu0 0.0
    %7220 = vmatpush1.msra.mxu0 0.0
    %7221 = vmatprep.subr.mxu0 0.0
    %7222 = vmatpush1.msra.mxu0 0.0
    %7223 = vmatprep.subr.mxu0 0.0
    %7224 = vmatpush1.msra.mxu0 0.0
    %7225 = vmatprep.subr.mxu0 0.0
    %7226 = vmatpush1.msra.mxu0 0.0
    %7227 = vmatprep.subr.mxu0 0.0
    %7228 = vmatpush1.msra.mxu0 0.0
    %7229 = vmatprep.subr.mxu0 0.0
    %7230 = vmatpush1.msra.mxu0 0.0
    %7231 = vmatprep.subr.mxu0 0.0
    %7232 = vmatpush1.msra.mxu0 0.0
    %7233 = vmatprep.subr.mxu0 0.0
    %7234 = vmatpush1.msra.mxu0 0.0
    %7235 = vmatprep.subr.mxu0 0.0
    %7236 = vmatpush1.msra.mxu0 0.0
    %7237 = vmatprep.subr.mxu0 0.0
    %7238 = vmatpush1.msra.mxu0 0.0
    %7239 = vmatprep.subr.mxu0 0.0
    %7240 = vmatpush1.msra.mxu0 0.0
    %7241 = vmatprep.subr.mxu0 0.0
    %7242 = vmatpush1.msra.mxu0 0.0
    %7243 = vmatprep.subr.mxu0 0.0
    %7244 = vmatpush1.msra.mxu0 0.0
    %7245 = vmatprep.subr.mxu0 0.0
    %7246 = vmatpush1.msra.mxu0 0.0
    %7247 = vmatprep.subr.mxu0 0.0
    %7248 = vmatpush1.msra.mxu0 0.0
    %7249 = vmatprep.subr.mxu0 0.0
    %7250 = vmatpush1.msra.mxu0 0.0
    %7251 = vmatprep.mubr.f32.mxu0 0.0
    %7252 = vmatmul.mubr.f32.gmra.mrb[0].mxu0 %v7101
    %v7253 = vpop.f32.mrb[0].mxu0
    %v7254 = vadd.f32 %v7098, %v7253
    %v7255 = vpop.f32.mrb[0].mxu0
    %7256 = vmatprep.mubr.f32.mxu0 0.0
    %7257 = vmatmul.mubr.f32.gmra.mrb[0].mxu0 %v7104
    %v7258 = vpop.f32.mrb[0].mxu0
    %v7259 = vadd.f32 %v7098, %v7258
    %v7260 = vpop.f32.mrb[0].mxu0
    %7261 = vmatprep.mubr.f32.mxu0 0.0
    %7262 = vmatmul.mubr.f32.gmra.mrb[0].mxu0 %v7107
    %v7263 = vpop.f32.mrb[0].mxu0
    %v7264 = vadd.f32 %v7098, %v7263
    %v7265 = vpop.f32.mrb[0].mxu0
    %7266 = vmatprep.mubr.f32.mxu0 0.0
    %7267 = vmatmul.mubr.f32.gmra.mrb[0].mxu0 %v7110
    %v7268 = vpop.f32.mrb[0].mxu0
    %v7269 = vadd.f32 %v7098, %v7268
    %v7270 = vpop.f32.mrb[0].mxu0
    %7271 = vmatprep.mubr.f32.mxu0 0.0
    %7272 = vmatmul.mubr.f32.gmra.mrb[0].mxu0 %v7113
    %v7273 = vpop.f32.mrb[0].mxu0
    %v7274 = vadd.f32 %v7098, %v7273
    %v7275 = vpop.f32.mrb[0].mxu0
    %7276 = vmatprep.mubr.f32.mxu0 0.0
    %7277 = vmatmul.mubr.f32.gmra.mrb[0].mxu0 %v7116
    %v7278 = vpop.f32.mrb[0].mxu0
    %v7279 = vadd.f32 %v7098, %v7278
    %v7280 = vpop.f32.mrb[0].mxu0
    %7281 = vmatprep.mubr.f32.mxu0 0.0
    %7282 = vmatmul.mubr.f32.gmra.mrb[0].mxu0 %v7119
    %v7283 = vpop.f32.mrb[0].mxu0
    %v7284 = vadd.f32 %v7098, %v7283
    %v7285 = vpop.f32.mrb[0].mxu0
    %7286 = vmatprep.mubr.f32.mxu0 0.0
    %7287 = vmatmul.mubr.f32.gmra.mrb[0].mxu0 %v7122
    %v7288 = vpop.f32.mrb[0].mxu0
    %v7289 = vadd.f32 %v7098, %v7288
    %v7290 = vpop.f32.mrb[0].mxu0
    %7291 = vmatprep.mubr.f32.mxu0 0.0
    %7292 = vmatmul.mubr.f32.gmra.mrb[0].mxu0 %v7125
    %v7293 = vpop.f32.mrb[0].mxu0
    %v7294 = vadd.f32 %v7098, %v7293
    %v7295 = vpop.f32.mrb[0].mxu0
    %7296 = vmatprep.mubr.f32.mxu0 0.0
    %7297 = vmatmul.mubr.f32.gmra.mrb[0].mxu0 %v7128
    %v7298 = vpop.f32.mrb[0].mxu0
    %v7299 = vadd.f32 %v7098, %v7298
    %v7300 = vpop.f32.mrb[0].mxu0
    %7301 = vmatprep.mubr.f32.mxu0 0.0
    %7302 = vmatmul.mubr.f32.gmra.mrb[0].mxu0 %v7131
    %v7303 = vpop.f32.mrb[0].mxu0
    %v7304 = vadd.f32 %v7098, %v7303
    %v7305 = vpop.f32.mrb[0].mxu0
    %7306 = vmatprep.mubr.f32.mxu0 0.0
    %7307 = vmatmul.mubr.f32.gmra.mrb[0].mxu0 %v7134
    %v7308 = vpop.f32.mrb[0].mxu0
    %v7309 = vadd.f32 %v7098, %v7308
    %v7310 = vpop.f32.mrb[0].mxu0
    %7311 = vmatprep.mubr.f32.mxu0 0.0
    %7312 = vmatmul.mubr.f32.gmra.mrb[0].mxu0 %v7137
    %v7313 = vpop.f32.mrb[0].mxu0
    %v7314 = vadd.f32 %v7098, %v7313
    %v7315 = vpop.f32.mrb[0].mxu0
    %7316 = vmatprep.mubr.f32.mxu0 0.0
    %7317 = vmatmul.mubr.f32.gmra.mrb[0].mxu0 %v7140
    %v7318 = vpop.f32.mrb[0].mxu0
    %v7319 = vadd.f32 %v7098, %v7318
    %v7320 = vpop.f32.mrb[0].mxu0
    %7321 = vmatprep.mubr.f32.mxu0 0.0
    %7322 = vmatmul.mubr.f32.gmra.mrb[0].mxu0 %v7143
    %v7323 = vpop.f32.mrb[0].mxu0
    %v7324 = vadd.f32 %v7098, %v7323
    %v7325 = vpop.f32.mrb[0].mxu0
    %7326 = vmatprep.mubr.f32.mxu0 0.0
    %7327 = vmatmul.mubr.f32.gmra.mrb[0].mxu0 %v7146
    %v7328 = vpop.f32.mrb[0].mxu0
    %v7329 = vadd.f32 %v7098, %v7328
    %v7330 = vpop.f32.mrb[0].mxu0
    %7331 = vmatprep.mubr.f32.mxu0 0.0
    %7332 = vmatmul.mubr.f32.gmra.mrb[0].mxu0 %v7149
    %v7333 = vpop.f32.mrb[0].mxu0
    %v7334 = vadd.f32 %v7098, %v7333
    %v7335 = vpop.f32.mrb[0].mxu0
    %7336 = vmatprep.mubr.f32.mxu0 0.0
    %7337 = vmatmul.mubr.f32.gmra.mrb[0].mxu0 %v7152
    %v7338 = vpop.f32.mrb[0].mxu0
    %v7339 = vadd.f32 %v7098, %v7338
    %v7340 = vpop.f32.mrb[0].mxu0
    %7341 = vmatprep.mubr.f32.mxu0 0.0
    %7342 = vmatmul.mubr.f32.gmra.mrb[0].mxu0 %v7155
    %v7343 = vpop.f32.mrb[0].mxu0
    %v7344 = vadd.f32 %v7098, %v7343
    %v7345 = vpop.f32.mrb[0].mxu0
    %7346 = vmatprep.mubr.f32.mxu0 0.0
    %7347 = vmatmul.mubr.f32.gmra.mrb[0].mxu0 %v7158
    %v7348 = vpop.f32.mrb[0].mxu0
    %v7349 = vadd.f32 %v7098, %v7348
    %v7350 = vpop.f32.mrb[0].mxu0
    %7351 = vmatprep.mubr.f32.mxu0 0.0
    %7352 = vmatmul.mubr.f32.gmra.mrb[0].mxu0 %v7161
    %v7353 = vpop.f32.mrb[0].mxu0
    %v7354 = vadd.f32 %v7098, %v7353
    %v7355 = vpop.f32.mrb[0].mxu0
    %7356 = vmatprep.mubr.f32.mxu0 0.0
    %7357 = vmatmul.mubr.f32.gmra.mrb[0].mxu0 %v7164
    %v7358 = vpop.f32.mrb[0].mxu0
    %v7359 = vadd.f32 %v7098, %v7358
    %v7360 = vpop.f32.mrb[0].mxu0
    %7361 = vmatprep.mubr.f32.mxu0 0.0
    %7362 = vmatmul.mubr.f32.gmra.mrb[0].mxu0 %v7167
    %v7363 = vpop.f32.mrb[0].mxu0
    %v7364 = vadd.f32 %v7098, %v7363
    %v7365 = vpop.f32.mrb[0].mxu0
    %7366 = vmatprep.mubr.f32.mxu0 0.0
    %7367 = vmatmul.mubr.f32.gmra.mrb[0].mxu0 %v7170
    %v7368 = vpop.f32.mrb[0].mxu0
    %v7369 = vadd.f32 %v7098, %v7368
    %v7370 = vpop.f32.mrb[0].mxu0
    %7371 = vmatprep.mubr.f32.mxu0 0.0
    %7372 = vmatmul.mubr.f32.gmra.mrb[0].mxu0 %v7173
    %v7373 = vpop.f32.mrb[0].mxu0
    %v7374 = vadd.f32 %v7098, %v7373
    %v7375 = vpop.f32.mrb[0].mxu0
    %7376 = vmatprep.mubr.f32.mxu0 0.0
    %7377 = vmatmul.mubr.f32.gmra.mrb[0].mxu0 %v7176
    %v7378 = vpop.f32.mrb[0].mxu0
    %v7379 = vadd.f32 %v7098, %v7378
    %v7380 = vpop.f32.mrb[0].mxu0
    %7381 = vmatprep.mubr.f32.mxu0 0.0
    %7382 = vmatmul.mubr.f32.gmra.mrb[0].mxu0 %v7179
    %v7383 = vpop.f32.mrb[0].mxu0
    %v7384 = vadd.f32 %v7098, %v7383
    %v7385 = vpop.f32.mrb[0].mxu0
    %7386 = vmatprep.mubr.f32.mxu0 0.0
    %7387 = vmatmul.mubr.f32.gmra.mrb[0].mxu0 %v7182
    %v7388 = vpop.f32.mrb[0].mxu0
    %v7389 = vadd.f32 %v7098, %v7388
    %v7390 = vpop.f32.mrb[0].mxu0
    %7391 = vdwg.mxu0
    %v7392 = vxor.u32 %v7254, 2147483648
    %v7393 = vxor.u32 %v7259, 2147483648
    %v7394 = vxor.u32 %v7264, 2147483648
    %v7395 = vxor.u32 %v7269, 2147483648
    %v7396 = vxor.u32 %v7274, 2147483648
    %v7397 = vxor.u32 %v7279, 2147483648
    %v7398 = vxor.u32 %v7284, 2147483648
    %v7399 = vxor.u32 %v7289, 2147483648
    %v7400 = vxor.u32 %v7294, 2147483648
    %v7401 = vxor.u32 %v7299, 2147483648
    %v7402 = vxor.u32 %v7304, 2147483648
    %v7403 = vxor.u32 %v7309, 2147483648
    %v7404 = vxor.u32 %v7314, 2147483648
    %v7405 = vxor.u32 %v7319, 2147483648
    %v7406 = vxor.u32 %v7324, 2147483648
    %v7407 = vxor.u32 %v7329, 2147483648
    %v7408 = vxor.u32 %v7334, 2147483648
    %v7409 = vxor.u32 %v7339, 2147483648
    %v7410 = vxor.u32 %v7344, 2147483648
    %v7411 = vxor.u32 %v7349, 2147483648
    %v7412 = vxor.u32 %v7354, 2147483648
    %v7413 = vxor.u32 %v7359, 2147483648
    %v7414 = vxor.u32 %v7364, 2147483648
    %v7415 = vxor.u32 %v7369, 2147483648
    %v7416 = vxor.u32 %v7374, 2147483648
    %v7417 = vxor.u32 %v7379, 2147483648
    %v7418 = vxor.u32 %v7384, 2147483648
    %v7419 = vxor.u32 %v7389, 2147483648
    %v7420 = vmul.f32 %v7392, 1.442695
    %v7421 = vpow.pop %v7420
    %v7422 = vmul.f32 %v7393, 1.442695
    %v7423 = vpow.pop %v7422
    %v7424 = vmul.f32 %v7394, 1.442695
    %v7425 = vpow.pop %v7424
    %v7426 = vmul.f32 %v7395, 1.442695
    %v7427 = vpow.pop %v7426
    %v7428 = vmul.f32 %v7396, 1.442695
    %v7429 = vpow.pop %v7428
    %v7430 = vmul.f32 %v7397, 1.442695
    %v7431 = vpow.pop %v7430
    %v7432 = vmul.f32 %v7398, 1.442695
    %v7433 = vpow.pop %v7432
    %v7434 = vmul.f32 %v7399, 1.442695
    %v7435 = vpow.pop %v7434
    %v7436 = vmul.f32 %v7400, 1.442695
    %v7437 = vpow.pop %v7436
    %v7438 = vmul.f32 %v7401, 1.442695
    %v7439 = vpow.pop %v7438
    %v7440 = vmul.f32 %v7402, 1.442695
    %v7441 = vpow.pop %v7440
    %v7442 = vmul.f32 %v7403, 1.442695
    %v7443 = vpow.pop %v7442
    %v7444 = vmul.f32 %v7404, 1.442695
    %v7445 = vpow.pop %v7444
    %v7446 = vmul.f32 %v7405, 1.442695
    %v7447 = vpow.pop %v7446
    %v7448 = vmul.f32 %v7406, 1.442695
    %v7449 = vpow.pop %v7448
    %v7450 = vmul.f32 %v7407, 1.442695
    %v7451 = vpow.pop %v7450
    %v7452 = vmul.f32 %v7408, 1.442695
    %v7453 = vpow.pop %v7452
    %v7454 = vmul.f32 %v7409, 1.442695
    %v7455 = vpow.pop %v7454
    %v7456 = vmul.f32 %v7410, 1.442695
    %v7457 = vpow.pop %v7456
    %v7458 = vmul.f32 %v7411, 1.442695
    %v7459 = vpow.pop %v7458
    %v7460 = vmul.f32 %v7412, 1.442695
    %v7461 = vpow.pop %v7460
    %v7462 = vmul.f32 %v7413, 1.442695
    %v7463 = vpow.pop %v7462
    %v7464 = vmul.f32 %v7414, 1.442695
    %v7465 = vpow.pop %v7464
    %v7466 = vmul.f32 %v7415, 1.442695
    %v7467 = vpow.pop %v7466
    %v7468 = vmul.f32 %v7416, 1.442695
    %v7469 = vpow.pop %v7468
    %v7470 = vmul.f32 %v7417, 1.442695
    %v7471 = vpow.pop %v7470
    %v7472 = vmul.f32 %v7418, 1.442695
    %v7473 = vpow.pop %v7472
    %v7474 = vmul.f32 %v7419, 1.442695
    %v7475 = vpow.pop %v7474
    %v7476 = vadd.f32 %v7421, 1.0
    %v7477 = vadd.f32 %v7423, 1.0
    %v7478 = vadd.f32 %v7425, 1.0
    %v7479 = vadd.f32 %v7427, 1.0
    %v7480 = vadd.f32 %v7429, 1.0
    %v7481 = vadd.f32 %v7431, 1.0
    %v7482 = vadd.f32 %v7433, 1.0
    %v7483 = vadd.f32 %v7435, 1.0
    %v7484 = vadd.f32 %v7437, 1.0
    %v7485 = vadd.f32 %v7439, 1.0
    %v7486 = vadd.f32 %v7441, 1.0
    %v7487 = vadd.f32 %v7443, 1.0
    %v7488 = vadd.f32 %v7445, 1.0
    %v7489 = vadd.f32 %v7447, 1.0
    %v7490 = vadd.f32 %v7449, 1.0
    %v7491 = vadd.f32 %v7451, 1.0
    %v7492 = vadd.f32 %v7453, 1.0
    %v7493 = vadd.f32 %v7455, 1.0
    %v7494 = vadd.f32 %v7457, 1.0
    %v7495 = vadd.f32 %v7459, 1.0
    %v7496 = vadd.f32 %v7461, 1.0
    %v7497 = vadd.f32 %v7463, 1.0
    %v7498 = vadd.f32 %v7465, 1.0
    %v7499 = vadd.f32 %v7467, 1.0
    %v7500 = vadd.f32 %v7469, 1.0
    %v7501 = vadd.f32 %v7471, 1.0
    %v7502 = vadd.f32 %v7473, 1.0
    %v7503 = vadd.f32 %v7475, 1.0
    %v7504 = vrcp.pop %v7476
    %v7505 = vmul.f32 1.0, %v7504
    %v7506 = vrcp.pop %v7477
    %v7507 = vmul.f32 1.0, %v7506
    %v7508 = vrcp.pop %v7478
    %v7509 = vmul.f32 1.0, %v7508
    %v7510 = vrcp.pop %v7479
    %v7511 = vmul.f32 1.0, %v7510
    %v7512 = vrcp.pop %v7480
    %v7513 = vmul.f32 1.0, %v7512
    %v7514 = vrcp.pop %v7481
    %v7515 = vmul.f32 1.0, %v7514
    %v7516 = vrcp.pop %v7482
    %v7517 = vmul.f32 1.0, %v7516
    %v7518 = vrcp.pop %v7483
    %v7519 = vmul.f32 1.0, %v7518
    %v7520 = vrcp.pop %v7484
    %v7521 = vmul.f32 1.0, %v7520
    %v7522 = vrcp.pop %v7485
    %v7523 = vmul.f32 1.0, %v7522
    %v7524 = vrcp.pop %v7486
    %v7525 = vmul.f32 1.0, %v7524
    %v7526 = vrcp.pop %v7487
    %v7527 = vmul.f32 1.0, %v7526
    %v7528 = vrcp.pop %v7488
    %v7529 = vmul.f32 1.0, %v7528
    %v7530 = vrcp.pop %v7489
    %v7531 = vmul.f32 1.0, %v7530
    %v7532 = vrcp.pop %v7490
    %v7533 = vmul.f32 1.0, %v7532
    %v7534 = vrcp.pop %v7491
    %v7535 = vmul.f32 1.0, %v7534
    %v7536 = vrcp.pop %v7492
    %v7537 = vmul.f32 1.0, %v7536
    %v7538 = vrcp.pop %v7493
    %v7539 = vmul.f32 1.0, %v7538
    %v7540 = vrcp.pop %v7494
    %v7541 = vmul.f32 1.0, %v7540
    %v7542 = vrcp.pop %v7495
    %v7543 = vmul.f32 1.0, %v7542
    %v7544 = vrcp.pop %v7496
    %v7545 = vmul.f32 1.0, %v7544
    %v7546 = vrcp.pop %v7497
    %v7547 = vmul.f32 1.0, %v7546
    %v7548 = vrcp.pop %v7498
    %v7549 = vmul.f32 1.0, %v7548
    %v7550 = vrcp.pop %v7499
    %v7551 = vmul.f32 1.0, %v7550
    %v7552 = vrcp.pop %v7500
    %v7553 = vmul.f32 1.0, %v7552
    %v7554 = vrcp.pop %v7501
    %v7555 = vmul.f32 1.0, %v7554
    %v7556 = vrcp.pop %v7502
    %v7557 = vmul.f32 1.0, %v7556
    %v7558 = vrcp.pop %v7503
    %v7559 = vmul.f32 1.0, %v7558
    %v7560 = vmul.f32 %v7254, %v7505
    %v7561 = vmul.f32 %v7259, %v7507
    %v7562 = vmul.f32 %v7264, %v7509
    %v7563 = vmul.f32 %v7269, %v7511
    %v7564 = vmul.f32 %v7274, %v7513
    %v7565 = vmul.f32 %v7279, %v7515
    %v7566 = vmul.f32 %v7284, %v7517
    %v7567 = vmul.f32 %v7289, %v7519
    %v7568 = vmul.f32 %v7294, %v7521
    %v7569 = vmul.f32 %v7299, %v7523
    %v7570 = vmul.f32 %v7304, %v7525
    %v7571 = vmul.f32 %v7309, %v7527
    %v7572 = vmul.f32 %v7314, %v7529
    %v7573 = vmul.f32 %v7319, %v7531
    %v7574 = vmul.f32 %v7324, %v7533
    %v7575 = vmul.f32 %v7329, %v7535
    %v7576 = vmul.f32 %v7334, %v7537
    %v7577 = vmul.f32 %v7339, %v7539
    %v7578 = vmul.f32 %v7344, %v7541
    %v7579 = vmul.f32 %v7349, %v7543
    %v7580 = vmul.f32 %v7354, %v7545
    %v7581 = vmul.f32 %v7359, %v7547
    %v7582 = vmul.f32 %v7364, %v7549
    %v7583 = vmul.f32 %v7369, %v7551
    %v7584 = vmul.f32 %v7374, %v7553
    %v7585 = vmul.f32 %v7379, %v7555
    %v7586 = vmul.f32 %v7384, %v7557
    %v7587 = vmul.f32 %v7389, %v7559
    %v7588 = vld [vmem:[%s21] sm:$0xff]
    %v7589 = vld [vmem:[%s21 + $0x8] sm:$0xff]
    %v7590 = vld [vmem:[%s21 + $0x10] sm:$0xff]
    %v7591 = vld [vmem:[%s21 + $0x18] sm:$0xff]
    %v7592 = vld [vmem:[%s22] sm:$0x1]
    %v7594 = vlaneseq
    %v7595 = vshrl.u32 %v7594, 7
    %v7596 = vsub.s32 0, %v7595
    %v7597 = vrot.slane %v7592, %v7596
    %v7600 = vsel %vm212, %v7560, 0
    %v7603 = vsel %vm212, %v7561, 0
    %v7606 = vsel %vm212, %v7562, 0
    %v7609 = vsel %vm212, %v7563, 0
    %v7612 = vsel %vm212, %v7564, 0
    %v7615 = vsel %vm212, %v7565, 0
    %v7618 = vsel %vm212, %v7566, 0
    %v7621 = vsel %vm212, %v7567, 0
    %v7624 = vsel %vm212, %v7568, 0
    %v7627 = vsel %vm212, %v7569, 0
    %v7630 = vsel %vm212, %v7570, 0
    %v7633 = vsel %vm212, %v7571, 0
    %v7636 = vsel %vm212, %v7572, 0
    %v7639 = vsel %vm212, %v7573, 0
    %v7642 = vsel %vm212, %v7574, 0
    %v7645 = vsel %vm212, %v7575, 0
    %v7648 = vsel %vm212, %v7576, 0
    %v7651 = vsel %vm212, %v7577, 0
    %v7654 = vsel %vm212, %v7578, 0
    %v7657 = vsel %vm212, %v7579, 0
    %v7660 = vsel %vm212, %v7580, 0
    %v7663 = vsel %vm212, %v7581, 0
    %v7666 = vsel %vm212, %v7582, 0
    %v7669 = vsel %vm212, %v7583, 0
    %v7672 = vsel %vm212, %v7584, 0
    %v7675 = vsel %vm212, %v7585, 0
    %v7678 = vsel %vm212, %v7586, 0
    %v7681 = vsel %vm212, %v7587, 0
    %7683 = vmatprep.subr.mxu0 0.0
    %7684 = vmatpush1.msra.mxu0 %v7588
    %7685 = vmatprep.subr.mxu0 0.0
    %7686 = vmatpush1.msra.mxu0 %v7589
    %7687 = vmatprep.subr.mxu0 0.0
    %7688 = vmatpush1.msra.mxu0 %v7590
    %7689 = vmatprep.subr.mxu0 0.0
    %7690 = vmatpush1.msra.mxu0 %v7591
    %7691 = vmatprep.subr.mxu0 0.0
    %7692 = vmatpush1.msra.mxu0 0.0
    %7693 = vmatprep.subr.mxu0 0.0
    %7694 = vmatpush1.msra.mxu0 0.0
    %7695 = vmatprep.subr.mxu0 0.0
    %7696 = vmatpush1.msra.mxu0 0.0
    %7697 = vmatprep.subr.mxu0 0.0
    %7698 = vmatpush1.msra.mxu0 0.0
    %7699 = vmatprep.subr.mxu0 0.0
    %7700 = vmatpush1.msra.mxu0 0.0
    %7701 = vmatprep.subr.mxu0 0.0
    %7702 = vmatpush1.msra.mxu0 0.0
    %7703 = vmatprep.subr.mxu0 0.0
    %7704 = vmatpush1.msra.mxu0 0.0
    %7705 = vmatprep.subr.mxu0 0.0
    %7706 = vmatpush1.msra.mxu0 0.0
    %7707 = vmatprep.subr.mxu0 0.0
    %7708 = vmatpush1.msra.mxu0 0.0
    %7709 = vmatprep.subr.mxu0 0.0
    %7710 = vmatpush1.msra.mxu0 0.0
    %7711 = vmatprep.subr.mxu0 0.0
    %7712 = vmatpush1.msra.mxu0 0.0
    %7713 = vmatprep.subr.mxu0 0.0
    %7714 = vmatpush1.msra.mxu0 0.0
    %7715 = vmatprep.subr.mxu0 0.0
    %7716 = vmatpush1.msra.mxu0 0.0
    %7717 = vmatprep.subr.mxu0 0.0
    %7718 = vmatpush1.msra.mxu0 0.0
    %7719 = vmatprep.subr.mxu0 0.0
    %7720 = vmatpush1.msra.mxu0 0.0
    %7721 = vmatprep.subr.mxu0 0.0
    %7722 = vmatpush1.msra.mxu0 0.0
    %7723 = vmatprep.subr.mxu0 0.0
    %7724 = vmatpush1.msra.mxu0 0.0
    %7725 = vmatprep.subr.mxu0 0.0
    %7726 = vmatpush1.msra.mxu0 0.0
    %7727 = vmatprep.subr.mxu0 0.0
    %7728 = vmatpush1.msra.mxu0 0.0
    %7729 = vmatprep.subr.mxu0 0.0
    %7730 = vmatpush1.msra.mxu0 0.0
    %7731 = vmatprep.subr.mxu0 0.0
    %7732 = vmatpush1.msra.mxu0 0.0
    %7733 = vmatprep.subr.mxu0 0.0
    %7734 = vmatpush1.msra.mxu0 0.0
    %7735 = vmatprep.subr.mxu0 0.0
    %7736 = vmatpush1.msra.mxu0 0.0
    %7737 = vmatprep.subr.mxu0 0.0
    %7738 = vmatpush1.msra.mxu0 0.0
    %7739 = vmatprep.subr.mxu0 0.0
    %7740 = vmatpush1.msra.mxu0 0.0
    %7741 = vmatprep.subr.mxu0 0.0
    %7742 = vmatpush1.msra.mxu0 0.0
    %7743 = vmatprep.subr.mxu0 0.0
    %7744 = vmatpush1.msra.mxu0 0.0
    %7745 = vmatprep.subr.mxu0 0.0
    %7746 = vmatpush1.msra.mxu0 0.0
    %7747 = vmatprep.mubr.f32.mxu0 0.0
    %7748 = vmatmul.mubr.f32.gmra.mrb[0].mxu0 %v7600
    %v7749 = vpop.f32.mrb[0].mxu0
    %v7750 = vadd.f32 %v7597, %v7749
    %v7751 = vpop.f32.mrb[0].mxu0
    %7752 = vmatprep.mubr.f32.mxu0 0.0
    %7753 = vmatmul.mubr.f32.gmra.mrb[0].mxu0 %v7603
    %v7754 = vpop.f32.mrb[0].mxu0
    %v7755 = vadd.f32 %v7597, %v7754
    %v7756 = vpop.f32.mrb[0].mxu0
    %7757 = vmatprep.mubr.f32.mxu0 0.0
    %7758 = vmatmul.mubr.f32.gmra.mrb[0].mxu0 %v7606
    %v7759 = vpop.f32.mrb[0].mxu0
    %v7760 = vadd.f32 %v7597, %v7759
    %v7761 = vpop.f32.mrb[0].mxu0
    %7762 = vmatprep.mubr.f32.mxu0 0.0
    %7763 = vmatmul.mubr.f32.gmra.mrb[0].mxu0 %v7609
    %v7764 = vpop.f32.mrb[0].mxu0
    %v7765 = vadd.f32 %v7597, %v7764
    %v7766 = vpop.f32.mrb[0].mxu0
    %7767 = vmatprep.mubr.f32.mxu0 0.0
    %7768 = vmatmul.mubr.f32.gmra.mrb[0].mxu0 %v7612
    %v7769 = vpop.f32.mrb[0].mxu0
    %v7770 = vadd.f32 %v7597, %v7769
    %v7771 = vpop.f32.mrb[0].mxu0
    %7772 = vmatprep.mubr.f32.mxu0 0.0
    %7773 = vmatmul.mubr.f32.gmra.mrb[0].mxu0 %v7615
    %v7774 = vpop.f32.mrb[0].mxu0
    %v7775 = vadd.f32 %v7597, %v7774
    %v7776 = vpop.f32.mrb[0].mxu0
    %7777 = vmatprep.mubr.f32.mxu0 0.0
    %7778 = vmatmul.mubr.f32.gmra.mrb[0].mxu0 %v7618
    %v7779 = vpop.f32.mrb[0].mxu0
    %v7780 = vadd.f32 %v7597, %v7779
    %v7781 = vpop.f32.mrb[0].mxu0
    %7782 = vmatprep.mubr.f32.mxu0 0.0
    %7783 = vmatmul.mubr.f32.gmra.mrb[0].mxu0 %v7621
    %v7784 = vpop.f32.mrb[0].mxu0
    %v7785 = vadd.f32 %v7597, %v7784
    %v7786 = vpop.f32.mrb[0].mxu0
    %7787 = vmatprep.mubr.f32.mxu0 0.0
    %7788 = vmatmul.mubr.f32.gmra.mrb[0].mxu0 %v7624
    %v7789 = vpop.f32.mrb[0].mxu0
    %v7790 = vadd.f32 %v7597, %v7789
    %v7791 = vpop.f32.mrb[0].mxu0
    %7792 = vmatprep.mubr.f32.mxu0 0.0
    %7793 = vmatmul.mubr.f32.gmra.mrb[0].mxu0 %v7627
    %v7794 = vpop.f32.mrb[0].mxu0
    %v7795 = vadd.f32 %v7597, %v7794
    %v7796 = vpop.f32.mrb[0].mxu0
    %7797 = vmatprep.mubr.f32.mxu0 0.0
    %7798 = vmatmul.mubr.f32.gmra.mrb[0].mxu0 %v7630
    %v7799 = vpop.f32.mrb[0].mxu0
    %v7800 = vadd.f32 %v7597, %v7799
    %v7801 = vpop.f32.mrb[0].mxu0
    %7802 = vmatprep.mubr.f32.mxu0 0.0
    %7803 = vmatmul.mubr.f32.gmra.mrb[0].mxu0 %v7633
    %v7804 = vpop.f32.mrb[0].mxu0
    %v7805 = vadd.f32 %v7597, %v7804
    %v7806 = vpop.f32.mrb[0].mxu0
    %7807 = vmatprep.mubr.f32.mxu0 0.0
    %7808 = vmatmul.mubr.f32.gmra.mrb[0].mxu0 %v7636
    %v7809 = vpop.f32.mrb[0].mxu0
    %v7810 = vadd.f32 %v7597, %v7809
    %v7811 = vpop.f32.mrb[0].mxu0
    %7812 = vmatprep.mubr.f32.mxu0 0.0
    %7813 = vmatmul.mubr.f32.gmra.mrb[0].mxu0 %v7639
    %v7814 = vpop.f32.mrb[0].mxu0
    %v7815 = vadd.f32 %v7597, %v7814
    %v7816 = vpop.f32.mrb[0].mxu0
    %7817 = vmatprep.mubr.f32.mxu0 0.0
    %7818 = vmatmul.mubr.f32.gmra.mrb[0].mxu0 %v7642
    %v7819 = vpop.f32.mrb[0].mxu0
    %v7820 = vadd.f32 %v7597, %v7819
    %v7821 = vpop.f32.mrb[0].mxu0
    %7822 = vmatprep.mubr.f32.mxu0 0.0
    %7823 = vmatmul.mubr.f32.gmra.mrb[0].mxu0 %v7645
    %v7824 = vpop.f32.mrb[0].mxu0
    %v7825 = vadd.f32 %v7597, %v7824
    %v7826 = vpop.f32.mrb[0].mxu0
    %7827 = vmatprep.mubr.f32.mxu0 0.0
    %7828 = vmatmul.mubr.f32.gmra.mrb[0].mxu0 %v7648
    %v7829 = vpop.f32.mrb[0].mxu0
    %v7830 = vadd.f32 %v7597, %v7829
    %v7831 = vpop.f32.mrb[0].mxu0
    %7832 = vmatprep.mubr.f32.mxu0 0.0
    %7833 = vmatmul.mubr.f32.gmra.mrb[0].mxu0 %v7651
    %v7834 = vpop.f32.mrb[0].mxu0
    %v7835 = vadd.f32 %v7597, %v7834
    %v7836 = vpop.f32.mrb[0].mxu0
    %7837 = vmatprep.mubr.f32.mxu0 0.0
    %7838 = vmatmul.mubr.f32.gmra.mrb[0].mxu0 %v7654
    %v7839 = vpop.f32.mrb[0].mxu0
    %v7840 = vadd.f32 %v7597, %v7839
    %v7841 = vpop.f32.mrb[0].mxu0
    %7842 = vmatprep.mubr.f32.mxu0 0.0
    %7843 = vmatmul.mubr.f32.gmra.mrb[0].mxu0 %v7657
    %v7844 = vpop.f32.mrb[0].mxu0
    %v7845 = vadd.f32 %v7597, %v7844
    %v7846 = vpop.f32.mrb[0].mxu0
    %7847 = vmatprep.mubr.f32.mxu0 0.0
    %7848 = vmatmul.mubr.f32.gmra.mrb[0].mxu0 %v7660
    %v7849 = vpop.f32.mrb[0].mxu0
    %v7850 = vadd.f32 %v7597, %v7849
    %v7851 = vpop.f32.mrb[0].mxu0
    %7852 = vmatprep.mubr.f32.mxu0 0.0
    %7853 = vmatmul.mubr.f32.gmra.mrb[0].mxu0 %v7663
    %v7854 = vpop.f32.mrb[0].mxu0
    %v7855 = vadd.f32 %v7597, %v7854
    %v7856 = vpop.f32.mrb[0].mxu0
    %7857 = vmatprep.mubr.f32.mxu0 0.0
    %7858 = vmatmul.mubr.f32.gmra.mrb[0].mxu0 %v7666
    %v7859 = vpop.f32.mrb[0].mxu0
    %v7860 = vadd.f32 %v7597, %v7859
    %v7861 = vpop.f32.mrb[0].mxu0
    %7862 = vmatprep.mubr.f32.mxu0 0.0
    %7863 = vmatmul.mubr.f32.gmra.mrb[0].mxu0 %v7669
    %v7864 = vpop.f32.mrb[0].mxu0
    %v7865 = vadd.f32 %v7597, %v7864
    %v7866 = vpop.f32.mrb[0].mxu0
    %7867 = vmatprep.mubr.f32.mxu0 0.0
    %7868 = vmatmul.mubr.f32.gmra.mrb[0].mxu0 %v7672
    %v7869 = vpop.f32.mrb[0].mxu0
    %v7870 = vadd.f32 %v7597, %v7869
    %v7871 = vpop.f32.mrb[0].mxu0
    %7872 = vmatprep.mubr.f32.mxu0 0.0
    %7873 = vmatmul.mubr.f32.gmra.mrb[0].mxu0 %v7675
    %v7874 = vpop.f32.mrb[0].mxu0
    %v7875 = vadd.f32 %v7597, %v7874
    %v7876 = vpop.f32.mrb[0].mxu0
    %7877 = vmatprep.mubr.f32.mxu0 0.0
    %7878 = vmatmul.mubr.f32.gmra.mrb[0].mxu0 %v7678
    %v7879 = vpop.f32.mrb[0].mxu0
    %v7880 = vadd.f32 %v7597, %v7879
    %v7881 = vpop.f32.mrb[0].mxu0
    %7882 = vmatprep.mubr.f32.mxu0 0.0
    %7883 = vmatmul.mubr.f32.gmra.mrb[0].mxu0 %v7681
    %v7884 = vpop.f32.mrb[0].mxu0
    %v7885 = vadd.f32 %v7597, %v7884
    %v7886 = vpop.f32.mrb[0].mxu0
    %7887 = vdwg.mxu0
    %v7888 = vxor.u32 %v7750, 2147483648
    %v7889 = vxor.u32 %v7755, 2147483648
    %v7890 = vxor.u32 %v7760, 2147483648
    %v7891 = vxor.u32 %v7765, 2147483648
    %v7892 = vxor.u32 %v7770, 2147483648
    %v7893 = vxor.u32 %v7775, 2147483648
    %v7894 = vxor.u32 %v7780, 2147483648
    %v7895 = vxor.u32 %v7785, 2147483648
    %v7896 = vxor.u32 %v7790, 2147483648
    %v7897 = vxor.u32 %v7795, 2147483648
    %v7898 = vxor.u32 %v7800, 2147483648
    %v7899 = vxor.u32 %v7805, 2147483648
    %v7900 = vxor.u32 %v7810, 2147483648
    %v7901 = vxor.u32 %v7815, 2147483648
    %v7902 = vxor.u32 %v7820, 2147483648
    %v7903 = vxor.u32 %v7825, 2147483648
    %v7904 = vxor.u32 %v7830, 2147483648
    %v7905 = vxor.u32 %v7835, 2147483648
    %v7906 = vxor.u32 %v7840, 2147483648
    %v7907 = vxor.u32 %v7845, 2147483648
    %v7908 = vxor.u32 %v7850, 2147483648
    %v7909 = vxor.u32 %v7855, 2147483648
    %v7910 = vxor.u32 %v7860, 2147483648
    %v7911 = vxor.u32 %v7865, 2147483648
    %v7912 = vxor.u32 %v7870, 2147483648
    %v7913 = vxor.u32 %v7875, 2147483648
    %v7914 = vxor.u32 %v7880, 2147483648
    %v7915 = vxor.u32 %v7885, 2147483648
    %v7916 = vmul.f32 %v7888, 1.442695
    %v7917 = vpow.pop %v7916
    %v7918 = vmul.f32 %v7889, 1.442695
    %v7919 = vpow.pop %v7918
    %v7920 = vmul.f32 %v7890, 1.442695
    %v7921 = vpow.pop %v7920
    %v7922 = vmul.f32 %v7891, 1.442695
    %v7923 = vpow.pop %v7922
    %v7924 = vmul.f32 %v7892, 1.442695
    %v7925 = vpow.pop %v7924
    %v7926 = vmul.f32 %v7893, 1.442695
    %v7927 = vpow.pop %v7926
    %v7928 = vmul.f32 %v7894, 1.442695
    %v7929 = vpow.pop %v7928
    %v7930 = vmul.f32 %v7895, 1.442695
    %v7931 = vpow.pop %v7930
    %v7932 = vmul.f32 %v7896, 1.442695
    %v7933 = vpow.pop %v7932
    %v7934 = vmul.f32 %v7897, 1.442695
    %v7935 = vpow.pop %v7934
    %v7936 = vmul.f32 %v7898, 1.442695
    %v7937 = vpow.pop %v7936
    %v7938 = vmul.f32 %v7899, 1.442695
    %v7939 = vpow.pop %v7938
    %v7940 = vmul.f32 %v7900, 1.442695
    %v7941 = vpow.pop %v7940
    %v7942 = vmul.f32 %v7901, 1.442695
    %v7943 = vpow.pop %v7942
    %v7944 = vmul.f32 %v7902, 1.442695
    %v7945 = vpow.pop %v7944
    %v7946 = vmul.f32 %v7903, 1.442695
    %v7947 = vpow.pop %v7946
    %v7948 = vmul.f32 %v7904, 1.442695
    %v7949 = vpow.pop %v7948
    %v7950 = vmul.f32 %v7905, 1.442695
    %v7951 = vpow.pop %v7950
    %v7952 = vmul.f32 %v7906, 1.442695
    %v7953 = vpow.pop %v7952
    %v7954 = vmul.f32 %v7907, 1.442695
    %v7955 = vpow.pop %v7954
    %v7956 = vmul.f32 %v7908, 1.442695
    %v7957 = vpow.pop %v7956
    %v7958 = vmul.f32 %v7909, 1.442695
    %v7959 = vpow.pop %v7958
    %v7960 = vmul.f32 %v7910, 1.442695
    %v7961 = vpow.pop %v7960
    %v7962 = vmul.f32 %v7911, 1.442695
    %v7963 = vpow.pop %v7962
    %v7964 = vmul.f32 %v7912, 1.442695
    %v7965 = vpow.pop %v7964
    %v7966 = vmul.f32 %v7913, 1.442695
    %v7967 = vpow.pop %v7966
    %v7968 = vmul.f32 %v7914, 1.442695
    %v7969 = vpow.pop %v7968
    %v7970 = vmul.f32 %v7915, 1.442695
    %v7971 = vpow.pop %v7970
    %v7972 = vadd.f32 %v7917, 1.0
    %v7973 = vadd.f32 %v7919, 1.0
    %v7974 = vadd.f32 %v7921, 1.0
    %v7975 = vadd.f32 %v7923, 1.0
    %v7976 = vadd.f32 %v7925, 1.0
    %v7977 = vadd.f32 %v7927, 1.0
    %v7978 = vadd.f32 %v7929, 1.0
    %v7979 = vadd.f32 %v7931, 1.0
    %v7980 = vadd.f32 %v7933, 1.0
    %v7981 = vadd.f32 %v7935, 1.0
    %v7982 = vadd.f32 %v7937, 1.0
    %v7983 = vadd.f32 %v7939, 1.0
    %v7984 = vadd.f32 %v7941, 1.0
    %v7985 = vadd.f32 %v7943, 1.0
    %v7986 = vadd.f32 %v7945, 1.0
    %v7987 = vadd.f32 %v7947, 1.0
    %v7988 = vadd.f32 %v7949, 1.0
    %v7989 = vadd.f32 %v7951, 1.0
    %v7990 = vadd.f32 %v7953, 1.0
    %v7991 = vadd.f32 %v7955, 1.0
    %v7992 = vadd.f32 %v7957, 1.0
    %v7993 = vadd.f32 %v7959, 1.0
    %v7994 = vadd.f32 %v7961, 1.0
    %v7995 = vadd.f32 %v7963, 1.0
    %v7996 = vadd.f32 %v7965, 1.0
    %v7997 = vadd.f32 %v7967, 1.0
    %v7998 = vadd.f32 %v7969, 1.0
    %v7999 = vadd.f32 %v7971, 1.0
    %v8000 = vrcp.pop %v7972
    %v8001 = vmul.f32 1.0, %v8000
    %v8002 = vrcp.pop %v7973
    %v8003 = vmul.f32 1.0, %v8002
    %v8004 = vrcp.pop %v7974
    %v8005 = vmul.f32 1.0, %v8004
    %v8006 = vrcp.pop %v7975
    %v8007 = vmul.f32 1.0, %v8006
    %v8008 = vrcp.pop %v7976
    %v8009 = vmul.f32 1.0, %v8008
    %v8010 = vrcp.pop %v7977
    %v8011 = vmul.f32 1.0, %v8010
    %v8012 = vrcp.pop %v7978
    %v8013 = vmul.f32 1.0, %v8012
    %v8014 = vrcp.pop %v7979
    %v8015 = vmul.f32 1.0, %v8014
    %v8016 = vrcp.pop %v7980
    %v8017 = vmul.f32 1.0, %v8016
    %v8018 = vrcp.pop %v7981
    %v8019 = vmul.f32 1.0, %v8018
    %v8020 = vrcp.pop %v7982
    %v8021 = vmul.f32 1.0, %v8020
    %v8022 = vrcp.pop %v7983
    %v8023 = vmul.f32 1.0, %v8022
    %v8024 = vrcp.pop %v7984
    %v8025 = vmul.f32 1.0, %v8024
    %v8026 = vrcp.pop %v7985
    %v8027 = vmul.f32 1.0, %v8026
    %v8028 = vrcp.pop %v7986
    %v8029 = vmul.f32 1.0, %v8028
    %v8030 = vrcp.pop %v7987
    %v8031 = vmul.f32 1.0, %v8030
    %v8032 = vrcp.pop %v7988
    %v8033 = vmul.f32 1.0, %v8032
    %v8034 = vrcp.pop %v7989
    %v8035 = vmul.f32 1.0, %v8034
    %v8036 = vrcp.pop %v7990
    %v8037 = vmul.f32 1.0, %v8036
    %v8038 = vrcp.pop %v7991
    %v8039 = vmul.f32 1.0, %v8038
    %v8040 = vrcp.pop %v7992
    %v8041 = vmul.f32 1.0, %v8040
    %v8042 = vrcp.pop %v7993
    %v8043 = vmul.f32 1.0, %v8042
    %v8044 = vrcp.pop %v7994
    %v8045 = vmul.f32 1.0, %v8044
    %v8046 = vrcp.pop %v7995
    %v8047 = vmul.f32 1.0, %v8046
    %v8048 = vrcp.pop %v7996
    %v8049 = vmul.f32 1.0, %v8048
    %v8050 = vrcp.pop %v7997
    %v8051 = vmul.f32 1.0, %v8050
    %v8052 = vrcp.pop %v7998
    %v8053 = vmul.f32 1.0, %v8052
    %v8054 = vrcp.pop %v7999
    %v8055 = vmul.f32 1.0, %v8054
    %v8056 = vmul.f32 %v7750, %v8001
    %v8057 = vmul.f32 %v7755, %v8003
    %v8058 = vmul.f32 %v7760, %v8005
    %v8059 = vmul.f32 %v7765, %v8007
    %v8060 = vmul.f32 %v7770, %v8009
    %v8061 = vmul.f32 %v7775, %v8011
    %v8062 = vmul.f32 %v7780, %v8013
    %v8063 = vmul.f32 %v7785, %v8015
    %v8064 = vmul.f32 %v7790, %v8017
    %v8065 = vmul.f32 %v7795, %v8019
    %v8066 = vmul.f32 %v7800, %v8021
    %v8067 = vmul.f32 %v7805, %v8023
    %v8068 = vmul.f32 %v7810, %v8025
    %v8069 = vmul.f32 %v7815, %v8027
    %v8070 = vmul.f32 %v7820, %v8029
    %v8071 = vmul.f32 %v7825, %v8031
    %v8072 = vmul.f32 %v7830, %v8033
    %v8073 = vmul.f32 %v7835, %v8035
    %v8074 = vmul.f32 %v7840, %v8037
    %v8075 = vmul.f32 %v7845, %v8039
    %v8076 = vmul.f32 %v7850, %v8041
    %v8077 = vmul.f32 %v7855, %v8043
    %v8078 = vmul.f32 %v7860, %v8045
    %v8079 = vmul.f32 %v7865, %v8047
    %v8080 = vmul.f32 %v7870, %v8049
    %v8081 = vmul.f32 %v7875, %v8051
    %v8082 = vmul.f32 %v7880, %v8053
    %v8083 = vmul.f32 %v7885, %v8055
    %v8084 = vld [vmem:[%s23] sm:$0x1]
    %v8086 = vlaneseq
    %v8087 = vshrl.u32 %v8086, 7
    %v8088 = vsub.s32 0, %v8087
    %v8089 = vrot.slane %v8084, %v8088
    %v8091 = vmul.f32 %v8056, %v8089
    %v8092 = vmul.f32 %v8057, %v8089
    %v8093 = vmul.f32 %v8058, %v8089
    %v8094 = vmul.f32 %v8059, %v8089
    %v8095 = vmul.f32 %v8060, %v8089
    %v8096 = vmul.f32 %v8061, %v8089
    %v8097 = vmul.f32 %v8062, %v8089
    %v8098 = vmul.f32 %v8063, %v8089
    %v8099 = vmul.f32 %v8064, %v8089
    %v8100 = vmul.f32 %v8065, %v8089
    %v8101 = vmul.f32 %v8066, %v8089
    %v8102 = vmul.f32 %v8067, %v8089
    %v8103 = vmul.f32 %v8068, %v8089
    %v8104 = vmul.f32 %v8069, %v8089
    %v8105 = vmul.f32 %v8070, %v8089
    %v8106 = vmul.f32 %v8071, %v8089
    %v8107 = vmul.f32 %v8072, %v8089
    %v8108 = vmul.f32 %v8073, %v8089
    %v8109 = vmul.f32 %v8074, %v8089
    %v8110 = vmul.f32 %v8075, %v8089
    %v8111 = vmul.f32 %v8076, %v8089
    %v8112 = vmul.f32 %v8077, %v8089
    %v8113 = vmul.f32 %v8078, %v8089
    %v8114 = vmul.f32 %v8079, %v8089
    %v8115 = vmul.f32 %v8080, %v8089
    %v8116 = vmul.f32 %v8081, %v8089
    %v8117 = vmul.f32 %v8082, %v8089
    %v8118 = vmul.f32 %v8083, %v8089
    %v8119 = vsel %vm212, %v8091, 0.0
    %8120 = vadd.xlane.f32.xlu0 %v8119
    %v8121 = vpop.xlane.xlu0 %8120
    %v8122 = vsel %vm212, %v8092, 0.0
    %8123 = vadd.xlane.f32.xlu0 %v8122
    %v8124 = vpop.xlane.xlu0 %8123
    %v8125 = vsel %vm212, %v8093, 0.0
    %8126 = vadd.xlane.f32.xlu0 %v8125
    %v8127 = vpop.xlane.xlu0 %8126
    %v8128 = vsel %vm212, %v8094, 0.0
    %8129 = vadd.xlane.f32.xlu0 %v8128
    %v8130 = vpop.xlane.xlu0 %8129
    %v8131 = vsel %vm212, %v8095, 0.0
    %8132 = vadd.xlane.f32.xlu0 %v8131
    %v8133 = vpop.xlane.xlu0 %8132
    %v8134 = vsel %vm212, %v8096, 0.0
    %8135 = vadd.xlane.f32.xlu0 %v8134
    %v8136 = vpop.xlane.xlu0 %8135
    %v8137 = vsel %vm212, %v8097, 0.0
    %8138 = vadd.xlane.f32.xlu0 %v8137
    %v8139 = vpop.xlane.xlu0 %8138
    %v8140 = vsel %vm212, %v8098, 0.0
    %8141 = vadd.xlane.f32.xlu0 %v8140
    %v8142 = vpop.xlane.xlu0 %8141
    %v8143 = vsel %vm212, %v8099, 0.0
    %8144 = vadd.xlane.f32.xlu0 %v8143
    %v8145 = vpop.xlane.xlu0 %8144
    %v8146 = vsel %vm212, %v8100, 0.0
    %8147 = vadd.xlane.f32.xlu0 %v8146
    %v8148 = vpop.xlane.xlu0 %8147
    %v8149 = vsel %vm212, %v8101, 0.0
    %8150 = vadd.xlane.f32.xlu0 %v8149
    %v8151 = vpop.xlane.xlu0 %8150
    %v8152 = vsel %vm212, %v8102, 0.0
    %8153 = vadd.xlane.f32.xlu0 %v8152
    %v8154 = vpop.xlane.xlu0 %8153
    %v8155 = vsel %vm212, %v8103, 0.0
    %8156 = vadd.xlane.f32.xlu0 %v8155
    %v8157 = vpop.xlane.xlu0 %8156
    %v8158 = vsel %vm212, %v8104, 0.0
    %8159 = vadd.xlane.f32.xlu0 %v8158
    %v8160 = vpop.xlane.xlu0 %8159
    %v8161 = vsel %vm212, %v8105, 0.0
    %8162 = vadd.xlane.f32.xlu0 %v8161
    %v8163 = vpop.xlane.xlu0 %8162
    %v8164 = vsel %vm212, %v8106, 0.0
    %8165 = vadd.xlane.f32.xlu0 %v8164
    %v8166 = vpop.xlane.xlu0 %8165
    %v8167 = vsel %vm212, %v8107, 0.0
    %8168 = vadd.xlane.f32.xlu0 %v8167
    %v8169 = vpop.xlane.xlu0 %8168
    %v8170 = vsel %vm212, %v8108, 0.0
    %8171 = vadd.xlane.f32.xlu0 %v8170
    %v8172 = vpop.xlane.xlu0 %8171
    %v8173 = vsel %vm212, %v8109, 0.0
    %8174 = vadd.xlane.f32.xlu0 %v8173
    %v8175 = vpop.xlane.xlu0 %8174
    %v8176 = vsel %vm212, %v8110, 0.0
    %8177 = vadd.xlane.f32.xlu0 %v8176
    %v8178 = vpop.xlane.xlu0 %8177
    %v8179 = vsel %vm212, %v8111, 0.0
    %8180 = vadd.xlane.f32.xlu0 %v8179
    %v8181 = vpop.xlane.xlu0 %8180
    %v8182 = vsel %vm212, %v8112, 0.0
    %8183 = vadd.xlane.f32.xlu0 %v8182
    %v8184 = vpop.xlane.xlu0 %8183
    %v8185 = vsel %vm212, %v8113, 0.0
    %8186 = vadd.xlane.f32.xlu0 %v8185
    %v8187 = vpop.xlane.xlu0 %8186
    %v8188 = vsel %vm212, %v8114, 0.0
    %8189 = vadd.xlane.f32.xlu0 %v8188
    %v8190 = vpop.xlane.xlu0 %8189
    %v8191 = vsel %vm212, %v8115, 0.0
    %8192 = vadd.xlane.f32.xlu0 %v8191
    %v8193 = vpop.xlane.xlu0 %8192
    %v8194 = vsel %vm212, %v8116, 0.0
    %8195 = vadd.xlane.f32.xlu0 %v8194
    %v8196 = vpop.xlane.xlu0 %8195
    %v8197 = vsel %vm212, %v8117, 0.0
    %8198 = vadd.xlane.f32.xlu0 %v8197
    %v8199 = vpop.xlane.xlu0 %8198
    %v8200 = vsel %vm212, %v8118, 0.0
    %8201 = vadd.xlane.f32.xlu0 %v8200
    %v8202 = vpop.xlane.xlu0 %8201
    %v8203 = vmul.f32 %v895, %v8121
    %v8204 = vmul.f32 %v896, %v8124
    %v8205 = vmul.f32 %v897, %v8127
    %v8206 = vmul.f32 %v898, %v8130
    %v8207 = vmul.f32 %v899, %v8133
    %v8208 = vmul.f32 %v900, %v8136
    %v8209 = vmul.f32 %v901, %v8139
    %v8210 = vmul.f32 %v902, %v8142
    %v8211 = vmul.f32 %v903, %v8145
    %v8212 = vmul.f32 %v904, %v8148
    %v8213 = vmul.f32 %v905, %v8151
    %v8214 = vmul.f32 %v906, %v8154
    %v8215 = vmul.f32 %v907, %v8157
    %v8216 = vmul.f32 %v908, %v8160
    %v8217 = vmul.f32 %v909, %v8163
    %v8218 = vmul.f32 %v910, %v8166
    %v8219 = vmul.f32 %v911, %v8169
    %v8220 = vmul.f32 %v912, %v8172
    %v8221 = vmul.f32 %v913, %v8175
    %v8222 = vmul.f32 %v914, %v8178
    %v8223 = vmul.f32 %v915, %v8181
    %v8224 = vmul.f32 %v916, %v8184
    %v8225 = vmul.f32 %v917, %v8187
    %v8226 = vmul.f32 %v918, %v8190
    %v8227 = vmul.f32 %v919, %v8193
    %v8228 = vmul.f32 %v920, %v8196
    %v8229 = vmul.f32 %v921, %v8199
    %v8230 = vmul.f32 %v922, %v8202
    %v8231 = vmul.f32 %v8203, %v3391
    %v8232 = vmul.f32 %v8204, %v3396
    %v8233 = vmul.f32 %v8205, %v3401
    %v8234 = vmul.f32 %v8206, %v3406
    %v8235 = vmul.f32 %v8207, %v3411
    %v8236 = vmul.f32 %v8208, %v3416
    %v8237 = vmul.f32 %v8209, %v3421
    %v8238 = vmul.f32 %v8210, %v3426
    %v8239 = vmul.f32 %v8211, %v3431
    %v8240 = vmul.f32 %v8212, %v3436
    %v8241 = vmul.f32 %v8213, %v3441
    %v8242 = vmul.f32 %v8214, %v3446
    %v8243 = vmul.f32 %v8215, %v3451
    %v8244 = vmul.f32 %v8216, %v3456
    %v8245 = vmul.f32 %v8217, %v3461
    %v8246 = vmul.f32 %v8218, %v3466
    %v8247 = vmul.f32 %v8219, %v3471
    %v8248 = vmul.f32 %v8220, %v3476
    %v8249 = vmul.f32 %v8221, %v3481
    %v8250 = vmul.f32 %v8222, %v3486
    %v8251 = vmul.f32 %v8223, %v3491
    %v8252 = vmul.f32 %v8224, %v3496
    %v8253 = vmul.f32 %v8225, %v3501
    %v8254 = vmul.f32 %v8226, %v3506
    %v8255 = vmul.f32 %v8227, %v3511
    %v8256 = vmul.f32 %v8228, %v3516
    %v8257 = vmul.f32 %v8229, %v3521
    %v8258 = vmul.f32 %v8230, %v3526
    %8259 = vmatprep.subr.mxu0 0.0
    %8260 = vmatpush1.msra.mxu0 %v8231
    %8261 = vmatprep.subr.mxu0 0.0
    %8262 = vmatpush1.msra.mxu0 %v8232
    %8263 = vmatprep.subr.mxu0 0.0
    %8264 = vmatpush1.msra.mxu0 %v8233
    %8265 = vmatprep.subr.mxu0 0.0
    %8266 = vmatpush1.msra.mxu0 %v8234
    %8267 = vmatprep.subr.mxu0 0.0
    %8268 = vmatpush1.msra.mxu0 %v8235
    %8269 = vmatprep.subr.mxu0 0.0
    %8270 = vmatpush1.msra.mxu0 %v8236
    %8271 = vmatprep.subr.mxu0 0.0
    %8272 = vmatpush1.msra.mxu0 %v8237
    %8273 = vmatprep.subr.mxu0 0.0
    %8274 = vmatpush1.msra.mxu0 %v8238
    %8275 = vmatprep.subr.mxu0 0.0
    %8276 = vmatpush1.msra.mxu0 %v8239
    %8277 = vmatprep.subr.mxu0 0.0
    %8278 = vmatpush1.msra.mxu0 %v8240
    %8279 = vmatprep.subr.mxu0 0.0
    %8280 = vmatpush1.msra.mxu0 %v8241
    %8281 = vmatprep.subr.mxu0 0.0
    %8282 = vmatpush1.msra.mxu0 %v8242
    %8283 = vmatprep.subr.mxu0 0.0
    %8284 = vmatpush1.msra.mxu0 %v8243
    %8285 = vmatprep.subr.mxu0 0.0
    %8286 = vmatpush1.msra.mxu0 %v8244
    %8287 = vmatprep.subr.mxu0 0.0
    %8288 = vmatpush1.msra.mxu0 %v8245
    %8289 = vmatprep.subr.mxu0 0.0
    %8290 = vmatpush1.msra.mxu0 %v8246
    %8291 = vmatprep.subr.mxu0 0.0
    %8292 = vmatpush1.msra.mxu0 %v8247
    %8293 = vmatprep.subr.mxu0 0.0
    %8294 = vmatpush1.msra.mxu0 %v8248
    %8295 = vmatprep.subr.mxu0 0.0
    %8296 = vmatpush1.msra.mxu0 %v8249
    %8297 = vmatprep.subr.mxu0 0.0
    %8298 = vmatpush1.msra.mxu0 %v8250
    %8299 = vmatprep.subr.mxu0 0.0
    %8300 = vmatpush1.msra.mxu0 %v8251
    %8301 = vmatprep.subr.mxu0 0.0
    %8302 = vmatpush1.msra.mxu0 %v8252
    %8303 = vmatprep.subr.mxu0 0.0
    %8304 = vmatpush1.msra.mxu0 %v8253
    %8305 = vmatprep.subr.mxu0 0.0
    %8306 = vmatpush1.msra.mxu0 %v8254
    %8307 = vmatprep.subr.mxu0 0.0
    %8308 = vmatpush1.msra.mxu0 %v8255
    %8309 = vmatprep.subr.mxu0 0.0
    %8310 = vmatpush1.msra.mxu0 %v8256
    %8311 = vmatprep.subr.mxu0 0.0
    %8312 = vmatpush1.msra.mxu0 %v8257
    %8313 = vmatprep.subr.mxu0 0.0
    %8314 = vmatpush1.msra.mxu0 %v8258
    %8315 = vmatprep.subr.mxu0 0.0
    %8316 = vmatpush1.msra.mxu0 0.0
    %8317 = vmatprep.subr.mxu0 0.0
    %8318 = vmatpush1.msra.mxu0 0.0
    %8319 = vmatprep.subr.mxu0 0.0
    %8320 = vmatpush1.msra.mxu0 0.0
    %8321 = vmatprep.subr.mxu0 0.0
    %8322 = vmatpush1.msra.mxu0 0.0
    %8323 = vmatprep.mubr.f32.mxu0 %v3558
    %8324 = vmatmul.mubr.f32.gmra.mrb[0].mxu0 %v136
    %v8325 = vpop.f32.mrb[0].mxu0
    %v8326 = vadd.f32 0.0, %v8325
    %v8327 = vpop.f32.mrb[0].mxu0
    %8328 = vmatprep.mubr.f32.mxu0 %v3561
    %8329 = vmatmul.mubr.f32.gmra.mrb[0].mxu0 %v138
    %v8330 = vpop.f32.mrb[0].mxu0
    %v8331 = vadd.f32 0.0, %v8330
    %v8332 = vpop.f32.mrb[0].mxu0
    %8333 = vmatprep.mubr.f32.mxu0 %v3564
    %8334 = vmatmul.mubr.f32.gmra.mrb[0].mxu0 %v140
    %v8335 = vpop.f32.mrb[0].mxu0
    %v8336 = vadd.f32 0.0, %v8335
    %v8337 = vpop.f32.mrb[0].mxu0
    %8338 = vmatprep.mubr.f32.mxu0 %v3567
    %8339 = vmatmul.mubr.f32.gmra.mrb[0].mxu0 %v142
    %v8340 = vpop.f32.mrb[0].mxu0
    %v8341 = vadd.f32 0.0, %v8340
    %v8342 = vpop.f32.mrb[0].mxu0
    %8343 = vdwg.mxu0
    %v8344 = vmul.f32 %v8326, 0.01
    %v8345 = vmul.f32 %v8331, 0.01
    %v8346 = vmul.f32 %v8336, 0.01
    %v8347 = vmul.f32 %v8341, 0.01
    %v8348 = vadd.f32 %v148, %v8344
    %v8349 = vadd.f32 %v149, %v8345
    %v8350 = vadd.f32 %v150, %v8346
    %v8351 = vadd.f32 %v151, %v8347
    %v8352 = vmul.f32 %v8348, %v3946
    %v8353 = vmul.f32 %v8349, %v3951
    %v8354 = vmul.f32 %v8350, %v3956
    %v8355 = vmul.f32 %v8351, %v3961
    %8356 = vst.msk [vmem:[%s25] sm:$0xff] %vm530, %v8352
    %8357 = vst.msk [vmem:[%s25 + $0x8] sm:$0xff] %vm530, %v8353
    %8358 = vst.msk [vmem:[%s25 + $0x10] sm:$0xff] %vm530, %v8354
    %8359 = vst.msk [vmem:[%s25 + $0x18] sm:$0xff] %vm530, %v8355
    %8360 = vst.msk [vmem:[#allocation4] sm:$0xff] %vm212, %v6474
    %8361 = vst.msk [vmem:[#allocation4 + $0x8] sm:$0xff] %vm212, %v6475
    %8362 = vst.msk [vmem:[#allocation4 + $0x10] sm:$0xff] %vm212, %v6476
    %8363 = vst.msk [vmem:[#allocation4 + $0x18] sm:$0xff] %vm212, %v6477
    // Predicated region
    $region98: #{tpu_custom_call.1} parent=1 // pred_check
      _
    $region99: #{tpu_custom_call.1} parent=1 // pred_check_branch
      %8365 = sbr.rel (0) target = $region101
    $region100: #{tpu_custom_call.1} parent=1 // pred_region
      %s8367 = ssub.s32 512, 512
      %8368 = vsyncadd [#allocation5], %s8367
      %s8369 = sshll.u32 [#allocation4], 4
      %s8370 = int_to_ptr.vmem [resolvable:$true] %s8369
      %8375 = dma.vmem_to_hbm [thread:$0]  %s8370, 512, %s24, [#allocation5], 128, 128, 8
    $region101: #{tpu_custom_call.1} parent=1 // pred_fallthru
      _
    // Predicated region
    $region102: #{tpu_custom_call.1} parent=1 // pred_check
      _
    $region103: #{tpu_custom_call.1} parent=1 // pred_check_branch
      %8377 = sbr.rel (0) target = $region105
    $region104: #{tpu_custom_call.1} parent=1 // pred_region
      _
    $region105: #{tpu_custom_call.1} parent=1 // pred_fallthru
      _
    // Predicated region
    $region106: #{tpu_custom_call.1} parent=1 // pred_check
      _
    $region107: #{tpu_custom_call.1} parent=1 // pred_check_branch
      %8379 = sbr.rel (0) target = $region109
    $region108: #{tpu_custom_call.1} parent=1 // pred_region
      %8380 = dma.done [#allocation5], 512
    $region109: #{tpu_custom_call.1} parent=1 // pred_fallthru
      _
    // Predicated region
    $region110: #{tpu_custom_call.1} parent=1 // pred_check
      _
    $region111: #{tpu_custom_call.1} parent=1 // pred_check_branch
      %8382 = sbr.rel (0) target = $region113
    $region112: #{tpu_custom_call.1} parent=1 // pred_region
      _
    $region113: #{tpu_custom_call.1} parent=1 // pred_fallthru
      _
    %8383 = vsyncpa [#allocation5], 1

</llo_original>
